<compile_context>
chip_gen: v5e
topology: v5e:2x2
jax: 0.10.0
libtpu: 0.0.40
codegen_flags: <defaults>
</compile_context>

<pallas_src>
import jax
import jax.numpy as jnp
from jax import lax
from jax.experimental import pallas as pl
from jax.experimental.pallas import tpu as pltpu

NUM_CLASSES = 2
NUM_METADATA_FEATURES = 2

# Image geometry implied by the module (fc_output expects 128*16*16 + 64 inputs).
IMG_C, IMG_H, IMG_W = 3, 128, 128


# ---------------------------------------------------------------------------
# The fused forward kernel: one grid step == one image.
# ---------------------------------------------------------------------------

def _fused_forward_kernel(img_ref, meta_ref, w1_ref, b1_ref, w2_ref, b2_ref,
                          w3_ref, b3_ref, wm_ref, bm_ref, wimg_ref, wmo_ref,
                          bout_ref, o_ref,
                          xpad1, hrow, a1pad, vpool2, a2pad, vpool3, a3):
    f32 = jnp.float32

    # ---- Stage 0: zero ONLY the halo borders (interiors are overwritten). ----
    xpad1[:, 0:1, :] = jnp.zeros((3, 1, 128), f32)
    xpad1[:, 129:130, :] = jnp.zeros((3, 1, 128), f32)

    a1pad[0:1, :, :] = jnp.zeros((1, 66, 32), f32)
    a1pad[65:66, :, :] = jnp.zeros((1, 66, 32), f32)
    a1pad[:, 0:1, :] = jnp.zeros((66, 1, 32), f32)
    a1pad[:, 65:66, :] = jnp.zeros((66, 1, 32), f32)

    a2pad[0:1, :, :] = jnp.zeros((1, 34, 64), f32)
    a2pad[33:34, :, :] = jnp.zeros((1, 34, 64), f32)
    a2pad[:, 0:1, :] = jnp.zeros((34, 1, 64), f32)
    a2pad[:, 33:34, :] = jnp.zeros((34, 1, 64), f32)

    # NCHW image -> interior rows [1..129) of the vertically padded conv1 buffer
    # (horizontal padding is handled when the 3x3 patches are built below).
    xpad1[:, 1:129, :] = img_ref[0]

    # ---- Stage 1: conv1 (3->32, 3x3, pad 1) + bias + ReLU + 2x2 max pool. ----
    eye = jnp.eye(128, dtype=f32)          # MXU-based CHW->HWC flip (I @ Z^T)
    nt = (((1,), (1,)), ((), ()))          # contract lhs dim1 with rhs dim1

    def conv1_body(jp, carry):
        r0 = 2 * jp                        # first of the two conv rows pooled into row jp
        # Padded rows r0..r0+3 per channel (rows 0 / 129 are the zero halo).
        rows = [[xpad1[c, pl.ds(r0 + j, 1), :] for j in range(4)]
                for c in range(3)]         # each (1, 128)

        def patch(sub):                    # im2col column block for conv row r0+sub
            zero1 = jnp.zeros((1, 1), f32)
            pieces = []
            for c in range(3):
                for dh in range(3):
                    row = rows[c][sub + dh]
                    # dw = 0 / 1 / 2  <->  image column w-1 / w / w+1 (zero edges)
                    pieces.append(jnp.concatenate([zero1, row[:, 0:127]], axis=1))
                    pieces.append(row)
                    pieces.append(jnp.concatenate([row[:, 1:128], zero1], axis=1))
            pieces.append(jnp.zeros((5, 128), f32))   # pad K: 27 -> 32
            return jnp.concatenate(pieces, axis=0)    # (32, 128)

        chw0 = jnp.dot(w1_ref[...], patch(0), preferred_element_type=f32)
        chw1 = jnp.dot(w1_ref[...], patch(1), preferred_element_type=f32)
        # pool(relu(x + b)) == relu(max-pool(x) + b): pool first, then bias+ReLU.
        z = jnp.maximum(jnp.maximum(chw0, chw1) + b1_ref[...], 0.0)      # (32, 128)
        hrow[...] = lax.dot_general(eye, z, nt, preferred_element_type=f32)  # (128, 32)
        pooled = jnp.maximum(hrow[pl.ds(0, 64, stride=2), :],
                             hrow[pl.ds(1, 64, stride=2), :])            # (64, 32)
        a1pad[pl.ds(1 + jp, 1), pl.ds(1, 64), :] = pooled.reshape(1, 64, 32)
        return carry

    lax.fori_loop(0, 64, conv1_body, 0)

    # ---- Stage 2: conv2 (32->64) + bias + ReLU + pool; 8 conv rows / step. ----
    def conv2_body(kb, carry):
        acc = jnp.zeros((512, 64), f32)
        for dh in range(3):
            for dw in range(3):
                p = a1pad[pl.ds(kb * 8 + dh, 8), pl.ds(dw, 64), :]       # (8, 64, 32)
                acc = acc + jnp.dot(p.reshape(512, 32), w2_ref[dh * 3 + dw],
                                    preferred_element_type=f32)
        z = jnp.maximum(acc + b2_ref[...], 0.0).reshape(4, 2, 64, 64)
        vpool2[...] = jnp.maximum(z[:, 0], z[:, 1])                      # (4, 64, 64)
        pooled = jnp.maximum(vpool2[:, pl.ds(0, 32, stride=2), :],
                             vpool2[:, pl.ds(1, 32, stride=2), :])       # (4, 32, 64)
        a2pad[pl.ds(1 + kb * 4, 4), pl.ds(1, 32), :] = pooled
        return carry

    lax.fori_loop(0, 8, conv2_body, 0)

    # ---- Stage 3: conv3 (64->128) + bias + ReLU + pool; 8 conv rows / step. ----
    def conv3_body(kb, carry):
        acc = jnp.zeros((256, 128), f32)
        for dh in range(3):
            for dw in range(3):
                p = a2pad[pl.ds(kb * 8 + dh, 8), pl.ds(dw, 32), :]       # (8, 32, 64)
                acc = acc + jnp.dot(p.reshape(256, 64), w3_ref[dh * 3 + dw],
                                    preferred_element_type=f32)
        z = jnp.maximum(acc + b3_ref[...], 0.0).reshape(4, 2, 32, 128)
        vpool3[...] = jnp.maximum(z[:, 0], z[:, 1])                      # (4, 32, 128)
        pooled = jnp.maximum(vpool3[:, pl.ds(0, 16, stride=2), :],
                             vpool3[:, pl.ds(1, 16, stride=2), :])       # (4, 16, 128)
        a3[pl.ds(kb * 4, 4), :, :] = pooled
        return carry

    lax.fori_loop(0, 4, conv3_body, 0)

    # ---- Stage 4: FC head (fc_meta + fc_output) epilogue for this image. ----
    feat = a3[...].reshape(256, 128)                      # NHWC flatten (h*16+w, c)
    m = meta_ref[0]                                       # (1, 2)
    h = jnp.maximum(m[:, 0:1] * wm_ref[0:1, :] + m[:, 1:2] * wm_ref[1:2, :]
                    + bm_ref[...], 0.0)                   # (1, 64) relu(fc_meta)
    col = lax.broadcasted_iota(jnp.int32, (1, NUM_CLASSES), 1)
    out = bout_ref[...]                                   # (1, NUM_CLASSES)
    for n in range(NUM_CLASSES):
        s = (jnp.sum(feat * wimg_ref[n].reshape(256, 128)) +
             jnp.sum(h * wmo_ref[n:n + 1, :]))
        out = out + jnp.where(col == n, s, 0.0)
    o_ref[...] = out.reshape(1, 1, NUM_CLASSES)


# ---------------------------------------------------------------------------
# Wrapper: one pallas_call per forward pass, grid over batch.
# ---------------------------------------------------------------------------

def multi_input_forward(kparams, img_nchw, meta):
    """img_nchw: (B, 3, 128, 128) float32, meta: (B, 2) float32 -> (B, 2)."""
    B, C, H, W = img_nchw.shape
    assert (C, H, W) == (IMG_C, IMG_H, IMG_W), (C, H, W)
    meta3d = meta.reshape(B, 1, NUM_METADATA_FEATURES).astype(jnp.float32)

    def _full(arr):
        return pl.BlockSpec(arr.shape, lambda b, _n=arr.ndim: (0,) * _n)

    kp = kparams
    operands = (img_nchw, meta3d, kp["w1"], kp["b1"], kp["w2"], kp["b2"],
                kp["w3"], kp["b3"], kp["meta_w"], kp["meta_b"],
                kp["out_w_img"], kp["out_w_meta"], kp["out_b"])

    in_specs = [
        pl.BlockSpec((1, IMG_C, IMG_H, IMG_W), lambda b: (b, 0, 0, 0)),
        pl.BlockSpec((1, 1, NUM_METADATA_FEATURES), lambda b: (b, 0, 0)),
    ] + [_full(a) for a in operands[2:]]

    out = pl.pallas_call(
        _fused_forward_kernel,
        out_shape=jax.ShapeDtypeStruct((B, 1, NUM_CLASSES), jnp.float32),
        grid=(B,),
        in_specs=in_specs,
        out_specs=pl.BlockSpec((1, 1, NUM_CLASSES), lambda b: (b, 0, 0)),
        scratch_shapes=[
            pltpu.VMEM((3, 130, 128), jnp.float32),    # conv1 input, row-padded
            pltpu.VMEM((128, 32), jnp.float32),        # conv1 HWC row (pre h-pool)
            pltpu.VMEM((66, 66, 32), jnp.float32),     # conv2 input, halo-padded
            pltpu.VMEM((4, 64, 64), jnp.float32),      # conv2 vertical-pool rows
            pltpu.VMEM((34, 34, 64), jnp.float32),     # conv3 input, halo-padded
            pltpu.VMEM((4, 32, 128), jnp.float32),     # conv3 vertical-pool rows
            pltpu.VMEM((16, 16, 128), jnp.float32),    # conv3 pooled output
        ],
        compiler_params=pltpu.CompilerParams(dimension_semantics=("parallel",)),
    )(*operands)
    return out.reshape(B, NUM_CLASSES)


# ---------------------------------------------------------------------------
# Parameters (PyTorch layouts) and kernel-layout preparation.
# ---------------------------------------------------------------------------

def init_params(key):
    """Random params in PyTorch layouts: conv (Cout,Cin,3,3), linear (out,in)."""
    ks = jax.random.split(key, 10)

    def conv_init(kw, kb, cout, cin):
        w = jax.random.normal(kw, (cout, cin, 3, 3), jnp.float32) / jnp.sqrt(cin * 9.0)
        b = jax.random.normal(kb, (cout,), jnp.float32) * 0.01
        return w, b

    def linear_init(kw, kb, out_f, in_f):
        w = jax.random.normal(kw, (out_f, in_f), jnp.float32) / jnp.sqrt(float(in_f))
        b = jax.random.normal(kb, (out_f,), jnp.float32) * 0.01
        return w, b

    c1w, c1b = conv_init(ks[0], ks[1], 32, 3)
    c2w, c2b = conv_init(ks[2], ks[3], 64, 32)
    c3w, c3b = conv_init(ks[4], ks[5], 128, 64)
    mw, mb = linear_init(ks[6], ks[7], 64, NUM_METADATA_FEATURES)
    ow, ob = linear_init(ks[8], ks[9], NUM_CLASSES, 32832)
    return dict(conv1_w=c1w, conv1_b=c1b, conv2_w=c2w, conv2_b=c2b,
                conv3_w=c3w, conv3_b=c3b, fc_meta_w=mw, fc_meta_b=mb,
                fc_output_w=ow, fc_output_b=ob)


def prepare_params(p):
    """Convert PyTorch-layout params into the layouts the fused kernel consumes."""
    def conv_w(w_oihw):                       # (Cout,Cin,3,3) -> (9, Cin, Cout), t=dh*3+dw
        cout, cin, kh, kw = w_oihw.shape
        return jnp.transpose(w_oihw, (2, 3, 1, 0)).reshape(kh * kw, cin, cout)

    nc = p["fc_output_w"].shape[0]
    w_out = p["fc_output_w"]                  # (NC, 32832): cols = [CHW flatten | meta]
    # image part: column index c*256 + h*16 + w  ->  (NC, 16, 16, 128) NHWC order
    w_img = jnp.transpose(w_out[:, :32768].reshape(nc, 128, 16, 16), (0, 2, 3, 1))
    # conv1: K ordered (c, dh, dw) == plain OIHW reshape; pad K 27 -> 32 with zeros.
    w1 = jnp.pad(p["conv1_w"].reshape(32, 27), ((0, 0), (0, 5)))
    return dict(
        w1=w1, b1=p["conv1_b"].reshape(32, 1),
        w2=conv_w(p["conv2_w"]), b2=p["conv2_b"].reshape(1, 64),
        w3=conv_w(p["conv3_w"]), b3=p["conv3_b"].reshape(1, 128),
        meta_w=jnp.transpose(p["fc_meta_w"]),            # (2, 64)
        meta_b=p["fc_meta_b"].reshape(1, -1),            # (1, 64)
        out_w_img=w_img,                                 # (NC, 16, 16, 128)
        out_w_meta=w_out[:, 32768:],                     # (NC, 64)
        out_b=p["fc_output_b"].reshape(1, -1),           # (1, NC)
    )


# ---------------------------------------------------------------------------
# Pure-XLA reference that mirrors the PyTorch module exactly.
# ---------------------------------------------------------------------------

def reference_forward(params, img, meta):
    prec = jax.lax.Precision.HIGHEST
    x = img
    for i in (1, 2, 3):
        w, b = params[f"conv{i}_w"], params[f"conv{i}_b"]
        x = jax.lax.conv_general_dilated(
            x, w, (1, 1), ((1, 1), (1, 1)),
            dimension_numbers=("NCHW", "OIHW", "NCHW"), precision=prec)
        x = jax.nn.relu(x + b[None, :, None, None])
        x = jax.lax.reduce_window(x, -jnp.inf, jax.lax.max,
                                  (1, 1, 2, 2), (1, 1, 2, 2), "VALID")
    xf = x.reshape(x.shape[0], -1)
    meta_out = jax.nn.relu(
        jnp.dot(meta, params["fc_meta_w"].T, precision=prec) + params["fc_meta_b"])
    comb = jnp.concatenate([xf, meta_out], axis=1)
    return jnp.dot(comb, params["fc_output_w"].T, precision=prec) + params["fc_output_b"]


# ---------------------------------------------------------------------------

if __name__ == "__main__":
    key = jax.random.PRNGKey(0)
    pkey, ikey, mkey = jax.random.split(key, 3)

    params = init_params(pkey)
    kparams = prepare_params(params)

    B = 2
    img = jax.random.normal(ikey, (B, IMG_C, IMG_H, IMG_W), jnp.float32)
    meta = jax.random.normal(mkey, (B, NUM_METADATA_FEATURES), jnp.float32)

    fwd = jax.jit(multi_input_forward)
    out = jax.block_until_ready(fwd(kparams, img, meta))

    assert out.shape == (B, NUM_CLASSES), out.shape
    assert bool(jnp.all(jnp.isfinite(out)))

    ref = jax.block_until_ready(jax.jit(reference_forward)(params, img, meta))
    assert bool(jnp.allclose(out, ref, rtol=1e-2, atol=1e-2)), (out, ref)

    print("KERNEL_OK")
</pallas_src>

<mosaic_0001>
module attributes {stable_mosaic.version = 11 : i64} {
  func.func @_fused_forward_kernel(%arg0: i32, %arg1: memref<1x3x128x128xf32, #tpu.memory_space<vmem>>, %arg2: memref<1x1x2xf32, #tpu.memory_space<vmem>>, %arg3: memref<32x32xf32, #tpu.memory_space<vmem>>, %arg4: memref<32x1xf32, #tpu.memory_space<vmem>>, %arg5: memref<9x32x64xf32, #tpu.memory_space<vmem>>, %arg6: memref<1x64xf32, #tpu.memory_space<vmem>>, %arg7: memref<9x64x128xf32, #tpu.memory_space<vmem>>, %arg8: memref<1x128xf32, #tpu.memory_space<vmem>>, %arg9: memref<2x64xf32, #tpu.memory_space<vmem>>, %arg10: memref<1x64xf32, #tpu.memory_space<vmem>>, %arg11: memref<2x16x16x128xf32, #tpu.memory_space<vmem>>, %arg12: memref<2x64xf32, #tpu.memory_space<vmem>>, %arg13: memref<1x2xf32, #tpu.memory_space<vmem>>, %arg14: memref<1x1x2xf32, #tpu.memory_space<vmem>>, %arg15: memref<3x130x128xf32, #tpu.memory_space<vmem>>, %arg16: memref<128x32xf32, #tpu.memory_space<vmem>>, %arg17: memref<66x66x32xf32, #tpu.memory_space<vmem>>, %arg18: memref<4x64x64xf32, #tpu.memory_space<vmem>>, %arg19: memref<34x34x64xf32, #tpu.memory_space<vmem>>, %arg20: memref<4x32x128xf32, #tpu.memory_space<vmem>>, %arg21: memref<16x16x128xf32, #tpu.memory_space<vmem>>) attributes {dimension_semantics = [#tpu.dimension_semantics<parallel>], iteration_bounds = array<i64: 2>, scalar_prefetch = 0 : i64, scratch_operands = 7 : i64, tpu.core_type = #tpu.core_type<tc>, window_params = [{transform_indices = @transform_0, window_bounds = array<i64: 1, 3, 128, 128>}, {transform_indices = @transform_1, window_bounds = array<i64: 1, 1, 2>}, {pipeline_mode = #tpu.pipeline_mode<synchronous>, transform_indices = @transform_2, window_bounds = array<i64: 32, 32>}, {pipeline_mode = #tpu.pipeline_mode<synchronous>, transform_indices = @transform_3, window_bounds = array<i64: 32, 1>}, {pipeline_mode = #tpu.pipeline_mode<synchronous>, transform_indices = @transform_4, window_bounds = array<i64: 9, 32, 64>}, {pipeline_mode = #tpu.pipeline_mode<synchronous>, transform_indices = @transform_5, window_bounds = array<i64: 1, 64>}, {pipeline_mode = #tpu.pipeline_mode<synchronous>, transform_indices = @transform_6, window_bounds = array<i64: 9, 64, 128>}, {pipeline_mode = #tpu.pipeline_mode<synchronous>, transform_indices = @transform_7, window_bounds = array<i64: 1, 128>}, {pipeline_mode = #tpu.pipeline_mode<synchronous>, transform_indices = @transform_8, window_bounds = array<i64: 2, 64>}, {pipeline_mode = #tpu.pipeline_mode<synchronous>, transform_indices = @transform_9, window_bounds = array<i64: 1, 64>}, {pipeline_mode = #tpu.pipeline_mode<synchronous>, transform_indices = @transform_10, window_bounds = array<i64: 2, 16, 16, 128>}, {pipeline_mode = #tpu.pipeline_mode<synchronous>, transform_indices = @transform_11, window_bounds = array<i64: 2, 64>}, {pipeline_mode = #tpu.pipeline_mode<synchronous>, transform_indices = @transform_12, window_bounds = array<i64: 1, 2>}, {transform_indices = @transform_13, window_bounds = array<i64: 1, 1, 2>}]} {
    %cst = arith.constant 0.000000e+00 : f32
    %0 = vector.broadcast %cst : f32 to vector<3x1x128xf32>
    %c0 = arith.constant 0 : index
    %c0_0 = arith.constant 0 : index
    %c0_1 = arith.constant 0 : index
    %1 = vector.load %arg15[%c0, %c0_0, %c0_1] : memref<3x130x128xf32, #tpu.memory_space<vmem>>, vector<3x1x128xf32>
    tpu.vector_store %arg15[%c0, %c0_0, %c0_1], %0 {strides = array<i32>} : memref<3x130x128xf32, #tpu.memory_space<vmem>>, vector<3x1x128xf32>,
    %cst_2 = arith.constant 0.000000e+00 : f32
    %2 = vector.broadcast %cst_2 : f32 to vector<3x1x128xf32>
    %c0_3 = arith.constant 0 : index
    %c129 = arith.constant 129 : index
    %c0_4 = arith.constant 0 : index
    %3 = vector.load %arg15[%c0_3, %c129, %c0_4] : memref<3x130x128xf32, #tpu.memory_space<vmem>>, vector<3x1x128xf32>
    tpu.vector_store %arg15[%c0_3, %c129, %c0_4], %2 {strides = array<i32>} : memref<3x130x128xf32, #tpu.memory_space<vmem>>, vector<3x1x128xf32>,
    %cst_5 = arith.constant 0.000000e+00 : f32
    %4 = vector.broadcast %cst_5 : f32 to vector<1x66x32xf32>
    %c0_6 = arith.constant 0 : index
    %c0_7 = arith.constant 0 : index
    %c0_8 = arith.constant 0 : index
    %5 = vector.load %arg17[%c0_6, %c0_7, %c0_8] : memref<66x66x32xf32, #tpu.memory_space<vmem>>, vector<1x66x32xf32>
    tpu.vector_store %arg17[%c0_6, %c0_7, %c0_8], %4 {strides = array<i32>} : memref<66x66x32xf32, #tpu.memory_space<vmem>>, vector<1x66x32xf32>,
    %cst_9 = arith.constant 0.000000e+00 : f32
    %6 = vector.broadcast %cst_9 : f32 to vector<1x66x32xf32>
    %c65 = arith.constant 65 : index
    %c0_10 = arith.constant 0 : index
    %c0_11 = arith.constant 0 : index
    %7 = vector.load %arg17[%c65, %c0_10, %c0_11] : memref<66x66x32xf32, #tpu.memory_space<vmem>>, vector<1x66x32xf32>
    tpu.vector_store %arg17[%c65, %c0_10, %c0_11], %6 {strides = array<i32>} : memref<66x66x32xf32, #tpu.memory_space<vmem>>, vector<1x66x32xf32>,
    %cst_12 = arith.constant 0.000000e+00 : f32
    %8 = vector.broadcast %cst_12 : f32 to vector<66x1x32xf32>
    %c0_13 = arith.constant 0 : index
    %c0_14 = arith.constant 0 : index
    %c0_15 = arith.constant 0 : index
    %9 = vector.load %arg17[%c0_13, %c0_14, %c0_15] : memref<66x66x32xf32, #tpu.memory_space<vmem>>, vector<66x1x32xf32>
    tpu.vector_store %arg17[%c0_13, %c0_14, %c0_15], %8 {strides = array<i32>} : memref<66x66x32xf32, #tpu.memory_space<vmem>>, vector<66x1x32xf32>,
    %cst_16 = arith.constant 0.000000e+00 : f32
    %10 = vector.broadcast %cst_16 : f32 to vector<66x1x32xf32>
    %c0_17 = arith.constant 0 : index
    %c65_18 = arith.constant 65 : index
    %c0_19 = arith.constant 0 : index
    %11 = vector.load %arg17[%c0_17, %c65_18, %c0_19] : memref<66x66x32xf32, #tpu.memory_space<vmem>>, vector<66x1x32xf32>
    tpu.vector_store %arg17[%c0_17, %c65_18, %c0_19], %10 {strides = array<i32>} : memref<66x66x32xf32, #tpu.memory_space<vmem>>, vector<66x1x32xf32>,
    %cst_20 = arith.constant 0.000000e+00 : f32
    %12 = vector.broadcast %cst_20 : f32 to vector<1x34x64xf32>
    %c0_21 = arith.constant 0 : index
    %c0_22 = arith.constant 0 : index
    %c0_23 = arith.constant 0 : index
    %13 = vector.load %arg19[%c0_21, %c0_22, %c0_23] : memref<34x34x64xf32, #tpu.memory_space<vmem>>, vector<1x34x64xf32>
    tpu.vector_store %arg19[%c0_21, %c0_22, %c0_23], %12 {strides = array<i32>} : memref<34x34x64xf32, #tpu.memory_space<vmem>>, vector<1x34x64xf32>,
    %cst_24 = arith.constant 0.000000e+00 : f32
    %14 = vector.broadcast %cst_24 : f32 to vector<1x34x64xf32>
    %c33 = arith.constant 33 : index
    %c0_25 = arith.constant 0 : index
    %c0_26 = arith.constant 0 : index
    %15 = vector.load %arg19[%c33, %c0_25, %c0_26] : memref<34x34x64xf32, #tpu.memory_space<vmem>>, vector<1x34x64xf32>
    tpu.vector_store %arg19[%c33, %c0_25, %c0_26], %14 {strides = array<i32>} : memref<34x34x64xf32, #tpu.memory_space<vmem>>, vector<1x34x64xf32>,
    %cst_27 = arith.constant 0.000000e+00 : f32
    %16 = vector.broadcast %cst_27 : f32 to vector<34x1x64xf32>
    %c0_28 = arith.constant 0 : index
    %c0_29 = arith.constant 0 : index
    %c0_30 = arith.constant 0 : index
    %17 = vector.load %arg19[%c0_28, %c0_29, %c0_30] : memref<34x34x64xf32, #tpu.memory_space<vmem>>, vector<34x1x64xf32>
    tpu.vector_store %arg19[%c0_28, %c0_29, %c0_30], %16 {strides = array<i32>} : memref<34x34x64xf32, #tpu.memory_space<vmem>>, vector<34x1x64xf32>,
    %cst_31 = arith.constant 0.000000e+00 : f32
    %18 = vector.broadcast %cst_31 : f32 to vector<34x1x64xf32>
    %c0_32 = arith.constant 0 : index
    %c33_33 = arith.constant 33 : index
    %c0_34 = arith.constant 0 : index
    %19 = vector.load %arg19[%c0_32, %c33_33, %c0_34] : memref<34x34x64xf32, #tpu.memory_space<vmem>>, vector<34x1x64xf32>
    tpu.vector_store %arg19[%c0_32, %c33_33, %c0_34], %18 {strides = array<i32>} : memref<34x34x64xf32, #tpu.memory_space<vmem>>, vector<34x1x64xf32>,
    %c0_35 = arith.constant 0 : index
    %c0_36 = arith.constant 0 : index
    %c0_37 = arith.constant 0 : index
    %c0_38 = arith.constant 0 : index
    %20 = vector.load %arg1[%c0_35, %c0_36, %c0_37, %c0_38] : memref<1x3x128x128xf32, #tpu.memory_space<vmem>>, vector<1x3x128x128xf32>
    %21 = vector.shape_cast %20 : vector<1x3x128x128xf32> to vector<3x128x128xf32>
    %c0_39 = arith.constant 0 : index
    %c1 = arith.constant 1 : index
    %c0_40 = arith.constant 0 : index
    %22 = vector.load %arg15[%c0_39, %c1, %c0_40] : memref<3x130x128xf32, #tpu.memory_space<vmem>>, vector<3x128x128xf32>
    tpu.vector_store %arg15[%c0_39, %c1, %c0_40], %21 {strides = array<i32>} : memref<3x130x128xf32, #tpu.memory_space<vmem>>, vector<3x128x128xf32>,
    %23 = tpu.iota {dimensions = array<i32: 0>} : vector<128x128xi32>
    %24 = tpu.iota {dimensions = array<i32: 1>} : vector<128x128xi32>
    %c0_i32 = arith.constant 0 : i32
    %25 = vector.broadcast %c0_i32 : i32 to vector<128x128xi32>
    %26 = arith.addi %23, %25 : vector<128x128xi32>
    %27 = arith.cmpi eq, %26, %24 : vector<128x128xi32>
    %28 = arith.extui %27 : vector<128x128xi1> to vector<128x128xi32>
    %29 = arith.sitofp %28 : vector<128x128xi32> to vector<128x128xf32>
    %c0_i32_41 = arith.constant 0 : i32
    %c64_i32 = arith.constant 64 : i32
    %30 = arith.addi %c0_i32_41, %c64_i32 : i32
    %c1_i32 = arith.constant 1 : i32
    scf.for %arg22 = %c0_i32_41 to %30 step %c1_i32  : i32 {
      %c2_i32 = arith.constant 2 : i32
      %96 = arith.muli %c2_i32, %arg22 : i32
      %c0_i32_87 = arith.constant 0 : i32
      %97 = arith.addi %96, %c0_i32_87 : i32
      %c0_88 = arith.constant 0 : index
      %98 = arith.index_cast %97 : i32 to index
      %c0_89 = arith.constant 0 : index
      %99 = vector.load %arg15[%c0_88, %98, %c0_89] : memref<3x130x128xf32, #tpu.memory_space<vmem>>, vector<1x1x128xf32>
      %100 = vector.shape_cast %99 : vector<1x1x128xf32> to vector<1x128xf32>
      %c1_i32_90 = arith.constant 1 : i32
      %101 = arith.addi %96, %c1_i32_90 : i32
      %c0_91 = arith.constant 0 : index
      %102 = arith.index_cast %101 : i32 to index
      %c0_92 = arith.constant 0 : index
      %103 = vector.load %arg15[%c0_91, %102, %c0_92] : memref<3x130x128xf32, #tpu.memory_space<vmem>>, vector<1x1x128xf32>
      %104 = vector.shape_cast %103 : vector<1x1x128xf32> to vector<1x128xf32>
      %c2_i32_93 = arith.constant 2 : i32
      %105 = arith.addi %96, %c2_i32_93 : i32
      %c0_94 = arith.constant 0 : index
      %106 = arith.index_cast %105 : i32 to index
      %c0_95 = arith.constant 0 : index
      %107 = vector.load %arg15[%c0_94, %106, %c0_95] : memref<3x130x128xf32, #tpu.memory_space<vmem>>, vector<1x1x128xf32>
      %108 = vector.shape_cast %107 : vector<1x1x128xf32> to vector<1x128xf32>
      %c3_i32 = arith.constant 3 : i32
      %109 = arith.addi %96, %c3_i32 : i32
      %c0_96 = arith.constant 0 : index
      %110 = arith.index_cast %109 : i32 to index
      %c0_97 = arith.constant 0 : index
      %111 = vector.load %arg15[%c0_96, %110, %c0_97] : memref<3x130x128xf32, #tpu.memory_space<vmem>>, vector<1x1x128xf32>
      %112 = vector.shape_cast %111 : vector<1x1x128xf32> to vector<1x128xf32>
      %c0_i32_98 = arith.constant 0 : i32
      %113 = arith.addi %96, %c0_i32_98 : i32
      %c1_99 = arith.constant 1 : index
      %114 = arith.index_cast %113 : i32 to index
      %c0_100 = arith.constant 0 : index
      %115 = vector.load %arg15[%c1_99, %114, %c0_100] : memref<3x130x128xf32, #tpu.memory_space<vmem>>, vector<1x1x128xf32>
      %116 = vector.shape_cast %115 : vector<1x1x128xf32> to vector<1x128xf32>
      %c1_i32_101 = arith.constant 1 : i32
      %117 = arith.addi %96, %c1_i32_101 : i32
      %c1_102 = arith.constant 1 : index
      %118 = arith.index_cast %117 : i32 to index
      %c0_103 = arith.constant 0 : index
      %119 = vector.load %arg15[%c1_102, %118, %c0_103] : memref<3x130x128xf32, #tpu.memory_space<vmem>>, vector<1x1x128xf32>
      %120 = vector.shape_cast %119 : vector<1x1x128xf32> to vector<1x128xf32>
      %c2_i32_104 = arith.constant 2 : i32
      %121 = arith.addi %96, %c2_i32_104 : i32
      %c1_105 = arith.constant 1 : index
      %122 = arith.index_cast %121 : i32 to index
      %c0_106 = arith.constant 0 : index
      %123 = vector.load %arg15[%c1_105, %122, %c0_106] : memref<3x130x128xf32, #tpu.memory_space<vmem>>, vector<1x1x128xf32>
      %124 = vector.shape_cast %123 : vector<1x1x128xf32> to vector<1x128xf32>
      %c3_i32_107 = arith.constant 3 : i32
      %125 = arith.addi %96, %c3_i32_107 : i32
      %c1_108 = arith.constant 1 : index
      %126 = arith.index_cast %125 : i32 to index
      %c0_109 = arith.constant 0 : index
      %127 = vector.load %arg15[%c1_108, %126, %c0_109] : memref<3x130x128xf32, #tpu.memory_space<vmem>>, vector<1x1x128xf32>
      %128 = vector.shape_cast %127 : vector<1x1x128xf32> to vector<1x128xf32>
      %c0_i32_110 = arith.constant 0 : i32
      %129 = arith.addi %96, %c0_i32_110 : i32
      %c2 = arith.constant 2 : index
      %130 = arith.index_cast %129 : i32 to index
      %c0_111 = arith.constant 0 : index
      %131 = vector.load %arg15[%c2, %130, %c0_111] : memref<3x130x128xf32, #tpu.memory_space<vmem>>, vector<1x1x128xf32>
      %132 = vector.shape_cast %131 : vector<1x1x128xf32> to vector<1x128xf32>
      %c1_i32_112 = arith.constant 1 : i32
      %133 = arith.addi %96, %c1_i32_112 : i32
      %c2_113 = arith.constant 2 : index
      %134 = arith.index_cast %133 : i32 to index
      %c0_114 = arith.constant 0 : index
      %135 = vector.load %arg15[%c2_113, %134, %c0_114] : memref<3x130x128xf32, #tpu.memory_space<vmem>>, vector<1x1x128xf32>
      %136 = vector.shape_cast %135 : vector<1x1x128xf32> to vector<1x128xf32>
      %c2_i32_115 = arith.constant 2 : i32
      %137 = arith.addi %96, %c2_i32_115 : i32
      %c2_116 = arith.constant 2 : index
      %138 = arith.index_cast %137 : i32 to index
      %c0_117 = arith.constant 0 : index
      %139 = vector.load %arg15[%c2_116, %138, %c0_117] : memref<3x130x128xf32, #tpu.memory_space<vmem>>, vector<1x1x128xf32>
      %140 = vector.shape_cast %139 : vector<1x1x128xf32> to vector<1x128xf32>
      %c3_i32_118 = arith.constant 3 : i32
      %141 = arith.addi %96, %c3_i32_118 : i32
      %c2_119 = arith.constant 2 : index
      %142 = arith.index_cast %141 : i32 to index
      %c0_120 = arith.constant 0 : index
      %143 = vector.load %arg15[%c2_119, %142, %c0_120] : memref<3x130x128xf32, #tpu.memory_space<vmem>>, vector<1x1x128xf32>
      %144 = vector.shape_cast %143 : vector<1x1x128xf32> to vector<1x128xf32>
      %c0_121 = arith.constant 0 : index
      %c0_122 = arith.constant 0 : index
      %145 = vector.load %arg3[%c0_121, %c0_122] : memref<32x32xf32, #tpu.memory_space<vmem>>, vector<32x32xf32>
      %cst_123 = arith.constant 0.000000e+00 : f32
      %146 = vector.broadcast %cst_123 : f32 to vector<1x1xf32>
      %147 = vector.extract_strided_slice %100 {offsets = [0, 0], sizes = [1, 127], strides = [1, 1]} : vector<1x128xf32> to vector<1x127xf32>
      %148 = tpu.concatenate %146, %147 in 1 : vector<1x1xf32>, vector<1x127xf32> -> vector<1x128xf32>
      %149 = vector.extract_strided_slice %100 {offsets = [0, 1], sizes = [1, 127], strides = [1, 1]} : vector<1x128xf32> to vector<1x127xf32>
      %150 = tpu.concatenate %149, %146 in 1 : vector<1x127xf32>, vector<1x1xf32> -> vector<1x128xf32>
      %151 = vector.extract_strided_slice %104 {offsets = [0, 0], sizes = [1, 127], strides = [1, 1]} : vector<1x128xf32> to vector<1x127xf32>
      %152 = tpu.concatenate %146, %151 in 1 : vector<1x1xf32>, vector<1x127xf32> -> vector<1x128xf32>
      %153 = vector.extract_strided_slice %104 {offsets = [0, 1], sizes = [1, 127], strides = [1, 1]} : vector<1x128xf32> to vector<1x127xf32>
      %154 = tpu.concatenate %153, %146 in 1 : vector<1x127xf32>, vector<1x1xf32> -> vector<1x128xf32>
      %155 = vector.extract_strided_slice %108 {offsets = [0, 0], sizes = [1, 127], strides = [1, 1]} : vector<1x128xf32> to vector<1x127xf32>
      %156 = tpu.concatenate %146, %155 in 1 : vector<1x1xf32>, vector<1x127xf32> -> vector<1x128xf32>
      %157 = vector.extract_strided_slice %108 {offsets = [0, 1], sizes = [1, 127], strides = [1, 1]} : vector<1x128xf32> to vector<1x127xf32>
      %158 = tpu.concatenate %157, %146 in 1 : vector<1x127xf32>, vector<1x1xf32> -> vector<1x128xf32>
      %159 = vector.extract_strided_slice %116 {offsets = [0, 0], sizes = [1, 127], strides = [1, 1]} : vector<1x128xf32> to vector<1x127xf32>
      %160 = tpu.concatenate %146, %159 in 1 : vector<1x1xf32>, vector<1x127xf32> -> vector<1x128xf32>
      %161 = vector.extract_strided_slice %116 {offsets = [0, 1], sizes = [1, 127], strides = [1, 1]} : vector<1x128xf32> to vector<1x127xf32>
      %162 = tpu.concatenate %161, %146 in 1 : vector<1x127xf32>, vector<1x1xf32> -> vector<1x128xf32>
      %163 = vector.extract_strided_slice %120 {offsets = [0, 0], sizes = [1, 127], strides = [1, 1]} : vector<1x128xf32> to vector<1x127xf32>
      %164 = tpu.concatenate %146, %163 in 1 : vector<1x1xf32>, vector<1x127xf32> -> vector<1x128xf32>
      %165 = vector.extract_strided_slice %120 {offsets = [0, 1], sizes = [1, 127], strides = [1, 1]} : vector<1x128xf32> to vector<1x127xf32>
      %166 = tpu.concatenate %165, %146 in 1 : vector<1x127xf32>, vector<1x1xf32> -> vector<1x128xf32>
      %167 = vector.extract_strided_slice %124 {offsets = [0, 0], sizes = [1, 127], strides = [1, 1]} : vector<1x128xf32> to vector<1x127xf32>
      %168 = tpu.concatenate %146, %167 in 1 : vector<1x1xf32>, vector<1x127xf32> -> vector<1x128xf32>
      %169 = vector.extract_strided_slice %124 {offsets = [0, 1], sizes = [1, 127], strides = [1, 1]} : vector<1x128xf32> to vector<1x127xf32>
      %170 = tpu.concatenate %169, %146 in 1 : vector<1x127xf32>, vector<1x1xf32> -> vector<1x128xf32>
      %171 = vector.extract_strided_slice %132 {offsets = [0, 0], sizes = [1, 127], strides = [1, 1]} : vector<1x128xf32> to vector<1x127xf32>
      %172 = tpu.concatenate %146, %171 in 1 : vector<1x1xf32>, vector<1x127xf32> -> vector<1x128xf32>
      %173 = vector.extract_strided_slice %132 {offsets = [0, 1], sizes = [1, 127], strides = [1, 1]} : vector<1x128xf32> to vector<1x127xf32>
      %174 = tpu.concatenate %173, %146 in 1 : vector<1x127xf32>, vector<1x1xf32> -> vector<1x128xf32>
      %175 = vector.extract_strided_slice %136 {offsets = [0, 0], sizes = [1, 127], strides = [1, 1]} : vector<1x128xf32> to vector<1x127xf32>
      %176 = tpu.concatenate %146, %175 in 1 : vector<1x1xf32>, vector<1x127xf32> -> vector<1x128xf32>
      %177 = vector.extract_strided_slice %136 {offsets = [0, 1], sizes = [1, 127], strides = [1, 1]} : vector<1x128xf32> to vector<1x127xf32>
      %178 = tpu.concatenate %177, %146 in 1 : vector<1x127xf32>, vector<1x1xf32> -> vector<1x128xf32>
      %179 = vector.extract_strided_slice %140 {offsets = [0, 0], sizes = [1, 127], strides = [1, 1]} : vector<1x128xf32> to vector<1x127xf32>
      %180 = tpu.concatenate %146, %179 in 1 : vector<1x1xf32>, vector<1x127xf32> -> vector<1x128xf32>
      %181 = vector.extract_strided_slice %140 {offsets = [0, 1], sizes = [1, 127], strides = [1, 1]} : vector<1x128xf32> to vector<1x127xf32>
      %182 = tpu.concatenate %181, %146 in 1 : vector<1x127xf32>, vector<1x1xf32> -> vector<1x128xf32>
      %cst_124 = arith.constant 0.000000e+00 : f32
      %183 = vector.broadcast %cst_124 : f32 to vector<5x128xf32>
      %184 = tpu.concatenate %148, %100, %150, %152, %104, %154, %156, %108, %158, %160, %116, %162, %164, %120, %166, %168 in 0 : vector<1x128xf32>, vector<1x128xf32>, vector<1x128xf32>, vector<1x128xf32>, vector<1x128xf32>, vector<1x128xf32>, vector<1x128xf32>, vector<1x128xf32>, vector<1x128xf32>, vector<1x128xf32>, vector<1x128xf32>, vector<1x128xf32>, vector<1x128xf32>, vector<1x128xf32>, vector<1x128xf32>, vector<1x128xf32> -> vector<16x128xf32>
      %185 = tpu.concatenate %124, %170, %172, %132, %174, %176, %136, %178, %180, %140, %182, %183 in 0 : vector<1x128xf32>, vector<1x128xf32>, vector<1x128xf32>, vector<1x128xf32>, vector<1x128xf32>, vector<1x128xf32>, vector<1x128xf32>, vector<1x128xf32>, vector<1x128xf32>, vector<1x128xf32>, vector<1x128xf32>, vector<5x128xf32> -> vector<16x128xf32>
      %186 = tpu.concatenate %184, %185 in 0 : vector<16x128xf32>, vector<16x128xf32> -> vector<32x128xf32>
      %cst_125 = arith.constant dense<0.000000e+00> : vector<32x128xf32>
      %187 = tpu.matmul %145, %186, %cst_125 {dimension_numbers = #tpu.dot_dimension_numbers<[1], [0], [0], [1], [0, 0, 1, 1], [], []>} : vector<32x32xf32>, vector<32x128xf32>, vector<32x128xf32> -> vector<32x128xf32>
      %c0_126 = arith.constant 0 : index
      %c0_127 = arith.constant 0 : index
      %188 = vector.load %arg3[%c0_126, %c0_127] : memref<32x32xf32, #tpu.memory_space<vmem>>, vector<32x32xf32>
      %cst_128 = arith.constant 0.000000e+00 : f32
      %189 = vector.broadcast %cst_128 : f32 to vector<1x1xf32>
      %190 = vector.extract_strided_slice %104 {offsets = [0, 0], sizes = [1, 127], strides = [1, 1]} : vector<1x128xf32> to vector<1x127xf32>
      %191 = tpu.concatenate %189, %190 in 1 : vector<1x1xf32>, vector<1x127xf32> -> vector<1x128xf32>
      %192 = vector.extract_strided_slice %104 {offsets = [0, 1], sizes = [1, 127], strides = [1, 1]} : vector<1x128xf32> to vector<1x127xf32>
      %193 = tpu.concatenate %192, %189 in 1 : vector<1x127xf32>, vector<1x1xf32> -> vector<1x128xf32>
      %194 = vector.extract_strided_slice %108 {offsets = [0, 0], sizes = [1, 127], strides = [1, 1]} : vector<1x128xf32> to vector<1x127xf32>
      %195 = tpu.concatenate %189, %194 in 1 : vector<1x1xf32>, vector<1x127xf32> -> vector<1x128xf32>
      %196 = vector.extract_strided_slice %108 {offsets = [0, 1], sizes = [1, 127], strides = [1, 1]} : vector<1x128xf32> to vector<1x127xf32>
      %197 = tpu.concatenate %196, %189 in 1 : vector<1x127xf32>, vector<1x1xf32> -> vector<1x128xf32>
      %198 = vector.extract_strided_slice %112 {offsets = [0, 0], sizes = [1, 127], strides = [1, 1]} : vector<1x128xf32> to vector<1x127xf32>
      %199 = tpu.concatenate %189, %198 in 1 : vector<1x1xf32>, vector<1x127xf32> -> vector<1x128xf32>
      %200 = vector.extract_strided_slice %112 {offsets = [0, 1], sizes = [1, 127], strides = [1, 1]} : vector<1x128xf32> to vector<1x127xf32>
      %201 = tpu.concatenate %200, %189 in 1 : vector<1x127xf32>, vector<1x1xf32> -> vector<1x128xf32>
      %202 = vector.extract_strided_slice %120 {offsets = [0, 0], sizes = [1, 127], strides = [1, 1]} : vector<1x128xf32> to vector<1x127xf32>
      %203 = tpu.concatenate %189, %202 in 1 : vector<1x1xf32>, vector<1x127xf32> -> vector<1x128xf32>
      %204 = vector.extract_strided_slice %120 {offsets = [0, 1], sizes = [1, 127], strides = [1, 1]} : vector<1x128xf32> to vector<1x127xf32>
      %205 = tpu.concatenate %204, %189 in 1 : vector<1x127xf32>, vector<1x1xf32> -> vector<1x128xf32>
      %206 = vector.extract_strided_slice %124 {offsets = [0, 0], sizes = [1, 127], strides = [1, 1]} : vector<1x128xf32> to vector<1x127xf32>
      %207 = tpu.concatenate %189, %206 in 1 : vector<1x1xf32>, vector<1x127xf32> -> vector<1x128xf32>
      %208 = vector.extract_strided_slice %124 {offsets = [0, 1], sizes = [1, 127], strides = [1, 1]} : vector<1x128xf32> to vector<1x127xf32>
      %209 = tpu.concatenate %208, %189 in 1 : vector<1x127xf32>, vector<1x1xf32> -> vector<1x128xf32>
      %210 = vector.extract_strided_slice %128 {offsets = [0, 0], sizes = [1, 127], strides = [1, 1]} : vector<1x128xf32> to vector<1x127xf32>
      %211 = tpu.concatenate %189, %210 in 1 : vector<1x1xf32>, vector<1x127xf32> -> vector<1x128xf32>
      %212 = vector.extract_strided_slice %128 {offsets = [0, 1], sizes = [1, 127], strides = [1, 1]} : vector<1x128xf32> to vector<1x127xf32>
      %213 = tpu.concatenate %212, %189 in 1 : vector<1x127xf32>, vector<1x1xf32> -> vector<1x128xf32>
      %214 = vector.extract_strided_slice %136 {offsets = [0, 0], sizes = [1, 127], strides = [1, 1]} : vector<1x128xf32> to vector<1x127xf32>
      %215 = tpu.concatenate %189, %214 in 1 : vector<1x1xf32>, vector<1x127xf32> -> vector<1x128xf32>
      %216 = vector.extract_strided_slice %136 {offsets = [0, 1], sizes = [1, 127], strides = [1, 1]} : vector<1x128xf32> to vector<1x127xf32>
      %217 = tpu.concatenate %216, %189 in 1 : vector<1x127xf32>, vector<1x1xf32> -> vector<1x128xf32>
      %218 = vector.extract_strided_slice %140 {offsets = [0, 0], sizes = [1, 127], strides = [1, 1]} : vector<1x128xf32> to vector<1x127xf32>
      %219 = tpu.concatenate %189, %218 in 1 : vector<1x1xf32>, vector<1x127xf32> -> vector<1x128xf32>
      %220 = vector.extract_strided_slice %140 {offsets = [0, 1], sizes = [1, 127], strides = [1, 1]} : vector<1x128xf32> to vector<1x127xf32>
      %221 = tpu.concatenate %220, %189 in 1 : vector<1x127xf32>, vector<1x1xf32> -> vector<1x128xf32>
      %222 = vector.extract_strided_slice %144 {offsets = [0, 0], sizes = [1, 127], strides = [1, 1]} : vector<1x128xf32> to vector<1x127xf32>
      %223 = tpu.concatenate %189, %222 in 1 : vector<1x1xf32>, vector<1x127xf32> -> vector<1x128xf32>
      %224 = vector.extract_strided_slice %144 {offsets = [0, 1], sizes = [1, 127], strides = [1, 1]} : vector<1x128xf32> to vector<1x127xf32>
      %225 = tpu.concatenate %224, %189 in 1 : vector<1x127xf32>, vector<1x1xf32> -> vector<1x128xf32>
      %cst_129 = arith.constant 0.000000e+00 : f32
      %226 = vector.broadcast %cst_129 : f32 to vector<5x128xf32>
      %227 = tpu.concatenate %191, %104, %193, %195, %108, %197, %199, %112, %201, %203, %120, %205, %207, %124, %209, %211 in 0 : vector<1x128xf32>, vector<1x128xf32>, vector<1x128xf32>, vector<1x128xf32>, vector<1x128xf32>, vector<1x128xf32>, vector<1x128xf32>, vector<1x128xf32>, vector<1x128xf32>, vector<1x128xf32>, vector<1x128xf32>, vector<1x128xf32>, vector<1x128xf32>, vector<1x128xf32>, vector<1x128xf32>, vector<1x128xf32> -> vector<16x128xf32>
      %228 = tpu.concatenate %128, %213, %215, %136, %217, %219, %140, %221, %223, %144, %225, %226 in 0 : vector<1x128xf32>, vector<1x128xf32>, vector<1x128xf32>, vector<1x128xf32>, vector<1x128xf32>, vector<1x128xf32>, vector<1x128xf32>, vector<1x128xf32>, vector<1x128xf32>, vector<1x128xf32>, vector<1x128xf32>, vector<5x128xf32> -> vector<16x128xf32>
      %229 = tpu.concatenate %227, %228 in 0 : vector<16x128xf32>, vector<16x128xf32> -> vector<32x128xf32>
      %cst_130 = arith.constant dense<0.000000e+00> : vector<32x128xf32>
      %230 = tpu.matmul %188, %229, %cst_130 {dimension_numbers = #tpu.dot_dimension_numbers<[1], [0], [0], [1], [0, 0, 1, 1], [], []>} : vector<32x32xf32>, vector<32x128xf32>, vector<32x128xf32> -> vector<32x128xf32>
      %231 = arith.maximumf %187, %230 : vector<32x128xf32>
      %c0_131 = arith.constant 0 : index
      %c0_132 = arith.constant 0 : index
      %232 = vector.load %arg4[%c0_131, %c0_132] : memref<32x1xf32, #tpu.memory_space<vmem>>, vector<32x1xf32>
      %233 = vector.broadcast %232 : vector<32x1xf32> to vector<32x128xf32>
      %234 = arith.addf %231, %233 : vector<32x128xf32>
      %cst_133 = arith.constant 0.000000e+00 : f32
      %235 = vector.broadcast %cst_133 : f32 to vector<32x128xf32>
      %236 = arith.maximumf %234, %235 : vector<32x128xf32>
      %cst_134 = arith.constant dense<0.000000e+00> : vector<128x32xf32>
      %237 = tpu.matmul %29, %236, %cst_134 {dimension_numbers = #tpu.dot_dimension_numbers<[1], [1], [0], [0], [0, 0, 1, 0], [], []>} : vector<128x128xf32>, vector<32x128xf32>, vector<128x32xf32> -> vector<128x32xf32>
      %c0_135 = arith.constant 0 : index
      %c0_136 = arith.constant 0 : index
      %238 = vector.load %arg16[%c0_135, %c0_136] : memref<128x32xf32, #tpu.memory_space<vmem>>, vector<128x32xf32>
      tpu.vector_store %arg16[%c0_135, %c0_136], %237 {strides = array<i32>} : memref<128x32xf32, #tpu.memory_space<vmem>>, vector<128x32xf32>,
      %c0_137 = arith.constant 0 : index
      %c0_138 = arith.constant 0 : index
      %239 = tpu.strided_load %arg16[%c0_137, %c0_138] {strides = array<i32: 2, 1>} : memref<128x32xf32, #tpu.memory_space<vmem>>, vector<64x32xf32>
      %c1_139 = arith.constant 1 : index
      %c0_140 = arith.constant 0 : index
      %240 = tpu.strided_load %arg16[%c1_139, %c0_140] {strides = array<i32: 2, 1>} : memref<128x32xf32, #tpu.memory_space<vmem>>, vector<64x32xf32>
      %241 = arith.maximumf %239, %240 : vector<64x32xf32>
      %242 = vector.shape_cast %241 : vector<64x32xf32> to vector<1x64x32xf32>
      %c1_i32_141 = arith.constant 1 : i32
      %243 = arith.addi %c1_i32_141, %arg22 : i32
      %244 = arith.index_cast %243 : i32 to index
      %c1_142 = arith.constant 1 : index
      %c0_143 = arith.constant 0 : index
      %245 = vector.load %arg17[%244, %c1_142, %c0_143] : memref<66x66x32xf32, #tpu.memory_space<vmem>>, vector<1x64x32xf32>
      tpu.vector_store %arg17[%244, %c1_142, %c0_143], %242 {strides = array<i32>} : memref<66x66x32xf32, #tpu.memory_space<vmem>>, vector<1x64x32xf32>,
    }
    %c64_i32_42 = arith.constant 64 : i32
    %c0_i32_43 = arith.constant 0 : i32
    %c8_i32 = arith.constant 8 : i32
    %31 = arith.addi %c0_i32_43, %c8_i32 : i32
    %c1_i32_44 = arith.constant 1 : i32
    scf.for %arg22 = %c0_i32_43 to %31 step %c1_i32_44  : i32 {
      %cst_87 = arith.constant 0.000000e+00 : f32
      %96 = vector.broadcast %cst_87 : f32 to vector<512x64xf32>
      %c8_i32_88 = arith.constant 8 : i32
      %97 = arith.muli %arg22, %c8_i32_88 : i32
      %c0_i32_89 = arith.constant 0 : i32
      %98 = arith.addi %97, %c0_i32_89 : i32
      %99 = arith.index_cast %98 : i32 to index
      %c0_90 = arith.constant 0 : index
      %c0_91 = arith.constant 0 : index
      %100 = vector.load %arg17[%99, %c0_90, %c0_91] : memref<66x66x32xf32, #tpu.memory_space<vmem>>, vector<8x64x32xf32>
      %101 = vector.shape_cast %100 : vector<8x64x32xf32> to vector<512x32xf32>
      %c0_92 = arith.constant 0 : index
      %c0_93 = arith.constant 0 : index
      %c0_94 = arith.constant 0 : index
      %102 = vector.load %arg5[%c0_92, %c0_93, %c0_94] : memref<9x32x64xf32, #tpu.memory_space<vmem>>, vector<1x32x64xf32>
      %103 = vector.shape_cast %102 : vector<1x32x64xf32> to vector<32x64xf32>
      %cst_95 = arith.constant dense<0.000000e+00> : vector<512x64xf32>
      %104 = tpu.matmul %101, %103, %cst_95 {dimension_numbers = #tpu.dot_dimension_numbers<[1], [0], [0], [1], [0, 0, 1, 1], [], []>} : vector<512x32xf32>, vector<32x64xf32>, vector<512x64xf32> -> vector<512x64xf32>
      %105 = arith.addf %96, %104 : vector<512x64xf32>
      %c8_i32_96 = arith.constant 8 : i32
      %106 = arith.muli %arg22, %c8_i32_96 : i32
      %c0_i32_97 = arith.constant 0 : i32
      %107 = arith.addi %106, %c0_i32_97 : i32
      %108 = arith.index_cast %107 : i32 to index
      %c1_98 = arith.constant 1 : index
      %c0_99 = arith.constant 0 : index
      %109 = vector.load %arg17[%108, %c1_98, %c0_99] : memref<66x66x32xf32, #tpu.memory_space<vmem>>, vector<8x64x32xf32>
      %110 = vector.shape_cast %109 : vector<8x64x32xf32> to vector<512x32xf32>
      %c1_100 = arith.constant 1 : index
      %c0_101 = arith.constant 0 : index
      %c0_102 = arith.constant 0 : index
      %111 = vector.load %arg5[%c1_100, %c0_101, %c0_102] : memref<9x32x64xf32, #tpu.memory_space<vmem>>, vector<1x32x64xf32>
      %112 = vector.shape_cast %111 : vector<1x32x64xf32> to vector<32x64xf32>
      %cst_103 = arith.constant dense<0.000000e+00> : vector<512x64xf32>
      %113 = tpu.matmul %110, %112, %cst_103 {dimension_numbers = #tpu.dot_dimension_numbers<[1], [0], [0], [1], [0, 0, 1, 1], [], []>} : vector<512x32xf32>, vector<32x64xf32>, vector<512x64xf32> -> vector<512x64xf32>
      %114 = arith.addf %105, %113 : vector<512x64xf32>
      %c8_i32_104 = arith.constant 8 : i32
      %115 = arith.muli %arg22, %c8_i32_104 : i32
      %c0_i32_105 = arith.constant 0 : i32
      %116 = arith.addi %115, %c0_i32_105 : i32
      %117 = arith.index_cast %116 : i32 to index
      %c2 = arith.constant 2 : index
      %c0_106 = arith.constant 0 : index
      %118 = vector.load %arg17[%117, %c2, %c0_106] : memref<66x66x32xf32, #tpu.memory_space<vmem>>, vector<8x64x32xf32>
      %119 = vector.shape_cast %118 : vector<8x64x32xf32> to vector<512x32xf32>
      %c2_107 = arith.constant 2 : index
      %c0_108 = arith.constant 0 : index
      %c0_109 = arith.constant 0 : index
      %120 = vector.load %arg5[%c2_107, %c0_108, %c0_109] : memref<9x32x64xf32, #tpu.memory_space<vmem>>, vector<1x32x64xf32>
      %121 = vector.shape_cast %120 : vector<1x32x64xf32> to vector<32x64xf32>
      %cst_110 = arith.constant dense<0.000000e+00> : vector<512x64xf32>
      %122 = tpu.matmul %119, %121, %cst_110 {dimension_numbers = #tpu.dot_dimension_numbers<[1], [0], [0], [1], [0, 0, 1, 1], [], []>} : vector<512x32xf32>, vector<32x64xf32>, vector<512x64xf32> -> vector<512x64xf32>
      %123 = arith.addf %114, %122 : vector<512x64xf32>
      %c8_i32_111 = arith.constant 8 : i32
      %124 = arith.muli %arg22, %c8_i32_111 : i32
      %c1_i32_112 = arith.constant 1 : i32
      %125 = arith.addi %124, %c1_i32_112 : i32
      %126 = arith.index_cast %125 : i32 to index
      %c0_113 = arith.constant 0 : index
      %c0_114 = arith.constant 0 : index
      %127 = vector.load %arg17[%126, %c0_113, %c0_114] : memref<66x66x32xf32, #tpu.memory_space<vmem>>, vector<8x64x32xf32>
      %128 = vector.shape_cast %127 : vector<8x64x32xf32> to vector<512x32xf32>
      %c3 = arith.constant 3 : index
      %c0_115 = arith.constant 0 : index
      %c0_116 = arith.constant 0 : index
      %129 = vector.load %arg5[%c3, %c0_115, %c0_116] : memref<9x32x64xf32, #tpu.memory_space<vmem>>, vector<1x32x64xf32>
      %130 = vector.shape_cast %129 : vector<1x32x64xf32> to vector<32x64xf32>
      %cst_117 = arith.constant dense<0.000000e+00> : vector<512x64xf32>
      %131 = tpu.matmul %128, %130, %cst_117 {dimension_numbers = #tpu.dot_dimension_numbers<[1], [0], [0], [1], [0, 0, 1, 1], [], []>} : vector<512x32xf32>, vector<32x64xf32>, vector<512x64xf32> -> vector<512x64xf32>
      %132 = arith.addf %123, %131 : vector<512x64xf32>
      %c8_i32_118 = arith.constant 8 : i32
      %133 = arith.muli %arg22, %c8_i32_118 : i32
      %c1_i32_119 = arith.constant 1 : i32
      %134 = arith.addi %133, %c1_i32_119 : i32
      %135 = arith.index_cast %134 : i32 to index
      %c1_120 = arith.constant 1 : index
      %c0_121 = arith.constant 0 : index
      %136 = vector.load %arg17[%135, %c1_120, %c0_121] : memref<66x66x32xf32, #tpu.memory_space<vmem>>, vector<8x64x32xf32>
      %137 = vector.shape_cast %136 : vector<8x64x32xf32> to vector<512x32xf32>
      %c4 = arith.constant 4 : index
      %c0_122 = arith.constant 0 : index
      %c0_123 = arith.constant 0 : index
      %138 = vector.load %arg5[%c4, %c0_122, %c0_123] : memref<9x32x64xf32, #tpu.memory_space<vmem>>, vector<1x32x64xf32>
      %139 = vector.shape_cast %138 : vector<1x32x64xf32> to vector<32x64xf32>
      %cst_124 = arith.constant dense<0.000000e+00> : vector<512x64xf32>
      %140 = tpu.matmul %137, %139, %cst_124 {dimension_numbers = #tpu.dot_dimension_numbers<[1], [0], [0], [1], [0, 0, 1, 1], [], []>} : vector<512x32xf32>, vector<32x64xf32>, vector<512x64xf32> -> vector<512x64xf32>
      %141 = arith.addf %132, %140 : vector<512x64xf32>
      %c8_i32_125 = arith.constant 8 : i32
      %142 = arith.muli %arg22, %c8_i32_125 : i32
      %c1_i32_126 = arith.constant 1 : i32
      %143 = arith.addi %142, %c1_i32_126 : i32
      %144 = arith.index_cast %143 : i32 to index
      %c2_127 = arith.constant 2 : index
      %c0_128 = arith.constant 0 : index
      %145 = vector.load %arg17[%144, %c2_127, %c0_128] : memref<66x66x32xf32, #tpu.memory_space<vmem>>, vector<8x64x32xf32>
      %146 = vector.shape_cast %145 : vector<8x64x32xf32> to vector<512x32xf32>
      %c5 = arith.constant 5 : index
      %c0_129 = arith.constant 0 : index
      %c0_130 = arith.constant 0 : index
      %147 = vector.load %arg5[%c5, %c0_129, %c0_130] : memref<9x32x64xf32, #tpu.memory_space<vmem>>, vector<1x32x64xf32>
      %148 = vector.shape_cast %147 : vector<1x32x64xf32> to vector<32x64xf32>
      %cst_131 = arith.constant dense<0.000000e+00> : vector<512x64xf32>
      %149 = tpu.matmul %146, %148, %cst_131 {dimension_numbers = #tpu.dot_dimension_numbers<[1], [0], [0], [1], [0, 0, 1, 1], [], []>} : vector<512x32xf32>, vector<32x64xf32>, vector<512x64xf32> -> vector<512x64xf32>
      %150 = arith.addf %141, %149 : vector<512x64xf32>
      %c8_i32_132 = arith.constant 8 : i32
      %151 = arith.muli %arg22, %c8_i32_132 : i32
      %c2_i32 = arith.constant 2 : i32
      %152 = arith.addi %151, %c2_i32 : i32
      %153 = arith.index_cast %152 : i32 to index
      %c0_133 = arith.constant 0 : index
      %c0_134 = arith.constant 0 : index
      %154 = vector.load %arg17[%153, %c0_133, %c0_134] : memref<66x66x32xf32, #tpu.memory_space<vmem>>, vector<8x64x32xf32>
      %155 = vector.shape_cast %154 : vector<8x64x32xf32> to vector<512x32xf32>
      %c6 = arith.constant 6 : index
      %c0_135 = arith.constant 0 : index
      %c0_136 = arith.constant 0 : index
      %156 = vector.load %arg5[%c6, %c0_135, %c0_136] : memref<9x32x64xf32, #tpu.memory_space<vmem>>, vector<1x32x64xf32>
      %157 = vector.shape_cast %156 : vector<1x32x64xf32> to vector<32x64xf32>
      %cst_137 = arith.constant dense<0.000000e+00> : vector<512x64xf32>
      %158 = tpu.matmul %155, %157, %cst_137 {dimension_numbers = #tpu.dot_dimension_numbers<[1], [0], [0], [1], [0, 0, 1, 1], [], []>} : vector<512x32xf32>, vector<32x64xf32>, vector<512x64xf32> -> vector<512x64xf32>
      %159 = arith.addf %150, %158 : vector<512x64xf32>
      %c8_i32_138 = arith.constant 8 : i32
      %160 = arith.muli %arg22, %c8_i32_138 : i32
      %c2_i32_139 = arith.constant 2 : i32
      %161 = arith.addi %160, %c2_i32_139 : i32
      %162 = arith.index_cast %161 : i32 to index
      %c1_140 = arith.constant 1 : index
      %c0_141 = arith.constant 0 : index
      %163 = vector.load %arg17[%162, %c1_140, %c0_141] : memref<66x66x32xf32, #tpu.memory_space<vmem>>, vector<8x64x32xf32>
      %164 = vector.shape_cast %163 : vector<8x64x32xf32> to vector<512x32xf32>
      %c7 = arith.constant 7 : index
      %c0_142 = arith.constant 0 : index
      %c0_143 = arith.constant 0 : index
      %165 = vector.load %arg5[%c7, %c0_142, %c0_143] : memref<9x32x64xf32, #tpu.memory_space<vmem>>, vector<1x32x64xf32>
      %166 = vector.shape_cast %165 : vector<1x32x64xf32> to vector<32x64xf32>
      %cst_144 = arith.constant dense<0.000000e+00> : vector<512x64xf32>
      %167 = tpu.matmul %164, %166, %cst_144 {dimension_numbers = #tpu.dot_dimension_numbers<[1], [0], [0], [1], [0, 0, 1, 1], [], []>} : vector<512x32xf32>, vector<32x64xf32>, vector<512x64xf32> -> vector<512x64xf32>
      %168 = arith.addf %159, %167 : vector<512x64xf32>
      %c8_i32_145 = arith.constant 8 : i32
      %169 = arith.muli %arg22, %c8_i32_145 : i32
      %c2_i32_146 = arith.constant 2 : i32
      %170 = arith.addi %169, %c2_i32_146 : i32
      %171 = arith.index_cast %170 : i32 to index
      %c2_147 = arith.constant 2 : index
      %c0_148 = arith.constant 0 : index
      %172 = vector.load %arg17[%171, %c2_147, %c0_148] : memref<66x66x32xf32, #tpu.memory_space<vmem>>, vector<8x64x32xf32>
      %173 = vector.shape_cast %172 : vector<8x64x32xf32> to vector<512x32xf32>
      %c8 = arith.constant 8 : index
      %c0_149 = arith.constant 0 : index
      %c0_150 = arith.constant 0 : index
      %174 = vector.load %arg5[%c8, %c0_149, %c0_150] : memref<9x32x64xf32, #tpu.memory_space<vmem>>, vector<1x32x64xf32>
      %175 = vector.shape_cast %174 : vector<1x32x64xf32> to vector<32x64xf32>
      %cst_151 = arith.constant dense<0.000000e+00> : vector<512x64xf32>
      %176 = tpu.matmul %173, %175, %cst_151 {dimension_numbers = #tpu.dot_dimension_numbers<[1], [0], [0], [1], [0, 0, 1, 1], [], []>} : vector<512x32xf32>, vector<32x64xf32>, vector<512x64xf32> -> vector<512x64xf32>
      %177 = arith.addf %168, %176 : vector<512x64xf32>
      %c0_152 = arith.constant 0 : index
      %c0_153 = arith.constant 0 : index
      %178 = vector.load %arg6[%c0_152, %c0_153] : memref<1x64xf32, #tpu.memory_space<vmem>>, vector<1x64xf32>
      %179 = vector.broadcast %178 : vector<1x64xf32> to vector<512x64xf32>
      %180 = arith.addf %177, %179 : vector<512x64xf32>
      %cst_154 = arith.constant 0.000000e+00 : f32
      %181 = vector.broadcast %cst_154 : f32 to vector<512x64xf32>
      %182 = arith.maximumf %180, %181 : vector<512x64xf32>
      %183 = vector.shape_cast %182 : vector<512x64xf32> to vector<4x2x64x64xf32>
      %184 = vector.extract_strided_slice %183 {offsets = [0, 0, 0, 0], sizes = [4, 1, 64, 64], strides = [1, 1, 1, 1]} : vector<4x2x64x64xf32> to vector<4x1x64x64xf32>
      %185 = vector.shape_cast %184 : vector<4x1x64x64xf32> to vector<4x64x64xf32>
      %186 = vector.extract_strided_slice %183 {offsets = [0, 1, 0, 0], sizes = [4, 1, 64, 64], strides = [1, 1, 1, 1]} : vector<4x2x64x64xf32> to vector<4x1x64x64xf32>
      %187 = vector.shape_cast %186 : vector<4x1x64x64xf32> to vector<4x64x64xf32>
      %188 = arith.maximumf %185, %187 : vector<4x64x64xf32>
      %c0_155 = arith.constant 0 : index
      %c0_156 = arith.constant 0 : index
      %c0_157 = arith.constant 0 : index
      %189 = vector.load %arg18[%c0_155, %c0_156, %c0_157] : memref<4x64x64xf32, #tpu.memory_space<vmem>>, vector<4x64x64xf32>
      tpu.vector_store %arg18[%c0_155, %c0_156, %c0_157], %188 {strides = array<i32>} : memref<4x64x64xf32, #tpu.memory_space<vmem>>, vector<4x64x64xf32>,
      %c0_158 = arith.constant 0 : index
      %c0_159 = arith.constant 0 : index
      %c0_160 = arith.constant 0 : index
      %190 = tpu.strided_load %arg18[%c0_158, %c0_159, %c0_160] {strides = array<i32: 1, 2, 1>} : memref<4x64x64xf32, #tpu.memory_space<vmem>>, vector<4x32x64xf32>
      %c0_161 = arith.constant 0 : index
      %c1_162 = arith.constant 1 : index
      %c0_163 = arith.constant 0 : index
      %191 = tpu.strided_load %arg18[%c0_161, %c1_162, %c0_163] {strides = array<i32: 1, 2, 1>} : memref<4x64x64xf32, #tpu.memory_space<vmem>>, vector<4x32x64xf32>
      %192 = arith.maximumf %190, %191 : vector<4x32x64xf32>
      %c4_i32_164 = arith.constant 4 : i32
      %193 = arith.muli %arg22, %c4_i32_164 : i32
      %c1_i32_165 = arith.constant 1 : i32
      %194 = arith.addi %c1_i32_165, %193 : i32
      %195 = arith.index_cast %194 : i32 to index
      %c1_166 = arith.constant 1 : index
      %c0_167 = arith.constant 0 : index
      %196 = vector.load %arg19[%195, %c1_166, %c0_167] : memref<34x34x64xf32, #tpu.memory_space<vmem>>, vector<4x32x64xf32>
      tpu.vector_store %arg19[%195, %c1_166, %c0_167], %192 {strides = array<i32>} : memref<34x34x64xf32, #tpu.memory_space<vmem>>, vector<4x32x64xf32>,
    }
    %c8_i32_45 = arith.constant 8 : i32
    %c0_i32_46 = arith.constant 0 : i32
    %c4_i32 = arith.constant 4 : i32
    %32 = arith.addi %c0_i32_46, %c4_i32 : i32
    %c1_i32_47 = arith.constant 1 : i32
    scf.for %arg22 = %c0_i32_46 to %32 step %c1_i32_47  : i32 {
      %cst_87 = arith.constant 0.000000e+00 : f32
      %96 = vector.broadcast %cst_87 : f32 to vector<256x128xf32>
      %c8_i32_88 = arith.constant 8 : i32
      %97 = arith.muli %arg22, %c8_i32_88 : i32
      %c0_i32_89 = arith.constant 0 : i32
      %98 = arith.addi %97, %c0_i32_89 : i32
      %99 = arith.index_cast %98 : i32 to index
      %c0_90 = arith.constant 0 : index
      %c0_91 = arith.constant 0 : index
      %100 = vector.load %arg19[%99, %c0_90, %c0_91] : memref<34x34x64xf32, #tpu.memory_space<vmem>>, vector<8x32x64xf32>
      %101 = vector.shape_cast %100 : vector<8x32x64xf32> to vector<256x64xf32>
      %c0_92 = arith.constant 0 : index
      %c0_93 = arith.constant 0 : index
      %c0_94 = arith.constant 0 : index
      %102 = vector.load %arg7[%c0_92, %c0_93, %c0_94] : memref<9x64x128xf32, #tpu.memory_space<vmem>>, vector<1x64x128xf32>
      %103 = vector.shape_cast %102 : vector<1x64x128xf32> to vector<64x128xf32>
      %cst_95 = arith.constant dense<0.000000e+00> : vector<256x128xf32>
      %104 = tpu.matmul %101, %103, %cst_95 {dimension_numbers = #tpu.dot_dimension_numbers<[1], [0], [0], [1], [0, 0, 1, 1], [], []>} : vector<256x64xf32>, vector<64x128xf32>, vector<256x128xf32> -> vector<256x128xf32>
      %105 = arith.addf %96, %104 : vector<256x128xf32>
      %c8_i32_96 = arith.constant 8 : i32
      %106 = arith.muli %arg22, %c8_i32_96 : i32
      %c0_i32_97 = arith.constant 0 : i32
      %107 = arith.addi %106, %c0_i32_97 : i32
      %108 = arith.index_cast %107 : i32 to index
      %c1_98 = arith.constant 1 : index
      %c0_99 = arith.constant 0 : index
      %109 = vector.load %arg19[%108, %c1_98, %c0_99] : memref<34x34x64xf32, #tpu.memory_space<vmem>>, vector<8x32x64xf32>
      %110 = vector.shape_cast %109 : vector<8x32x64xf32> to vector<256x64xf32>
      %c1_100 = arith.constant 1 : index
      %c0_101 = arith.constant 0 : index
      %c0_102 = arith.constant 0 : index
      %111 = vector.load %arg7[%c1_100, %c0_101, %c0_102] : memref<9x64x128xf32, #tpu.memory_space<vmem>>, vector<1x64x128xf32>
      %112 = vector.shape_cast %111 : vector<1x64x128xf32> to vector<64x128xf32>
      %cst_103 = arith.constant dense<0.000000e+00> : vector<256x128xf32>
      %113 = tpu.matmul %110, %112, %cst_103 {dimension_numbers = #tpu.dot_dimension_numbers<[1], [0], [0], [1], [0, 0, 1, 1], [], []>} : vector<256x64xf32>, vector<64x128xf32>, vector<256x128xf32> -> vector<256x128xf32>
      %114 = arith.addf %105, %113 : vector<256x128xf32>
      %c8_i32_104 = arith.constant 8 : i32
      %115 = arith.muli %arg22, %c8_i32_104 : i32
      %c0_i32_105 = arith.constant 0 : i32
      %116 = arith.addi %115, %c0_i32_105 : i32
      %117 = arith.index_cast %116 : i32 to index
      %c2 = arith.constant 2 : index
      %c0_106 = arith.constant 0 : index
      %118 = vector.load %arg19[%117, %c2, %c0_106] : memref<34x34x64xf32, #tpu.memory_space<vmem>>, vector<8x32x64xf32>
      %119 = vector.shape_cast %118 : vector<8x32x64xf32> to vector<256x64xf32>
      %c2_107 = arith.constant 2 : index
      %c0_108 = arith.constant 0 : index
      %c0_109 = arith.constant 0 : index
      %120 = vector.load %arg7[%c2_107, %c0_108, %c0_109] : memref<9x64x128xf32, #tpu.memory_space<vmem>>, vector<1x64x128xf32>
      %121 = vector.shape_cast %120 : vector<1x64x128xf32> to vector<64x128xf32>
      %cst_110 = arith.constant dense<0.000000e+00> : vector<256x128xf32>
      %122 = tpu.matmul %119, %121, %cst_110 {dimension_numbers = #tpu.dot_dimension_numbers<[1], [0], [0], [1], [0, 0, 1, 1], [], []>} : vector<256x64xf32>, vector<64x128xf32>, vector<256x128xf32> -> vector<256x128xf32>
      %123 = arith.addf %114, %122 : vector<256x128xf32>
      %c8_i32_111 = arith.constant 8 : i32
      %124 = arith.muli %arg22, %c8_i32_111 : i32
      %c1_i32_112 = arith.constant 1 : i32
      %125 = arith.addi %124, %c1_i32_112 : i32
      %126 = arith.index_cast %125 : i32 to index
      %c0_113 = arith.constant 0 : index
      %c0_114 = arith.constant 0 : index
      %127 = vector.load %arg19[%126, %c0_113, %c0_114] : memref<34x34x64xf32, #tpu.memory_space<vmem>>, vector<8x32x64xf32>
      %128 = vector.shape_cast %127 : vector<8x32x64xf32> to vector<256x64xf32>
      %c3 = arith.constant 3 : index
      %c0_115 = arith.constant 0 : index
      %c0_116 = arith.constant 0 : index
      %129 = vector.load %arg7[%c3, %c0_115, %c0_116] : memref<9x64x128xf32, #tpu.memory_space<vmem>>, vector<1x64x128xf32>
      %130 = vector.shape_cast %129 : vector<1x64x128xf32> to vector<64x128xf32>
      %cst_117 = arith.constant dense<0.000000e+00> : vector<256x128xf32>
      %131 = tpu.matmul %128, %130, %cst_117 {dimension_numbers = #tpu.dot_dimension_numbers<[1], [0], [0], [1], [0, 0, 1, 1], [], []>} : vector<256x64xf32>, vector<64x128xf32>, vector<256x128xf32> -> vector<256x128xf32>
      %132 = arith.addf %123, %131 : vector<256x128xf32>
      %c8_i32_118 = arith.constant 8 : i32
      %133 = arith.muli %arg22, %c8_i32_118 : i32
      %c1_i32_119 = arith.constant 1 : i32
      %134 = arith.addi %133, %c1_i32_119 : i32
      %135 = arith.index_cast %134 : i32 to index
      %c1_120 = arith.constant 1 : index
      %c0_121 = arith.constant 0 : index
      %136 = vector.load %arg19[%135, %c1_120, %c0_121] : memref<34x34x64xf32, #tpu.memory_space<vmem>>, vector<8x32x64xf32>
      %137 = vector.shape_cast %136 : vector<8x32x64xf32> to vector<256x64xf32>
      %c4 = arith.constant 4 : index
      %c0_122 = arith.constant 0 : index
      %c0_123 = arith.constant 0 : index
      %138 = vector.load %arg7[%c4, %c0_122, %c0_123] : memref<9x64x128xf32, #tpu.memory_space<vmem>>, vector<1x64x128xf32>
      %139 = vector.shape_cast %138 : vector<1x64x128xf32> to vector<64x128xf32>
      %cst_124 = arith.constant dense<0.000000e+00> : vector<256x128xf32>
      %140 = tpu.matmul %137, %139, %cst_124 {dimension_numbers = #tpu.dot_dimension_numbers<[1], [0], [0], [1], [0, 0, 1, 1], [], []>} : vector<256x64xf32>, vector<64x128xf32>, vector<256x128xf32> -> vector<256x128xf32>
      %141 = arith.addf %132, %140 : vector<256x128xf32>
      %c8_i32_125 = arith.constant 8 : i32
      %142 = arith.muli %arg22, %c8_i32_125 : i32
      %c1_i32_126 = arith.constant 1 : i32
      %143 = arith.addi %142, %c1_i32_126 : i32
      %144 = arith.index_cast %143 : i32 to index
      %c2_127 = arith.constant 2 : index
      %c0_128 = arith.constant 0 : index
      %145 = vector.load %arg19[%144, %c2_127, %c0_128] : memref<34x34x64xf32, #tpu.memory_space<vmem>>, vector<8x32x64xf32>
      %146 = vector.shape_cast %145 : vector<8x32x64xf32> to vector<256x64xf32>
      %c5 = arith.constant 5 : index
      %c0_129 = arith.constant 0 : index
      %c0_130 = arith.constant 0 : index
      %147 = vector.load %arg7[%c5, %c0_129, %c0_130] : memref<9x64x128xf32, #tpu.memory_space<vmem>>, vector<1x64x128xf32>
      %148 = vector.shape_cast %147 : vector<1x64x128xf32> to vector<64x128xf32>
      %cst_131 = arith.constant dense<0.000000e+00> : vector<256x128xf32>
      %149 = tpu.matmul %146, %148, %cst_131 {dimension_numbers = #tpu.dot_dimension_numbers<[1], [0], [0], [1], [0, 0, 1, 1], [], []>} : vector<256x64xf32>, vector<64x128xf32>, vector<256x128xf32> -> vector<256x128xf32>
      %150 = arith.addf %141, %149 : vector<256x128xf32>
      %c8_i32_132 = arith.constant 8 : i32
      %151 = arith.muli %arg22, %c8_i32_132 : i32
      %c2_i32 = arith.constant 2 : i32
      %152 = arith.addi %151, %c2_i32 : i32
      %153 = arith.index_cast %152 : i32 to index
      %c0_133 = arith.constant 0 : index
      %c0_134 = arith.constant 0 : index
      %154 = vector.load %arg19[%153, %c0_133, %c0_134] : memref<34x34x64xf32, #tpu.memory_space<vmem>>, vector<8x32x64xf32>
      %155 = vector.shape_cast %154 : vector<8x32x64xf32> to vector<256x64xf32>
      %c6 = arith.constant 6 : index
      %c0_135 = arith.constant 0 : index
      %c0_136 = arith.constant 0 : index
      %156 = vector.load %arg7[%c6, %c0_135, %c0_136] : memref<9x64x128xf32, #tpu.memory_space<vmem>>, vector<1x64x128xf32>
      %157 = vector.shape_cast %156 : vector<1x64x128xf32> to vector<64x128xf32>
      %cst_137 = arith.constant dense<0.000000e+00> : vector<256x128xf32>
      %158 = tpu.matmul %155, %157, %cst_137 {dimension_numbers = #tpu.dot_dimension_numbers<[1], [0], [0], [1], [0, 0, 1, 1], [], []>} : vector<256x64xf32>, vector<64x128xf32>, vector<256x128xf32> -> vector<256x128xf32>
      %159 = arith.addf %150, %158 : vector<256x128xf32>
      %c8_i32_138 = arith.constant 8 : i32
      %160 = arith.muli %arg22, %c8_i32_138 : i32
      %c2_i32_139 = arith.constant 2 : i32
      %161 = arith.addi %160, %c2_i32_139 : i32
      %162 = arith.index_cast %161 : i32 to index
      %c1_140 = arith.constant 1 : index
      %c0_141 = arith.constant 0 : index
      %163 = vector.load %arg19[%162, %c1_140, %c0_141] : memref<34x34x64xf32, #tpu.memory_space<vmem>>, vector<8x32x64xf32>
      %164 = vector.shape_cast %163 : vector<8x32x64xf32> to vector<256x64xf32>
      %c7 = arith.constant 7 : index
      %c0_142 = arith.constant 0 : index
      %c0_143 = arith.constant 0 : index
      %165 = vector.load %arg7[%c7, %c0_142, %c0_143] : memref<9x64x128xf32, #tpu.memory_space<vmem>>, vector<1x64x128xf32>
      %166 = vector.shape_cast %165 : vector<1x64x128xf32> to vector<64x128xf32>
      %cst_144 = arith.constant dense<0.000000e+00> : vector<256x128xf32>
      %167 = tpu.matmul %164, %166, %cst_144 {dimension_numbers = #tpu.dot_dimension_numbers<[1], [0], [0], [1], [0, 0, 1, 1], [], []>} : vector<256x64xf32>, vector<64x128xf32>, vector<256x128xf32> -> vector<256x128xf32>
      %168 = arith.addf %159, %167 : vector<256x128xf32>
      %c8_i32_145 = arith.constant 8 : i32
      %169 = arith.muli %arg22, %c8_i32_145 : i32
      %c2_i32_146 = arith.constant 2 : i32
      %170 = arith.addi %169, %c2_i32_146 : i32
      %171 = arith.index_cast %170 : i32 to index
      %c2_147 = arith.constant 2 : index
      %c0_148 = arith.constant 0 : index
      %172 = vector.load %arg19[%171, %c2_147, %c0_148] : memref<34x34x64xf32, #tpu.memory_space<vmem>>, vector<8x32x64xf32>
      %173 = vector.shape_cast %172 : vector<8x32x64xf32> to vector<256x64xf32>
      %c8 = arith.constant 8 : index
      %c0_149 = arith.constant 0 : index
      %c0_150 = arith.constant 0 : index
      %174 = vector.load %arg7[%c8, %c0_149, %c0_150] : memref<9x64x128xf32, #tpu.memory_space<vmem>>, vector<1x64x128xf32>
      %175 = vector.shape_cast %174 : vector<1x64x128xf32> to vector<64x128xf32>
      %cst_151 = arith.constant dense<0.000000e+00> : vector<256x128xf32>
      %176 = tpu.matmul %173, %175, %cst_151 {dimension_numbers = #tpu.dot_dimension_numbers<[1], [0], [0], [1], [0, 0, 1, 1], [], []>} : vector<256x64xf32>, vector<64x128xf32>, vector<256x128xf32> -> vector<256x128xf32>
      %177 = arith.addf %168, %176 : vector<256x128xf32>
      %c0_152 = arith.constant 0 : index
      %c0_153 = arith.constant 0 : index
      %178 = vector.load %arg8[%c0_152, %c0_153] : memref<1x128xf32, #tpu.memory_space<vmem>>, vector<1x128xf32>
      %179 = vector.broadcast %178 : vector<1x128xf32> to vector<256x128xf32>
      %180 = arith.addf %177, %179 : vector<256x128xf32>
      %cst_154 = arith.constant 0.000000e+00 : f32
      %181 = vector.broadcast %cst_154 : f32 to vector<256x128xf32>
      %182 = arith.maximumf %180, %181 : vector<256x128xf32>
      %183 = vector.shape_cast %182 : vector<256x128xf32> to vector<4x2x32x128xf32>
      %184 = vector.extract_strided_slice %183 {offsets = [0, 0, 0, 0], sizes = [4, 1, 32, 128], strides = [1, 1, 1, 1]} : vector<4x2x32x128xf32> to vector<4x1x32x128xf32>
      %185 = vector.shape_cast %184 : vector<4x1x32x128xf32> to vector<4x32x128xf32>
      %186 = vector.extract_strided_slice %183 {offsets = [0, 1, 0, 0], sizes = [4, 1, 32, 128], strides = [1, 1, 1, 1]} : vector<4x2x32x128xf32> to vector<4x1x32x128xf32>
      %187 = vector.shape_cast %186 : vector<4x1x32x128xf32> to vector<4x32x128xf32>
      %188 = arith.maximumf %185, %187 : vector<4x32x128xf32>
      %c0_155 = arith.constant 0 : index
      %c0_156 = arith.constant 0 : index
      %c0_157 = arith.constant 0 : index
      %189 = vector.load %arg20[%c0_155, %c0_156, %c0_157] : memref<4x32x128xf32, #tpu.memory_space<vmem>>, vector<4x32x128xf32>
      tpu.vector_store %arg20[%c0_155, %c0_156, %c0_157], %188 {strides = array<i32>} : memref<4x32x128xf32, #tpu.memory_space<vmem>>, vector<4x32x128xf32>,
      %c0_158 = arith.constant 0 : index
      %c0_159 = arith.constant 0 : index
      %c0_160 = arith.constant 0 : index
      %190 = tpu.strided_load %arg20[%c0_158, %c0_159, %c0_160] {strides = array<i32: 1, 2, 1>} : memref<4x32x128xf32, #tpu.memory_space<vmem>>, vector<4x16x128xf32>
      %c0_161 = arith.constant 0 : index
      %c1_162 = arith.constant 1 : index
      %c0_163 = arith.constant 0 : index
      %191 = tpu.strided_load %arg20[%c0_161, %c1_162, %c0_163] {strides = array<i32: 1, 2, 1>} : memref<4x32x128xf32, #tpu.memory_space<vmem>>, vector<4x16x128xf32>
      %192 = arith.maximumf %190, %191 : vector<4x16x128xf32>
      %c4_i32_164 = arith.constant 4 : i32
      %193 = arith.muli %arg22, %c4_i32_164 : i32
      %194 = arith.index_cast %193 : i32 to index
      %c0_165 = arith.constant 0 : index
      %c0_166 = arith.constant 0 : index
      %195 = vector.load %arg21[%194, %c0_165, %c0_166] : memref<16x16x128xf32, #tpu.memory_space<vmem>>, vector<4x16x128xf32>
      tpu.vector_store %arg21[%194, %c0_165, %c0_166], %192 {strides = array<i32>} : memref<16x16x128xf32, #tpu.memory_space<vmem>>, vector<4x16x128xf32>,
    }
    %c4_i32_48 = arith.constant 4 : i32
    %c0_49 = arith.constant 0 : index
    %c0_50 = arith.constant 0 : index
    %c0_51 = arith.constant 0 : index
    %33 = vector.load %arg21[%c0_49, %c0_50, %c0_51] : memref<16x16x128xf32, #tpu.memory_space<vmem>>, vector<16x16x128xf32>
    %34 = vector.shape_cast %33 : vector<16x16x128xf32> to vector<256x128xf32>
    %c0_52 = arith.constant 0 : index
    %c0_53 = arith.constant 0 : index
    %c0_54 = arith.constant 0 : index
    %35 = vector.load %arg2[%c0_52, %c0_53, %c0_54] : memref<1x1x2xf32, #tpu.memory_space<vmem>>, vector<1x1x2xf32>
    %36 = vector.shape_cast %35 : vector<1x1x2xf32> to vector<1x2xf32>
    %37 = vector.extract_strided_slice %36 {offsets = [0, 0], sizes = [1, 1], strides = [1, 1]} : vector<1x2xf32> to vector<1x1xf32>
    %c0_55 = arith.constant 0 : index
    %c0_56 = arith.constant 0 : index
    %38 = vector.load %arg9[%c0_55, %c0_56] : memref<2x64xf32, #tpu.memory_space<vmem>>, vector<1x64xf32>
    %39 = vector.broadcast %37 : vector<1x1xf32> to vector<1x64xf32>
    %40 = arith.mulf %39, %38 : vector<1x64xf32>
    %41 = vector.extract_strided_slice %36 {offsets = [0, 1], sizes = [1, 1], strides = [1, 1]} : vector<1x2xf32> to vector<1x1xf32>
    %c1_57 = arith.constant 1 : index
    %c0_58 = arith.constant 0 : index
    %42 = vector.load %arg9[%c1_57, %c0_58] : memref<2x64xf32, #tpu.memory_space<vmem>>, vector<1x64xf32>
    %43 = vector.broadcast %41 : vector<1x1xf32> to vector<1x64xf32>
    %44 = arith.mulf %43, %42 : vector<1x64xf32>
    %45 = arith.addf %40, %44 : vector<1x64xf32>
    %c0_59 = arith.constant 0 : index
    %c0_60 = arith.constant 0 : index
    %46 = vector.load %arg10[%c0_59, %c0_60] : memref<1x64xf32, #tpu.memory_space<vmem>>, vector<1x64xf32>
    %47 = arith.addf %45, %46 : vector<1x64xf32>
    %cst_61 = arith.constant 0.000000e+00 : f32
    %48 = vector.broadcast %cst_61 : f32 to vector<1x64xf32>
    %49 = arith.maximumf %47, %48 : vector<1x64xf32>
    %50 = tpu.iota {dimensions = array<i32: 1>} : vector<1x2xi32>
    %c0_62 = arith.constant 0 : index
    %c0_63 = arith.constant 0 : index
    %51 = vector.load %arg13[%c0_62, %c0_63] : memref<1x2xf32, #tpu.memory_space<vmem>>, vector<1x2xf32>
    %c0_64 = arith.constant 0 : index
    %c0_65 = arith.constant 0 : index
    %c0_66 = arith.constant 0 : index
    %c0_67 = arith.constant 0 : index
    %52 = vector.load %arg11[%c0_64, %c0_65, %c0_66, %c0_67] : memref<2x16x16x128xf32, #tpu.memory_space<vmem>>, vector<1x16x16x128xf32>
    %53 = vector.shape_cast %52 : vector<1x16x16x128xf32> to vector<16x16x128xf32>
    %54 = vector.shape_cast %53 : vector<16x16x128xf32> to vector<256x128xf32>
    %55 = arith.mulf %34, %54 : vector<256x128xf32>
    %56 = vector.shape_cast %55 : vector<256x128xf32> to vector<1x256x128xf32>
    %cst_68 = arith.constant dense<0.000000e+00> : vector<1xf32>
    %57 = vector.multi_reduction <add>, %56, %cst_68 [1, 2] : vector<1x256x128xf32> to vector<1xf32>
    %58 = vector.shape_cast %57 : vector<1xf32> to vector<1x1x1xf32>
    %59 = vector.extract %58[0, 0, 0] : f32 from vector<1x1x1xf32>
    %c0_69 = arith.constant 0 : index
    %c0_70 = arith.constant 0 : index
    %60 = vector.load %arg12[%c0_69, %c0_70] : memref<2x64xf32, #tpu.memory_space<vmem>>, vector<1x64xf32>
    %61 = arith.mulf %49, %60 : vector<1x64xf32>
    %62 = vector.shape_cast %61 : vector<1x64xf32> to vector<1x1x64xf32>
    %cst_71 = arith.constant dense<0.000000e+00> : vector<1xf32>
    %63 = vector.multi_reduction <add>, %62, %cst_71 [1, 2] : vector<1x1x64xf32> to vector<1xf32>
    %64 = vector.shape_cast %63 : vector<1xf32> to vector<1x1x1xf32>
    %65 = vector.extract %64[0, 0, 0] : f32 from vector<1x1x1xf32>
    %66 = arith.addf %59, %65 : f32
    %c0_i32_72 = arith.constant 0 : i32
    %67 = vector.broadcast %c0_i32_72 : i32 to vector<1x2xi32>
    %68 = arith.cmpi eq, %50, %67 : vector<1x2xi32>
    %cst_73 = arith.constant 0.000000e+00 : f32
    %69 = vector.broadcast %66 : f32 to vector<1x2xf32>
    %70 = vector.broadcast %cst_73 : f32 to vector<1x2xf32>
    %71 = arith.select %68, %69, %70 : vector<1x2xi1>, vector<1x2xf32>
    %72 = arith.addf %51, %71 : vector<1x2xf32>
    %c1_74 = arith.constant 1 : index
    %c0_75 = arith.constant 0 : index
    %c0_76 = arith.constant 0 : index
    %c0_77 = arith.constant 0 : index
    %73 = vector.load %arg11[%c1_74, %c0_75, %c0_76, %c0_77] : memref<2x16x16x128xf32, #tpu.memory_space<vmem>>, vector<1x16x16x128xf32>
    %74 = vector.shape_cast %73 : vector<1x16x16x128xf32> to vector<16x16x128xf32>
    %75 = vector.shape_cast %74 : vector<16x16x128xf32> to vector<256x128xf32>
    %76 = arith.mulf %34, %75 : vector<256x128xf32>
    %77 = vector.shape_cast %76 : vector<256x128xf32> to vector<1x256x128xf32>
    %cst_78 = arith.constant dense<0.000000e+00> : vector<1xf32>
    %78 = vector.multi_reduction <add>, %77, %cst_78 [1, 2] : vector<1x256x128xf32> to vector<1xf32>
    %79 = vector.shape_cast %78 : vector<1xf32> to vector<1x1x1xf32>
    %80 = vector.extract %79[0, 0, 0] : f32 from vector<1x1x1xf32>
    %c1_79 = arith.constant 1 : index
    %c0_80 = arith.constant 0 : index
    %81 = vector.load %arg12[%c1_79, %c0_80] : memref<2x64xf32, #tpu.memory_space<vmem>>, vector<1x64xf32>
    %82 = arith.mulf %49, %81 : vector<1x64xf32>
    %83 = vector.shape_cast %82 : vector<1x64xf32> to vector<1x1x64xf32>
    %cst_81 = arith.constant dense<0.000000e+00> : vector<1xf32>
    %84 = vector.multi_reduction <add>, %83, %cst_81 [1, 2] : vector<1x1x64xf32> to vector<1xf32>
    %85 = vector.shape_cast %84 : vector<1xf32> to vector<1x1x1xf32>
    %86 = vector.extract %85[0, 0, 0] : f32 from vector<1x1x1xf32>
    %87 = arith.addf %80, %86 : f32
    %c1_i32_82 = arith.constant 1 : i32
    %88 = vector.broadcast %c1_i32_82 : i32 to vector<1x2xi32>
    %89 = arith.cmpi eq, %50, %88 : vector<1x2xi32>
    %cst_83 = arith.constant 0.000000e+00 : f32
    %90 = vector.broadcast %87 : f32 to vector<1x2xf32>
    %91 = vector.broadcast %cst_83 : f32 to vector<1x2xf32>
    %92 = arith.select %89, %90, %91 : vector<1x2xi1>, vector<1x2xf32>
    %93 = arith.addf %72, %92 : vector<1x2xf32>
    %94 = vector.shape_cast %93 : vector<1x2xf32> to vector<1x1x2xf32>
    %c0_84 = arith.constant 0 : index
    %c0_85 = arith.constant 0 : index
    %c0_86 = arith.constant 0 : index
    %95 = vector.load %arg14[%c0_84, %c0_85, %c0_86] : memref<1x1x2xf32, #tpu.memory_space<vmem>>, vector<1x1x2xf32>
    tpu.vector_store %arg14[%c0_84, %c0_85, %c0_86], %94 {strides = array<i32>} : memref<1x1x2xf32, #tpu.memory_space<vmem>>, vector<1x1x2xf32>,
    return
  }
  func.func @transform_0(%arg0: i32) -> (i32, i32, i32, i32) {
    %c0_i32 = arith.constant 0 : i32
    %c0_i32_0 = arith.constant 0 : i32
    %c0_i32_1 = arith.constant 0 : i32
    %c0_i32_2 = arith.constant 0 : i32
    return %arg0, %c0_i32, %c0_i32_0, %c0_i32_1 : i32, i32, i32, i32
  }
  func.func @transform_1(%arg0: i32) -> (i32, i32, i32) {
    %c0_i32 = arith.constant 0 : i32
    %c0_i32_0 = arith.constant 0 : i32
    %c0_i32_1 = arith.constant 0 : i32
    return %arg0, %c0_i32, %c0_i32_0 : i32, i32, i32
  }
  func.func @transform_2(%arg0: i32) -> (i32, i32) {
    %c0_i32 = arith.constant 0 : i32
    %c0_i32_0 = arith.constant 0 : i32
    %c0_i32_1 = arith.constant 0 : i32
    return %c0_i32, %c0_i32_0 : i32, i32
  }
  func.func @transform_3(%arg0: i32) -> (i32, i32) {
    %c0_i32 = arith.constant 0 : i32
    %c0_i32_0 = arith.constant 0 : i32
    %c0_i32_1 = arith.constant 0 : i32
    return %c0_i32, %c0_i32_0 : i32, i32
  }
  func.func @transform_4(%arg0: i32) -> (i32, i32, i32) {
    %c0_i32 = arith.constant 0 : i32
    %c0_i32_0 = arith.constant 0 : i32
    %c0_i32_1 = arith.constant 0 : i32
    %c0_i32_2 = arith.constant 0 : i32
    return %c0_i32, %c0_i32_0, %c0_i32_1 : i32, i32, i32
  }
  func.func @transform_5(%arg0: i32) -> (i32, i32) {
    %c0_i32 = arith.constant 0 : i32
    %c0_i32_0 = arith.constant 0 : i32
    %c0_i32_1 = arith.constant 0 : i32
    return %c0_i32, %c0_i32_0 : i32, i32
  }
  func.func @transform_6(%arg0: i32) -> (i32, i32, i32) {
    %c0_i32 = arith.constant 0 : i32
    %c0_i32_0 = arith.constant 0 : i32
    %c0_i32_1 = arith.constant 0 : i32
    %c0_i32_2 = arith.constant 0 : i32
    return %c0_i32, %c0_i32_0, %c0_i32_1 : i32, i32, i32
  }
  func.func @transform_7(%arg0: i32) -> (i32, i32) {
    %c0_i32 = arith.constant 0 : i32
    %c0_i32_0 = arith.constant 0 : i32
    %c0_i32_1 = arith.constant 0 : i32
    return %c0_i32, %c0_i32_0 : i32, i32
  }
  func.func @transform_8(%arg0: i32) -> (i32, i32) {
    %c0_i32 = arith.constant 0 : i32
    %c0_i32_0 = arith.constant 0 : i32
    %c0_i32_1 = arith.constant 0 : i32
    return %c0_i32, %c0_i32_0 : i32, i32
  }
  func.func @transform_9(%arg0: i32) -> (i32, i32) {
    %c0_i32 = arith.constant 0 : i32
    %c0_i32_0 = arith.constant 0 : i32
    %c0_i32_1 = arith.constant 0 : i32
    return %c0_i32, %c0_i32_0 : i32, i32
  }
  func.func @transform_10(%arg0: i32) -> (i32, i32, i32, i32) {
    %c0_i32 = arith.constant 0 : i32
    %c0_i32_0 = arith.constant 0 : i32
    %c0_i32_1 = arith.constant 0 : i32
    %c0_i32_2 = arith.constant 0 : i32
    %c0_i32_3 = arith.constant 0 : i32
    return %c0_i32, %c0_i32_0, %c0_i32_1, %c0_i32_2 : i32, i32, i32, i32
  }
  func.func @transform_11(%arg0: i32) -> (i32, i32) {
    %c0_i32 = arith.constant 0 : i32
    %c0_i32_0 = arith.constant 0 : i32
    %c0_i32_1 = arith.constant 0 : i32
    return %c0_i32, %c0_i32_0 : i32, i32
  }
  func.func @transform_12(%arg0: i32) -> (i32, i32) {
    %c0_i32 = arith.constant 0 : i32
    %c0_i32_0 = arith.constant 0 : i32
    %c0_i32_1 = arith.constant 0 : i32
    return %c0_i32, %c0_i32_0 : i32, i32
  }
  func.func @transform_13(%arg0: i32) -> (i32, i32, i32) {
    %c0_i32 = arith.constant 0 : i32
    %c0_i32_0 = arith.constant 0 : i32
    %c0_i32_1 = arith.constant 0 : i32
    return %arg0, %c0_i32, %c0_i32_0 : i32, i32, i32
  }
}

</mosaic_0001>

<llo_original>
// kernel: multi_input_forward.1
$region0: #{multi_input_forward.1}
  #allocation0 [shape = 'u32[]', space=smem, size = 0x4, offset = 0x4, fixed_abs, tag = 'smem constant byte address 0x4 - core index']
  #allocation1 [shape = 'u32[72,128]{1,0:T(1,128)}', space=vmem, size = 0x9000, scoped, tag = 'internal scratch']
  #allocation2 [shape = 'f32[3,130,128]{2,1,0:T(8,128)}', space=vmem, size = 0x33000, scoped, tag = 'scratch operand']
  #allocation3 [shape = 'f32[128,32]{1,0:T(8,128)}', space=vmem, size = 0x10000, scoped, tag = 'scratch operand']
  #allocation4 [shape = 'f32[66,66,32]{2,1,0:T(8,128)}', space=vmem, size = 0x252000, scoped, tag = 'scratch operand']
  #allocation5 [shape = 'f32[4,64,64]{2,1,0:T(8,128)}', space=vmem, size = 0x20000, scoped, tag = 'scratch operand']
  #allocation6 [shape = 'f32[34,34,64]{2,1,0:T(8,128)}', space=vmem, size = 0xaa000, scoped, tag = 'scratch operand']
  #allocation7 [shape = 'f32[4,32,128]{2,1,0:T(8,128)}', space=vmem, size = 0x10000, scoped, tag = 'scratch operand']
  #allocation8 [shape = 'f32[16,16,128]{2,1,0:T(8,128)}', space=vmem, size = 0x20000, scoped, tag = 'scratch operand']
  %s0 = inlined_call_operand.hbm [shape: f32[2,3,128,128], index: 0, kind: input, shape index: {}]
  %s1 = inlined_call_operand.vmem [shape: f32[2,1,2], index: 1, kind: input, shape index: {}]
  %s2 = inlined_call_operand.vmem [shape: f32[32,32], index: 2, kind: input, shape index: {}]
  %s3 = inlined_call_operand.vmem [shape: f32[32,1], index: 3, kind: input, shape index: {}]
  %s4 = inlined_call_operand.hbm [shape: f32[9,32,64], index: 4, kind: input, shape index: {}]
  %s5 = inlined_call_operand.vmem [shape: f32[1,64], index: 5, kind: input, shape index: {}]
  %s6 = inlined_call_operand.hbm [shape: f32[9,64,128], index: 6, kind: input, shape index: {}]
  %s7 = inlined_call_operand.vmem [shape: f32[1,128], index: 7, kind: input, shape index: {}]
  %s8 = inlined_call_operand.vmem [shape: f32[2,64], index: 8, kind: input, shape index: {}]
  %s9 = inlined_call_operand.vmem [shape: f32[1,64], index: 9, kind: input, shape index: {}]
  %s10 = inlined_call_operand.hbm [shape: f32[2,16,16,128], index: 10, kind: input, shape index: {}]
  %s11 = inlined_call_operand.vmem [shape: f32[2,64], index: 11, kind: input, shape index: {}]
  %s12 = inlined_call_operand.hbm [shape: f32[1,2], index: 12, kind: input, shape index: {}]
  %s13 = inlined_call_operand.hbm [shape: f32[2,1,2], index: 13, kind: output, shape index: {}]
  %s14 = sld [smem:[#allocation0]]
  $region126: #{multi_input_forward.1} parent=0
    _
  %s16 = ssub.s32 1, %s14
  %s17 = scalar_select 0, %s16, %s14
  $region1: #{multi_input_forward.1} parent=0
    #allocation9 [shape = 'u8[393216]{0}', space=vmem, size = 0x60000, scoped, tag = 'input window, operand 0']
    #allocation10 [shape = 's32[2]{0}', space=sflag, size = 0x8, scoped, tag = 'scoped memory for multi_input_forward.1']
    #allocation11 [shape = 's32[2]{0}', space=sflag, size = 0x8, scoped, tag = 'scoped memory for multi_input_forward.1']
    #allocation12 [shape = 'u8[147456]{0}', space=vmem, size = 0x24000, scoped, tag = 'input window, operand 4, single buffered']
    #allocation13 [shape = 's32[1]{0}', space=sflag, size = 0x4, scoped, tag = 'scoped memory for multi_input_forward.1']
    #allocation14 [shape = 'u8[294912]{0}', space=vmem, size = 0x48000, scoped, tag = 'input window, operand 6, single buffered']
    #allocation15 [shape = 'u8[262144]{0}', space=vmem, size = 0x40000, scoped, tag = 'input window, operand 10, single buffered']
    #allocation16 [shape = 's32[1]{0}', space=sflag, size = 0x4, scoped, tag = 'scoped memory for multi_input_forward.1']
    #allocation17 [shape = 'u8[512]{0}', space=vmem, size = 0x400, scoped, tag = 'input window, operand 12, single buffered']
    #allocation18 [shape = 'u8[1024]{0}', space=vmem, size = 0x400, scoped, tag = 'output window, operand 0']
    %18 = vsyncpa [#allocation10], 0
    %s19 = scalar_lea.sflag [#allocation10], 1
    %20 = vsyncpa %s19, 0
    %21 = vsyncpa [#allocation13], 0
    %22 = vsyncpa [#allocation16], 0
    %23 = vsyncpa [#allocation11], 0
    %s24 = scalar_lea.sflag [#allocation11], 1
    %25 = vsyncpa %s24, 0
    loop: start=0, step=1, limit=4
    $region2: #{multi_input_forward.1} parent=1 // loop_pre_header
      _
    $region3: #{multi_input_forward.1} parent=1 // loop_header
      %s27 = sphi 0, %s31
      %p28 = scmp.ge.s32.totalorder %s27, 4
      %s37 = sphi 0, %s39
      %s40 = sphi 0, %s37
      %s41 = sphi 0, %s40
      %s57 = sphi 0, %s41
      %s63 = sphi 0, %s65
      %s66 = sphi 0, %s63
      %s67 = sphi 0, %s66
      %s83 = sphi 0, %s67
      %s87 = sphi 0, %s87
      %s89 = sphi 0, %s87
      %s90 = sphi 0, %s89
      %s104 = sphi 0, %s90
      %s108 = sphi 0, %s108
      %s110 = sphi 0, %s108
      %s111 = sphi 0, %s110
      %s125 = sphi 0, %s111
      %s129 = sphi 0, %s129
      %s131 = sphi 0, %s129
      %s132 = sphi 0, %s131
      %s146 = sphi 0, %s132
      %s150 = sphi 0, %s150
      %s152 = sphi 0, %s150
      %s153 = sphi 0, %s152
      %s167 = sphi 0, %s153
      %s171 = sphi 0, %s171
      %s173 = sphi 0, %s171
      %s174 = sphi 0, %s173
      %s188 = sphi 0, %s174
      %s192 = sphi 0, %s192
      %s194 = sphi 0, %s192
      %s195 = sphi 0, %s194
      %s209 = sphi 0, %s195
      %s213 = sphi 0, %s213
      %s215 = sphi 0, %s213
      %s216 = sphi 0, %s215
      %s230 = sphi 0, %s216
      %s234 = sphi 0, %s234
      %s236 = sphi 0, %s234
      %s237 = sphi 0, %s236
      %s251 = sphi 0, %s237
      %s255 = sphi 0, %s255
      %s257 = sphi 0, %s255
      %s258 = sphi 0, %s257
      %s272 = sphi 0, %s258
      %s276 = sphi 0, %s276
      %s278 = sphi 0, %s276
      %s279 = sphi 0, %s278
      %s293 = sphi 0, %s279
      %s297 = sphi 0, %s297
      %s299 = sphi 0, %s297
      %s300 = sphi 0, %s299
      %s314 = sphi 0, %s300
      %s320 = sphi 0, %s322
      %s323 = sphi 0, %s320
      %s324 = sphi 0, %s323
      %s340 = sphi 0, %s324
    $region4: #{multi_input_forward.1} parent=1 // loop_header_branch
      %30 = sbr.rel (%p28) target = $region8
    $region5: #{multi_input_forward.1} parent=1 // loop_body
      %s32 = ssub.s32 %s27, 1
      %s33 = ssub.s32 %s27, 2
      %s34 = sadd.s32 %s27, 1
      %s35 = ssub.s32 %s27, %s34
      %p36 = scmp.eq.s32.totalorder %s35, 0
      %s38 = sadd.s32 %s37, 1
      %s39 = scalar_select %p36, %s37, %s38
      %p42 = pneg %p36
      %p43 = scmp.eq.s32.totalorder %s27, 1
      %p44 = por %p42, %p43
      %p45 = scmp.ne.s32.totalorder %s37, %s40
      %p46 = scmp.eq.s32.totalorder %s27, 0
      %p47 = por %p45, %p46
      %p48 = scmp.ne.s32.totalorder %s37, %s40
      %p49 = scmp.eq.s32.totalorder %s32, 1
      %p50 = por %p48, %p49
      %p51 = scmp.ne.s32.totalorder %s40, %s41
      %p52 = scmp.eq.s32.totalorder %s32, 0
      %p53 = por %p51, %p52
      %p54 = scmp.ne.s32.totalorder %s40, %s41
      %p55 = scmp.eq.s32.totalorder %s33, 1
      %p56 = por %p54, %p55
      %p58 = scmp.ne.s32.totalorder %s41, %s57
      %p59 = scmp.eq.s32.totalorder %s33, 0
      %p60 = por %p58, %p59
      %s61 = ssub.s32 %s27, %s34
      %p62 = scmp.eq.s32.totalorder %s61, 0
      %s64 = sadd.s32 %s63, 1
      %s65 = scalar_select %p62, %s63, %s64
      %p68 = pneg %p62
      %p69 = scmp.eq.s32.totalorder %s27, 1
      %p70 = por %p68, %p69
      %p71 = scmp.ne.s32.totalorder %s63, %s66
      %p72 = scmp.eq.s32.totalorder %s27, 0
      %p73 = por %p71, %p72
      %p74 = scmp.ne.s32.totalorder %s63, %s66
      %p75 = scmp.eq.s32.totalorder %s32, 1
      %p76 = por %p74, %p75
      %p77 = scmp.ne.s32.totalorder %s66, %s67
      %p78 = scmp.eq.s32.totalorder %s32, 0
      %p79 = por %p77, %p78
      %p80 = scmp.ne.s32.totalorder %s66, %s67
      %p81 = scmp.eq.s32.totalorder %s33, 1
      %p82 = por %p80, %p81
      %p84 = scmp.ne.s32.totalorder %s67, %s83
      %p85 = scmp.eq.s32.totalorder %s33, 0
      %p86 = por %p84, %p85
      %s88 = sadd.s32 %s87, 1
      %p91 = scmp.eq.s32.totalorder %s27, 1
      %p92 = scmp.ne.s32.totalorder %s87, %s89
      %p93 = scmp.eq.s32.totalorder %s27, 0
      %p94 = por %p92, %p93
      %p95 = scmp.ne.s32.totalorder %s87, %s89
      %p96 = scmp.eq.s32.totalorder %s32, 1
      %p97 = por %p95, %p96
      %p98 = scmp.ne.s32.totalorder %s89, %s90
      %p99 = scmp.eq.s32.totalorder %s32, 0
      %p100 = por %p98, %p99
      %p101 = scmp.ne.s32.totalorder %s89, %s90
      %p102 = scmp.eq.s32.totalorder %s33, 1
      %p103 = por %p101, %p102
      %p105 = scmp.ne.s32.totalorder %s90, %s104
      %p106 = scmp.eq.s32.totalorder %s33, 0
      %p107 = por %p105, %p106
      %s109 = sadd.s32 %s108, 1
      %p112 = scmp.eq.s32.totalorder %s27, 1
      %p113 = scmp.ne.s32.totalorder %s108, %s110
      %p114 = scmp.eq.s32.totalorder %s27, 0
      %p115 = por %p113, %p114
      %p116 = scmp.ne.s32.totalorder %s108, %s110
      %p117 = scmp.eq.s32.totalorder %s32, 1
      %p118 = por %p116, %p117
      %p119 = scmp.ne.s32.totalorder %s110, %s111
      %p120 = scmp.eq.s32.totalorder %s32, 0
      %p121 = por %p119, %p120
      %p122 = scmp.ne.s32.totalorder %s110, %s111
      %p123 = scmp.eq.s32.totalorder %s33, 1
      %p124 = por %p122, %p123
      %p126 = scmp.ne.s32.totalorder %s111, %s125
      %p127 = scmp.eq.s32.totalorder %s33, 0
      %p128 = por %p126, %p127
      %s130 = sadd.s32 %s129, 1
      %p133 = scmp.eq.s32.totalorder %s27, 1
      %p134 = scmp.ne.s32.totalorder %s129, %s131
      %p135 = scmp.eq.s32.totalorder %s27, 0
      %p136 = por %p134, %p135
      %p137 = scmp.ne.s32.totalorder %s129, %s131
      %p138 = scmp.eq.s32.totalorder %s32, 1
      %p139 = por %p137, %p138
      %p140 = scmp.ne.s32.totalorder %s131, %s132
      %p141 = scmp.eq.s32.totalorder %s32, 0
      %p142 = por %p140, %p141
      %p143 = scmp.ne.s32.totalorder %s131, %s132
      %p144 = scmp.eq.s32.totalorder %s33, 1
      %p145 = por %p143, %p144
      %p147 = scmp.ne.s32.totalorder %s132, %s146
      %p148 = scmp.eq.s32.totalorder %s33, 0
      %p149 = por %p147, %p148
      %s151 = sadd.s32 %s150, 1
      %p154 = scmp.eq.s32.totalorder %s27, 1
      %p155 = scmp.ne.s32.totalorder %s150, %s152
      %p156 = scmp.eq.s32.totalorder %s27, 0
      %p157 = por %p155, %p156
      %p158 = scmp.ne.s32.totalorder %s150, %s152
      %p159 = scmp.eq.s32.totalorder %s32, 1
      %p160 = por %p158, %p159
      %p161 = scmp.ne.s32.totalorder %s152, %s153
      %p162 = scmp.eq.s32.totalorder %s32, 0
      %p163 = por %p161, %p162
      %p164 = scmp.ne.s32.totalorder %s152, %s153
      %p165 = scmp.eq.s32.totalorder %s33, 1
      %p166 = por %p164, %p165
      %p168 = scmp.ne.s32.totalorder %s153, %s167
      %p169 = scmp.eq.s32.totalorder %s33, 0
      %p170 = por %p168, %p169
      %s172 = sadd.s32 %s171, 1
      %p175 = scmp.eq.s32.totalorder %s27, 1
      %p176 = scmp.ne.s32.totalorder %s171, %s173
      %p177 = scmp.eq.s32.totalorder %s27, 0
      %p178 = por %p176, %p177
      %p179 = scmp.ne.s32.totalorder %s171, %s173
      %p180 = scmp.eq.s32.totalorder %s32, 1
      %p181 = por %p179, %p180
      %p182 = scmp.ne.s32.totalorder %s173, %s174
      %p183 = scmp.eq.s32.totalorder %s32, 0
      %p184 = por %p182, %p183
      %p185 = scmp.ne.s32.totalorder %s173, %s174
      %p186 = scmp.eq.s32.totalorder %s33, 1
      %p187 = por %p185, %p186
      %p189 = scmp.ne.s32.totalorder %s174, %s188
      %p190 = scmp.eq.s32.totalorder %s33, 0
      %p191 = por %p189, %p190
      %s193 = sadd.s32 %s192, 1
      %p196 = scmp.eq.s32.totalorder %s27, 1
      %p197 = scmp.ne.s32.totalorder %s192, %s194
      %p198 = scmp.eq.s32.totalorder %s27, 0
      %p199 = por %p197, %p198
      %p200 = scmp.ne.s32.totalorder %s192, %s194
      %p201 = scmp.eq.s32.totalorder %s32, 1
      %p202 = por %p200, %p201
      %p203 = scmp.ne.s32.totalorder %s194, %s195
      %p204 = scmp.eq.s32.totalorder %s32, 0
      %p205 = por %p203, %p204
      %p206 = scmp.ne.s32.totalorder %s194, %s195
      %p207 = scmp.eq.s32.totalorder %s33, 1
      %p208 = por %p206, %p207
      %p210 = scmp.ne.s32.totalorder %s195, %s209
      %p211 = scmp.eq.s32.totalorder %s33, 0
      %p212 = por %p210, %p211
      %s214 = sadd.s32 %s213, 1
      %p217 = scmp.eq.s32.totalorder %s27, 1
      %p218 = scmp.ne.s32.totalorder %s213, %s215
      %p219 = scmp.eq.s32.totalorder %s27, 0
      %p220 = por %p218, %p219
      %p221 = scmp.ne.s32.totalorder %s213, %s215
      %p222 = scmp.eq.s32.totalorder %s32, 1
      %p223 = por %p221, %p222
      %p224 = scmp.ne.s32.totalorder %s215, %s216
      %p225 = scmp.eq.s32.totalorder %s32, 0
      %p226 = por %p224, %p225
      %p227 = scmp.ne.s32.totalorder %s215, %s216
      %p228 = scmp.eq.s32.totalorder %s33, 1
      %p229 = por %p227, %p228
      %p231 = scmp.ne.s32.totalorder %s216, %s230
      %p232 = scmp.eq.s32.totalorder %s33, 0
      %p233 = por %p231, %p232
      %s235 = sadd.s32 %s234, 1
      %p238 = scmp.eq.s32.totalorder %s27, 1
      %p239 = scmp.ne.s32.totalorder %s234, %s236
      %p240 = scmp.eq.s32.totalorder %s27, 0
      %p241 = por %p239, %p240
      %p242 = scmp.ne.s32.totalorder %s234, %s236
      %p243 = scmp.eq.s32.totalorder %s32, 1
      %p244 = por %p242, %p243
      %p245 = scmp.ne.s32.totalorder %s236, %s237
      %p246 = scmp.eq.s32.totalorder %s32, 0
      %p247 = por %p245, %p246
      %p248 = scmp.ne.s32.totalorder %s236, %s237
      %p249 = scmp.eq.s32.totalorder %s33, 1
      %p250 = por %p248, %p249
      %p252 = scmp.ne.s32.totalorder %s237, %s251
      %p253 = scmp.eq.s32.totalorder %s33, 0
      %p254 = por %p252, %p253
      %s256 = sadd.s32 %s255, 1
      %p259 = scmp.eq.s32.totalorder %s27, 1
      %p260 = scmp.ne.s32.totalorder %s255, %s257
      %p261 = scmp.eq.s32.totalorder %s27, 0
      %p262 = por %p260, %p261
      %p263 = scmp.ne.s32.totalorder %s255, %s257
      %p264 = scmp.eq.s32.totalorder %s32, 1
      %p265 = por %p263, %p264
      %p266 = scmp.ne.s32.totalorder %s257, %s258
      %p267 = scmp.eq.s32.totalorder %s32, 0
      %p268 = por %p266, %p267
      %p269 = scmp.ne.s32.totalorder %s257, %s258
      %p270 = scmp.eq.s32.totalorder %s33, 1
      %p271 = por %p269, %p270
      %p273 = scmp.ne.s32.totalorder %s258, %s272
      %p274 = scmp.eq.s32.totalorder %s33, 0
      %p275 = por %p273, %p274
      %s277 = sadd.s32 %s276, 1
      %p280 = scmp.eq.s32.totalorder %s27, 1
      %p281 = scmp.ne.s32.totalorder %s276, %s278
      %p282 = scmp.eq.s32.totalorder %s27, 0
      %p283 = por %p281, %p282
      %p284 = scmp.ne.s32.totalorder %s276, %s278
      %p285 = scmp.eq.s32.totalorder %s32, 1
      %p286 = por %p284, %p285
      %p287 = scmp.ne.s32.totalorder %s278, %s279
      %p288 = scmp.eq.s32.totalorder %s32, 0
      %p289 = por %p287, %p288
      %p290 = scmp.ne.s32.totalorder %s278, %s279
      %p291 = scmp.eq.s32.totalorder %s33, 1
      %p292 = por %p290, %p291
      %p294 = scmp.ne.s32.totalorder %s279, %s293
      %p295 = scmp.eq.s32.totalorder %s33, 0
      %p296 = por %p294, %p295
      %s298 = sadd.s32 %s297, 1
      %p301 = scmp.eq.s32.totalorder %s27, 1
      %p302 = scmp.ne.s32.totalorder %s297, %s299
      %p303 = scmp.eq.s32.totalorder %s27, 0
      %p304 = por %p302, %p303
      %p305 = scmp.ne.s32.totalorder %s297, %s299
      %p306 = scmp.eq.s32.totalorder %s32, 1
      %p307 = por %p305, %p306
      %p308 = scmp.ne.s32.totalorder %s299, %s300
      %p309 = scmp.eq.s32.totalorder %s32, 0
      %p310 = por %p308, %p309
      %p311 = scmp.ne.s32.totalorder %s299, %s300
      %p312 = scmp.eq.s32.totalorder %s33, 1
      %p313 = por %p311, %p312
      %p315 = scmp.ne.s32.totalorder %s300, %s314
      %p316 = scmp.eq.s32.totalorder %s33, 0
      %p317 = por %p315, %p316
      %s318 = ssub.s32 %s27, %s34
      %p319 = scmp.eq.s32.totalorder %s318, 0
      %s321 = sadd.s32 %s320, 1
      %s322 = scalar_select %p319, %s320, %s321
      %p325 = pneg %p319
      %p326 = scmp.eq.s32.totalorder %s27, 1
      %p327 = por %p325, %p326
      %p328 = scmp.ne.s32.totalorder %s320, %s323
      %p329 = scmp.eq.s32.totalorder %s27, 0
      %p330 = por %p328, %p329
      %p331 = scmp.ne.s32.totalorder %s320, %s323
      %p332 = scmp.eq.s32.totalorder %s32, 1
      %p333 = por %p331, %p332
      %p334 = scmp.ne.s32.totalorder %s323, %s324
      %p335 = scmp.eq.s32.totalorder %s32, 0
      %p336 = por %p334, %p335
      %p337 = scmp.ne.s32.totalorder %s323, %s324
      %p338 = scmp.eq.s32.totalorder %s33, 1
      %p339 = por %p337, %p338
      %p341 = scmp.ne.s32.totalorder %s324, %s340
      %p342 = scmp.eq.s32.totalorder %s33, 0
      %p343 = por %p341, %p342
      %p344 = scmp.le.s32.totalorder 1, %s27
      %p345 = scmp.lt.s32.totalorder %s27, 3
      %p346 = pnand %p344, %p345
      %p347 = pneg %p346
      // Predicated region
      $region9: #{multi_input_forward.1} parent=5 // pred_check
        _
      $region10: #{multi_input_forward.1} parent=5 // pred_check_branch
        %349 = sbr.rel (%p346) target = $region12
      $region11: #{multi_input_forward.1} parent=5 // pred_region
        %s350 = ssub.s32 %s27, 1
        // Predicated region
        $region13: #{multi_input_forward.1} parent=11 // pred_check
          %p351 = pneg %p100
        $region14: #{multi_input_forward.1} parent=11 // pred_check_branch
          %353 = sbr.rel (%p351) target = $region16
        $region15: #{multi_input_forward.1} parent=11 // pred_region
          _
        $region16: #{multi_input_forward.1} parent=11 // pred_fallthru
          _
        // Predicated region
        $region17: #{multi_input_forward.1} parent=11 // pred_check
          %p354 = pneg %p121
        $region18: #{multi_input_forward.1} parent=11 // pred_check_branch
          %356 = sbr.rel (%p354) target = $region20
        $region19: #{multi_input_forward.1} parent=11 // pred_region
          _
        $region20: #{multi_input_forward.1} parent=11 // pred_fallthru
          _
        // Predicated region
        $region21: #{multi_input_forward.1} parent=11 // pred_check
          %p357 = pneg %p142
        $region22: #{multi_input_forward.1} parent=11 // pred_check_branch
          %359 = sbr.rel (%p357) target = $region24
        $region23: #{multi_input_forward.1} parent=11 // pred_region
          %361 = vsyncadd [#allocation13], 0
          %s362 = sshll.u32 %s4, 4
          %s363 = int_to_ptr.hbm [resolvable:$true] %s362
          %s364 = sshll.u32 [#allocation12], 4
          %s365 = int_to_ptr.vmem [resolvable:$true] %s364
          %370 = dma.hbm_to_vmem [thread:$0]  %s363, 4608, %s365, [#allocation13], 128, 128, 8
        $region24: #{multi_input_forward.1} parent=11 // pred_fallthru
          _
        // Predicated region
        $region25: #{multi_input_forward.1} parent=11 // pred_check
          %p371 = pneg %p163
        $region26: #{multi_input_forward.1} parent=11 // pred_check_branch
          %373 = sbr.rel (%p371) target = $region28
        $region27: #{multi_input_forward.1} parent=11 // pred_region
          _
        $region28: #{multi_input_forward.1} parent=11 // pred_fallthru
          _
        // Predicated region
        $region29: #{multi_input_forward.1} parent=11 // pred_check
          %p374 = pneg %p184
        $region30: #{multi_input_forward.1} parent=11 // pred_check_branch
          %376 = sbr.rel (%p374) target = $region32
        $region31: #{multi_input_forward.1} parent=11 // pred_region
          %378 = vsyncadd [#allocation13], 0
          %s379 = sshll.u32 %s6, 4
          %s380 = int_to_ptr.hbm [resolvable:$true] %s379
          %s381 = sshll.u32 [#allocation14], 4
          %s382 = int_to_ptr.vmem [resolvable:$true] %s381
          %387 = dma.hbm_to_vmem [thread:$0]  %s380, 9216, %s382, [#allocation13], 128, 128, 8
        $region32: #{multi_input_forward.1} parent=11 // pred_fallthru
          _
        // Predicated region
        $region33: #{multi_input_forward.1} parent=11 // pred_check
          %p388 = pneg %p205
        $region34: #{multi_input_forward.1} parent=11 // pred_check_branch
          %390 = sbr.rel (%p388) target = $region36
        $region35: #{multi_input_forward.1} parent=11 // pred_region
          _
        $region36: #{multi_input_forward.1} parent=11 // pred_fallthru
          _
        // Predicated region
        $region37: #{multi_input_forward.1} parent=11 // pred_check
          %p391 = pneg %p226
        $region38: #{multi_input_forward.1} parent=11 // pred_check_branch
          %393 = sbr.rel (%p391) target = $region40
        $region39: #{multi_input_forward.1} parent=11 // pred_region
          _
        $region40: #{multi_input_forward.1} parent=11 // pred_fallthru
          _
        // Predicated region
        $region41: #{multi_input_forward.1} parent=11 // pred_check
          %p394 = pneg %p247
        $region42: #{multi_input_forward.1} parent=11 // pred_check_branch
          %396 = sbr.rel (%p394) target = $region44
        $region43: #{multi_input_forward.1} parent=11 // pred_region
          _
        $region44: #{multi_input_forward.1} parent=11 // pred_fallthru
          _
        // Predicated region
        $region45: #{multi_input_forward.1} parent=11 // pred_check
          %p397 = pneg %p268
        $region46: #{multi_input_forward.1} parent=11 // pred_check_branch
          %399 = sbr.rel (%p397) target = $region48
        $region47: #{multi_input_forward.1} parent=11 // pred_region
          %401 = vsyncadd [#allocation16], 0
          %s402 = sshll.u32 %s10, 4
          %s403 = int_to_ptr.hbm [resolvable:$true] %s402
          %s404 = sshll.u32 [#allocation15], 4
          %s405 = int_to_ptr.vmem [resolvable:$true] %s404
          %410 = dma.hbm_to_vmem [thread:$0]  %s403, 8192, %s405, [#allocation16], 128, 128, 8
        $region48: #{multi_input_forward.1} parent=11 // pred_fallthru
          _
        // Predicated region
        $region49: #{multi_input_forward.1} parent=11 // pred_check
          %p411 = pneg %p289
        $region50: #{multi_input_forward.1} parent=11 // pred_check_branch
          %413 = sbr.rel (%p411) target = $region52
        $region51: #{multi_input_forward.1} parent=11 // pred_region
          _
        $region52: #{multi_input_forward.1} parent=11 // pred_fallthru
          _
        // Predicated region
        $region53: #{multi_input_forward.1} parent=11 // pred_check
          %p414 = pneg %p310
        $region54: #{multi_input_forward.1} parent=11 // pred_check_branch
          %416 = sbr.rel (%p414) target = $region56
        $region55: #{multi_input_forward.1} parent=11 // pred_region
          %418 = vsyncadd [#allocation16], 0
          %s420 = sshll.u32 %s12, 4
          %s421 = int_to_ptr.hbm [resolvable:$true] %s420
          %s422 = sshll.u32 [#allocation17], 4
          %s423 = int_to_ptr.vmem [resolvable:$true] %s422
          %425 = dma.hbm_to_vmem [thread:$0]  %s421, 16, %s423, [#allocation16]
        $region56: #{multi_input_forward.1} parent=11 // pred_fallthru
          _
      $region12: #{multi_input_forward.1} parent=5 // pred_fallthru
        _
      %p426 = scmp.lt.s32.totalorder %s27, 2
      // Predicated region
      $region57: #{multi_input_forward.1} parent=5 // pred_check
        %p427 = pneg %p426
      $region58: #{multi_input_forward.1} parent=5 // pred_check_branch
        %429 = sbr.rel (%p427) target = $region60
      $region59: #{multi_input_forward.1} parent=5 // pred_region
        // Predicated region
        $region61: #{multi_input_forward.1} parent=59 // pred_check
          %p430 = pneg %p47
        $region62: #{multi_input_forward.1} parent=59 // pred_check_branch
          %432 = sbr.rel (%p430) target = $region64
        $region63: #{multi_input_forward.1} parent=59 // pred_region
          %s433 = sand.u32 %s37, 1
          %s434 = scalar_lea.sflag [#allocation10], %s433
          %s435 = sand.u32 %s37, 1
          %s436 = smul.addr %s435, 384
          %s437 = scalar_lea.vmem [#allocation9], %s436
          %439 = vsyncadd %s434, 0
          %s440 = smul.addr %s27, 48
          %s441 = smul.addr %s440, 8
          %s442 = scalar_lea.hbm %s0, %s441
          %s443 = sshll.u32 %s442, 4
          %s444 = int_to_ptr.hbm [resolvable:$true] %s443
          %s445 = sshll.u32 %s437, 4
          %s446 = int_to_ptr.vmem [resolvable:$true] %s445
          %451 = dma.hbm_to_vmem [thread:$0]  %s444, 6144, %s446, %s434, 128, 128, 8
        $region64: #{multi_input_forward.1} parent=59 // pred_fallthru
          _
        // Predicated region
        $region65: #{multi_input_forward.1} parent=59 // pred_check
          %p452 = pneg %p73
        $region66: #{multi_input_forward.1} parent=59 // pred_check_branch
          %454 = sbr.rel (%p452) target = $region68
        $region67: #{multi_input_forward.1} parent=59 // pred_region
          %p455 = scmp.lt.s32.totalorder %s27, 1
          %s456 = scalar_select %p455, %s27, 1
          %s457 = scalar_lea.vmem %s1, %s456
        $region68: #{multi_input_forward.1} parent=59 // pred_fallthru
          _
      $region60: #{multi_input_forward.1} parent=5 // pred_fallthru
        _
      %p458 = scmp.le.s32.totalorder 1, %s27
      %p459 = scmp.lt.s32.totalorder %s27, 3
      %p460 = pnand %p458, %p459
      %p461 = pneg %p460
      // Predicated region
      $region69: #{multi_input_forward.1} parent=5 // pred_check
        _
      $region70: #{multi_input_forward.1} parent=5 // pred_check_branch
        %463 = sbr.rel (%p460) target = $region72
      $region71: #{multi_input_forward.1} parent=5 // pred_region
        %s464 = ssub.s32 %s27, 1
        %s465 = sand.u32 %s40, 1
        %s466 = scalar_lea.sflag [#allocation10], %s465
        %s467 = sand.u32 %s40, 1
        %s468 = smul.addr %s467, 384
        %s469 = scalar_lea.vmem [#allocation9], %s468
        // Predicated region
        $region73: #{multi_input_forward.1} parent=71 // pred_check
          %p470 = pneg %p53
        $region74: #{multi_input_forward.1} parent=71 // pred_check_branch
          %472 = sbr.rel (%p470) target = $region76
        $region75: #{multi_input_forward.1} parent=71 // pred_region
          %474 = dma.done %s466, 6144
        $region76: #{multi_input_forward.1} parent=71 // pred_fallthru
          _
        // Predicated region
        $region77: #{multi_input_forward.1} parent=71 // pred_check
          %p475 = pneg %p142
        $region78: #{multi_input_forward.1} parent=71 // pred_check_branch
          %477 = sbr.rel (%p475) target = $region80
        $region79: #{multi_input_forward.1} parent=71 // pred_region
          %479 = dma.done [#allocation13], 4608
        $region80: #{multi_input_forward.1} parent=71 // pred_fallthru
          _
        // Predicated region
        $region81: #{multi_input_forward.1} parent=71 // pred_check
          %p480 = pneg %p184
        $region82: #{multi_input_forward.1} parent=71 // pred_check_branch
          %482 = sbr.rel (%p480) target = $region84
        $region83: #{multi_input_forward.1} parent=71 // pred_region
          %484 = dma.done [#allocation13], 9216
        $region84: #{multi_input_forward.1} parent=71 // pred_fallthru
          _
        // Predicated region
        $region85: #{multi_input_forward.1} parent=71 // pred_check
          %p485 = pneg %p268
        $region86: #{multi_input_forward.1} parent=71 // pred_check_branch
          %487 = sbr.rel (%p485) target = $region88
        $region87: #{multi_input_forward.1} parent=71 // pred_region
          %489 = dma.done [#allocation16], 8192
        $region88: #{multi_input_forward.1} parent=71 // pred_fallthru
          _
        // Predicated region
        $region89: #{multi_input_forward.1} parent=71 // pred_check
          %p490 = pneg %p310
        $region90: #{multi_input_forward.1} parent=71 // pred_check_branch
          %492 = sbr.rel (%p490) target = $region92
        $region91: #{multi_input_forward.1} parent=71 // pred_region
          %494 = dma.done [#allocation16], 16
        $region92: #{multi_input_forward.1} parent=71 // pred_fallthru
          _
        %s495 = sand.u32 %s40, 1
        %s496 = scalar_lea.sflag [#allocation10], %s495
        %s497 = sand.u32 %s40, 1
        %s498 = smul.addr %s497, 384
        %s499 = scalar_lea.vmem [#allocation9], %s498
        %p500 = pneg %p53
        %p501 = pneg %p50
        %p502 = scmp.lt.s32.totalorder %s32, 1
        %s503 = scalar_select %p502, %s32, 1
        %s504 = scalar_lea.vmem %s1, %s503
        %p505 = pneg %p79
        %p506 = pneg %p76
        %p507 = pneg %p100
        %p508 = pneg %p97
        %p509 = pneg %p121
        %p510 = pneg %p118
        %p511 = pneg %p142
        %p512 = pneg %p139
        %p513 = pneg %p163
        %p514 = pneg %p160
        %p515 = pneg %p184
        %p516 = pneg %p181
        %p517 = pneg %p205
        %p518 = pneg %p202
        %p519 = pneg %p226
        %p520 = pneg %p223
        %p521 = pneg %p247
        %p522 = pneg %p244
        %p523 = pneg %p268
        %p524 = pneg %p265
        %p525 = pneg %p289
        %p526 = pneg %p286
        %p527 = pneg %p310
        %p528 = pneg %p307
        %p529 = pneg %p336
        %p530 = pneg %p333
        %s531 = sand.u32 %s323, 1
        %s532 = scalar_lea.sflag [#allocation11], %s531
        %s533 = sand.u32 %s323, 1
        %s534 = scalar_lea.vmem [#allocation18], %s533
        %p535 = scmp.lt.s32.totalorder %s32, 1
        %s536 = scalar_select %p535, %s32, 1
        %s537 = scalar_lea.vmem %s1, %s536
        %538 = vst [vmem:[#allocation2] sm:$0x1] 0.0
        %539 = vst [vmem:[#allocation2 + $0x88] sm:$0x1] 0.0
        %540 = vst [vmem:[#allocation2 + $0x110] sm:$0x1] 0.0
        %541 = vst [vmem:[#allocation2 + $0x81] sm:$0x1] 0.0
        %542 = vst [vmem:[#allocation2 + $0x109] sm:$0x1] 0.0
        %543 = vst [vmem:[#allocation2 + $0x191] sm:$0x1] 0.0
        %vm544 = vcmask 261120
        %545 = vst.msk [vmem:[#allocation4] sm:$0xff] %vm544, 0.0
        %546 = vst.msk [vmem:[#allocation4 + $0x8] sm:$0xff] %vm544, 0.0
        %547 = vst.msk [vmem:[#allocation4 + $0x10] sm:$0xff] %vm544, 0.0
        %548 = vst.msk [vmem:[#allocation4 + $0x18] sm:$0xff] %vm544, 0.0
        %549 = vst.msk [vmem:[#allocation4 + $0x20] sm:$0xff] %vm544, 0.0
        %550 = vst.msk [vmem:[#allocation4 + $0x28] sm:$0xff] %vm544, 0.0
        %551 = vst.msk [vmem:[#allocation4 + $0x30] sm:$0xff] %vm544, 0.0
        %552 = vst.msk [vmem:[#allocation4 + $0x38] sm:$0xff] %vm544, 0.0
        %vm553 = vcmask 254976
        %554 = vst.msk [vmem:[#allocation4 + $0x40] sm:$0x3] %vm553, 0.0
        %s555 = scalar_lea.vmem [#allocation4], 4680
        %556 = vst.msk [vmem:[%s555] sm:$0xff] %vm544, 0.0
        %557 = vst.msk [vmem:[%s555 + $0x8] sm:$0xff] %vm544, 0.0
        %558 = vst.msk [vmem:[%s555 + $0x10] sm:$0xff] %vm544, 0.0
        %559 = vst.msk [vmem:[%s555 + $0x18] sm:$0xff] %vm544, 0.0
        %560 = vst.msk [vmem:[%s555 + $0x20] sm:$0xff] %vm544, 0.0
        %561 = vst.msk [vmem:[%s555 + $0x28] sm:$0xff] %vm544, 0.0
        %562 = vst.msk [vmem:[%s555 + $0x30] sm:$0xff] %vm544, 0.0
        %563 = vst.msk [vmem:[%s555 + $0x38] sm:$0xff] %vm544, 0.0
        %564 = vst.msk [vmem:[%s555 + $0x40] sm:$0x3] %vm553, 0.0
        %vm565 = vcmask 253952
        %566 = vst.msk [vmem:[#allocation4] sm:$0x1] %vm565, 0.0
        %567 = vst.msk [vmem:[#allocation4 + $0x48] sm:$0x1] %vm565, 0.0
        %568 = vst.msk [vmem:[#allocation4 + $0x90] sm:$0x1] %vm565, 0.0
        %569 = vst.msk [vmem:[#allocation4 + $0xd8] sm:$0x1] %vm565, 0.0
        %570 = vst.msk [vmem:[#allocation4 + $0x120] sm:$0x1] %vm565, 0.0
        %571 = vst.msk [vmem:[#allocation4 + $0x168] sm:$0x1] %vm565, 0.0
        %572 = vst.msk [vmem:[#allocation4 + $0x1b0] sm:$0x1] %vm565, 0.0
        %573 = vst.msk [vmem:[#allocation4 + $0x1f8] sm:$0x1] %vm565, 0.0
        %574 = vst.msk [vmem:[#allocation4 + $0x240] sm:$0x1] %vm565, 0.0
        %575 = vst.msk [vmem:[#allocation4 + $0x288] sm:$0x1] %vm565, 0.0
        %576 = vst.msk [vmem:[#allocation4 + $0x2d0] sm:$0x1] %vm565, 0.0
        %577 = vst.msk [vmem:[#allocation4 + $0x318] sm:$0x1] %vm565, 0.0
        %578 = vst.msk [vmem:[#allocation4 + $0x360] sm:$0x1] %vm565, 0.0
        %579 = vst.msk [vmem:[#allocation4 + $0x3a8] sm:$0x1] %vm565, 0.0
        %580 = vst.msk [vmem:[#allocation4 + $0x3f0] sm:$0x1] %vm565, 0.0
        %581 = vst.msk [vmem:[#allocation4 + $0x438] sm:$0x1] %vm565, 0.0
        %582 = vst.msk [vmem:[#allocation4 + $0x480] sm:$0x1] %vm565, 0.0
        %583 = vst.msk [vmem:[#allocation4 + $0x4c8] sm:$0x1] %vm565, 0.0
        %584 = vst.msk [vmem:[#allocation4 + $0x510] sm:$0x1] %vm565, 0.0
        %585 = vst.msk [vmem:[#allocation4 + $0x558] sm:$0x1] %vm565, 0.0
        %586 = vst.msk [vmem:[#allocation4 + $0x5a0] sm:$0x1] %vm565, 0.0
        %587 = vst.msk [vmem:[#allocation4 + $0x5e8] sm:$0x1] %vm565, 0.0
        %588 = vst.msk [vmem:[#allocation4 + $0x630] sm:$0x1] %vm565, 0.0
        %589 = vst.msk [vmem:[#allocation4 + $0x678] sm:$0x1] %vm565, 0.0
        %590 = vst.msk [vmem:[#allocation4 + $0x6c0] sm:$0x1] %vm565, 0.0
        %591 = vst.msk [vmem:[#allocation4 + $0x708] sm:$0x1] %vm565, 0.0
        %592 = vst.msk [vmem:[#allocation4 + $0x750] sm:$0x1] %vm565, 0.0
        %593 = vst.msk [vmem:[#allocation4 + $0x798] sm:$0x1] %vm565, 0.0
        %594 = vst.msk [vmem:[#allocation4 + $0x7e0] sm:$0x1] %vm565, 0.0
        %595 = vst.msk [vmem:[#allocation4 + $0x828] sm:$0x1] %vm565, 0.0
        %596 = vst.msk [vmem:[#allocation4 + $0x870] sm:$0x1] %vm565, 0.0
        %597 = vst.msk [vmem:[#allocation4 + $0x8b8] sm:$0x1] %vm565, 0.0
        %598 = vst.msk [vmem:[#allocation4 + $0x900] sm:$0x1] %vm565, 0.0
        %599 = vst.msk [vmem:[#allocation4 + $0x948] sm:$0x1] %vm565, 0.0
        %600 = vst.msk [vmem:[#allocation4 + $0x990] sm:$0x1] %vm565, 0.0
        %601 = vst.msk [vmem:[#allocation4 + $0x9d8] sm:$0x1] %vm565, 0.0
        %602 = vst.msk [vmem:[#allocation4 + $0xa20] sm:$0x1] %vm565, 0.0
        %603 = vst.msk [vmem:[#allocation4 + $0xa68] sm:$0x1] %vm565, 0.0
        %604 = vst.msk [vmem:[#allocation4 + $0xab0] sm:$0x1] %vm565, 0.0
        %605 = vst.msk [vmem:[#allocation4 + $0xaf8] sm:$0x1] %vm565, 0.0
        %606 = vst.msk [vmem:[#allocation4 + $0xb40] sm:$0x1] %vm565, 0.0
        %607 = vst.msk [vmem:[#allocation4 + $0xb88] sm:$0x1] %vm565, 0.0
        %608 = vst.msk [vmem:[#allocation4 + $0xbd0] sm:$0x1] %vm565, 0.0
        %609 = vst.msk [vmem:[#allocation4 + $0xc18] sm:$0x1] %vm565, 0.0
        %610 = vst.msk [vmem:[#allocation4 + $0xc60] sm:$0x1] %vm565, 0.0
        %611 = vst.msk [vmem:[#allocation4 + $0xca8] sm:$0x1] %vm565, 0.0
        %612 = vst.msk [vmem:[#allocation4 + $0xcf0] sm:$0x1] %vm565, 0.0
        %613 = vst.msk [vmem:[#allocation4 + $0xd38] sm:$0x1] %vm565, 0.0
        %614 = vst.msk [vmem:[#allocation4 + $0xd80] sm:$0x1] %vm565, 0.0
        %615 = vst.msk [vmem:[#allocation4 + $0xdc8] sm:$0x1] %vm565, 0.0
        %616 = vst.msk [vmem:[#allocation4 + $0xe10] sm:$0x1] %vm565, 0.0
        %617 = vst.msk [vmem:[#allocation4 + $0xe58] sm:$0x1] %vm565, 0.0
        %618 = vst.msk [vmem:[#allocation4 + $0xea0] sm:$0x1] %vm565, 0.0
        %619 = vst.msk [vmem:[#allocation4 + $0xee8] sm:$0x1] %vm565, 0.0
        %620 = vst.msk [vmem:[#allocation4 + $0xf30] sm:$0x1] %vm565, 0.0
        %621 = vst.msk [vmem:[#allocation4 + $0xf78] sm:$0x1] %vm565, 0.0
        %622 = vst.msk [vmem:[#allocation4 + $0xfc0] sm:$0x1] %vm565, 0.0
        %623 = vst.msk [vmem:[#allocation4 + $0x1008] sm:$0x1] %vm565, 0.0
        %624 = vst.msk [vmem:[#allocation4 + $0x1050] sm:$0x1] %vm565, 0.0
        %625 = vst.msk [vmem:[#allocation4 + $0x1098] sm:$0x1] %vm565, 0.0
        %626 = vst.msk [vmem:[#allocation4 + $0x10e0] sm:$0x1] %vm565, 0.0
        %627 = vst.msk [vmem:[#allocation4 + $0x1128] sm:$0x1] %vm565, 0.0
        %628 = vst.msk [vmem:[#allocation4 + $0x1170] sm:$0x1] %vm565, 0.0
        %629 = vst.msk [vmem:[#allocation4 + $0x11b8] sm:$0x1] %vm565, 0.0
        %630 = vst.msk [vmem:[#allocation4 + $0x1200] sm:$0x1] %vm565, 0.0
        %631 = vst.msk [vmem:[#allocation4 + $0x1248] sm:$0x1] %vm565, 0.0
        %632 = vst.msk [vmem:[#allocation4 + $0x41] sm:$0x1] %vm565, 0.0
        %633 = vst.msk [vmem:[#allocation4 + $0x89] sm:$0x1] %vm565, 0.0
        %634 = vst.msk [vmem:[#allocation4 + $0xd1] sm:$0x1] %vm565, 0.0
        %635 = vst.msk [vmem:[#allocation4 + $0x119] sm:$0x1] %vm565, 0.0
        %636 = vst.msk [vmem:[#allocation4 + $0x161] sm:$0x1] %vm565, 0.0
        %637 = vst.msk [vmem:[#allocation4 + $0x1a9] sm:$0x1] %vm565, 0.0
        %638 = vst.msk [vmem:[#allocation4 + $0x1f1] sm:$0x1] %vm565, 0.0
        %639 = vst.msk [vmem:[#allocation4 + $0x239] sm:$0x1] %vm565, 0.0
        %640 = vst.msk [vmem:[#allocation4 + $0x281] sm:$0x1] %vm565, 0.0
        %641 = vst.msk [vmem:[#allocation4 + $0x2c9] sm:$0x1] %vm565, 0.0
        %642 = vst.msk [vmem:[#allocation4 + $0x311] sm:$0x1] %vm565, 0.0
        %643 = vst.msk [vmem:[#allocation4 + $0x359] sm:$0x1] %vm565, 0.0
        %644 = vst.msk [vmem:[#allocation4 + $0x3a1] sm:$0x1] %vm565, 0.0
        %645 = vst.msk [vmem:[#allocation4 + $0x3e9] sm:$0x1] %vm565, 0.0
        %646 = vst.msk [vmem:[#allocation4 + $0x431] sm:$0x1] %vm565, 0.0
        %647 = vst.msk [vmem:[#allocation4 + $0x479] sm:$0x1] %vm565, 0.0
        %648 = vst.msk [vmem:[#allocation4 + $0x4c1] sm:$0x1] %vm565, 0.0
        %649 = vst.msk [vmem:[#allocation4 + $0x509] sm:$0x1] %vm565, 0.0
        %650 = vst.msk [vmem:[#allocation4 + $0x551] sm:$0x1] %vm565, 0.0
        %651 = vst.msk [vmem:[#allocation4 + $0x599] sm:$0x1] %vm565, 0.0
        %652 = vst.msk [vmem:[#allocation4 + $0x5e1] sm:$0x1] %vm565, 0.0
        %653 = vst.msk [vmem:[#allocation4 + $0x629] sm:$0x1] %vm565, 0.0
        %654 = vst.msk [vmem:[#allocation4 + $0x671] sm:$0x1] %vm565, 0.0
        %655 = vst.msk [vmem:[#allocation4 + $0x6b9] sm:$0x1] %vm565, 0.0
        %656 = vst.msk [vmem:[#allocation4 + $0x701] sm:$0x1] %vm565, 0.0
        %657 = vst.msk [vmem:[#allocation4 + $0x749] sm:$0x1] %vm565, 0.0
        %658 = vst.msk [vmem:[#allocation4 + $0x791] sm:$0x1] %vm565, 0.0
        %659 = vst.msk [vmem:[#allocation4 + $0x7d9] sm:$0x1] %vm565, 0.0
        %660 = vst.msk [vmem:[#allocation4 + $0x821] sm:$0x1] %vm565, 0.0
        %661 = vst.msk [vmem:[#allocation4 + $0x869] sm:$0x1] %vm565, 0.0
        %662 = vst.msk [vmem:[#allocation4 + $0x8b1] sm:$0x1] %vm565, 0.0
        %663 = vst.msk [vmem:[#allocation4 + $0x8f9] sm:$0x1] %vm565, 0.0
        %664 = vst.msk [vmem:[#allocation4 + $0x941] sm:$0x1] %vm565, 0.0
        %665 = vst.msk [vmem:[#allocation4 + $0x989] sm:$0x1] %vm565, 0.0
        %666 = vst.msk [vmem:[#allocation4 + $0x9d1] sm:$0x1] %vm565, 0.0
        %667 = vst.msk [vmem:[#allocation4 + $0xa19] sm:$0x1] %vm565, 0.0
        %668 = vst.msk [vmem:[#allocation4 + $0xa61] sm:$0x1] %vm565, 0.0
        %669 = vst.msk [vmem:[#allocation4 + $0xaa9] sm:$0x1] %vm565, 0.0
        %670 = vst.msk [vmem:[#allocation4 + $0xaf1] sm:$0x1] %vm565, 0.0
        %671 = vst.msk [vmem:[#allocation4 + $0xb39] sm:$0x1] %vm565, 0.0
        %672 = vst.msk [vmem:[#allocation4 + $0xb81] sm:$0x1] %vm565, 0.0
        %673 = vst.msk [vmem:[#allocation4 + $0xbc9] sm:$0x1] %vm565, 0.0
        %674 = vst.msk [vmem:[#allocation4 + $0xc11] sm:$0x1] %vm565, 0.0
        %675 = vst.msk [vmem:[#allocation4 + $0xc59] sm:$0x1] %vm565, 0.0
        %676 = vst.msk [vmem:[#allocation4 + $0xca1] sm:$0x1] %vm565, 0.0
        %677 = vst.msk [vmem:[#allocation4 + $0xce9] sm:$0x1] %vm565, 0.0
        %678 = vst.msk [vmem:[#allocation4 + $0xd31] sm:$0x1] %vm565, 0.0
        %679 = vst.msk [vmem:[#allocation4 + $0xd79] sm:$0x1] %vm565, 0.0
        %680 = vst.msk [vmem:[#allocation4 + $0xdc1] sm:$0x1] %vm565, 0.0
        %681 = vst.msk [vmem:[#allocation4 + $0xe09] sm:$0x1] %vm565, 0.0
        %682 = vst.msk [vmem:[#allocation4 + $0xe51] sm:$0x1] %vm565, 0.0
        %683 = vst.msk [vmem:[#allocation4 + $0xe99] sm:$0x1] %vm565, 0.0
        %684 = vst.msk [vmem:[#allocation4 + $0xee1] sm:$0x1] %vm565, 0.0
        %685 = vst.msk [vmem:[#allocation4 + $0xf29] sm:$0x1] %vm565, 0.0
        %686 = vst.msk [vmem:[#allocation4 + $0xf71] sm:$0x1] %vm565, 0.0
        %687 = vst.msk [vmem:[#allocation4 + $0xfb9] sm:$0x1] %vm565, 0.0
        %688 = vst.msk [vmem:[#allocation4 + $0x1001] sm:$0x1] %vm565, 0.0
        %689 = vst.msk [vmem:[#allocation4 + $0x1049] sm:$0x1] %vm565, 0.0
        %690 = vst.msk [vmem:[#allocation4 + $0x1091] sm:$0x1] %vm565, 0.0
        %691 = vst.msk [vmem:[#allocation4 + $0x10d9] sm:$0x1] %vm565, 0.0
        %692 = vst.msk [vmem:[#allocation4 + $0x1121] sm:$0x1] %vm565, 0.0
        %693 = vst.msk [vmem:[#allocation4 + $0x1169] sm:$0x1] %vm565, 0.0
        %694 = vst.msk [vmem:[#allocation4 + $0x11b1] sm:$0x1] %vm565, 0.0
        %695 = vst.msk [vmem:[#allocation4 + $0x11f9] sm:$0x1] %vm565, 0.0
        %696 = vst.msk [vmem:[#allocation4 + $0x1241] sm:$0x1] %vm565, 0.0
        %697 = vst.msk [vmem:[#allocation4 + $0x1289] sm:$0x1] %vm565, 0.0
        %vm698 = vcmask 523264
        %699 = vst.msk [vmem:[#allocation6] sm:$0xff] %vm698, 0.0
        %700 = vst.msk [vmem:[#allocation6 + $0x8] sm:$0xff] %vm698, 0.0
        %701 = vst.msk [vmem:[#allocation6 + $0x10] sm:$0xff] %vm698, 0.0
        %702 = vst.msk [vmem:[#allocation6 + $0x18] sm:$0xff] %vm698, 0.0
        %vm703 = vcmask 517120
        %704 = vst.msk [vmem:[#allocation6 + $0x20] sm:$0x3] %vm703, 0.0
        %s705 = scalar_lea.vmem [#allocation6], 1320
        %706 = vst.msk [vmem:[%s705] sm:$0xff] %vm698, 0.0
        %707 = vst.msk [vmem:[%s705 + $0x8] sm:$0xff] %vm698, 0.0
        %708 = vst.msk [vmem:[%s705 + $0x10] sm:$0xff] %vm698, 0.0
        %709 = vst.msk [vmem:[%s705 + $0x18] sm:$0xff] %vm698, 0.0
        %710 = vst.msk [vmem:[%s705 + $0x20] sm:$0x3] %vm703, 0.0
        %vm711 = vcmask 516096
        %712 = vst.msk [vmem:[#allocation6] sm:$0x1] %vm711, 0.0
        %713 = vst.msk [vmem:[#allocation6 + $0x28] sm:$0x1] %vm711, 0.0
        %714 = vst.msk [vmem:[#allocation6 + $0x50] sm:$0x1] %vm711, 0.0
        %715 = vst.msk [vmem:[#allocation6 + $0x78] sm:$0x1] %vm711, 0.0
        %716 = vst.msk [vmem:[#allocation6 + $0xa0] sm:$0x1] %vm711, 0.0
        %717 = vst.msk [vmem:[#allocation6 + $0xc8] sm:$0x1] %vm711, 0.0
        %718 = vst.msk [vmem:[#allocation6 + $0xf0] sm:$0x1] %vm711, 0.0
        %719 = vst.msk [vmem:[#allocation6 + $0x118] sm:$0x1] %vm711, 0.0
        %720 = vst.msk [vmem:[#allocation6 + $0x140] sm:$0x1] %vm711, 0.0
        %721 = vst.msk [vmem:[#allocation6 + $0x168] sm:$0x1] %vm711, 0.0
        %722 = vst.msk [vmem:[#allocation6 + $0x190] sm:$0x1] %vm711, 0.0
        %723 = vst.msk [vmem:[#allocation6 + $0x1b8] sm:$0x1] %vm711, 0.0
        %724 = vst.msk [vmem:[#allocation6 + $0x1e0] sm:$0x1] %vm711, 0.0
        %725 = vst.msk [vmem:[#allocation6 + $0x208] sm:$0x1] %vm711, 0.0
        %726 = vst.msk [vmem:[#allocation6 + $0x230] sm:$0x1] %vm711, 0.0
        %727 = vst.msk [vmem:[#allocation6 + $0x258] sm:$0x1] %vm711, 0.0
        %728 = vst.msk [vmem:[#allocation6 + $0x280] sm:$0x1] %vm711, 0.0
        %729 = vst.msk [vmem:[#allocation6 + $0x2a8] sm:$0x1] %vm711, 0.0
        %730 = vst.msk [vmem:[#allocation6 + $0x2d0] sm:$0x1] %vm711, 0.0
        %731 = vst.msk [vmem:[#allocation6 + $0x2f8] sm:$0x1] %vm711, 0.0
        %732 = vst.msk [vmem:[#allocation6 + $0x320] sm:$0x1] %vm711, 0.0
        %733 = vst.msk [vmem:[#allocation6 + $0x348] sm:$0x1] %vm711, 0.0
        %734 = vst.msk [vmem:[#allocation6 + $0x370] sm:$0x1] %vm711, 0.0
        %735 = vst.msk [vmem:[#allocation6 + $0x398] sm:$0x1] %vm711, 0.0
        %736 = vst.msk [vmem:[#allocation6 + $0x3c0] sm:$0x1] %vm711, 0.0
        %737 = vst.msk [vmem:[#allocation6 + $0x3e8] sm:$0x1] %vm711, 0.0
        %738 = vst.msk [vmem:[#allocation6 + $0x410] sm:$0x1] %vm711, 0.0
        %739 = vst.msk [vmem:[#allocation6 + $0x438] sm:$0x1] %vm711, 0.0
        %740 = vst.msk [vmem:[#allocation6 + $0x460] sm:$0x1] %vm711, 0.0
        %741 = vst.msk [vmem:[#allocation6 + $0x488] sm:$0x1] %vm711, 0.0
        %742 = vst.msk [vmem:[#allocation6 + $0x4b0] sm:$0x1] %vm711, 0.0
        %743 = vst.msk [vmem:[#allocation6 + $0x4d8] sm:$0x1] %vm711, 0.0
        %744 = vst.msk [vmem:[#allocation6 + $0x500] sm:$0x1] %vm711, 0.0
        %745 = vst.msk [vmem:[#allocation6 + $0x528] sm:$0x1] %vm711, 0.0
        %746 = vst.msk [vmem:[#allocation6 + $0x21] sm:$0x1] %vm711, 0.0
        %747 = vst.msk [vmem:[#allocation6 + $0x49] sm:$0x1] %vm711, 0.0
        %748 = vst.msk [vmem:[#allocation6 + $0x71] sm:$0x1] %vm711, 0.0
        %749 = vst.msk [vmem:[#allocation6 + $0x99] sm:$0x1] %vm711, 0.0
        %750 = vst.msk [vmem:[#allocation6 + $0xc1] sm:$0x1] %vm711, 0.0
        %751 = vst.msk [vmem:[#allocation6 + $0xe9] sm:$0x1] %vm711, 0.0
        %752 = vst.msk [vmem:[#allocation6 + $0x111] sm:$0x1] %vm711, 0.0
        %753 = vst.msk [vmem:[#allocation6 + $0x139] sm:$0x1] %vm711, 0.0
        %754 = vst.msk [vmem:[#allocation6 + $0x161] sm:$0x1] %vm711, 0.0
        %755 = vst.msk [vmem:[#allocation6 + $0x189] sm:$0x1] %vm711, 0.0
        %756 = vst.msk [vmem:[#allocation6 + $0x1b1] sm:$0x1] %vm711, 0.0
        %757 = vst.msk [vmem:[#allocation6 + $0x1d9] sm:$0x1] %vm711, 0.0
        %758 = vst.msk [vmem:[#allocation6 + $0x201] sm:$0x1] %vm711, 0.0
        %759 = vst.msk [vmem:[#allocation6 + $0x229] sm:$0x1] %vm711, 0.0
        %760 = vst.msk [vmem:[#allocation6 + $0x251] sm:$0x1] %vm711, 0.0
        %761 = vst.msk [vmem:[#allocation6 + $0x279] sm:$0x1] %vm711, 0.0
        %762 = vst.msk [vmem:[#allocation6 + $0x2a1] sm:$0x1] %vm711, 0.0
        %763 = vst.msk [vmem:[#allocation6 + $0x2c9] sm:$0x1] %vm711, 0.0
        %764 = vst.msk [vmem:[#allocation6 + $0x2f1] sm:$0x1] %vm711, 0.0
        %765 = vst.msk [vmem:[#allocation6 + $0x319] sm:$0x1] %vm711, 0.0
        %766 = vst.msk [vmem:[#allocation6 + $0x341] sm:$0x1] %vm711, 0.0
        %767 = vst.msk [vmem:[#allocation6 + $0x369] sm:$0x1] %vm711, 0.0
        %768 = vst.msk [vmem:[#allocation6 + $0x391] sm:$0x1] %vm711, 0.0
        %769 = vst.msk [vmem:[#allocation6 + $0x3b9] sm:$0x1] %vm711, 0.0
        %770 = vst.msk [vmem:[#allocation6 + $0x3e1] sm:$0x1] %vm711, 0.0
        %771 = vst.msk [vmem:[#allocation6 + $0x409] sm:$0x1] %vm711, 0.0
        %772 = vst.msk [vmem:[#allocation6 + $0x431] sm:$0x1] %vm711, 0.0
        %773 = vst.msk [vmem:[#allocation6 + $0x459] sm:$0x1] %vm711, 0.0
        %774 = vst.msk [vmem:[#allocation6 + $0x481] sm:$0x1] %vm711, 0.0
        %775 = vst.msk [vmem:[#allocation6 + $0x4a9] sm:$0x1] %vm711, 0.0
        %776 = vst.msk [vmem:[#allocation6 + $0x4d1] sm:$0x1] %vm711, 0.0
        %777 = vst.msk [vmem:[#allocation6 + $0x4f9] sm:$0x1] %vm711, 0.0
        %778 = vst.msk [vmem:[#allocation6 + $0x521] sm:$0x1] %vm711, 0.0
        %779 = vst.msk [vmem:[#allocation6 + $0x549] sm:$0x1] %vm711, 0.0
        %v780 = vld [vmem:[%s469] sm:$0xff]
        %v781 = vld [vmem:[%s469 + $0x8] sm:$0xff]
        %v782 = vld [vmem:[%s469 + $0x10] sm:$0xff]
        %v783 = vld [vmem:[%s469 + $0x18] sm:$0xff]
        %v784 = vld [vmem:[%s469 + $0x20] sm:$0xff]
        %v785 = vld [vmem:[%s469 + $0x28] sm:$0xff]
        %v786 = vld [vmem:[%s469 + $0x30] sm:$0xff]
        %v787 = vld [vmem:[%s469 + $0x38] sm:$0xff]
        %v788 = vld [vmem:[%s469 + $0x40] sm:$0xff]
        %v789 = vld [vmem:[%s469 + $0x48] sm:$0xff]
        %v790 = vld [vmem:[%s469 + $0x50] sm:$0xff]
        %v791 = vld [vmem:[%s469 + $0x58] sm:$0xff]
        %v792 = vld [vmem:[%s469 + $0x60] sm:$0xff]
        %v793 = vld [vmem:[%s469 + $0x68] sm:$0xff]
        %v794 = vld [vmem:[%s469 + $0x70] sm:$0xff]
        %v795 = vld [vmem:[%s469 + $0x78] sm:$0xff]
        %v796 = vld [vmem:[%s469 + $0x80] sm:$0xff]
        %v797 = vld [vmem:[%s469 + $0x88] sm:$0xff]
        %v798 = vld [vmem:[%s469 + $0x90] sm:$0xff]
        %v799 = vld [vmem:[%s469 + $0x98] sm:$0xff]
        %v800 = vld [vmem:[%s469 + $0xa0] sm:$0xff]
        %v801 = vld [vmem:[%s469 + $0xa8] sm:$0xff]
        %v802 = vld [vmem:[%s469 + $0xb0] sm:$0xff]
        %v803 = vld [vmem:[%s469 + $0xb8] sm:$0xff]
        %v804 = vld [vmem:[%s469 + $0xc0] sm:$0xff]
        %v805 = vld [vmem:[%s469 + $0xc8] sm:$0xff]
        %v806 = vld [vmem:[%s469 + $0xd0] sm:$0xff]
        %v807 = vld [vmem:[%s469 + $0xd8] sm:$0xff]
        %v808 = vld [vmem:[%s469 + $0xe0] sm:$0xff]
        %v809 = vld [vmem:[%s469 + $0xe8] sm:$0xff]
        %v810 = vld [vmem:[%s469 + $0xf0] sm:$0xff]
        %v811 = vld [vmem:[%s469 + $0xf8] sm:$0xff]
        %v812 = vld [vmem:[%s469 + $0x100] sm:$0xff]
        %v813 = vld [vmem:[%s469 + $0x108] sm:$0xff]
        %v814 = vld [vmem:[%s469 + $0x110] sm:$0xff]
        %v815 = vld [vmem:[%s469 + $0x118] sm:$0xff]
        %v816 = vld [vmem:[%s469 + $0x120] sm:$0xff]
        %v817 = vld [vmem:[%s469 + $0x128] sm:$0xff]
        %v818 = vld [vmem:[%s469 + $0x130] sm:$0xff]
        %v819 = vld [vmem:[%s469 + $0x138] sm:$0xff]
        %v820 = vld [vmem:[%s469 + $0x140] sm:$0xff]
        %v821 = vld [vmem:[%s469 + $0x148] sm:$0xff]
        %v822 = vld [vmem:[%s469 + $0x150] sm:$0xff]
        %v823 = vld [vmem:[%s469 + $0x158] sm:$0xff]
        %v824 = vld [vmem:[%s469 + $0x160] sm:$0xff]
        %v825 = vld [vmem:[%s469 + $0x168] sm:$0xff]
        %v826 = vld [vmem:[%s469 + $0x170] sm:$0xff]
        %v827 = vld [vmem:[%s469 + $0x178] sm:$0xff]
        %828 = vst [vmem:[#allocation2 + $0x1] sm:$0xff] %v780
        %829 = vst [vmem:[#allocation2 + $0x9] sm:$0xff] %v781
        %830 = vst [vmem:[#allocation2 + $0x11] sm:$0xff] %v782
        %831 = vst [vmem:[#allocation2 + $0x19] sm:$0xff] %v783
        %832 = vst [vmem:[#allocation2 + $0x21] sm:$0xff] %v784
        %833 = vst [vmem:[#allocation2 + $0x29] sm:$0xff] %v785
        %834 = vst [vmem:[#allocation2 + $0x31] sm:$0xff] %v786
        %835 = vst [vmem:[#allocation2 + $0x39] sm:$0xff] %v787
        %836 = vst [vmem:[#allocation2 + $0x41] sm:$0xff] %v788
        %837 = vst [vmem:[#allocation2 + $0x49] sm:$0xff] %v789
        %838 = vst [vmem:[#allocation2 + $0x51] sm:$0xff] %v790
        %839 = vst [vmem:[#allocation2 + $0x59] sm:$0xff] %v791
        %840 = vst [vmem:[#allocation2 + $0x61] sm:$0xff] %v792
        %841 = vst [vmem:[#allocation2 + $0x69] sm:$0xff] %v793
        %842 = vst [vmem:[#allocation2 + $0x71] sm:$0xff] %v794
        %843 = vst [vmem:[#allocation2 + $0x79] sm:$0xff] %v795
        %844 = vst [vmem:[#allocation2 + $0x89] sm:$0xff] %v796
        %845 = vst [vmem:[#allocation2 + $0x91] sm:$0xff] %v797
        %846 = vst [vmem:[#allocation2 + $0x99] sm:$0xff] %v798
        %847 = vst [vmem:[#allocation2 + $0xa1] sm:$0xff] %v799
        %848 = vst [vmem:[#allocation2 + $0xa9] sm:$0xff] %v800
        %849 = vst [vmem:[#allocation2 + $0xb1] sm:$0xff] %v801
        %850 = vst [vmem:[#allocation2 + $0xb9] sm:$0xff] %v802
        %851 = vst [vmem:[#allocation2 + $0xc1] sm:$0xff] %v803
        %852 = vst [vmem:[#allocation2 + $0xc9] sm:$0xff] %v804
        %853 = vst [vmem:[#allocation2 + $0xd1] sm:$0xff] %v805
        %854 = vst [vmem:[#allocation2 + $0xd9] sm:$0xff] %v806
        %855 = vst [vmem:[#allocation2 + $0xe1] sm:$0xff] %v807
        %856 = vst [vmem:[#allocation2 + $0xe9] sm:$0xff] %v808
        %857 = vst [vmem:[#allocation2 + $0xf1] sm:$0xff] %v809
        %858 = vst [vmem:[#allocation2 + $0xf9] sm:$0xff] %v810
        %859 = vst [vmem:[#allocation2 + $0x101] sm:$0xff] %v811
        %860 = vst [vmem:[#allocation2 + $0x111] sm:$0xff] %v812
        %861 = vst [vmem:[#allocation2 + $0x119] sm:$0xff] %v813
        %862 = vst [vmem:[#allocation2 + $0x121] sm:$0xff] %v814
        %863 = vst [vmem:[#allocation2 + $0x129] sm:$0xff] %v815
        %864 = vst [vmem:[#allocation2 + $0x131] sm:$0xff] %v816
        %865 = vst [vmem:[#allocation2 + $0x139] sm:$0xff] %v817
        %866 = vst [vmem:[#allocation2 + $0x141] sm:$0xff] %v818
        %867 = vst [vmem:[#allocation2 + $0x149] sm:$0xff] %v819
        %868 = vst [vmem:[#allocation2 + $0x151] sm:$0xff] %v820
        %869 = vst [vmem:[#allocation2 + $0x159] sm:$0xff] %v821
        %870 = vst [vmem:[#allocation2 + $0x161] sm:$0xff] %v822
        %871 = vst [vmem:[#allocation2 + $0x169] sm:$0xff] %v823
        %872 = vst [vmem:[#allocation2 + $0x171] sm:$0xff] %v824
        %873 = vst [vmem:[#allocation2 + $0x179] sm:$0xff] %v825
        %874 = vst [vmem:[#allocation2 + $0x181] sm:$0xff] %v826
        %875 = vst [vmem:[#allocation2 + $0x189] sm:$0xff] %v827
        %v876 = vlaneseq
        %v877 = vshrl.u32 %v876, 7
        %v878 = vadd.s32 %v877, 8
        %v879 = vadd.s32 %v877, 16
        %v880 = vadd.s32 %v877, 24
        %v881 = vadd.s32 %v877, 32
        %v882 = vadd.s32 %v877, 40
        %v883 = vadd.s32 %v877, 48
        %v884 = vadd.s32 %v877, 56
        %v885 = vadd.s32 %v877, 64
        %v886 = vadd.s32 %v877, 72
        %v887 = vadd.s32 %v877, 80
        %v888 = vadd.s32 %v877, 88
        %v889 = vadd.s32 %v877, 96
        %v890 = vadd.s32 %v877, 104
        %v891 = vadd.s32 %v877, 112
        %v892 = vadd.s32 %v877, 120
        %v893 = vlaneseq
        %v894 = vand.u32 %v893, 127
        %vm895 = vcmp.eq.s32.totalorder %v877, %v894
        %vm896 = vcmp.eq.s32.totalorder %v878, %v894
        %vm897 = vcmp.eq.s32.totalorder %v879, %v894
        %vm898 = vcmp.eq.s32.totalorder %v880, %v894
        %vm899 = vcmp.eq.s32.totalorder %v881, %v894
        %vm900 = vcmp.eq.s32.totalorder %v882, %v894
        %vm901 = vcmp.eq.s32.totalorder %v883, %v894
        %vm902 = vcmp.eq.s32.totalorder %v884, %v894
        %vm903 = vcmp.eq.s32.totalorder %v885, %v894
        %vm904 = vcmp.eq.s32.totalorder %v886, %v894
        %vm905 = vcmp.eq.s32.totalorder %v887, %v894
        %vm906 = vcmp.eq.s32.totalorder %v888, %v894
        %vm907 = vcmp.eq.s32.totalorder %v889, %v894
        %vm908 = vcmp.eq.s32.totalorder %v890, %v894
        %vm909 = vcmp.eq.s32.totalorder %v891, %v894
        %vm910 = vcmp.eq.s32.totalorder %v892, %v894
        %v911 = vsel %vm895, 1, 0
        %v912 = vsel %vm896, 1, 0
        %v913 = vsel %vm897, 1, 0
        %v914 = vsel %vm898, 1, 0
        %v915 = vsel %vm899, 1, 0
        %v916 = vsel %vm900, 1, 0
        %v917 = vsel %vm901, 1, 0
        %v918 = vsel %vm902, 1, 0
        %v919 = vsel %vm903, 1, 0
        %v920 = vsel %vm904, 1, 0
        %v921 = vsel %vm905, 1, 0
        %v922 = vsel %vm906, 1, 0
        %v923 = vsel %vm907, 1, 0
        %v924 = vsel %vm908, 1, 0
        %v925 = vsel %vm909, 1, 0
        %v926 = vsel %vm910, 1, 0
        %v927 = vcvt.s32.f32 %v911
        %v928 = vcvt.s32.f32 %v912
        %v929 = vcvt.s32.f32 %v913
        %v930 = vcvt.s32.f32 %v914
        %v931 = vcvt.s32.f32 %v915
        %v932 = vcvt.s32.f32 %v916
        %v933 = vcvt.s32.f32 %v917
        %v934 = vcvt.s32.f32 %v918
        %v935 = vcvt.s32.f32 %v919
        %v936 = vcvt.s32.f32 %v920
        %v937 = vcvt.s32.f32 %v921
        %v938 = vcvt.s32.f32 %v922
        %v939 = vcvt.s32.f32 %v923
        %v940 = vcvt.s32.f32 %v924
        %v941 = vcvt.s32.f32 %v925
        %v942 = vcvt.s32.f32 %v926
        loop: start=0, step=1, limit=64
        $region93: #{multi_input_forward.1} parent=71 // loop_pre_header
          _
        $region94: #{multi_input_forward.1} parent=71 // loop_header
          %s944 = sphi 0, %s948
          %p945 = scmp.ge.s32.totalorder %s944, 64
        $region95: #{multi_input_forward.1} parent=71 // loop_header_branch
          %947 = sbr.rel (%p945) target = $region99
        $region96: #{multi_input_forward.1} parent=71 // loop_body
          %s949 = smul.u32 %s944, 2
          %s950 = scalar_lea.vmem [#allocation2], %s949
          %v951 = vld [vmem:[%s950] sm:$0x1]
          %s952 = sadd.s32 %s949, 1
          %s953 = scalar_lea.vmem [#allocation2], %s952
          %v954 = vld [vmem:[%s953] sm:$0x1]
          %s955 = sadd.s32 %s949, 2
          %s956 = scalar_lea.vmem [#allocation2], %s955
          %v957 = vld [vmem:[%s956] sm:$0x1]
          %s958 = sadd.s32 %s949, 3
          %s959 = scalar_lea.vmem [#allocation2], %s958
          %v960 = vld [vmem:[%s959] sm:$0x1]
          %s961 = sadd.s32 %s949, 136
          %s962 = scalar_lea.vmem [#allocation2], %s961
          %v963 = vld [vmem:[%s962] sm:$0x1]
          %s964 = sadd.s32 %s952, 136
          %s965 = scalar_lea.vmem [#allocation2], %s964
          %v966 = vld [vmem:[%s965] sm:$0x1]
          %s967 = sadd.s32 %s955, 136
          %s968 = scalar_lea.vmem [#allocation2], %s967
          %v969 = vld [vmem:[%s968] sm:$0x1]
          %s970 = sadd.s32 %s958, 136
          %s971 = scalar_lea.vmem [#allocation2], %s970
          %v972 = vld [vmem:[%s971] sm:$0x1]
          %s973 = sadd.s32 %s949, 272
          %s974 = scalar_lea.vmem [#allocation2], %s973
          %v975 = vld [vmem:[%s974] sm:$0x1]
          %s976 = sadd.s32 %s952, 272
          %s977 = scalar_lea.vmem [#allocation2], %s976
          %v978 = vld [vmem:[%s977] sm:$0x1]
          %s979 = sadd.s32 %s955, 272
          %s980 = scalar_lea.vmem [#allocation2], %s979
          %v981 = vld [vmem:[%s980] sm:$0x1]
          %s982 = sadd.s32 %s958, 272
          %s983 = scalar_lea.vmem [#allocation2], %s982
          %v984 = vld [vmem:[%s983] sm:$0x1]
          %v985 = vld [vmem:[%s2] sm:$0xff]
          %v986 = vld [vmem:[%s2 + $0x8] sm:$0xff]
          %v987 = vld [vmem:[%s2 + $0x10] sm:$0xff]
          %v988 = vld [vmem:[%s2 + $0x18] sm:$0xff]
          %990 = vrot.lane.b32.xlu0 %v951, 1
          %v991 = vpop.permute.xlu0 %990
          %vm993 = vcmask 7168
          %v994 = vsel %vm993, 0.0, %v991
          %995 = vrot.lane.b32.xlu0 %v951, 127
          %v996 = vpop.permute.xlu0 %995
          %vm998 = vcmask 1039360
          %v999 = vsel %vm998, %v996, 0.0
          %1001 = vrot.lane.b32.xlu0 %v954, 1
          %v1002 = vpop.permute.xlu0 %1001
          %v1004 = vsel %vm993, 0.0, %v1002
          %1005 = vrot.lane.b32.xlu0 %v954, 127
          %v1006 = vpop.permute.xlu0 %1005
          %v1008 = vsel %vm998, %v1006, 0.0
          %1010 = vrot.lane.b32.xlu0 %v957, 1
          %v1011 = vpop.permute.xlu0 %1010
          %v1013 = vsel %vm993, 0.0, %v1011
          %1014 = vrot.lane.b32.xlu0 %v957, 127
          %v1015 = vpop.permute.xlu0 %1014
          %v1017 = vsel %vm998, %v1015, 0.0
          %1019 = vrot.lane.b32.xlu0 %v963, 1
          %v1020 = vpop.permute.xlu0 %1019
          %v1022 = vsel %vm993, 0.0, %v1020
          %1023 = vrot.lane.b32.xlu0 %v963, 127
          %v1024 = vpop.permute.xlu0 %1023
          %v1026 = vsel %vm998, %v1024, 0.0
          %1028 = vrot.lane.b32.xlu0 %v966, 1
          %v1029 = vpop.permute.xlu0 %1028
          %v1031 = vsel %vm993, 0.0, %v1029
          %1032 = vrot.lane.b32.xlu0 %v966, 127
          %v1033 = vpop.permute.xlu0 %1032
          %v1035 = vsel %vm998, %v1033, 0.0
          %1037 = vrot.lane.b32.xlu0 %v969, 1
          %v1038 = vpop.permute.xlu0 %1037
          %v1040 = vsel %vm993, 0.0, %v1038
          %1041 = vrot.lane.b32.xlu0 %v969, 127
          %v1042 = vpop.permute.xlu0 %1041
          %v1044 = vsel %vm998, %v1042, 0.0
          %1046 = vrot.lane.b32.xlu0 %v975, 1
          %v1047 = vpop.permute.xlu0 %1046
          %v1049 = vsel %vm993, 0.0, %v1047
          %1050 = vrot.lane.b32.xlu0 %v975, 127
          %v1051 = vpop.permute.xlu0 %1050
          %v1053 = vsel %vm998, %v1051, 0.0
          %1055 = vrot.lane.b32.xlu0 %v978, 1
          %v1056 = vpop.permute.xlu0 %1055
          %v1058 = vsel %vm993, 0.0, %v1056
          %1059 = vrot.lane.b32.xlu0 %v978, 127
          %v1060 = vpop.permute.xlu0 %1059
          %v1062 = vsel %vm998, %v1060, 0.0
          %1064 = vrot.lane.b32.xlu0 %v981, 1
          %v1065 = vpop.permute.xlu0 %1064
          %v1067 = vsel %vm993, 0.0, %v1065
          %1068 = vrot.lane.b32.xlu0 %v981, 127
          %v1069 = vpop.permute.xlu0 %1068
          %v1071 = vsel %vm998, %v1069, 0.0
          %v1072 = vrot.slane %v951, 7
          %v1075 = vrot.slane %v999, 6
          %v1078 = vrot.slane %v1004, 5
          %v1080 = vrot.slane %v954, 4
          %v1083 = vrot.slane %v1008, 3
          %v1086 = vrot.slane %v1013, 2
          %v1088 = vrot.slane %v957, 1
          %v1091 = vrot.slane %v1022, 7
          %v1093 = vrot.slane %v963, 6
          %v1096 = vrot.slane %v1026, 5
          %v1099 = vrot.slane %v1031, 4
          %v1101 = vrot.slane %v966, 3
          %v1104 = vrot.slane %v1035, 2
          %v1107 = vrot.slane %v1040, 1
          %vm1109 = vcmask 1040384
          %v1110 = vsel %vm1109, %v994, %v1072
          %vm1111 = vcmask 1041408
          %v1112 = vsel %vm1111, %v1110, %v1075
          %vm1113 = vcmask 1042432
          %v1114 = vsel %vm1113, %v1112, %v1078
          %vm1115 = vcmask 1043456
          %v1116 = vsel %vm1115, %v1114, %v1080
          %vm1117 = vcmask 1044480
          %v1118 = vsel %vm1117, %v1116, %v1083
          %vm1119 = vcmask 1045504
          %v1120 = vsel %vm1119, %v1118, %v1086
          %vm1121 = vcmask 1046528
          %v1122 = vsel %vm1121, %v1120, %v1088
          %v1123 = vsel %vm1109, %v1017, %v1091
          %v1124 = vsel %vm1111, %v1123, %v1093
          %v1125 = vsel %vm1113, %v1124, %v1096
          %v1126 = vsel %vm1115, %v1125, %v1099
          %v1127 = vsel %vm1117, %v1126, %v1101
          %v1128 = vsel %vm1119, %v1127, %v1104
          %v1129 = vsel %vm1121, %v1128, %v1107
          %v1131 = vrot.slane %v1044, 7
          %v1134 = vrot.slane %v1049, 6
          %v1136 = vrot.slane %v975, 5
          %v1139 = vrot.slane %v1053, 4
          %v1142 = vrot.slane %v1058, 3
          %v1144 = vrot.slane %v978, 2
          %v1147 = vrot.slane %v1062, 1
          %v1149 = vrot.slane %v981, 7
          %v1152 = vrot.slane %v1071, 6
          %v1154 = vsel %vm1109, %v969, %v1131
          %v1155 = vsel %vm1111, %v1154, %v1134
          %v1156 = vsel %vm1113, %v1155, %v1136
          %v1157 = vsel %vm1115, %v1156, %v1139
          %v1158 = vsel %vm1117, %v1157, %v1142
          %v1159 = vsel %vm1119, %v1158, %v1144
          %v1160 = vsel %vm1121, %v1159, %v1147
          %v1161 = vsel %vm1109, %v1067, %v1149
          %v1162 = vsel %vm1111, %v1161, %v1152
          %v1163 = vsel %vm1113, %v1162, 0.0
          %v1165 = vsel %vm544, %v985, 0
          %v1168 = vsel %vm544, %v986, 0
          %v1171 = vsel %vm544, %v987, 0
          %v1174 = vsel %vm544, %v988, 0
          %1176 = vmatpush.msra.mxu0 0.0
          %1177 = vmatpush.msra.mxu0 0.0
          %1178 = vmatpush.msra.mxu0 0.0
          %1179 = vmatpush.msra.mxu0 0.0
          %1180 = vmatpush.msra.mxu0 0.0
          %1181 = vmatpush.msra.mxu0 0.0
          %1182 = vmatpush.msra.mxu0 0.0
          %1183 = vmatpush.msra.mxu0 0.0
          %1184 = vmatpush.msra.mxu0 0.0
          %1185 = vmatpush.msra.mxu0 0.0
          %1186 = vmatpush.msra.mxu0 0.0
          %1187 = vmatpush.msra.mxu0 0.0
          %1188 = vmatpush.msra.mxu0 %v1163
          %1189 = vmatpush.msra.mxu0 %v1160
          %1190 = vmatpush.msra.mxu0 %v1129
          %1191 = vmatpush.msra.mxu0 %v1122
          %1192 = vmatmul.f32.gmra.mxu0 %v1165
          %v1193 = vpop.f32.mrf.mxu0
          %v1194 = vadd.f32 0.0, %v1193
          %1195 = vmatmul.f32.gmra.mxu0 %v1168
          %v1196 = vpop.f32.mrf.mxu0
          %v1197 = vadd.f32 0.0, %v1196
          %1198 = vmatmul.f32.gmra.mxu0 %v1171
          %v1199 = vpop.f32.mrf.mxu0
          %v1200 = vadd.f32 0.0, %v1199
          %1201 = vmatmul.f32.gmra.mxu0 %v1174
          %v1202 = vpop.f32.mrf.mxu0
          %v1203 = vadd.f32 0.0, %v1202
          %1204 = vdwg.mxu0
          %1206 = vrot.lane.b32.xlu0 %v960, 1
          %v1207 = vpop.permute.xlu0 %1206
          %v1209 = vsel %vm993, 0.0, %v1207
          %1210 = vrot.lane.b32.xlu0 %v960, 127
          %v1211 = vpop.permute.xlu0 %1210
          %v1213 = vsel %vm998, %v1211, 0.0
          %1215 = vrot.lane.b32.xlu0 %v972, 1
          %v1216 = vpop.permute.xlu0 %1215
          %v1218 = vsel %vm993, 0.0, %v1216
          %1219 = vrot.lane.b32.xlu0 %v972, 127
          %v1220 = vpop.permute.xlu0 %1219
          %v1222 = vsel %vm998, %v1220, 0.0
          %1224 = vrot.lane.b32.xlu0 %v984, 1
          %v1225 = vpop.permute.xlu0 %1224
          %v1227 = vsel %vm993, 0.0, %v1225
          %1228 = vrot.lane.b32.xlu0 %v984, 127
          %v1229 = vpop.permute.xlu0 %1228
          %v1231 = vsel %vm998, %v1229, 0.0
          %v1232 = vrot.slane %v954, 7
          %v1234 = vrot.slane %v1008, 6
          %v1236 = vrot.slane %v1013, 5
          %v1238 = vrot.slane %v957, 4
          %v1241 = vrot.slane %v1017, 3
          %v1244 = vrot.slane %v1209, 2
          %v1246 = vrot.slane %v960, 1
          %v1248 = vrot.slane %v1031, 7
          %v1250 = vrot.slane %v966, 6
          %v1252 = vrot.slane %v1035, 5
          %v1254 = vrot.slane %v1040, 4
          %v1256 = vrot.slane %v969, 3
          %v1258 = vrot.slane %v1044, 2
          %v1261 = vrot.slane %v1218, 1
          %v1263 = vsel %vm1109, %v1004, %v1232
          %v1264 = vsel %vm1111, %v1263, %v1234
          %v1265 = vsel %vm1113, %v1264, %v1236
          %v1266 = vsel %vm1115, %v1265, %v1238
          %v1267 = vsel %vm1117, %v1266, %v1241
          %v1268 = vsel %vm1119, %v1267, %v1244
          %v1269 = vsel %vm1121, %v1268, %v1246
          %v1270 = vsel %vm1109, %v1213, %v1248
          %v1271 = vsel %vm1111, %v1270, %v1250
          %v1272 = vsel %vm1113, %v1271, %v1252
          %v1273 = vsel %vm1115, %v1272, %v1254
          %v1274 = vsel %vm1117, %v1273, %v1256
          %v1275 = vsel %vm1119, %v1274, %v1258
          %v1276 = vsel %vm1121, %v1275, %v1261
          %v1278 = vrot.slane %v1222, 7
          %v1280 = vrot.slane %v1058, 6
          %v1282 = vrot.slane %v978, 5
          %v1284 = vrot.slane %v1062, 4
          %v1287 = vrot.slane %v1067, 3
          %v1289 = vrot.slane %v981, 2
          %v1291 = vrot.slane %v1071, 1
          %v1293 = vrot.slane %v984, 7
          %v1296 = vrot.slane %v1231, 6
          %v1298 = vsel %vm1109, %v972, %v1278
          %v1299 = vsel %vm1111, %v1298, %v1280
          %v1300 = vsel %vm1113, %v1299, %v1282
          %v1301 = vsel %vm1115, %v1300, %v1284
          %v1302 = vsel %vm1117, %v1301, %v1287
          %v1303 = vsel %vm1119, %v1302, %v1289
          %v1304 = vsel %vm1121, %v1303, %v1291
          %v1305 = vsel %vm1109, %v1227, %v1293
          %v1306 = vsel %vm1111, %v1305, %v1296
          %v1307 = vsel %vm1113, %v1306, 0.0
          %1308 = vmatpush.msra.mxu0 0.0
          %1309 = vmatpush.msra.mxu0 0.0
          %1310 = vmatpush.msra.mxu0 0.0
          %1311 = vmatpush.msra.mxu0 0.0
          %1312 = vmatpush.msra.mxu0 0.0
          %1313 = vmatpush.msra.mxu0 0.0
          %1314 = vmatpush.msra.mxu0 0.0
          %1315 = vmatpush.msra.mxu0 0.0
          %1316 = vmatpush.msra.mxu0 0.0
          %1317 = vmatpush.msra.mxu0 0.0
          %1318 = vmatpush.msra.mxu0 0.0
          %1319 = vmatpush.msra.mxu0 0.0
          %1320 = vmatpush.msra.mxu0 %v1307
          %1321 = vmatpush.msra.mxu0 %v1304
          %1322 = vmatpush.msra.mxu0 %v1276
          %1323 = vmatpush.msra.mxu0 %v1269
          %1324 = vmatmul.f32.gmra.mxu0 %v1165
          %v1325 = vpop.f32.mrf.mxu0
          %v1326 = vadd.f32 0.0, %v1325
          %1327 = vmatmul.f32.gmra.mxu0 %v1168
          %v1328 = vpop.f32.mrf.mxu0
          %v1329 = vadd.f32 0.0, %v1328
          %1330 = vmatmul.f32.gmra.mxu0 %v1171
          %v1331 = vpop.f32.mrf.mxu0
          %v1332 = vadd.f32 0.0, %v1331
          %1333 = vmatmul.f32.gmra.mxu0 %v1174
          %v1334 = vpop.f32.mrf.mxu0
          %v1335 = vadd.f32 0.0, %v1334
          %1336 = vdwg.mxu0
          %v1337 = vmax.f32 %v1194, %v1326
          %v1338 = vmax.f32 %v1197, %v1329
          %v1339 = vmax.f32 %v1200, %v1332
          %v1340 = vmax.f32 %v1203, %v1335
          %v1341 = vld [vmem:[%s3] sm:$0xff]
          %v1342 = vld [vmem:[%s3 + $0x8] sm:$0xff]
          %v1343 = vld [vmem:[%s3 + $0x10] sm:$0xff]
          %v1344 = vld [vmem:[%s3 + $0x18] sm:$0xff]
          %1346 = vset.pattern.permute.xlu0 0
          %1347 = vperm.xlu0 %1346, %v1341
          %v1348 = vpop.permute.xlu0 %1347
          %1351 = vset.pattern.permute.xlu0 0
          %1352 = vperm.xlu0 %1351, %v1342
          %v1353 = vpop.permute.xlu0 %1352
          %1356 = vset.pattern.permute.xlu0 0
          %1357 = vperm.xlu0 %1356, %v1343
          %v1358 = vpop.permute.xlu0 %1357
          %1361 = vset.pattern.permute.xlu0 0
          %1362 = vperm.xlu0 %1361, %v1344
          %v1363 = vpop.permute.xlu0 %1362
          %v1365 = vadd.f32 %v1337, %v1348
          %v1366 = vadd.f32 %v1338, %v1353
          %v1367 = vadd.f32 %v1339, %v1358
          %v1368 = vadd.f32 %v1340, %v1363
          %v1369 = vmax.f32 %v1365, 0.0
          %v1370 = vmax.f32 %v1366, 0.0
          %v1371 = vmax.f32 %v1367, 0.0
          %v1372 = vmax.f32 %v1368, 0.0
          %1373 = vmatpush.xpose.msra.mxu0 0.0
          %1374 = vmatpush.xpose.msra.mxu0 0.0
          %1375 = vmatpush.xpose.msra.mxu0 0.0
          %1376 = vmatpush.xpose.msra.mxu0 0.0
          %1377 = vmatpush.xpose.msra.mxu0 0.0
          %1378 = vmatpush.xpose.msra.mxu0 0.0
          %1379 = vmatpush.xpose.msra.mxu0 0.0
          %1380 = vmatpush.xpose.msra.mxu0 0.0
          %1381 = vmatpush.xpose.msra.mxu0 0.0
          %1382 = vmatpush.xpose.msra.mxu0 0.0
          %1383 = vmatpush.xpose.msra.mxu0 0.0
          %1384 = vmatpush.xpose.msra.mxu0 0.0
          %1385 = vmatpush.xpose.msra.mxu0 %v1372
          %1386 = vmatpush.xpose.msra.mxu0 %v1371
          %1387 = vmatpush.xpose.msra.mxu0 %v1370
          %1388 = vmatpush.xpose.msra.mxu0 %v1369
          %1389 = vmatmul.f32.gmra.mxu0 %v927
          %v1390 = vpop.f32.mrf.mxu0
          %v1391 = vadd.f32 0.0, %v1390
          %1392 = vmatmul.f32.gmra.mxu0 %v928
          %v1393 = vpop.f32.mrf.mxu0
          %v1394 = vadd.f32 0.0, %v1393
          %1395 = vmatmul.f32.gmra.mxu0 %v929
          %v1396 = vpop.f32.mrf.mxu0
          %v1397 = vadd.f32 0.0, %v1396
          %1398 = vmatmul.f32.gmra.mxu0 %v930
          %v1399 = vpop.f32.mrf.mxu0
          %v1400 = vadd.f32 0.0, %v1399
          %1401 = vmatmul.f32.gmra.mxu0 %v931
          %v1402 = vpop.f32.mrf.mxu0
          %v1403 = vadd.f32 0.0, %v1402
          %1404 = vmatmul.f32.gmra.mxu0 %v932
          %v1405 = vpop.f32.mrf.mxu0
          %v1406 = vadd.f32 0.0, %v1405
          %1407 = vmatmul.f32.gmra.mxu0 %v933
          %v1408 = vpop.f32.mrf.mxu0
          %v1409 = vadd.f32 0.0, %v1408
          %1410 = vmatmul.f32.gmra.mxu0 %v934
          %v1411 = vpop.f32.mrf.mxu0
          %v1412 = vadd.f32 0.0, %v1411
          %1413 = vmatmul.f32.gmra.mxu0 %v935
          %v1414 = vpop.f32.mrf.mxu0
          %v1415 = vadd.f32 0.0, %v1414
          %1416 = vmatmul.f32.gmra.mxu0 %v936
          %v1417 = vpop.f32.mrf.mxu0
          %v1418 = vadd.f32 0.0, %v1417
          %1419 = vmatmul.f32.gmra.mxu0 %v937
          %v1420 = vpop.f32.mrf.mxu0
          %v1421 = vadd.f32 0.0, %v1420
          %1422 = vmatmul.f32.gmra.mxu0 %v938
          %v1423 = vpop.f32.mrf.mxu0
          %v1424 = vadd.f32 0.0, %v1423
          %1425 = vmatmul.f32.gmra.mxu0 %v939
          %v1426 = vpop.f32.mrf.mxu0
          %v1427 = vadd.f32 0.0, %v1426
          %1428 = vmatmul.f32.gmra.mxu0 %v940
          %v1429 = vpop.f32.mrf.mxu0
          %v1430 = vadd.f32 0.0, %v1429
          %1431 = vmatmul.f32.gmra.mxu0 %v941
          %v1432 = vpop.f32.mrf.mxu0
          %v1433 = vadd.f32 0.0, %v1432
          %1434 = vmatmul.f32.gmra.mxu0 %v942
          %v1435 = vpop.f32.mrf.mxu0
          %v1436 = vadd.f32 0.0, %v1435
          %1437 = vdwg.mxu0
          %1438 = vst.msk [vmem:[#allocation3] sm:$0xff] %vm544, %v1391
          %1439 = vst.msk [vmem:[#allocation3 + $0x8] sm:$0xff] %vm544, %v1394
          %1440 = vst.msk [vmem:[#allocation3 + $0x10] sm:$0xff] %vm544, %v1397
          %1441 = vst.msk [vmem:[#allocation3 + $0x18] sm:$0xff] %vm544, %v1400
          %1442 = vst.msk [vmem:[#allocation3 + $0x20] sm:$0xff] %vm544, %v1403
          %1443 = vst.msk [vmem:[#allocation3 + $0x28] sm:$0xff] %vm544, %v1406
          %1444 = vst.msk [vmem:[#allocation3 + $0x30] sm:$0xff] %vm544, %v1409
          %1445 = vst.msk [vmem:[#allocation3 + $0x38] sm:$0xff] %vm544, %v1412
          %1446 = vst.msk [vmem:[#allocation3 + $0x40] sm:$0xff] %vm544, %v1415
          %1447 = vst.msk [vmem:[#allocation3 + $0x48] sm:$0xff] %vm544, %v1418
          %1448 = vst.msk [vmem:[#allocation3 + $0x50] sm:$0xff] %vm544, %v1421
          %1449 = vst.msk [vmem:[#allocation3 + $0x58] sm:$0xff] %vm544, %v1424
          %1450 = vst.msk [vmem:[#allocation3 + $0x60] sm:$0xff] %vm544, %v1427
          %1451 = vst.msk [vmem:[#allocation3 + $0x68] sm:$0xff] %vm544, %v1430
          %1452 = vst.msk [vmem:[#allocation3 + $0x70] sm:$0xff] %vm544, %v1433
          %1453 = vst.msk [vmem:[#allocation3 + $0x78] sm:$0xff] %vm544, %v1436
          %v1454 = vld [vmem:[#allocation3] ss:$2 sm:$0xff]
          %s1455 = scalar_lea.vmem [#allocation3], 16
          %v1456 = vld [vmem:[%s1455] ss:$2 sm:$0xff]
          %s1457 = scalar_lea.vmem [#allocation3], 32
          %v1458 = vld [vmem:[%s1457] ss:$2 sm:$0xff]
          %s1459 = scalar_lea.vmem [#allocation3], 48
          %v1460 = vld [vmem:[%s1459] ss:$2 sm:$0xff]
          %s1461 = scalar_lea.vmem [#allocation3], 64
          %v1462 = vld [vmem:[%s1461] ss:$2 sm:$0xff]
          %s1463 = scalar_lea.vmem [#allocation3], 80
          %v1464 = vld [vmem:[%s1463] ss:$2 sm:$0xff]
          %s1465 = scalar_lea.vmem [#allocation3], 96
          %v1466 = vld [vmem:[%s1465] ss:$2 sm:$0xff]
          %s1467 = scalar_lea.vmem [#allocation3], 112
          %v1468 = vld [vmem:[%s1467] ss:$2 sm:$0xff]
          %s1469 = scalar_lea.vmem [#allocation3], 1
          %v1470 = vld [vmem:[%s1469] ss:$2 sm:$0xff]
          %s1471 = scalar_lea.vmem [#allocation3], 17
          %v1472 = vld [vmem:[%s1471] ss:$2 sm:$0xff]
          %s1473 = scalar_lea.vmem [#allocation3], 33
          %v1474 = vld [vmem:[%s1473] ss:$2 sm:$0xff]
          %s1475 = scalar_lea.vmem [#allocation3], 49
          %v1476 = vld [vmem:[%s1475] ss:$2 sm:$0xff]
          %s1477 = scalar_lea.vmem [#allocation3], 65
          %v1478 = vld [vmem:[%s1477] ss:$2 sm:$0xff]
          %s1479 = scalar_lea.vmem [#allocation3], 81
          %v1480 = vld [vmem:[%s1479] ss:$2 sm:$0xff]
          %s1481 = scalar_lea.vmem [#allocation3], 97
          %v1482 = vld [vmem:[%s1481] ss:$2 sm:$0xff]
          %s1483 = scalar_lea.vmem [#allocation3], 113
          %v1484 = vld [vmem:[%s1483] ss:$2 sm:$0xff]
          %v1485 = vmax.f32 %v1454, %v1470
          %v1486 = vmax.f32 %v1456, %v1472
          %v1487 = vmax.f32 %v1458, %v1474
          %v1488 = vmax.f32 %v1460, %v1476
          %v1489 = vmax.f32 %v1462, %v1478
          %v1490 = vmax.f32 %v1464, %v1480
          %v1491 = vmax.f32 %v1466, %v1482
          %v1492 = vmax.f32 %v1468, %v1484
          %s1493 = sadd.s32 %s944, 1
          %s1494 = smul.u32 %s1493, 72
          %s1495 = scalar_lea.vmem [#allocation4], %s1494
          %1496 = vst.msk [vmem:[%s1495 + $0x1] sm:$0xff] %vm544, %v1485
          %1497 = vst.msk [vmem:[%s1495 + $0x9] sm:$0xff] %vm544, %v1486
          %1498 = vst.msk [vmem:[%s1495 + $0x11] sm:$0xff] %vm544, %v1487
          %1499 = vst.msk [vmem:[%s1495 + $0x19] sm:$0xff] %vm544, %v1488
          %1500 = vst.msk [vmem:[%s1495 + $0x21] sm:$0xff] %vm544, %v1489
          %1501 = vst.msk [vmem:[%s1495 + $0x29] sm:$0xff] %vm544, %v1490
          %1502 = vst.msk [vmem:[%s1495 + $0x31] sm:$0xff] %vm544, %v1491
          %1503 = vst.msk [vmem:[%s1495 + $0x39] sm:$0xff] %vm544, %v1492
        $region97: #{multi_input_forward.1} parent=71 // loop_footer
          %s948 = sadd.s32 1, %s944
        $region98: #{multi_input_forward.1} parent=71 // loop_footer_branch
          %943 = sbr.rel target = $region94
        $region99: #{multi_input_forward.1} parent=71 // loop_exit
          _
        loop: start=0, step=1, limit=8
        $region100: #{multi_input_forward.1} parent=71 // loop_pre_header
          _
        $region101: #{multi_input_forward.1} parent=71 // loop_header
          %s1505 = sphi 0, %s1509
          %p1506 = scmp.ge.s32.totalorder %s1505, 8
        $region102: #{multi_input_forward.1} parent=71 // loop_header_branch
          %1508 = sbr.rel (%p1506) target = $region106
        $region103: #{multi_input_forward.1} parent=71 // loop_body
          %s1510 = smul.u32 %s1505, 8
          %s1511 = smul.u32 %s1510, 72
          %s1512 = scalar_lea.vmem [#allocation4], %s1511
          %v1513 = vld [vmem:[%s1512] sm:$0xff]
          %v1514 = vld [vmem:[%s1512 + $0x8] sm:$0xff]
          %v1515 = vld [vmem:[%s1512 + $0x10] sm:$0xff]
          %v1516 = vld [vmem:[%s1512 + $0x18] sm:$0xff]
          %v1517 = vld [vmem:[%s1512 + $0x20] sm:$0xff]
          %v1518 = vld [vmem:[%s1512 + $0x28] sm:$0xff]
          %v1519 = vld [vmem:[%s1512 + $0x30] sm:$0xff]
          %v1520 = vld [vmem:[%s1512 + $0x38] sm:$0xff]
          %v1521 = vld [vmem:[%s1512 + $0x48] sm:$0xff]
          %v1522 = vld [vmem:[%s1512 + $0x50] sm:$0xff]
          %v1523 = vld [vmem:[%s1512 + $0x58] sm:$0xff]
          %v1524 = vld [vmem:[%s1512 + $0x60] sm:$0xff]
          %v1525 = vld [vmem:[%s1512 + $0x68] sm:$0xff]
          %v1526 = vld [vmem:[%s1512 + $0x70] sm:$0xff]
          %v1527 = vld [vmem:[%s1512 + $0x78] sm:$0xff]
          %v1528 = vld [vmem:[%s1512 + $0x80] sm:$0xff]
          %v1529 = vld [vmem:[%s1512 + $0x90] sm:$0xff]
          %v1530 = vld [vmem:[%s1512 + $0x98] sm:$0xff]
          %v1531 = vld [vmem:[%s1512 + $0xa0] sm:$0xff]
          %v1532 = vld [vmem:[%s1512 + $0xa8] sm:$0xff]
          %v1533 = vld [vmem:[%s1512 + $0xb0] sm:$0xff]
          %v1534 = vld [vmem:[%s1512 + $0xb8] sm:$0xff]
          %v1535 = vld [vmem:[%s1512 + $0xc0] sm:$0xff]
          %v1536 = vld [vmem:[%s1512 + $0xc8] sm:$0xff]
          %v1537 = vld [vmem:[%s1512 + $0xd8] sm:$0xff]
          %v1538 = vld [vmem:[%s1512 + $0xe0] sm:$0xff]
          %v1539 = vld [vmem:[%s1512 + $0xe8] sm:$0xff]
          %v1540 = vld [vmem:[%s1512 + $0xf0] sm:$0xff]
          %v1541 = vld [vmem:[%s1512 + $0xf8] sm:$0xff]
          %v1542 = vld [vmem:[%s1512 + $0x100] sm:$0xff]
          %v1543 = vld [vmem:[%s1512 + $0x108] sm:$0xff]
          %v1544 = vld [vmem:[%s1512 + $0x110] sm:$0xff]
          %v1545 = vld [vmem:[%s1512 + $0x120] sm:$0xff]
          %v1546 = vld [vmem:[%s1512 + $0x128] sm:$0xff]
          %v1547 = vld [vmem:[%s1512 + $0x130] sm:$0xff]
          %v1548 = vld [vmem:[%s1512 + $0x138] sm:$0xff]
          %v1549 = vld [vmem:[%s1512 + $0x140] sm:$0xff]
          %v1550 = vld [vmem:[%s1512 + $0x148] sm:$0xff]
          %v1551 = vld [vmem:[%s1512 + $0x150] sm:$0xff]
          %v1552 = vld [vmem:[%s1512 + $0x158] sm:$0xff]
          %v1553 = vld [vmem:[%s1512 + $0x168] sm:$0xff]
          %v1554 = vld [vmem:[%s1512 + $0x170] sm:$0xff]
          %v1555 = vld [vmem:[%s1512 + $0x178] sm:$0xff]
          %v1556 = vld [vmem:[%s1512 + $0x180] sm:$0xff]
          %v1557 = vld [vmem:[%s1512 + $0x188] sm:$0xff]
          %v1558 = vld [vmem:[%s1512 + $0x190] sm:$0xff]
          %v1559 = vld [vmem:[%s1512 + $0x198] sm:$0xff]
          %v1560 = vld [vmem:[%s1512 + $0x1a0] sm:$0xff]
          %v1561 = vld [vmem:[%s1512 + $0x1b0] sm:$0xff]
          %v1562 = vld [vmem:[%s1512 + $0x1b8] sm:$0xff]
          %v1563 = vld [vmem:[%s1512 + $0x1c0] sm:$0xff]
          %v1564 = vld [vmem:[%s1512 + $0x1c8] sm:$0xff]
          %v1565 = vld [vmem:[%s1512 + $0x1d0] sm:$0xff]
          %v1566 = vld [vmem:[%s1512 + $0x1d8] sm:$0xff]
          %v1567 = vld [vmem:[%s1512 + $0x1e0] sm:$0xff]
          %v1568 = vld [vmem:[%s1512 + $0x1e8] sm:$0xff]
          %v1569 = vld [vmem:[%s1512 + $0x1f8] sm:$0xff]
          %v1570 = vld [vmem:[%s1512 + $0x200] sm:$0xff]
          %v1571 = vld [vmem:[%s1512 + $0x208] sm:$0xff]
          %v1572 = vld [vmem:[%s1512 + $0x210] sm:$0xff]
          %v1573 = vld [vmem:[%s1512 + $0x218] sm:$0xff]
          %v1574 = vld [vmem:[%s1512 + $0x220] sm:$0xff]
          %v1575 = vld [vmem:[%s1512 + $0x228] sm:$0xff]
          %v1576 = vld [vmem:[%s1512 + $0x230] sm:$0xff]
          %v1577 = vld [vmem:[#allocation12] sm:$0xff]
          %v1578 = vld [vmem:[#allocation12 + $0x8] sm:$0xff]
          %v1579 = vld [vmem:[#allocation12 + $0x10] sm:$0xff]
          %v1580 = vld [vmem:[#allocation12 + $0x18] sm:$0xff]
          %v1581 = vld [vmem:[%s1512 + $0x1] sm:$0xff]
          %v1582 = vld [vmem:[%s1512 + $0x9] sm:$0xff]
          %v1583 = vld [vmem:[%s1512 + $0x11] sm:$0xff]
          %v1584 = vld [vmem:[%s1512 + $0x19] sm:$0xff]
          %v1585 = vld [vmem:[%s1512 + $0x21] sm:$0xff]
          %v1586 = vld [vmem:[%s1512 + $0x29] sm:$0xff]
          %v1587 = vld [vmem:[%s1512 + $0x31] sm:$0xff]
          %v1588 = vld [vmem:[%s1512 + $0x39] sm:$0xff]
          %v1589 = vld [vmem:[%s1512 + $0x49] sm:$0xff]
          %v1590 = vld [vmem:[%s1512 + $0x51] sm:$0xff]
          %v1591 = vld [vmem:[%s1512 + $0x59] sm:$0xff]
          %v1592 = vld [vmem:[%s1512 + $0x61] sm:$0xff]
          %v1593 = vld [vmem:[%s1512 + $0x69] sm:$0xff]
          %v1594 = vld [vmem:[%s1512 + $0x71] sm:$0xff]
          %v1595 = vld [vmem:[%s1512 + $0x79] sm:$0xff]
          %v1596 = vld [vmem:[%s1512 + $0x81] sm:$0xff]
          %v1597 = vld [vmem:[%s1512 + $0x91] sm:$0xff]
          %v1598 = vld [vmem:[%s1512 + $0x99] sm:$0xff]
          %v1599 = vld [vmem:[%s1512 + $0xa1] sm:$0xff]
          %v1600 = vld [vmem:[%s1512 + $0xa9] sm:$0xff]
          %v1601 = vld [vmem:[%s1512 + $0xb1] sm:$0xff]
          %v1602 = vld [vmem:[%s1512 + $0xb9] sm:$0xff]
          %v1603 = vld [vmem:[%s1512 + $0xc1] sm:$0xff]
          %v1604 = vld [vmem:[%s1512 + $0xc9] sm:$0xff]
          %v1605 = vld [vmem:[%s1512 + $0xd9] sm:$0xff]
          %v1606 = vld [vmem:[%s1512 + $0xe1] sm:$0xff]
          %v1607 = vld [vmem:[%s1512 + $0xe9] sm:$0xff]
          %v1608 = vld [vmem:[%s1512 + $0xf1] sm:$0xff]
          %v1609 = vld [vmem:[%s1512 + $0xf9] sm:$0xff]
          %v1610 = vld [vmem:[%s1512 + $0x101] sm:$0xff]
          %v1611 = vld [vmem:[%s1512 + $0x109] sm:$0xff]
          %v1612 = vld [vmem:[%s1512 + $0x111] sm:$0xff]
          %v1613 = vld [vmem:[%s1512 + $0x121] sm:$0xff]
          %v1614 = vld [vmem:[%s1512 + $0x129] sm:$0xff]
          %v1615 = vld [vmem:[%s1512 + $0x131] sm:$0xff]
          %v1616 = vld [vmem:[%s1512 + $0x139] sm:$0xff]
          %v1617 = vld [vmem:[%s1512 + $0x141] sm:$0xff]
          %v1618 = vld [vmem:[%s1512 + $0x149] sm:$0xff]
          %v1619 = vld [vmem:[%s1512 + $0x151] sm:$0xff]
          %v1620 = vld [vmem:[%s1512 + $0x159] sm:$0xff]
          %v1621 = vld [vmem:[%s1512 + $0x169] sm:$0xff]
          %v1622 = vld [vmem:[%s1512 + $0x171] sm:$0xff]
          %v1623 = vld [vmem:[%s1512 + $0x179] sm:$0xff]
          %v1624 = vld [vmem:[%s1512 + $0x181] sm:$0xff]
          %v1625 = vld [vmem:[%s1512 + $0x189] sm:$0xff]
          %v1626 = vld [vmem:[%s1512 + $0x191] sm:$0xff]
          %v1627 = vld [vmem:[%s1512 + $0x199] sm:$0xff]
          %v1628 = vld [vmem:[%s1512 + $0x1a1] sm:$0xff]
          %v1629 = vld [vmem:[%s1512 + $0x1b1] sm:$0xff]
          %v1630 = vld [vmem:[%s1512 + $0x1b9] sm:$0xff]
          %v1631 = vld [vmem:[%s1512 + $0x1c1] sm:$0xff]
          %v1632 = vld [vmem:[%s1512 + $0x1c9] sm:$0xff]
          %v1633 = vld [vmem:[%s1512 + $0x1d1] sm:$0xff]
          %v1634 = vld [vmem:[%s1512 + $0x1d9] sm:$0xff]
          %v1635 = vld [vmem:[%s1512 + $0x1e1] sm:$0xff]
          %v1636 = vld [vmem:[%s1512 + $0x1e9] sm:$0xff]
          %v1637 = vld [vmem:[%s1512 + $0x1f9] sm:$0xff]
          %v1638 = vld [vmem:[%s1512 + $0x201] sm:$0xff]
          %v1639 = vld [vmem:[%s1512 + $0x209] sm:$0xff]
          %v1640 = vld [vmem:[%s1512 + $0x211] sm:$0xff]
          %v1641 = vld [vmem:[%s1512 + $0x219] sm:$0xff]
          %v1642 = vld [vmem:[%s1512 + $0x221] sm:$0xff]
          %v1643 = vld [vmem:[%s1512 + $0x229] sm:$0xff]
          %v1644 = vld [vmem:[%s1512 + $0x231] sm:$0xff]
          %s1645 = scalar_lea.vmem [#allocation12], 32
          %v1646 = vld [vmem:[%s1645] sm:$0xff]
          %v1647 = vld [vmem:[%s1645 + $0x8] sm:$0xff]
          %v1648 = vld [vmem:[%s1645 + $0x10] sm:$0xff]
          %v1649 = vld [vmem:[%s1645 + $0x18] sm:$0xff]
          %v1651 = vsel %vm544, %v1581, 0
          %v1654 = vsel %vm544, %v1582, 0
          %v1657 = vsel %vm544, %v1583, 0
          %v1660 = vsel %vm544, %v1584, 0
          %v1663 = vsel %vm544, %v1585, 0
          %v1666 = vsel %vm544, %v1586, 0
          %v1669 = vsel %vm544, %v1587, 0
          %v1672 = vsel %vm544, %v1588, 0
          %v1675 = vsel %vm544, %v1589, 0
          %v1678 = vsel %vm544, %v1590, 0
          %v1681 = vsel %vm544, %v1591, 0
          %v1684 = vsel %vm544, %v1592, 0
          %v1687 = vsel %vm544, %v1593, 0
          %v1690 = vsel %vm544, %v1594, 0
          %v1693 = vsel %vm544, %v1595, 0
          %v1696 = vsel %vm544, %v1596, 0
          %v1699 = vsel %vm544, %v1597, 0
          %v1702 = vsel %vm544, %v1598, 0
          %v1705 = vsel %vm544, %v1599, 0
          %v1708 = vsel %vm544, %v1600, 0
          %v1711 = vsel %vm544, %v1601, 0
          %v1714 = vsel %vm544, %v1602, 0
          %v1717 = vsel %vm544, %v1603, 0
          %v1720 = vsel %vm544, %v1604, 0
          %v1723 = vsel %vm544, %v1605, 0
          %v1726 = vsel %vm544, %v1606, 0
          %v1729 = vsel %vm544, %v1607, 0
          %v1732 = vsel %vm544, %v1608, 0
          %v1735 = vsel %vm544, %v1609, 0
          %v1738 = vsel %vm544, %v1610, 0
          %v1741 = vsel %vm544, %v1611, 0
          %v1744 = vsel %vm544, %v1612, 0
          %v1747 = vsel %vm544, %v1613, 0
          %v1750 = vsel %vm544, %v1614, 0
          %v1753 = vsel %vm544, %v1615, 0
          %v1756 = vsel %vm544, %v1616, 0
          %v1759 = vsel %vm544, %v1617, 0
          %v1762 = vsel %vm544, %v1618, 0
          %v1765 = vsel %vm544, %v1619, 0
          %v1768 = vsel %vm544, %v1620, 0
          %v1771 = vsel %vm544, %v1621, 0
          %v1774 = vsel %vm544, %v1622, 0
          %v1777 = vsel %vm544, %v1623, 0
          %v1780 = vsel %vm544, %v1624, 0
          %v1783 = vsel %vm544, %v1625, 0
          %v1786 = vsel %vm544, %v1626, 0
          %v1789 = vsel %vm544, %v1627, 0
          %v1792 = vsel %vm544, %v1628, 0
          %v1795 = vsel %vm544, %v1629, 0
          %v1798 = vsel %vm544, %v1630, 0
          %v1801 = vsel %vm544, %v1631, 0
          %v1804 = vsel %vm544, %v1632, 0
          %v1807 = vsel %vm544, %v1633, 0
          %v1810 = vsel %vm544, %v1634, 0
          %v1813 = vsel %vm544, %v1635, 0
          %v1816 = vsel %vm544, %v1636, 0
          %v1819 = vsel %vm544, %v1637, 0
          %v1822 = vsel %vm544, %v1638, 0
          %v1825 = vsel %vm544, %v1639, 0
          %v1828 = vsel %vm544, %v1640, 0
          %v1831 = vsel %vm544, %v1641, 0
          %v1834 = vsel %vm544, %v1642, 0
          %v1837 = vsel %vm544, %v1643, 0
          %v1840 = vsel %vm544, %v1644, 0
          %1842 = vmatpush.msra.mxu0 0.0
          %1843 = vmatpush.msra.mxu0 0.0
          %1844 = vmatpush.msra.mxu0 0.0
          %1845 = vmatpush.msra.mxu0 0.0
          %1846 = vmatpush.msra.mxu0 0.0
          %1847 = vmatpush.msra.mxu0 0.0
          %1848 = vmatpush.msra.mxu0 0.0
          %1849 = vmatpush.msra.mxu0 0.0
          %1850 = vmatpush.msra.mxu0 0.0
          %1851 = vmatpush.msra.mxu0 0.0
          %1852 = vmatpush.msra.mxu0 0.0
          %1853 = vmatpush.msra.mxu0 0.0
          %1854 = vmatpush.msra.mxu0 %v1649
          %1855 = vmatpush.msra.mxu0 %v1648
          %1856 = vmatpush.msra.mxu0 %v1647
          %1857 = vmatpush.msra.mxu0 %v1646
          %1858 = vmatmul.f32.gmra.mxu0 %v1651
          %v1859 = vpop.f32.mrf.mxu0
          %v1860 = vadd.f32 0.0, %v1859
          %1861 = vmatmul.f32.gmra.mxu0 %v1654
          %v1862 = vpop.f32.mrf.mxu0
          %v1863 = vadd.f32 0.0, %v1862
          %1864 = vmatmul.f32.gmra.mxu0 %v1657
          %v1865 = vpop.f32.mrf.mxu0
          %v1866 = vadd.f32 0.0, %v1865
          %1867 = vmatmul.f32.gmra.mxu0 %v1660
          %v1868 = vpop.f32.mrf.mxu0
          %v1869 = vadd.f32 0.0, %v1868
          %1870 = vmatmul.f32.gmra.mxu0 %v1663
          %v1871 = vpop.f32.mrf.mxu0
          %v1872 = vadd.f32 0.0, %v1871
          %1873 = vmatmul.f32.gmra.mxu0 %v1666
          %v1874 = vpop.f32.mrf.mxu0
          %v1875 = vadd.f32 0.0, %v1874
          %1876 = vmatmul.f32.gmra.mxu0 %v1669
          %v1877 = vpop.f32.mrf.mxu0
          %v1878 = vadd.f32 0.0, %v1877
          %1879 = vmatmul.f32.gmra.mxu0 %v1672
          %v1880 = vpop.f32.mrf.mxu0
          %v1881 = vadd.f32 0.0, %v1880
          %1882 = vmatmul.f32.gmra.mxu0 %v1675
          %v1883 = vpop.f32.mrf.mxu0
          %v1884 = vadd.f32 0.0, %v1883
          %1885 = vmatmul.f32.gmra.mxu0 %v1678
          %v1886 = vpop.f32.mrf.mxu0
          %v1887 = vadd.f32 0.0, %v1886
          %1888 = vmatmul.f32.gmra.mxu0 %v1681
          %v1889 = vpop.f32.mrf.mxu0
          %v1890 = vadd.f32 0.0, %v1889
          %1891 = vmatmul.f32.gmra.mxu0 %v1684
          %v1892 = vpop.f32.mrf.mxu0
          %v1893 = vadd.f32 0.0, %v1892
          %1894 = vmatmul.f32.gmra.mxu0 %v1687
          %v1895 = vpop.f32.mrf.mxu0
          %v1896 = vadd.f32 0.0, %v1895
          %1897 = vmatmul.f32.gmra.mxu0 %v1690
          %v1898 = vpop.f32.mrf.mxu0
          %v1899 = vadd.f32 0.0, %v1898
          %1900 = vmatmul.f32.gmra.mxu0 %v1693
          %v1901 = vpop.f32.mrf.mxu0
          %v1902 = vadd.f32 0.0, %v1901
          %1903 = vmatmul.f32.gmra.mxu0 %v1696
          %v1904 = vpop.f32.mrf.mxu0
          %v1905 = vadd.f32 0.0, %v1904
          %1906 = vmatmul.f32.gmra.mxu0 %v1699
          %v1907 = vpop.f32.mrf.mxu0
          %v1908 = vadd.f32 0.0, %v1907
          %1909 = vmatmul.f32.gmra.mxu0 %v1702
          %v1910 = vpop.f32.mrf.mxu0
          %v1911 = vadd.f32 0.0, %v1910
          %1912 = vmatmul.f32.gmra.mxu0 %v1705
          %v1913 = vpop.f32.mrf.mxu0
          %v1914 = vadd.f32 0.0, %v1913
          %1915 = vmatmul.f32.gmra.mxu0 %v1708
          %v1916 = vpop.f32.mrf.mxu0
          %v1917 = vadd.f32 0.0, %v1916
          %1918 = vmatmul.f32.gmra.mxu0 %v1711
          %v1919 = vpop.f32.mrf.mxu0
          %v1920 = vadd.f32 0.0, %v1919
          %1921 = vmatmul.f32.gmra.mxu0 %v1714
          %v1922 = vpop.f32.mrf.mxu0
          %v1923 = vadd.f32 0.0, %v1922
          %1924 = vmatmul.f32.gmra.mxu0 %v1717
          %v1925 = vpop.f32.mrf.mxu0
          %v1926 = vadd.f32 0.0, %v1925
          %1927 = vmatmul.f32.gmra.mxu0 %v1720
          %v1928 = vpop.f32.mrf.mxu0
          %v1929 = vadd.f32 0.0, %v1928
          %1930 = vmatmul.f32.gmra.mxu0 %v1723
          %v1931 = vpop.f32.mrf.mxu0
          %v1932 = vadd.f32 0.0, %v1931
          %1933 = vmatmul.f32.gmra.mxu0 %v1726
          %v1934 = vpop.f32.mrf.mxu0
          %v1935 = vadd.f32 0.0, %v1934
          %1936 = vmatmul.f32.gmra.mxu0 %v1729
          %v1937 = vpop.f32.mrf.mxu0
          %v1938 = vadd.f32 0.0, %v1937
          %1939 = vmatmul.f32.gmra.mxu0 %v1732
          %v1940 = vpop.f32.mrf.mxu0
          %v1941 = vadd.f32 0.0, %v1940
          %1942 = vmatmul.f32.gmra.mxu0 %v1735
          %v1943 = vpop.f32.mrf.mxu0
          %v1944 = vadd.f32 0.0, %v1943
          %1945 = vmatmul.f32.gmra.mxu0 %v1738
          %v1946 = vpop.f32.mrf.mxu0
          %v1947 = vadd.f32 0.0, %v1946
          %1948 = vmatmul.f32.gmra.mxu0 %v1741
          %v1949 = vpop.f32.mrf.mxu0
          %v1950 = vadd.f32 0.0, %v1949
          %1951 = vmatmul.f32.gmra.mxu0 %v1744
          %v1952 = vpop.f32.mrf.mxu0
          %v1953 = vadd.f32 0.0, %v1952
          %1954 = vmatmul.f32.gmra.mxu0 %v1747
          %v1955 = vpop.f32.mrf.mxu0
          %v1956 = vadd.f32 0.0, %v1955
          %1957 = vmatmul.f32.gmra.mxu0 %v1750
          %v1958 = vpop.f32.mrf.mxu0
          %v1959 = vadd.f32 0.0, %v1958
          %1960 = vmatmul.f32.gmra.mxu0 %v1753
          %v1961 = vpop.f32.mrf.mxu0
          %v1962 = vadd.f32 0.0, %v1961
          %1963 = vmatmul.f32.gmra.mxu0 %v1756
          %v1964 = vpop.f32.mrf.mxu0
          %v1965 = vadd.f32 0.0, %v1964
          %1966 = vmatmul.f32.gmra.mxu0 %v1759
          %v1967 = vpop.f32.mrf.mxu0
          %v1968 = vadd.f32 0.0, %v1967
          %1969 = vmatmul.f32.gmra.mxu0 %v1762
          %v1970 = vpop.f32.mrf.mxu0
          %v1971 = vadd.f32 0.0, %v1970
          %1972 = vmatmul.f32.gmra.mxu0 %v1765
          %v1973 = vpop.f32.mrf.mxu0
          %v1974 = vadd.f32 0.0, %v1973
          %1975 = vmatmul.f32.gmra.mxu0 %v1768
          %v1976 = vpop.f32.mrf.mxu0
          %v1977 = vadd.f32 0.0, %v1976
          %1978 = vmatmul.f32.gmra.mxu0 %v1771
          %v1979 = vpop.f32.mrf.mxu0
          %v1980 = vadd.f32 0.0, %v1979
          %1981 = vmatmul.f32.gmra.mxu0 %v1774
          %v1982 = vpop.f32.mrf.mxu0
          %v1983 = vadd.f32 0.0, %v1982
          %1984 = vmatmul.f32.gmra.mxu0 %v1777
          %v1985 = vpop.f32.mrf.mxu0
          %v1986 = vadd.f32 0.0, %v1985
          %1987 = vmatmul.f32.gmra.mxu0 %v1780
          %v1988 = vpop.f32.mrf.mxu0
          %v1989 = vadd.f32 0.0, %v1988
          %1990 = vmatmul.f32.gmra.mxu0 %v1783
          %v1991 = vpop.f32.mrf.mxu0
          %v1992 = vadd.f32 0.0, %v1991
          %1993 = vmatmul.f32.gmra.mxu0 %v1786
          %v1994 = vpop.f32.mrf.mxu0
          %v1995 = vadd.f32 0.0, %v1994
          %1996 = vmatmul.f32.gmra.mxu0 %v1789
          %v1997 = vpop.f32.mrf.mxu0
          %v1998 = vadd.f32 0.0, %v1997
          %1999 = vmatmul.f32.gmra.mxu0 %v1792
          %v2000 = vpop.f32.mrf.mxu0
          %v2001 = vadd.f32 0.0, %v2000
          %2002 = vmatmul.f32.gmra.mxu0 %v1795
          %v2003 = vpop.f32.mrf.mxu0
          %v2004 = vadd.f32 0.0, %v2003
          %2005 = vmatmul.f32.gmra.mxu0 %v1798
          %v2006 = vpop.f32.mrf.mxu0
          %v2007 = vadd.f32 0.0, %v2006
          %2008 = vmatmul.f32.gmra.mxu0 %v1801
          %v2009 = vpop.f32.mrf.mxu0
          %v2010 = vadd.f32 0.0, %v2009
          %2011 = vmatmul.f32.gmra.mxu0 %v1804
          %v2012 = vpop.f32.mrf.mxu0
          %v2013 = vadd.f32 0.0, %v2012
          %2014 = vmatmul.f32.gmra.mxu0 %v1807
          %v2015 = vpop.f32.mrf.mxu0
          %v2016 = vadd.f32 0.0, %v2015
          %2017 = vmatmul.f32.gmra.mxu0 %v1810
          %v2018 = vpop.f32.mrf.mxu0
          %v2019 = vadd.f32 0.0, %v2018
          %2020 = vmatmul.f32.gmra.mxu0 %v1813
          %v2021 = vpop.f32.mrf.mxu0
          %v2022 = vadd.f32 0.0, %v2021
          %2023 = vmatmul.f32.gmra.mxu0 %v1816
          %v2024 = vpop.f32.mrf.mxu0
          %v2025 = vadd.f32 0.0, %v2024
          %2026 = vmatmul.f32.gmra.mxu0 %v1819
          %v2027 = vpop.f32.mrf.mxu0
          %v2028 = vadd.f32 0.0, %v2027
          %2029 = vmatmul.f32.gmra.mxu0 %v1822
          %v2030 = vpop.f32.mrf.mxu0
          %v2031 = vadd.f32 0.0, %v2030
          %2032 = vmatmul.f32.gmra.mxu0 %v1825
          %v2033 = vpop.f32.mrf.mxu0
          %v2034 = vadd.f32 0.0, %v2033
          %2035 = vmatmul.f32.gmra.mxu0 %v1828
          %v2036 = vpop.f32.mrf.mxu0
          %v2037 = vadd.f32 0.0, %v2036
          %2038 = vmatmul.f32.gmra.mxu0 %v1831
          %v2039 = vpop.f32.mrf.mxu0
          %v2040 = vadd.f32 0.0, %v2039
          %2041 = vmatmul.f32.gmra.mxu0 %v1834
          %v2042 = vpop.f32.mrf.mxu0
          %v2043 = vadd.f32 0.0, %v2042
          %2044 = vmatmul.f32.gmra.mxu0 %v1837
          %v2045 = vpop.f32.mrf.mxu0
          %v2046 = vadd.f32 0.0, %v2045
          %2047 = vmatmul.f32.gmra.mxu0 %v1840
          %v2048 = vpop.f32.mrf.mxu0
          %v2049 = vadd.f32 0.0, %v2048
          %2050 = vdwg.mxu0
          %v2052 = vsel %vm544, %v1513, 0
          %v2055 = vsel %vm544, %v1514, 0
          %v2058 = vsel %vm544, %v1515, 0
          %v2061 = vsel %vm544, %v1516, 0
          %v2064 = vsel %vm544, %v1517, 0
          %v2067 = vsel %vm544, %v1518, 0
          %v2070 = vsel %vm544, %v1519, 0
          %v2073 = vsel %vm544, %v1520, 0
          %v2076 = vsel %vm544, %v1521, 0
          %v2079 = vsel %vm544, %v1522, 0
          %v2082 = vsel %vm544, %v1523, 0
          %v2085 = vsel %vm544, %v1524, 0
          %v2088 = vsel %vm544, %v1525, 0
          %v2091 = vsel %vm544, %v1526, 0
          %v2094 = vsel %vm544, %v1527, 0
          %v2097 = vsel %vm544, %v1528, 0
          %v2100 = vsel %vm544, %v1529, 0
          %v2103 = vsel %vm544, %v1530, 0
          %v2106 = vsel %vm544, %v1531, 0
          %v2109 = vsel %vm544, %v1532, 0
          %v2112 = vsel %vm544, %v1533, 0
          %v2115 = vsel %vm544, %v1534, 0
          %v2118 = vsel %vm544, %v1535, 0
          %v2121 = vsel %vm544, %v1536, 0
          %v2124 = vsel %vm544, %v1537, 0
          %v2127 = vsel %vm544, %v1538, 0
          %v2130 = vsel %vm544, %v1539, 0
          %v2133 = vsel %vm544, %v1540, 0
          %v2136 = vsel %vm544, %v1541, 0
          %v2139 = vsel %vm544, %v1542, 0
          %v2142 = vsel %vm544, %v1543, 0
          %v2145 = vsel %vm544, %v1544, 0
          %v2148 = vsel %vm544, %v1545, 0
          %v2151 = vsel %vm544, %v1546, 0
          %v2154 = vsel %vm544, %v1547, 0
          %v2157 = vsel %vm544, %v1548, 0
          %v2160 = vsel %vm544, %v1549, 0
          %v2163 = vsel %vm544, %v1550, 0
          %v2166 = vsel %vm544, %v1551, 0
          %v2169 = vsel %vm544, %v1552, 0
          %v2172 = vsel %vm544, %v1553, 0
          %v2175 = vsel %vm544, %v1554, 0
          %v2178 = vsel %vm544, %v1555, 0
          %v2181 = vsel %vm544, %v1556, 0
          %v2184 = vsel %vm544, %v1557, 0
          %v2187 = vsel %vm544, %v1558, 0
          %v2190 = vsel %vm544, %v1559, 0
          %v2193 = vsel %vm544, %v1560, 0
          %v2196 = vsel %vm544, %v1561, 0
          %v2199 = vsel %vm544, %v1562, 0
          %v2202 = vsel %vm544, %v1563, 0
          %v2205 = vsel %vm544, %v1564, 0
          %v2208 = vsel %vm544, %v1565, 0
          %v2211 = vsel %vm544, %v1566, 0
          %v2214 = vsel %vm544, %v1567, 0
          %v2217 = vsel %vm544, %v1568, 0
          %v2220 = vsel %vm544, %v1569, 0
          %v2223 = vsel %vm544, %v1570, 0
          %v2226 = vsel %vm544, %v1571, 0
          %v2229 = vsel %vm544, %v1572, 0
          %v2232 = vsel %vm544, %v1573, 0
          %v2235 = vsel %vm544, %v1574, 0
          %v2238 = vsel %vm544, %v1575, 0
          %v2241 = vsel %vm544, %v1576, 0
          %2243 = vmatpush.msra.mxu0 0.0
          %2244 = vmatpush.msra.mxu0 0.0
          %2245 = vmatpush.msra.mxu0 0.0
          %2246 = vmatpush.msra.mxu0 0.0
          %2247 = vmatpush.msra.mxu0 0.0
          %2248 = vmatpush.msra.mxu0 0.0
          %2249 = vmatpush.msra.mxu0 0.0
          %2250 = vmatpush.msra.mxu0 0.0
          %2251 = vmatpush.msra.mxu0 0.0
          %2252 = vmatpush.msra.mxu0 0.0
          %2253 = vmatpush.msra.mxu0 0.0
          %2254 = vmatpush.msra.mxu0 0.0
          %2255 = vmatpush.msra.mxu0 %v1580
          %2256 = vmatpush.msra.mxu0 %v1579
          %2257 = vmatpush.msra.mxu0 %v1578
          %2258 = vmatpush.msra.mxu0 %v1577
          %2259 = vmatmul.f32.gmra.mxu0 %v2052
          %v2260 = vpop.f32.mrf.mxu0
          %v2261 = vadd.f32 %v1860, %v2260
          %2262 = vmatmul.f32.gmra.mxu0 %v2055
          %v2263 = vpop.f32.mrf.mxu0
          %v2264 = vadd.f32 %v1863, %v2263
          %2265 = vmatmul.f32.gmra.mxu0 %v2058
          %v2266 = vpop.f32.mrf.mxu0
          %v2267 = vadd.f32 %v1866, %v2266
          %2268 = vmatmul.f32.gmra.mxu0 %v2061
          %v2269 = vpop.f32.mrf.mxu0
          %v2270 = vadd.f32 %v1869, %v2269
          %2271 = vmatmul.f32.gmra.mxu0 %v2064
          %v2272 = vpop.f32.mrf.mxu0
          %v2273 = vadd.f32 %v1872, %v2272
          %2274 = vmatmul.f32.gmra.mxu0 %v2067
          %v2275 = vpop.f32.mrf.mxu0
          %v2276 = vadd.f32 %v1875, %v2275
          %2277 = vmatmul.f32.gmra.mxu0 %v2070
          %v2278 = vpop.f32.mrf.mxu0
          %v2279 = vadd.f32 %v1878, %v2278
          %2280 = vmatmul.f32.gmra.mxu0 %v2073
          %v2281 = vpop.f32.mrf.mxu0
          %v2282 = vadd.f32 %v1881, %v2281
          %2283 = vmatmul.f32.gmra.mxu0 %v2076
          %v2284 = vpop.f32.mrf.mxu0
          %v2285 = vadd.f32 %v1884, %v2284
          %2286 = vmatmul.f32.gmra.mxu0 %v2079
          %v2287 = vpop.f32.mrf.mxu0
          %v2288 = vadd.f32 %v1887, %v2287
          %2289 = vmatmul.f32.gmra.mxu0 %v2082
          %v2290 = vpop.f32.mrf.mxu0
          %v2291 = vadd.f32 %v1890, %v2290
          %2292 = vmatmul.f32.gmra.mxu0 %v2085
          %v2293 = vpop.f32.mrf.mxu0
          %v2294 = vadd.f32 %v1893, %v2293
          %2295 = vmatmul.f32.gmra.mxu0 %v2088
          %v2296 = vpop.f32.mrf.mxu0
          %v2297 = vadd.f32 %v1896, %v2296
          %2298 = vmatmul.f32.gmra.mxu0 %v2091
          %v2299 = vpop.f32.mrf.mxu0
          %v2300 = vadd.f32 %v1899, %v2299
          %2301 = vmatmul.f32.gmra.mxu0 %v2094
          %v2302 = vpop.f32.mrf.mxu0
          %v2303 = vadd.f32 %v1902, %v2302
          %2304 = vmatmul.f32.gmra.mxu0 %v2097
          %v2305 = vpop.f32.mrf.mxu0
          %v2306 = vadd.f32 %v1905, %v2305
          %2307 = vmatmul.f32.gmra.mxu0 %v2100
          %v2308 = vpop.f32.mrf.mxu0
          %v2309 = vadd.f32 %v1908, %v2308
          %2310 = vmatmul.f32.gmra.mxu0 %v2103
          %v2311 = vpop.f32.mrf.mxu0
          %v2312 = vadd.f32 %v1911, %v2311
          %2313 = vmatmul.f32.gmra.mxu0 %v2106
          %v2314 = vpop.f32.mrf.mxu0
          %v2315 = vadd.f32 %v1914, %v2314
          %2316 = vmatmul.f32.gmra.mxu0 %v2109
          %v2317 = vpop.f32.mrf.mxu0
          %v2318 = vadd.f32 %v1917, %v2317
          %2319 = vmatmul.f32.gmra.mxu0 %v2112
          %v2320 = vpop.f32.mrf.mxu0
          %v2321 = vadd.f32 %v1920, %v2320
          %2322 = vmatmul.f32.gmra.mxu0 %v2115
          %v2323 = vpop.f32.mrf.mxu0
          %v2324 = vadd.f32 %v1923, %v2323
          %2325 = vmatmul.f32.gmra.mxu0 %v2118
          %v2326 = vpop.f32.mrf.mxu0
          %v2327 = vadd.f32 %v1926, %v2326
          %2328 = vmatmul.f32.gmra.mxu0 %v2121
          %v2329 = vpop.f32.mrf.mxu0
          %v2330 = vadd.f32 %v1929, %v2329
          %2331 = vmatmul.f32.gmra.mxu0 %v2124
          %v2332 = vpop.f32.mrf.mxu0
          %v2333 = vadd.f32 %v1932, %v2332
          %2334 = vmatmul.f32.gmra.mxu0 %v2127
          %v2335 = vpop.f32.mrf.mxu0
          %v2336 = vadd.f32 %v1935, %v2335
          %2337 = vmatmul.f32.gmra.mxu0 %v2130
          %v2338 = vpop.f32.mrf.mxu0
          %v2339 = vadd.f32 %v1938, %v2338
          %2340 = vmatmul.f32.gmra.mxu0 %v2133
          %v2341 = vpop.f32.mrf.mxu0
          %v2342 = vadd.f32 %v1941, %v2341
          %2343 = vmatmul.f32.gmra.mxu0 %v2136
          %v2344 = vpop.f32.mrf.mxu0
          %v2345 = vadd.f32 %v1944, %v2344
          %2346 = vmatmul.f32.gmra.mxu0 %v2139
          %v2347 = vpop.f32.mrf.mxu0
          %v2348 = vadd.f32 %v1947, %v2347
          %2349 = vmatmul.f32.gmra.mxu0 %v2142
          %v2350 = vpop.f32.mrf.mxu0
          %v2351 = vadd.f32 %v1950, %v2350
          %2352 = vmatmul.f32.gmra.mxu0 %v2145
          %v2353 = vpop.f32.mrf.mxu0
          %v2354 = vadd.f32 %v1953, %v2353
          %2355 = vmatmul.f32.gmra.mxu0 %v2148
          %v2356 = vpop.f32.mrf.mxu0
          %v2357 = vadd.f32 %v1956, %v2356
          %2358 = vmatmul.f32.gmra.mxu0 %v2151
          %v2359 = vpop.f32.mrf.mxu0
          %v2360 = vadd.f32 %v1959, %v2359
          %2361 = vmatmul.f32.gmra.mxu0 %v2154
          %v2362 = vpop.f32.mrf.mxu0
          %v2363 = vadd.f32 %v1962, %v2362
          %2364 = vmatmul.f32.gmra.mxu0 %v2157
          %v2365 = vpop.f32.mrf.mxu0
          %v2366 = vadd.f32 %v1965, %v2365
          %2367 = vmatmul.f32.gmra.mxu0 %v2160
          %v2368 = vpop.f32.mrf.mxu0
          %v2369 = vadd.f32 %v1968, %v2368
          %2370 = vmatmul.f32.gmra.mxu0 %v2163
          %v2371 = vpop.f32.mrf.mxu0
          %v2372 = vadd.f32 %v1971, %v2371
          %2373 = vmatmul.f32.gmra.mxu0 %v2166
          %v2374 = vpop.f32.mrf.mxu0
          %v2375 = vadd.f32 %v1974, %v2374
          %2376 = vmatmul.f32.gmra.mxu0 %v2169
          %v2377 = vpop.f32.mrf.mxu0
          %v2378 = vadd.f32 %v1977, %v2377
          %2379 = vmatmul.f32.gmra.mxu0 %v2172
          %v2380 = vpop.f32.mrf.mxu0
          %v2381 = vadd.f32 %v1980, %v2380
          %2382 = vmatmul.f32.gmra.mxu0 %v2175
          %v2383 = vpop.f32.mrf.mxu0
          %v2384 = vadd.f32 %v1983, %v2383
          %2385 = vmatmul.f32.gmra.mxu0 %v2178
          %v2386 = vpop.f32.mrf.mxu0
          %v2387 = vadd.f32 %v1986, %v2386
          %2388 = vmatmul.f32.gmra.mxu0 %v2181
          %v2389 = vpop.f32.mrf.mxu0
          %v2390 = vadd.f32 %v1989, %v2389
          %2391 = vmatmul.f32.gmra.mxu0 %v2184
          %v2392 = vpop.f32.mrf.mxu0
          %v2393 = vadd.f32 %v1992, %v2392
          %2394 = vmatmul.f32.gmra.mxu0 %v2187
          %v2395 = vpop.f32.mrf.mxu0
          %v2396 = vadd.f32 %v1995, %v2395
          %2397 = vmatmul.f32.gmra.mxu0 %v2190
          %v2398 = vpop.f32.mrf.mxu0
          %v2399 = vadd.f32 %v1998, %v2398
          %2400 = vmatmul.f32.gmra.mxu0 %v2193
          %v2401 = vpop.f32.mrf.mxu0
          %v2402 = vadd.f32 %v2001, %v2401
          %2403 = vmatmul.f32.gmra.mxu0 %v2196
          %v2404 = vpop.f32.mrf.mxu0
          %v2405 = vadd.f32 %v2004, %v2404
          %2406 = vmatmul.f32.gmra.mxu0 %v2199
          %v2407 = vpop.f32.mrf.mxu0
          %v2408 = vadd.f32 %v2007, %v2407
          %2409 = vmatmul.f32.gmra.mxu0 %v2202
          %v2410 = vpop.f32.mrf.mxu0
          %v2411 = vadd.f32 %v2010, %v2410
          %2412 = vmatmul.f32.gmra.mxu0 %v2205
          %v2413 = vpop.f32.mrf.mxu0
          %v2414 = vadd.f32 %v2013, %v2413
          %2415 = vmatmul.f32.gmra.mxu0 %v2208
          %v2416 = vpop.f32.mrf.mxu0
          %v2417 = vadd.f32 %v2016, %v2416
          %2418 = vmatmul.f32.gmra.mxu0 %v2211
          %v2419 = vpop.f32.mrf.mxu0
          %v2420 = vadd.f32 %v2019, %v2419
          %2421 = vmatmul.f32.gmra.mxu0 %v2214
          %v2422 = vpop.f32.mrf.mxu0
          %v2423 = vadd.f32 %v2022, %v2422
          %2424 = vmatmul.f32.gmra.mxu0 %v2217
          %v2425 = vpop.f32.mrf.mxu0
          %v2426 = vadd.f32 %v2025, %v2425
          %2427 = vmatmul.f32.gmra.mxu0 %v2220
          %v2428 = vpop.f32.mrf.mxu0
          %v2429 = vadd.f32 %v2028, %v2428
          %2430 = vmatmul.f32.gmra.mxu0 %v2223
          %v2431 = vpop.f32.mrf.mxu0
          %v2432 = vadd.f32 %v2031, %v2431
          %2433 = vmatmul.f32.gmra.mxu0 %v2226
          %v2434 = vpop.f32.mrf.mxu0
          %v2435 = vadd.f32 %v2034, %v2434
          %2436 = vmatmul.f32.gmra.mxu0 %v2229
          %v2437 = vpop.f32.mrf.mxu0
          %v2438 = vadd.f32 %v2037, %v2437
          %2439 = vmatmul.f32.gmra.mxu0 %v2232
          %v2440 = vpop.f32.mrf.mxu0
          %v2441 = vadd.f32 %v2040, %v2440
          %2442 = vmatmul.f32.gmra.mxu0 %v2235
          %v2443 = vpop.f32.mrf.mxu0
          %v2444 = vadd.f32 %v2043, %v2443
          %2445 = vmatmul.f32.gmra.mxu0 %v2238
          %v2446 = vpop.f32.mrf.mxu0
          %v2447 = vadd.f32 %v2046, %v2446
          %2448 = vmatmul.f32.gmra.mxu0 %v2241
          %v2449 = vpop.f32.mrf.mxu0
          %v2450 = vadd.f32 %v2049, %v2449
          %2451 = vdwg.mxu0
          %v2452 = vld [vmem:[%s1512 + $0x2] sm:$0xff]
          %v2453 = vld [vmem:[%s1512 + $0xa] sm:$0xff]
          %v2454 = vld [vmem:[%s1512 + $0x12] sm:$0xff]
          %v2455 = vld [vmem:[%s1512 + $0x1a] sm:$0xff]
          %v2456 = vld [vmem:[%s1512 + $0x22] sm:$0xff]
          %v2457 = vld [vmem:[%s1512 + $0x2a] sm:$0xff]
          %v2458 = vld [vmem:[%s1512 + $0x32] sm:$0xff]
          %v2459 = vld [vmem:[%s1512 + $0x3a] sm:$0xff]
          %v2460 = vld [vmem:[%s1512 + $0x4a] sm:$0xff]
          %v2461 = vld [vmem:[%s1512 + $0x52] sm:$0xff]
          %v2462 = vld [vmem:[%s1512 + $0x5a] sm:$0xff]
          %v2463 = vld [vmem:[%s1512 + $0x62] sm:$0xff]
          %v2464 = vld [vmem:[%s1512 + $0x6a] sm:$0xff]
          %v2465 = vld [vmem:[%s1512 + $0x72] sm:$0xff]
          %v2466 = vld [vmem:[%s1512 + $0x7a] sm:$0xff]
          %v2467 = vld [vmem:[%s1512 + $0x82] sm:$0xff]
          %v2468 = vld [vmem:[%s1512 + $0x92] sm:$0xff]
          %v2469 = vld [vmem:[%s1512 + $0x9a] sm:$0xff]
          %v2470 = vld [vmem:[%s1512 + $0xa2] sm:$0xff]
          %v2471 = vld [vmem:[%s1512 + $0xaa] sm:$0xff]
          %v2472 = vld [vmem:[%s1512 + $0xb2] sm:$0xff]
          %v2473 = vld [vmem:[%s1512 + $0xba] sm:$0xff]
          %v2474 = vld [vmem:[%s1512 + $0xc2] sm:$0xff]
          %v2475 = vld [vmem:[%s1512 + $0xca] sm:$0xff]
          %v2476 = vld [vmem:[%s1512 + $0xda] sm:$0xff]
          %v2477 = vld [vmem:[%s1512 + $0xe2] sm:$0xff]
          %v2478 = vld [vmem:[%s1512 + $0xea] sm:$0xff]
          %v2479 = vld [vmem:[%s1512 + $0xf2] sm:$0xff]
          %v2480 = vld [vmem:[%s1512 + $0xfa] sm:$0xff]
          %v2481 = vld [vmem:[%s1512 + $0x102] sm:$0xff]
          %v2482 = vld [vmem:[%s1512 + $0x10a] sm:$0xff]
          %v2483 = vld [vmem:[%s1512 + $0x112] sm:$0xff]
          %v2484 = vld [vmem:[%s1512 + $0x122] sm:$0xff]
          %v2485 = vld [vmem:[%s1512 + $0x12a] sm:$0xff]
          %v2486 = vld [vmem:[%s1512 + $0x132] sm:$0xff]
          %v2487 = vld [vmem:[%s1512 + $0x13a] sm:$0xff]
          %v2488 = vld [vmem:[%s1512 + $0x142] sm:$0xff]
          %v2489 = vld [vmem:[%s1512 + $0x14a] sm:$0xff]
          %v2490 = vld [vmem:[%s1512 + $0x152] sm:$0xff]
          %v2491 = vld [vmem:[%s1512 + $0x15a] sm:$0xff]
          %v2492 = vld [vmem:[%s1512 + $0x16a] sm:$0xff]
          %v2493 = vld [vmem:[%s1512 + $0x172] sm:$0xff]
          %v2494 = vld [vmem:[%s1512 + $0x17a] sm:$0xff]
          %v2495 = vld [vmem:[%s1512 + $0x182] sm:$0xff]
          %v2496 = vld [vmem:[%s1512 + $0x18a] sm:$0xff]
          %v2497 = vld [vmem:[%s1512 + $0x192] sm:$0xff]
          %v2498 = vld [vmem:[%s1512 + $0x19a] sm:$0xff]
          %v2499 = vld [vmem:[%s1512 + $0x1a2] sm:$0xff]
          %v2500 = vld [vmem:[%s1512 + $0x1b2] sm:$0xff]
          %v2501 = vld [vmem:[%s1512 + $0x1ba] sm:$0xff]
          %v2502 = vld [vmem:[%s1512 + $0x1c2] sm:$0xff]
          %v2503 = vld [vmem:[%s1512 + $0x1ca] sm:$0xff]
          %v2504 = vld [vmem:[%s1512 + $0x1d2] sm:$0xff]
          %v2505 = vld [vmem:[%s1512 + $0x1da] sm:$0xff]
          %v2506 = vld [vmem:[%s1512 + $0x1e2] sm:$0xff]
          %v2507 = vld [vmem:[%s1512 + $0x1ea] sm:$0xff]
          %v2508 = vld [vmem:[%s1512 + $0x1fa] sm:$0xff]
          %v2509 = vld [vmem:[%s1512 + $0x202] sm:$0xff]
          %v2510 = vld [vmem:[%s1512 + $0x20a] sm:$0xff]
          %v2511 = vld [vmem:[%s1512 + $0x212] sm:$0xff]
          %v2512 = vld [vmem:[%s1512 + $0x21a] sm:$0xff]
          %v2513 = vld [vmem:[%s1512 + $0x222] sm:$0xff]
          %v2514 = vld [vmem:[%s1512 + $0x22a] sm:$0xff]
          %v2515 = vld [vmem:[%s1512 + $0x232] sm:$0xff]
          %s2516 = scalar_lea.vmem [#allocation12], 64
          %v2517 = vld [vmem:[%s2516] sm:$0xff]
          %v2518 = vld [vmem:[%s2516 + $0x8] sm:$0xff]
          %v2519 = vld [vmem:[%s2516 + $0x10] sm:$0xff]
          %v2520 = vld [vmem:[%s2516 + $0x18] sm:$0xff]
          %v2522 = vsel %vm544, %v2452, 0
          %v2525 = vsel %vm544, %v2453, 0
          %v2528 = vsel %vm544, %v2454, 0
          %v2531 = vsel %vm544, %v2455, 0
          %v2534 = vsel %vm544, %v2456, 0
          %v2537 = vsel %vm544, %v2457, 0
          %v2540 = vsel %vm544, %v2458, 0
          %v2543 = vsel %vm544, %v2459, 0
          %v2546 = vsel %vm544, %v2460, 0
          %v2549 = vsel %vm544, %v2461, 0
          %v2552 = vsel %vm544, %v2462, 0
          %v2555 = vsel %vm544, %v2463, 0
          %v2558 = vsel %vm544, %v2464, 0
          %v2561 = vsel %vm544, %v2465, 0
          %v2564 = vsel %vm544, %v2466, 0
          %v2567 = vsel %vm544, %v2467, 0
          %v2570 = vsel %vm544, %v2468, 0
          %v2573 = vsel %vm544, %v2469, 0
          %v2576 = vsel %vm544, %v2470, 0
          %v2579 = vsel %vm544, %v2471, 0
          %v2582 = vsel %vm544, %v2472, 0
          %v2585 = vsel %vm544, %v2473, 0
          %v2588 = vsel %vm544, %v2474, 0
          %v2591 = vsel %vm544, %v2475, 0
          %v2594 = vsel %vm544, %v2476, 0
          %v2597 = vsel %vm544, %v2477, 0
          %v2600 = vsel %vm544, %v2478, 0
          %v2603 = vsel %vm544, %v2479, 0
          %v2606 = vsel %vm544, %v2480, 0
          %v2609 = vsel %vm544, %v2481, 0
          %v2612 = vsel %vm544, %v2482, 0
          %v2615 = vsel %vm544, %v2483, 0
          %v2618 = vsel %vm544, %v2484, 0
          %v2621 = vsel %vm544, %v2485, 0
          %v2624 = vsel %vm544, %v2486, 0
          %v2627 = vsel %vm544, %v2487, 0
          %v2630 = vsel %vm544, %v2488, 0
          %v2633 = vsel %vm544, %v2489, 0
          %v2636 = vsel %vm544, %v2490, 0
          %v2639 = vsel %vm544, %v2491, 0
          %v2642 = vsel %vm544, %v2492, 0
          %v2645 = vsel %vm544, %v2493, 0
          %v2648 = vsel %vm544, %v2494, 0
          %v2651 = vsel %vm544, %v2495, 0
          %v2654 = vsel %vm544, %v2496, 0
          %v2657 = vsel %vm544, %v2497, 0
          %v2660 = vsel %vm544, %v2498, 0
          %v2663 = vsel %vm544, %v2499, 0
          %v2666 = vsel %vm544, %v2500, 0
          %v2669 = vsel %vm544, %v2501, 0
          %v2672 = vsel %vm544, %v2502, 0
          %v2675 = vsel %vm544, %v2503, 0
          %v2678 = vsel %vm544, %v2504, 0
          %v2681 = vsel %vm544, %v2505, 0
          %v2684 = vsel %vm544, %v2506, 0
          %v2687 = vsel %vm544, %v2507, 0
          %v2690 = vsel %vm544, %v2508, 0
          %v2693 = vsel %vm544, %v2509, 0
          %v2696 = vsel %vm544, %v2510, 0
          %v2699 = vsel %vm544, %v2511, 0
          %v2702 = vsel %vm544, %v2512, 0
          %v2705 = vsel %vm544, %v2513, 0
          %v2708 = vsel %vm544, %v2514, 0
          %v2711 = vsel %vm544, %v2515, 0
          %2713 = vmatpush.msra.mxu0 0.0
          %2714 = vmatpush.msra.mxu0 0.0
          %2715 = vmatpush.msra.mxu0 0.0
          %2716 = vmatpush.msra.mxu0 0.0
          %2717 = vmatpush.msra.mxu0 0.0
          %2718 = vmatpush.msra.mxu0 0.0
          %2719 = vmatpush.msra.mxu0 0.0
          %2720 = vmatpush.msra.mxu0 0.0
          %2721 = vmatpush.msra.mxu0 0.0
          %2722 = vmatpush.msra.mxu0 0.0
          %2723 = vmatpush.msra.mxu0 0.0
          %2724 = vmatpush.msra.mxu0 0.0
          %2725 = vmatpush.msra.mxu0 %v2520
          %2726 = vmatpush.msra.mxu0 %v2519
          %2727 = vmatpush.msra.mxu0 %v2518
          %2728 = vmatpush.msra.mxu0 %v2517
          %2729 = vmatmul.f32.gmra.mxu0 %v2522
          %v2730 = vpop.f32.mrf.mxu0
          %v2731 = vadd.f32 0.0, %v2730
          %2732 = vmatmul.f32.gmra.mxu0 %v2525
          %v2733 = vpop.f32.mrf.mxu0
          %v2734 = vadd.f32 0.0, %v2733
          %2735 = vmatmul.f32.gmra.mxu0 %v2528
          %v2736 = vpop.f32.mrf.mxu0
          %v2737 = vadd.f32 0.0, %v2736
          %2738 = vmatmul.f32.gmra.mxu0 %v2531
          %v2739 = vpop.f32.mrf.mxu0
          %v2740 = vadd.f32 0.0, %v2739
          %2741 = vmatmul.f32.gmra.mxu0 %v2534
          %v2742 = vpop.f32.mrf.mxu0
          %v2743 = vadd.f32 0.0, %v2742
          %2744 = vmatmul.f32.gmra.mxu0 %v2537
          %v2745 = vpop.f32.mrf.mxu0
          %v2746 = vadd.f32 0.0, %v2745
          %2747 = vmatmul.f32.gmra.mxu0 %v2540
          %v2748 = vpop.f32.mrf.mxu0
          %v2749 = vadd.f32 0.0, %v2748
          %2750 = vmatmul.f32.gmra.mxu0 %v2543
          %v2751 = vpop.f32.mrf.mxu0
          %v2752 = vadd.f32 0.0, %v2751
          %2753 = vmatmul.f32.gmra.mxu0 %v2546
          %v2754 = vpop.f32.mrf.mxu0
          %v2755 = vadd.f32 0.0, %v2754
          %2756 = vmatmul.f32.gmra.mxu0 %v2549
          %v2757 = vpop.f32.mrf.mxu0
          %v2758 = vadd.f32 0.0, %v2757
          %2759 = vmatmul.f32.gmra.mxu0 %v2552
          %v2760 = vpop.f32.mrf.mxu0
          %v2761 = vadd.f32 0.0, %v2760
          %2762 = vmatmul.f32.gmra.mxu0 %v2555
          %v2763 = vpop.f32.mrf.mxu0
          %v2764 = vadd.f32 0.0, %v2763
          %2765 = vmatmul.f32.gmra.mxu0 %v2558
          %v2766 = vpop.f32.mrf.mxu0
          %v2767 = vadd.f32 0.0, %v2766
          %2768 = vmatmul.f32.gmra.mxu0 %v2561
          %v2769 = vpop.f32.mrf.mxu0
          %v2770 = vadd.f32 0.0, %v2769
          %2771 = vmatmul.f32.gmra.mxu0 %v2564
          %v2772 = vpop.f32.mrf.mxu0
          %v2773 = vadd.f32 0.0, %v2772
          %2774 = vmatmul.f32.gmra.mxu0 %v2567
          %v2775 = vpop.f32.mrf.mxu0
          %v2776 = vadd.f32 0.0, %v2775
          %2777 = vmatmul.f32.gmra.mxu0 %v2570
          %v2778 = vpop.f32.mrf.mxu0
          %v2779 = vadd.f32 0.0, %v2778
          %2780 = vmatmul.f32.gmra.mxu0 %v2573
          %v2781 = vpop.f32.mrf.mxu0
          %v2782 = vadd.f32 0.0, %v2781
          %2783 = vmatmul.f32.gmra.mxu0 %v2576
          %v2784 = vpop.f32.mrf.mxu0
          %v2785 = vadd.f32 0.0, %v2784
          %2786 = vmatmul.f32.gmra.mxu0 %v2579
          %v2787 = vpop.f32.mrf.mxu0
          %v2788 = vadd.f32 0.0, %v2787
          %2789 = vmatmul.f32.gmra.mxu0 %v2582
          %v2790 = vpop.f32.mrf.mxu0
          %v2791 = vadd.f32 0.0, %v2790
          %2792 = vmatmul.f32.gmra.mxu0 %v2585
          %v2793 = vpop.f32.mrf.mxu0
          %v2794 = vadd.f32 0.0, %v2793
          %2795 = vmatmul.f32.gmra.mxu0 %v2588
          %v2796 = vpop.f32.mrf.mxu0
          %v2797 = vadd.f32 0.0, %v2796
          %2798 = vmatmul.f32.gmra.mxu0 %v2591
          %v2799 = vpop.f32.mrf.mxu0
          %v2800 = vadd.f32 0.0, %v2799
          %2801 = vmatmul.f32.gmra.mxu0 %v2594
          %v2802 = vpop.f32.mrf.mxu0
          %v2803 = vadd.f32 0.0, %v2802
          %2804 = vmatmul.f32.gmra.mxu0 %v2597
          %v2805 = vpop.f32.mrf.mxu0
          %v2806 = vadd.f32 0.0, %v2805
          %2807 = vmatmul.f32.gmra.mxu0 %v2600
          %v2808 = vpop.f32.mrf.mxu0
          %v2809 = vadd.f32 0.0, %v2808
          %2810 = vmatmul.f32.gmra.mxu0 %v2603
          %v2811 = vpop.f32.mrf.mxu0
          %v2812 = vadd.f32 0.0, %v2811
          %2813 = vmatmul.f32.gmra.mxu0 %v2606
          %v2814 = vpop.f32.mrf.mxu0
          %v2815 = vadd.f32 0.0, %v2814
          %2816 = vmatmul.f32.gmra.mxu0 %v2609
          %v2817 = vpop.f32.mrf.mxu0
          %v2818 = vadd.f32 0.0, %v2817
          %2819 = vmatmul.f32.gmra.mxu0 %v2612
          %v2820 = vpop.f32.mrf.mxu0
          %v2821 = vadd.f32 0.0, %v2820
          %2822 = vmatmul.f32.gmra.mxu0 %v2615
          %v2823 = vpop.f32.mrf.mxu0
          %v2824 = vadd.f32 0.0, %v2823
          %2825 = vmatmul.f32.gmra.mxu0 %v2618
          %v2826 = vpop.f32.mrf.mxu0
          %v2827 = vadd.f32 0.0, %v2826
          %2828 = vmatmul.f32.gmra.mxu0 %v2621
          %v2829 = vpop.f32.mrf.mxu0
          %v2830 = vadd.f32 0.0, %v2829
          %2831 = vmatmul.f32.gmra.mxu0 %v2624
          %v2832 = vpop.f32.mrf.mxu0
          %v2833 = vadd.f32 0.0, %v2832
          %2834 = vmatmul.f32.gmra.mxu0 %v2627
          %v2835 = vpop.f32.mrf.mxu0
          %v2836 = vadd.f32 0.0, %v2835
          %2837 = vmatmul.f32.gmra.mxu0 %v2630
          %v2838 = vpop.f32.mrf.mxu0
          %v2839 = vadd.f32 0.0, %v2838
          %2840 = vmatmul.f32.gmra.mxu0 %v2633
          %v2841 = vpop.f32.mrf.mxu0
          %v2842 = vadd.f32 0.0, %v2841
          %2843 = vmatmul.f32.gmra.mxu0 %v2636
          %v2844 = vpop.f32.mrf.mxu0
          %v2845 = vadd.f32 0.0, %v2844
          %2846 = vmatmul.f32.gmra.mxu0 %v2639
          %v2847 = vpop.f32.mrf.mxu0
          %v2848 = vadd.f32 0.0, %v2847
          %2849 = vmatmul.f32.gmra.mxu0 %v2642
          %v2850 = vpop.f32.mrf.mxu0
          %v2851 = vadd.f32 0.0, %v2850
          %2852 = vmatmul.f32.gmra.mxu0 %v2645
          %v2853 = vpop.f32.mrf.mxu0
          %v2854 = vadd.f32 0.0, %v2853
          %2855 = vmatmul.f32.gmra.mxu0 %v2648
          %v2856 = vpop.f32.mrf.mxu0
          %v2857 = vadd.f32 0.0, %v2856
          %2858 = vmatmul.f32.gmra.mxu0 %v2651
          %v2859 = vpop.f32.mrf.mxu0
          %v2860 = vadd.f32 0.0, %v2859
          %2861 = vmatmul.f32.gmra.mxu0 %v2654
          %v2862 = vpop.f32.mrf.mxu0
          %v2863 = vadd.f32 0.0, %v2862
          %2864 = vmatmul.f32.gmra.mxu0 %v2657
          %v2865 = vpop.f32.mrf.mxu0
          %v2866 = vadd.f32 0.0, %v2865
          %2867 = vmatmul.f32.gmra.mxu0 %v2660
          %v2868 = vpop.f32.mrf.mxu0
          %v2869 = vadd.f32 0.0, %v2868
          %2870 = vmatmul.f32.gmra.mxu0 %v2663
          %v2871 = vpop.f32.mrf.mxu0
          %v2872 = vadd.f32 0.0, %v2871
          %2873 = vmatmul.f32.gmra.mxu0 %v2666
          %v2874 = vpop.f32.mrf.mxu0
          %v2875 = vadd.f32 0.0, %v2874
          %2876 = vmatmul.f32.gmra.mxu0 %v2669
          %v2877 = vpop.f32.mrf.mxu0
          %v2878 = vadd.f32 0.0, %v2877
          %2879 = vmatmul.f32.gmra.mxu0 %v2672
          %v2880 = vpop.f32.mrf.mxu0
          %v2881 = vadd.f32 0.0, %v2880
          %2882 = vmatmul.f32.gmra.mxu0 %v2675
          %v2883 = vpop.f32.mrf.mxu0
          %v2884 = vadd.f32 0.0, %v2883
          %2885 = vmatmul.f32.gmra.mxu0 %v2678
          %v2886 = vpop.f32.mrf.mxu0
          %v2887 = vadd.f32 0.0, %v2886
          %2888 = vmatmul.f32.gmra.mxu0 %v2681
          %v2889 = vpop.f32.mrf.mxu0
          %v2890 = vadd.f32 0.0, %v2889
          %2891 = vmatmul.f32.gmra.mxu0 %v2684
          %v2892 = vpop.f32.mrf.mxu0
          %v2893 = vadd.f32 0.0, %v2892
          %2894 = vmatmul.f32.gmra.mxu0 %v2687
          %v2895 = vpop.f32.mrf.mxu0
          %v2896 = vadd.f32 0.0, %v2895
          %2897 = vmatmul.f32.gmra.mxu0 %v2690
          %v2898 = vpop.f32.mrf.mxu0
          %v2899 = vadd.f32 0.0, %v2898
          %2900 = vmatmul.f32.gmra.mxu0 %v2693
          %v2901 = vpop.f32.mrf.mxu0
          %v2902 = vadd.f32 0.0, %v2901
          %2903 = vmatmul.f32.gmra.mxu0 %v2696
          %v2904 = vpop.f32.mrf.mxu0
          %v2905 = vadd.f32 0.0, %v2904
          %2906 = vmatmul.f32.gmra.mxu0 %v2699
          %v2907 = vpop.f32.mrf.mxu0
          %v2908 = vadd.f32 0.0, %v2907
          %2909 = vmatmul.f32.gmra.mxu0 %v2702
          %v2910 = vpop.f32.mrf.mxu0
          %v2911 = vadd.f32 0.0, %v2910
          %2912 = vmatmul.f32.gmra.mxu0 %v2705
          %v2913 = vpop.f32.mrf.mxu0
          %v2914 = vadd.f32 0.0, %v2913
          %2915 = vmatmul.f32.gmra.mxu0 %v2708
          %v2916 = vpop.f32.mrf.mxu0
          %v2917 = vadd.f32 0.0, %v2916
          %2918 = vmatmul.f32.gmra.mxu0 %v2711
          %v2919 = vpop.f32.mrf.mxu0
          %v2920 = vadd.f32 0.0, %v2919
          %2921 = vdwg.mxu0
          %v2922 = vadd.f32 %v2261, %v2731
          %v2923 = vadd.f32 %v2264, %v2734
          %v2924 = vadd.f32 %v2267, %v2737
          %v2925 = vadd.f32 %v2270, %v2740
          %v2926 = vadd.f32 %v2273, %v2743
          %v2927 = vadd.f32 %v2276, %v2746
          %v2928 = vadd.f32 %v2279, %v2749
          %v2929 = vadd.f32 %v2282, %v2752
          %v2930 = vadd.f32 %v2285, %v2755
          %v2931 = vadd.f32 %v2288, %v2758
          %v2932 = vadd.f32 %v2291, %v2761
          %v2933 = vadd.f32 %v2294, %v2764
          %v2934 = vadd.f32 %v2297, %v2767
          %v2935 = vadd.f32 %v2300, %v2770
          %v2936 = vadd.f32 %v2303, %v2773
          %v2937 = vadd.f32 %v2306, %v2776
          %v2938 = vadd.f32 %v2309, %v2779
          %v2939 = vadd.f32 %v2312, %v2782
          %v2940 = vadd.f32 %v2315, %v2785
          %v2941 = vadd.f32 %v2318, %v2788
          %v2942 = vadd.f32 %v2321, %v2791
          %v2943 = vadd.f32 %v2324, %v2794
          %v2944 = vadd.f32 %v2327, %v2797
          %v2945 = vadd.f32 %v2330, %v2800
          %v2946 = vadd.f32 %v2333, %v2803
          %v2947 = vadd.f32 %v2336, %v2806
          %v2948 = vadd.f32 %v2339, %v2809
          %v2949 = vadd.f32 %v2342, %v2812
          %v2950 = vadd.f32 %v2345, %v2815
          %v2951 = vadd.f32 %v2348, %v2818
          %v2952 = vadd.f32 %v2351, %v2821
          %v2953 = vadd.f32 %v2354, %v2824
          %v2954 = vadd.f32 %v2357, %v2827
          %v2955 = vadd.f32 %v2360, %v2830
          %v2956 = vadd.f32 %v2363, %v2833
          %v2957 = vadd.f32 %v2366, %v2836
          %v2958 = vadd.f32 %v2369, %v2839
          %v2959 = vadd.f32 %v2372, %v2842
          %v2960 = vadd.f32 %v2375, %v2845
          %v2961 = vadd.f32 %v2378, %v2848
          %v2962 = vadd.f32 %v2381, %v2851
          %v2963 = vadd.f32 %v2384, %v2854
          %v2964 = vadd.f32 %v2387, %v2857
          %v2965 = vadd.f32 %v2390, %v2860
          %v2966 = vadd.f32 %v2393, %v2863
          %v2967 = vadd.f32 %v2396, %v2866
          %v2968 = vadd.f32 %v2399, %v2869
          %v2969 = vadd.f32 %v2402, %v2872
          %v2970 = vadd.f32 %v2405, %v2875
          %v2971 = vadd.f32 %v2408, %v2878
          %v2972 = vadd.f32 %v2411, %v2881
          %v2973 = vadd.f32 %v2414, %v2884
          %v2974 = vadd.f32 %v2417, %v2887
          %v2975 = vadd.f32 %v2420, %v2890
          %v2976 = vadd.f32 %v2423, %v2893
          %v2977 = vadd.f32 %v2426, %v2896
          %v2978 = vadd.f32 %v2429, %v2899
          %v2979 = vadd.f32 %v2432, %v2902
          %v2980 = vadd.f32 %v2435, %v2905
          %v2981 = vadd.f32 %v2438, %v2908
          %v2982 = vadd.f32 %v2441, %v2911
          %v2983 = vadd.f32 %v2444, %v2914
          %v2984 = vadd.f32 %v2447, %v2917
          %v2985 = vadd.f32 %v2450, %v2920
          %s2986 = sadd.s32 %s1510, 1
          %s2987 = smul.u32 %s2986, 72
          %s2988 = scalar_lea.vmem [#allocation4], %s2987
          %v2989 = vld [vmem:[%s2988] sm:$0xff]
          %v2990 = vld [vmem:[%s2988 + $0x8] sm:$0xff]
          %v2991 = vld [vmem:[%s2988 + $0x10] sm:$0xff]
          %v2992 = vld [vmem:[%s2988 + $0x18] sm:$0xff]
          %v2993 = vld [vmem:[%s2988 + $0x20] sm:$0xff]
          %v2994 = vld [vmem:[%s2988 + $0x28] sm:$0xff]
          %v2995 = vld [vmem:[%s2988 + $0x30] sm:$0xff]
          %v2996 = vld [vmem:[%s2988 + $0x38] sm:$0xff]
          %v2997 = vld [vmem:[%s2988 + $0x48] sm:$0xff]
          %v2998 = vld [vmem:[%s2988 + $0x50] sm:$0xff]
          %v2999 = vld [vmem:[%s2988 + $0x58] sm:$0xff]
          %v3000 = vld [vmem:[%s2988 + $0x60] sm:$0xff]
          %v3001 = vld [vmem:[%s2988 + $0x68] sm:$0xff]
          %v3002 = vld [vmem:[%s2988 + $0x70] sm:$0xff]
          %v3003 = vld [vmem:[%s2988 + $0x78] sm:$0xff]
          %v3004 = vld [vmem:[%s2988 + $0x80] sm:$0xff]
          %v3005 = vld [vmem:[%s2988 + $0x90] sm:$0xff]
          %v3006 = vld [vmem:[%s2988 + $0x98] sm:$0xff]
          %v3007 = vld [vmem:[%s2988 + $0xa0] sm:$0xff]
          %v3008 = vld [vmem:[%s2988 + $0xa8] sm:$0xff]
          %v3009 = vld [vmem:[%s2988 + $0xb0] sm:$0xff]
          %v3010 = vld [vmem:[%s2988 + $0xb8] sm:$0xff]
          %v3011 = vld [vmem:[%s2988 + $0xc0] sm:$0xff]
          %v3012 = vld [vmem:[%s2988 + $0xc8] sm:$0xff]
          %v3013 = vld [vmem:[%s2988 + $0xd8] sm:$0xff]
          %v3014 = vld [vmem:[%s2988 + $0xe0] sm:$0xff]
          %v3015 = vld [vmem:[%s2988 + $0xe8] sm:$0xff]
          %v3016 = vld [vmem:[%s2988 + $0xf0] sm:$0xff]
          %v3017 = vld [vmem:[%s2988 + $0xf8] sm:$0xff]
          %v3018 = vld [vmem:[%s2988 + $0x100] sm:$0xff]
          %v3019 = vld [vmem:[%s2988 + $0x108] sm:$0xff]
          %v3020 = vld [vmem:[%s2988 + $0x110] sm:$0xff]
          %v3021 = vld [vmem:[%s2988 + $0x120] sm:$0xff]
          %v3022 = vld [vmem:[%s2988 + $0x128] sm:$0xff]
          %v3023 = vld [vmem:[%s2988 + $0x130] sm:$0xff]
          %v3024 = vld [vmem:[%s2988 + $0x138] sm:$0xff]
          %v3025 = vld [vmem:[%s2988 + $0x140] sm:$0xff]
          %v3026 = vld [vmem:[%s2988 + $0x148] sm:$0xff]
          %v3027 = vld [vmem:[%s2988 + $0x150] sm:$0xff]
          %v3028 = vld [vmem:[%s2988 + $0x158] sm:$0xff]
          %v3029 = vld [vmem:[%s2988 + $0x168] sm:$0xff]
          %v3030 = vld [vmem:[%s2988 + $0x170] sm:$0xff]
          %v3031 = vld [vmem:[%s2988 + $0x178] sm:$0xff]
          %v3032 = vld [vmem:[%s2988 + $0x180] sm:$0xff]
          %v3033 = vld [vmem:[%s2988 + $0x188] sm:$0xff]
          %v3034 = vld [vmem:[%s2988 + $0x190] sm:$0xff]
          %v3035 = vld [vmem:[%s2988 + $0x198] sm:$0xff]
          %v3036 = vld [vmem:[%s2988 + $0x1a0] sm:$0xff]
          %v3037 = vld [vmem:[%s2988 + $0x1b0] sm:$0xff]
          %v3038 = vld [vmem:[%s2988 + $0x1b8] sm:$0xff]
          %v3039 = vld [vmem:[%s2988 + $0x1c0] sm:$0xff]
          %v3040 = vld [vmem:[%s2988 + $0x1c8] sm:$0xff]
          %v3041 = vld [vmem:[%s2988 + $0x1d0] sm:$0xff]
          %v3042 = vld [vmem:[%s2988 + $0x1d8] sm:$0xff]
          %v3043 = vld [vmem:[%s2988 + $0x1e0] sm:$0xff]
          %v3044 = vld [vmem:[%s2988 + $0x1e8] sm:$0xff]
          %v3045 = vld [vmem:[%s2988 + $0x1f8] sm:$0xff]
          %v3046 = vld [vmem:[%s2988 + $0x200] sm:$0xff]
          %v3047 = vld [vmem:[%s2988 + $0x208] sm:$0xff]
          %v3048 = vld [vmem:[%s2988 + $0x210] sm:$0xff]
          %v3049 = vld [vmem:[%s2988 + $0x218] sm:$0xff]
          %v3050 = vld [vmem:[%s2988 + $0x220] sm:$0xff]
          %v3051 = vld [vmem:[%s2988 + $0x228] sm:$0xff]
          %v3052 = vld [vmem:[%s2988 + $0x230] sm:$0xff]
          %s3053 = scalar_lea.vmem [#allocation12], 96
          %v3054 = vld [vmem:[%s3053] sm:$0xff]
          %v3055 = vld [vmem:[%s3053 + $0x8] sm:$0xff]
          %v3056 = vld [vmem:[%s3053 + $0x10] sm:$0xff]
          %v3057 = vld [vmem:[%s3053 + $0x18] sm:$0xff]
          %v3059 = vsel %vm544, %v2989, 0
          %v3062 = vsel %vm544, %v2990, 0
          %v3065 = vsel %vm544, %v2991, 0
          %v3068 = vsel %vm544, %v2992, 0
          %v3071 = vsel %vm544, %v2993, 0
          %v3074 = vsel %vm544, %v2994, 0
          %v3077 = vsel %vm544, %v2995, 0
          %v3080 = vsel %vm544, %v2996, 0
          %v3083 = vsel %vm544, %v2997, 0
          %v3086 = vsel %vm544, %v2998, 0
          %v3089 = vsel %vm544, %v2999, 0
          %v3092 = vsel %vm544, %v3000, 0
          %v3095 = vsel %vm544, %v3001, 0
          %v3098 = vsel %vm544, %v3002, 0
          %v3101 = vsel %vm544, %v3003, 0
          %v3104 = vsel %vm544, %v3004, 0
          %v3107 = vsel %vm544, %v3005, 0
          %v3110 = vsel %vm544, %v3006, 0
          %v3113 = vsel %vm544, %v3007, 0
          %v3116 = vsel %vm544, %v3008, 0
          %v3119 = vsel %vm544, %v3009, 0
          %v3122 = vsel %vm544, %v3010, 0
          %v3125 = vsel %vm544, %v3011, 0
          %v3128 = vsel %vm544, %v3012, 0
          %v3131 = vsel %vm544, %v3013, 0
          %v3134 = vsel %vm544, %v3014, 0
          %v3137 = vsel %vm544, %v3015, 0
          %v3140 = vsel %vm544, %v3016, 0
          %v3143 = vsel %vm544, %v3017, 0
          %v3146 = vsel %vm544, %v3018, 0
          %v3149 = vsel %vm544, %v3019, 0
          %v3152 = vsel %vm544, %v3020, 0
          %v3155 = vsel %vm544, %v3021, 0
          %v3158 = vsel %vm544, %v3022, 0
          %v3161 = vsel %vm544, %v3023, 0
          %v3164 = vsel %vm544, %v3024, 0
          %v3167 = vsel %vm544, %v3025, 0
          %v3170 = vsel %vm544, %v3026, 0
          %v3173 = vsel %vm544, %v3027, 0
          %v3176 = vsel %vm544, %v3028, 0
          %v3179 = vsel %vm544, %v3029, 0
          %v3182 = vsel %vm544, %v3030, 0
          %v3185 = vsel %vm544, %v3031, 0
          %v3188 = vsel %vm544, %v3032, 0
          %v3191 = vsel %vm544, %v3033, 0
          %v3194 = vsel %vm544, %v3034, 0
          %v3197 = vsel %vm544, %v3035, 0
          %v3200 = vsel %vm544, %v3036, 0
          %v3203 = vsel %vm544, %v3037, 0
          %v3206 = vsel %vm544, %v3038, 0
          %v3209 = vsel %vm544, %v3039, 0
          %v3212 = vsel %vm544, %v3040, 0
          %v3215 = vsel %vm544, %v3041, 0
          %v3218 = vsel %vm544, %v3042, 0
          %v3221 = vsel %vm544, %v3043, 0
          %v3224 = vsel %vm544, %v3044, 0
          %v3227 = vsel %vm544, %v3045, 0
          %v3230 = vsel %vm544, %v3046, 0
          %v3233 = vsel %vm544, %v3047, 0
          %v3236 = vsel %vm544, %v3048, 0
          %v3239 = vsel %vm544, %v3049, 0
          %v3242 = vsel %vm544, %v3050, 0
          %v3245 = vsel %vm544, %v3051, 0
          %v3248 = vsel %vm544, %v3052, 0
          %3250 = vmatpush.msra.mxu0 0.0
          %3251 = vmatpush.msra.mxu0 0.0
          %3252 = vmatpush.msra.mxu0 0.0
          %3253 = vmatpush.msra.mxu0 0.0
          %3254 = vmatpush.msra.mxu0 0.0
          %3255 = vmatpush.msra.mxu0 0.0
          %3256 = vmatpush.msra.mxu0 0.0
          %3257 = vmatpush.msra.mxu0 0.0
          %3258 = vmatpush.msra.mxu0 0.0
          %3259 = vmatpush.msra.mxu0 0.0
          %3260 = vmatpush.msra.mxu0 0.0
          %3261 = vmatpush.msra.mxu0 0.0
          %3262 = vmatpush.msra.mxu0 %v3057
          %3263 = vmatpush.msra.mxu0 %v3056
          %3264 = vmatpush.msra.mxu0 %v3055
          %3265 = vmatpush.msra.mxu0 %v3054
          %3266 = vmatmul.f32.gmra.mxu0 %v3059
          %v3267 = vpop.f32.mrf.mxu0
          %v3268 = vadd.f32 0.0, %v3267
          %3269 = vmatmul.f32.gmra.mxu0 %v3062
          %v3270 = vpop.f32.mrf.mxu0
          %v3271 = vadd.f32 0.0, %v3270
          %3272 = vmatmul.f32.gmra.mxu0 %v3065
          %v3273 = vpop.f32.mrf.mxu0
          %v3274 = vadd.f32 0.0, %v3273
          %3275 = vmatmul.f32.gmra.mxu0 %v3068
          %v3276 = vpop.f32.mrf.mxu0
          %v3277 = vadd.f32 0.0, %v3276
          %3278 = vmatmul.f32.gmra.mxu0 %v3071
          %v3279 = vpop.f32.mrf.mxu0
          %v3280 = vadd.f32 0.0, %v3279
          %3281 = vmatmul.f32.gmra.mxu0 %v3074
          %v3282 = vpop.f32.mrf.mxu0
          %v3283 = vadd.f32 0.0, %v3282
          %3284 = vmatmul.f32.gmra.mxu0 %v3077
          %v3285 = vpop.f32.mrf.mxu0
          %v3286 = vadd.f32 0.0, %v3285
          %3287 = vmatmul.f32.gmra.mxu0 %v3080
          %v3288 = vpop.f32.mrf.mxu0
          %v3289 = vadd.f32 0.0, %v3288
          %3290 = vmatmul.f32.gmra.mxu0 %v3083
          %v3291 = vpop.f32.mrf.mxu0
          %v3292 = vadd.f32 0.0, %v3291
          %3293 = vmatmul.f32.gmra.mxu0 %v3086
          %v3294 = vpop.f32.mrf.mxu0
          %v3295 = vadd.f32 0.0, %v3294
          %3296 = vmatmul.f32.gmra.mxu0 %v3089
          %v3297 = vpop.f32.mrf.mxu0
          %v3298 = vadd.f32 0.0, %v3297
          %3299 = vmatmul.f32.gmra.mxu0 %v3092
          %v3300 = vpop.f32.mrf.mxu0
          %v3301 = vadd.f32 0.0, %v3300
          %3302 = vmatmul.f32.gmra.mxu0 %v3095
          %v3303 = vpop.f32.mrf.mxu0
          %v3304 = vadd.f32 0.0, %v3303
          %3305 = vmatmul.f32.gmra.mxu0 %v3098
          %v3306 = vpop.f32.mrf.mxu0
          %v3307 = vadd.f32 0.0, %v3306
          %3308 = vmatmul.f32.gmra.mxu0 %v3101
          %v3309 = vpop.f32.mrf.mxu0
          %v3310 = vadd.f32 0.0, %v3309
          %3311 = vmatmul.f32.gmra.mxu0 %v3104
          %v3312 = vpop.f32.mrf.mxu0
          %v3313 = vadd.f32 0.0, %v3312
          %3314 = vmatmul.f32.gmra.mxu0 %v3107
          %v3315 = vpop.f32.mrf.mxu0
          %v3316 = vadd.f32 0.0, %v3315
          %3317 = vmatmul.f32.gmra.mxu0 %v3110
          %v3318 = vpop.f32.mrf.mxu0
          %v3319 = vadd.f32 0.0, %v3318
          %3320 = vmatmul.f32.gmra.mxu0 %v3113
          %v3321 = vpop.f32.mrf.mxu0
          %v3322 = vadd.f32 0.0, %v3321
          %3323 = vmatmul.f32.gmra.mxu0 %v3116
          %v3324 = vpop.f32.mrf.mxu0
          %v3325 = vadd.f32 0.0, %v3324
          %3326 = vmatmul.f32.gmra.mxu0 %v3119
          %v3327 = vpop.f32.mrf.mxu0
          %v3328 = vadd.f32 0.0, %v3327
          %3329 = vmatmul.f32.gmra.mxu0 %v3122
          %v3330 = vpop.f32.mrf.mxu0
          %v3331 = vadd.f32 0.0, %v3330
          %3332 = vmatmul.f32.gmra.mxu0 %v3125
          %v3333 = vpop.f32.mrf.mxu0
          %v3334 = vadd.f32 0.0, %v3333
          %3335 = vmatmul.f32.gmra.mxu0 %v3128
          %v3336 = vpop.f32.mrf.mxu0
          %v3337 = vadd.f32 0.0, %v3336
          %3338 = vmatmul.f32.gmra.mxu0 %v3131
          %v3339 = vpop.f32.mrf.mxu0
          %v3340 = vadd.f32 0.0, %v3339
          %3341 = vmatmul.f32.gmra.mxu0 %v3134
          %v3342 = vpop.f32.mrf.mxu0
          %v3343 = vadd.f32 0.0, %v3342
          %3344 = vmatmul.f32.gmra.mxu0 %v3137
          %v3345 = vpop.f32.mrf.mxu0
          %v3346 = vadd.f32 0.0, %v3345
          %3347 = vmatmul.f32.gmra.mxu0 %v3140
          %v3348 = vpop.f32.mrf.mxu0
          %v3349 = vadd.f32 0.0, %v3348
          %3350 = vmatmul.f32.gmra.mxu0 %v3143
          %v3351 = vpop.f32.mrf.mxu0
          %v3352 = vadd.f32 0.0, %v3351
          %3353 = vmatmul.f32.gmra.mxu0 %v3146
          %v3354 = vpop.f32.mrf.mxu0
          %v3355 = vadd.f32 0.0, %v3354
          %3356 = vmatmul.f32.gmra.mxu0 %v3149
          %v3357 = vpop.f32.mrf.mxu0
          %v3358 = vadd.f32 0.0, %v3357
          %3359 = vmatmul.f32.gmra.mxu0 %v3152
          %v3360 = vpop.f32.mrf.mxu0
          %v3361 = vadd.f32 0.0, %v3360
          %3362 = vmatmul.f32.gmra.mxu0 %v3155
          %v3363 = vpop.f32.mrf.mxu0
          %v3364 = vadd.f32 0.0, %v3363
          %3365 = vmatmul.f32.gmra.mxu0 %v3158
          %v3366 = vpop.f32.mrf.mxu0
          %v3367 = vadd.f32 0.0, %v3366
          %3368 = vmatmul.f32.gmra.mxu0 %v3161
          %v3369 = vpop.f32.mrf.mxu0
          %v3370 = vadd.f32 0.0, %v3369
          %3371 = vmatmul.f32.gmra.mxu0 %v3164
          %v3372 = vpop.f32.mrf.mxu0
          %v3373 = vadd.f32 0.0, %v3372
          %3374 = vmatmul.f32.gmra.mxu0 %v3167
          %v3375 = vpop.f32.mrf.mxu0
          %v3376 = vadd.f32 0.0, %v3375
          %3377 = vmatmul.f32.gmra.mxu0 %v3170
          %v3378 = vpop.f32.mrf.mxu0
          %v3379 = vadd.f32 0.0, %v3378
          %3380 = vmatmul.f32.gmra.mxu0 %v3173
          %v3381 = vpop.f32.mrf.mxu0
          %v3382 = vadd.f32 0.0, %v3381
          %3383 = vmatmul.f32.gmra.mxu0 %v3176
          %v3384 = vpop.f32.mrf.mxu0
          %v3385 = vadd.f32 0.0, %v3384
          %3386 = vmatmul.f32.gmra.mxu0 %v3179
          %v3387 = vpop.f32.mrf.mxu0
          %v3388 = vadd.f32 0.0, %v3387
          %3389 = vmatmul.f32.gmra.mxu0 %v3182
          %v3390 = vpop.f32.mrf.mxu0
          %v3391 = vadd.f32 0.0, %v3390
          %3392 = vmatmul.f32.gmra.mxu0 %v3185
          %v3393 = vpop.f32.mrf.mxu0
          %v3394 = vadd.f32 0.0, %v3393
          %3395 = vmatmul.f32.gmra.mxu0 %v3188
          %v3396 = vpop.f32.mrf.mxu0
          %v3397 = vadd.f32 0.0, %v3396
          %3398 = vmatmul.f32.gmra.mxu0 %v3191
          %v3399 = vpop.f32.mrf.mxu0
          %v3400 = vadd.f32 0.0, %v3399
          %3401 = vmatmul.f32.gmra.mxu0 %v3194
          %v3402 = vpop.f32.mrf.mxu0
          %v3403 = vadd.f32 0.0, %v3402
          %3404 = vmatmul.f32.gmra.mxu0 %v3197
          %v3405 = vpop.f32.mrf.mxu0
          %v3406 = vadd.f32 0.0, %v3405
          %3407 = vmatmul.f32.gmra.mxu0 %v3200
          %v3408 = vpop.f32.mrf.mxu0
          %v3409 = vadd.f32 0.0, %v3408
          %3410 = vmatmul.f32.gmra.mxu0 %v3203
          %v3411 = vpop.f32.mrf.mxu0
          %v3412 = vadd.f32 0.0, %v3411
          %3413 = vmatmul.f32.gmra.mxu0 %v3206
          %v3414 = vpop.f32.mrf.mxu0
          %v3415 = vadd.f32 0.0, %v3414
          %3416 = vmatmul.f32.gmra.mxu0 %v3209
          %v3417 = vpop.f32.mrf.mxu0
          %v3418 = vadd.f32 0.0, %v3417
          %3419 = vmatmul.f32.gmra.mxu0 %v3212
          %v3420 = vpop.f32.mrf.mxu0
          %v3421 = vadd.f32 0.0, %v3420
          %3422 = vmatmul.f32.gmra.mxu0 %v3215
          %v3423 = vpop.f32.mrf.mxu0
          %v3424 = vadd.f32 0.0, %v3423
          %3425 = vmatmul.f32.gmra.mxu0 %v3218
          %v3426 = vpop.f32.mrf.mxu0
          %v3427 = vadd.f32 0.0, %v3426
          %3428 = vmatmul.f32.gmra.mxu0 %v3221
          %v3429 = vpop.f32.mrf.mxu0
          %v3430 = vadd.f32 0.0, %v3429
          %3431 = vmatmul.f32.gmra.mxu0 %v3224
          %v3432 = vpop.f32.mrf.mxu0
          %v3433 = vadd.f32 0.0, %v3432
          %3434 = vmatmul.f32.gmra.mxu0 %v3227
          %v3435 = vpop.f32.mrf.mxu0
          %v3436 = vadd.f32 0.0, %v3435
          %3437 = vmatmul.f32.gmra.mxu0 %v3230
          %v3438 = vpop.f32.mrf.mxu0
          %v3439 = vadd.f32 0.0, %v3438
          %3440 = vmatmul.f32.gmra.mxu0 %v3233
          %v3441 = vpop.f32.mrf.mxu0
          %v3442 = vadd.f32 0.0, %v3441
          %3443 = vmatmul.f32.gmra.mxu0 %v3236
          %v3444 = vpop.f32.mrf.mxu0
          %v3445 = vadd.f32 0.0, %v3444
          %3446 = vmatmul.f32.gmra.mxu0 %v3239
          %v3447 = vpop.f32.mrf.mxu0
          %v3448 = vadd.f32 0.0, %v3447
          %3449 = vmatmul.f32.gmra.mxu0 %v3242
          %v3450 = vpop.f32.mrf.mxu0
          %v3451 = vadd.f32 0.0, %v3450
          %3452 = vmatmul.f32.gmra.mxu0 %v3245
          %v3453 = vpop.f32.mrf.mxu0
          %v3454 = vadd.f32 0.0, %v3453
          %3455 = vmatmul.f32.gmra.mxu0 %v3248
          %v3456 = vpop.f32.mrf.mxu0
          %v3457 = vadd.f32 0.0, %v3456
          %3458 = vdwg.mxu0
          %v3459 = vadd.f32 %v2922, %v3268
          %v3460 = vadd.f32 %v2923, %v3271
          %v3461 = vadd.f32 %v2924, %v3274
          %v3462 = vadd.f32 %v2925, %v3277
          %v3463 = vadd.f32 %v2926, %v3280
          %v3464 = vadd.f32 %v2927, %v3283
          %v3465 = vadd.f32 %v2928, %v3286
          %v3466 = vadd.f32 %v2929, %v3289
          %v3467 = vadd.f32 %v2930, %v3292
          %v3468 = vadd.f32 %v2931, %v3295
          %v3469 = vadd.f32 %v2932, %v3298
          %v3470 = vadd.f32 %v2933, %v3301
          %v3471 = vadd.f32 %v2934, %v3304
          %v3472 = vadd.f32 %v2935, %v3307
          %v3473 = vadd.f32 %v2936, %v3310
          %v3474 = vadd.f32 %v2937, %v3313
          %v3475 = vadd.f32 %v2938, %v3316
          %v3476 = vadd.f32 %v2939, %v3319
          %v3477 = vadd.f32 %v2940, %v3322
          %v3478 = vadd.f32 %v2941, %v3325
          %v3479 = vadd.f32 %v2942, %v3328
          %v3480 = vadd.f32 %v2943, %v3331
          %v3481 = vadd.f32 %v2944, %v3334
          %v3482 = vadd.f32 %v2945, %v3337
          %v3483 = vadd.f32 %v2946, %v3340
          %v3484 = vadd.f32 %v2947, %v3343
          %v3485 = vadd.f32 %v2948, %v3346
          %v3486 = vadd.f32 %v2949, %v3349
          %v3487 = vadd.f32 %v2950, %v3352
          %v3488 = vadd.f32 %v2951, %v3355
          %v3489 = vadd.f32 %v2952, %v3358
          %v3490 = vadd.f32 %v2953, %v3361
          %v3491 = vadd.f32 %v2954, %v3364
          %v3492 = vadd.f32 %v2955, %v3367
          %v3493 = vadd.f32 %v2956, %v3370
          %v3494 = vadd.f32 %v2957, %v3373
          %v3495 = vadd.f32 %v2958, %v3376
          %v3496 = vadd.f32 %v2959, %v3379
          %v3497 = vadd.f32 %v2960, %v3382
          %v3498 = vadd.f32 %v2961, %v3385
          %v3499 = vadd.f32 %v2962, %v3388
          %v3500 = vadd.f32 %v2963, %v3391
          %v3501 = vadd.f32 %v2964, %v3394
          %v3502 = vadd.f32 %v2965, %v3397
          %v3503 = vadd.f32 %v2966, %v3400
          %v3504 = vadd.f32 %v2967, %v3403
          %v3505 = vadd.f32 %v2968, %v3406
          %v3506 = vadd.f32 %v2969, %v3409
          %v3507 = vadd.f32 %v2970, %v3412
          %v3508 = vadd.f32 %v2971, %v3415
          %v3509 = vadd.f32 %v2972, %v3418
          %v3510 = vadd.f32 %v2973, %v3421
          %v3511 = vadd.f32 %v2974, %v3424
          %v3512 = vadd.f32 %v2975, %v3427
          %v3513 = vadd.f32 %v2976, %v3430
          %v3514 = vadd.f32 %v2977, %v3433
          %v3515 = vadd.f32 %v2978, %v3436
          %v3516 = vadd.f32 %v2979, %v3439
          %v3517 = vadd.f32 %v2980, %v3442
          %v3518 = vadd.f32 %v2981, %v3445
          %v3519 = vadd.f32 %v2982, %v3448
          %v3520 = vadd.f32 %v2983, %v3451
          %v3521 = vadd.f32 %v2984, %v3454
          %v3522 = vadd.f32 %v2985, %v3457
          %v3523 = vld [vmem:[%s2988 + $0x1] sm:$0xff]
          %v3524 = vld [vmem:[%s2988 + $0x9] sm:$0xff]
          %v3525 = vld [vmem:[%s2988 + $0x11] sm:$0xff]
          %v3526 = vld [vmem:[%s2988 + $0x19] sm:$0xff]
          %v3527 = vld [vmem:[%s2988 + $0x21] sm:$0xff]
          %v3528 = vld [vmem:[%s2988 + $0x29] sm:$0xff]
          %v3529 = vld [vmem:[%s2988 + $0x31] sm:$0xff]
          %v3530 = vld [vmem:[%s2988 + $0x39] sm:$0xff]
          %v3531 = vld [vmem:[%s2988 + $0x49] sm:$0xff]
          %v3532 = vld [vmem:[%s2988 + $0x51] sm:$0xff]
          %v3533 = vld [vmem:[%s2988 + $0x59] sm:$0xff]
          %v3534 = vld [vmem:[%s2988 + $0x61] sm:$0xff]
          %v3535 = vld [vmem:[%s2988 + $0x69] sm:$0xff]
          %v3536 = vld [vmem:[%s2988 + $0x71] sm:$0xff]
          %v3537 = vld [vmem:[%s2988 + $0x79] sm:$0xff]
          %v3538 = vld [vmem:[%s2988 + $0x81] sm:$0xff]
          %v3539 = vld [vmem:[%s2988 + $0x91] sm:$0xff]
          %v3540 = vld [vmem:[%s2988 + $0x99] sm:$0xff]
          %v3541 = vld [vmem:[%s2988 + $0xa1] sm:$0xff]
          %v3542 = vld [vmem:[%s2988 + $0xa9] sm:$0xff]
          %v3543 = vld [vmem:[%s2988 + $0xb1] sm:$0xff]
          %v3544 = vld [vmem:[%s2988 + $0xb9] sm:$0xff]
          %v3545 = vld [vmem:[%s2988 + $0xc1] sm:$0xff]
          %v3546 = vld [vmem:[%s2988 + $0xc9] sm:$0xff]
          %v3547 = vld [vmem:[%s2988 + $0xd9] sm:$0xff]
          %v3548 = vld [vmem:[%s2988 + $0xe1] sm:$0xff]
          %v3549 = vld [vmem:[%s2988 + $0xe9] sm:$0xff]
          %v3550 = vld [vmem:[%s2988 + $0xf1] sm:$0xff]
          %v3551 = vld [vmem:[%s2988 + $0xf9] sm:$0xff]
          %v3552 = vld [vmem:[%s2988 + $0x101] sm:$0xff]
          %v3553 = vld [vmem:[%s2988 + $0x109] sm:$0xff]
          %v3554 = vld [vmem:[%s2988 + $0x111] sm:$0xff]
          %v3555 = vld [vmem:[%s2988 + $0x121] sm:$0xff]
          %v3556 = vld [vmem:[%s2988 + $0x129] sm:$0xff]
          %v3557 = vld [vmem:[%s2988 + $0x131] sm:$0xff]
          %v3558 = vld [vmem:[%s2988 + $0x139] sm:$0xff]
          %v3559 = vld [vmem:[%s2988 + $0x141] sm:$0xff]
          %v3560 = vld [vmem:[%s2988 + $0x149] sm:$0xff]
          %v3561 = vld [vmem:[%s2988 + $0x151] sm:$0xff]
          %v3562 = vld [vmem:[%s2988 + $0x159] sm:$0xff]
          %v3563 = vld [vmem:[%s2988 + $0x169] sm:$0xff]
          %v3564 = vld [vmem:[%s2988 + $0x171] sm:$0xff]
          %v3565 = vld [vmem:[%s2988 + $0x179] sm:$0xff]
          %v3566 = vld [vmem:[%s2988 + $0x181] sm:$0xff]
          %v3567 = vld [vmem:[%s2988 + $0x189] sm:$0xff]
          %v3568 = vld [vmem:[%s2988 + $0x191] sm:$0xff]
          %v3569 = vld [vmem:[%s2988 + $0x199] sm:$0xff]
          %v3570 = vld [vmem:[%s2988 + $0x1a1] sm:$0xff]
          %v3571 = vld [vmem:[%s2988 + $0x1b1] sm:$0xff]
          %v3572 = vld [vmem:[%s2988 + $0x1b9] sm:$0xff]
          %v3573 = vld [vmem:[%s2988 + $0x1c1] sm:$0xff]
          %v3574 = vld [vmem:[%s2988 + $0x1c9] sm:$0xff]
          %v3575 = vld [vmem:[%s2988 + $0x1d1] sm:$0xff]
          %v3576 = vld [vmem:[%s2988 + $0x1d9] sm:$0xff]
          %v3577 = vld [vmem:[%s2988 + $0x1e1] sm:$0xff]
          %v3578 = vld [vmem:[%s2988 + $0x1e9] sm:$0xff]
          %v3579 = vld [vmem:[%s2988 + $0x1f9] sm:$0xff]
          %v3580 = vld [vmem:[%s2988 + $0x201] sm:$0xff]
          %v3581 = vld [vmem:[%s2988 + $0x209] sm:$0xff]
          %v3582 = vld [vmem:[%s2988 + $0x211] sm:$0xff]
          %v3583 = vld [vmem:[%s2988 + $0x219] sm:$0xff]
          %v3584 = vld [vmem:[%s2988 + $0x221] sm:$0xff]
          %v3585 = vld [vmem:[%s2988 + $0x229] sm:$0xff]
          %v3586 = vld [vmem:[%s2988 + $0x231] sm:$0xff]
          %s3587 = scalar_lea.vmem [#allocation12], 128
          %v3588 = vld [vmem:[%s3587] sm:$0xff]
          %v3589 = vld [vmem:[%s3587 + $0x8] sm:$0xff]
          %v3590 = vld [vmem:[%s3587 + $0x10] sm:$0xff]
          %v3591 = vld [vmem:[%s3587 + $0x18] sm:$0xff]
          %v3593 = vsel %vm544, %v3523, 0
          %v3596 = vsel %vm544, %v3524, 0
          %v3599 = vsel %vm544, %v3525, 0
          %v3602 = vsel %vm544, %v3526, 0
          %v3605 = vsel %vm544, %v3527, 0
          %v3608 = vsel %vm544, %v3528, 0
          %v3611 = vsel %vm544, %v3529, 0
          %v3614 = vsel %vm544, %v3530, 0
          %v3617 = vsel %vm544, %v3531, 0
          %v3620 = vsel %vm544, %v3532, 0
          %v3623 = vsel %vm544, %v3533, 0
          %v3626 = vsel %vm544, %v3534, 0
          %v3629 = vsel %vm544, %v3535, 0
          %v3632 = vsel %vm544, %v3536, 0
          %v3635 = vsel %vm544, %v3537, 0
          %v3638 = vsel %vm544, %v3538, 0
          %v3641 = vsel %vm544, %v3539, 0
          %v3644 = vsel %vm544, %v3540, 0
          %v3647 = vsel %vm544, %v3541, 0
          %v3650 = vsel %vm544, %v3542, 0
          %v3653 = vsel %vm544, %v3543, 0
          %v3656 = vsel %vm544, %v3544, 0
          %v3659 = vsel %vm544, %v3545, 0
          %v3662 = vsel %vm544, %v3546, 0
          %v3665 = vsel %vm544, %v3547, 0
          %v3668 = vsel %vm544, %v3548, 0
          %v3671 = vsel %vm544, %v3549, 0
          %v3674 = vsel %vm544, %v3550, 0
          %v3677 = vsel %vm544, %v3551, 0
          %v3680 = vsel %vm544, %v3552, 0
          %v3683 = vsel %vm544, %v3553, 0
          %v3686 = vsel %vm544, %v3554, 0
          %v3689 = vsel %vm544, %v3555, 0
          %v3692 = vsel %vm544, %v3556, 0
          %v3695 = vsel %vm544, %v3557, 0
          %v3698 = vsel %vm544, %v3558, 0
          %v3701 = vsel %vm544, %v3559, 0
          %v3704 = vsel %vm544, %v3560, 0
          %v3707 = vsel %vm544, %v3561, 0
          %v3710 = vsel %vm544, %v3562, 0
          %v3713 = vsel %vm544, %v3563, 0
          %v3716 = vsel %vm544, %v3564, 0
          %v3719 = vsel %vm544, %v3565, 0
          %v3722 = vsel %vm544, %v3566, 0
          %v3725 = vsel %vm544, %v3567, 0
          %v3728 = vsel %vm544, %v3568, 0
          %v3731 = vsel %vm544, %v3569, 0
          %v3734 = vsel %vm544, %v3570, 0
          %v3737 = vsel %vm544, %v3571, 0
          %v3740 = vsel %vm544, %v3572, 0
          %v3743 = vsel %vm544, %v3573, 0
          %v3746 = vsel %vm544, %v3574, 0
          %v3749 = vsel %vm544, %v3575, 0
          %v3752 = vsel %vm544, %v3576, 0
          %v3755 = vsel %vm544, %v3577, 0
          %v3758 = vsel %vm544, %v3578, 0
          %v3761 = vsel %vm544, %v3579, 0
          %v3764 = vsel %vm544, %v3580, 0
          %v3767 = vsel %vm544, %v3581, 0
          %v3770 = vsel %vm544, %v3582, 0
          %v3773 = vsel %vm544, %v3583, 0
          %v3776 = vsel %vm544, %v3584, 0
          %v3779 = vsel %vm544, %v3585, 0
          %v3782 = vsel %vm544, %v3586, 0
          %3784 = vmatpush.msra.mxu0 0.0
          %3785 = vmatpush.msra.mxu0 0.0
          %3786 = vmatpush.msra.mxu0 0.0
          %3787 = vmatpush.msra.mxu0 0.0
          %3788 = vmatpush.msra.mxu0 0.0
          %3789 = vmatpush.msra.mxu0 0.0
          %3790 = vmatpush.msra.mxu0 0.0
          %3791 = vmatpush.msra.mxu0 0.0
          %3792 = vmatpush.msra.mxu0 0.0
          %3793 = vmatpush.msra.mxu0 0.0
          %3794 = vmatpush.msra.mxu0 0.0
          %3795 = vmatpush.msra.mxu0 0.0
          %3796 = vmatpush.msra.mxu0 %v3591
          %3797 = vmatpush.msra.mxu0 %v3590
          %3798 = vmatpush.msra.mxu0 %v3589
          %3799 = vmatpush.msra.mxu0 %v3588
          %3800 = vmatmul.f32.gmra.mxu0 %v3593
          %v3801 = vpop.f32.mrf.mxu0
          %v3802 = vadd.f32 0.0, %v3801
          %3803 = vmatmul.f32.gmra.mxu0 %v3596
          %v3804 = vpop.f32.mrf.mxu0
          %v3805 = vadd.f32 0.0, %v3804
          %3806 = vmatmul.f32.gmra.mxu0 %v3599
          %v3807 = vpop.f32.mrf.mxu0
          %v3808 = vadd.f32 0.0, %v3807
          %3809 = vmatmul.f32.gmra.mxu0 %v3602
          %v3810 = vpop.f32.mrf.mxu0
          %v3811 = vadd.f32 0.0, %v3810
          %3812 = vmatmul.f32.gmra.mxu0 %v3605
          %v3813 = vpop.f32.mrf.mxu0
          %v3814 = vadd.f32 0.0, %v3813
          %3815 = vmatmul.f32.gmra.mxu0 %v3608
          %v3816 = vpop.f32.mrf.mxu0
          %v3817 = vadd.f32 0.0, %v3816
          %3818 = vmatmul.f32.gmra.mxu0 %v3611
          %v3819 = vpop.f32.mrf.mxu0
          %v3820 = vadd.f32 0.0, %v3819
          %3821 = vmatmul.f32.gmra.mxu0 %v3614
          %v3822 = vpop.f32.mrf.mxu0
          %v3823 = vadd.f32 0.0, %v3822
          %3824 = vmatmul.f32.gmra.mxu0 %v3617
          %v3825 = vpop.f32.mrf.mxu0
          %v3826 = vadd.f32 0.0, %v3825
          %3827 = vmatmul.f32.gmra.mxu0 %v3620
          %v3828 = vpop.f32.mrf.mxu0
          %v3829 = vadd.f32 0.0, %v3828
          %3830 = vmatmul.f32.gmra.mxu0 %v3623
          %v3831 = vpop.f32.mrf.mxu0
          %v3832 = vadd.f32 0.0, %v3831
          %3833 = vmatmul.f32.gmra.mxu0 %v3626
          %v3834 = vpop.f32.mrf.mxu0
          %v3835 = vadd.f32 0.0, %v3834
          %3836 = vmatmul.f32.gmra.mxu0 %v3629
          %v3837 = vpop.f32.mrf.mxu0
          %v3838 = vadd.f32 0.0, %v3837
          %3839 = vmatmul.f32.gmra.mxu0 %v3632
          %v3840 = vpop.f32.mrf.mxu0
          %v3841 = vadd.f32 0.0, %v3840
          %3842 = vmatmul.f32.gmra.mxu0 %v3635
          %v3843 = vpop.f32.mrf.mxu0
          %v3844 = vadd.f32 0.0, %v3843
          %3845 = vmatmul.f32.gmra.mxu0 %v3638
          %v3846 = vpop.f32.mrf.mxu0
          %v3847 = vadd.f32 0.0, %v3846
          %3848 = vmatmul.f32.gmra.mxu0 %v3641
          %v3849 = vpop.f32.mrf.mxu0
          %v3850 = vadd.f32 0.0, %v3849
          %3851 = vmatmul.f32.gmra.mxu0 %v3644
          %v3852 = vpop.f32.mrf.mxu0
          %v3853 = vadd.f32 0.0, %v3852
          %3854 = vmatmul.f32.gmra.mxu0 %v3647
          %v3855 = vpop.f32.mrf.mxu0
          %v3856 = vadd.f32 0.0, %v3855
          %3857 = vmatmul.f32.gmra.mxu0 %v3650
          %v3858 = vpop.f32.mrf.mxu0
          %v3859 = vadd.f32 0.0, %v3858
          %3860 = vmatmul.f32.gmra.mxu0 %v3653
          %v3861 = vpop.f32.mrf.mxu0
          %v3862 = vadd.f32 0.0, %v3861
          %3863 = vmatmul.f32.gmra.mxu0 %v3656
          %v3864 = vpop.f32.mrf.mxu0
          %v3865 = vadd.f32 0.0, %v3864
          %3866 = vmatmul.f32.gmra.mxu0 %v3659
          %v3867 = vpop.f32.mrf.mxu0
          %v3868 = vadd.f32 0.0, %v3867
          %3869 = vmatmul.f32.gmra.mxu0 %v3662
          %v3870 = vpop.f32.mrf.mxu0
          %v3871 = vadd.f32 0.0, %v3870
          %3872 = vmatmul.f32.gmra.mxu0 %v3665
          %v3873 = vpop.f32.mrf.mxu0
          %v3874 = vadd.f32 0.0, %v3873
          %3875 = vmatmul.f32.gmra.mxu0 %v3668
          %v3876 = vpop.f32.mrf.mxu0
          %v3877 = vadd.f32 0.0, %v3876
          %3878 = vmatmul.f32.gmra.mxu0 %v3671
          %v3879 = vpop.f32.mrf.mxu0
          %v3880 = vadd.f32 0.0, %v3879
          %3881 = vmatmul.f32.gmra.mxu0 %v3674
          %v3882 = vpop.f32.mrf.mxu0
          %v3883 = vadd.f32 0.0, %v3882
          %3884 = vmatmul.f32.gmra.mxu0 %v3677
          %v3885 = vpop.f32.mrf.mxu0
          %v3886 = vadd.f32 0.0, %v3885
          %3887 = vmatmul.f32.gmra.mxu0 %v3680
          %v3888 = vpop.f32.mrf.mxu0
          %v3889 = vadd.f32 0.0, %v3888
          %3890 = vmatmul.f32.gmra.mxu0 %v3683
          %v3891 = vpop.f32.mrf.mxu0
          %v3892 = vadd.f32 0.0, %v3891
          %3893 = vmatmul.f32.gmra.mxu0 %v3686
          %v3894 = vpop.f32.mrf.mxu0
          %v3895 = vadd.f32 0.0, %v3894
          %3896 = vmatmul.f32.gmra.mxu0 %v3689
          %v3897 = vpop.f32.mrf.mxu0
          %v3898 = vadd.f32 0.0, %v3897
          %3899 = vmatmul.f32.gmra.mxu0 %v3692
          %v3900 = vpop.f32.mrf.mxu0
          %v3901 = vadd.f32 0.0, %v3900
          %3902 = vmatmul.f32.gmra.mxu0 %v3695
          %v3903 = vpop.f32.mrf.mxu0
          %v3904 = vadd.f32 0.0, %v3903
          %3905 = vmatmul.f32.gmra.mxu0 %v3698
          %v3906 = vpop.f32.mrf.mxu0
          %v3907 = vadd.f32 0.0, %v3906
          %3908 = vmatmul.f32.gmra.mxu0 %v3701
          %v3909 = vpop.f32.mrf.mxu0
          %v3910 = vadd.f32 0.0, %v3909
          %3911 = vmatmul.f32.gmra.mxu0 %v3704
          %v3912 = vpop.f32.mrf.mxu0
          %v3913 = vadd.f32 0.0, %v3912
          %3914 = vmatmul.f32.gmra.mxu0 %v3707
          %v3915 = vpop.f32.mrf.mxu0
          %v3916 = vadd.f32 0.0, %v3915
          %3917 = vmatmul.f32.gmra.mxu0 %v3710
          %v3918 = vpop.f32.mrf.mxu0
          %v3919 = vadd.f32 0.0, %v3918
          %3920 = vmatmul.f32.gmra.mxu0 %v3713
          %v3921 = vpop.f32.mrf.mxu0
          %v3922 = vadd.f32 0.0, %v3921
          %3923 = vmatmul.f32.gmra.mxu0 %v3716
          %v3924 = vpop.f32.mrf.mxu0
          %v3925 = vadd.f32 0.0, %v3924
          %3926 = vmatmul.f32.gmra.mxu0 %v3719
          %v3927 = vpop.f32.mrf.mxu0
          %v3928 = vadd.f32 0.0, %v3927
          %3929 = vmatmul.f32.gmra.mxu0 %v3722
          %v3930 = vpop.f32.mrf.mxu0
          %v3931 = vadd.f32 0.0, %v3930
          %3932 = vmatmul.f32.gmra.mxu0 %v3725
          %v3933 = vpop.f32.mrf.mxu0
          %v3934 = vadd.f32 0.0, %v3933
          %3935 = vmatmul.f32.gmra.mxu0 %v3728
          %v3936 = vpop.f32.mrf.mxu0
          %v3937 = vadd.f32 0.0, %v3936
          %3938 = vmatmul.f32.gmra.mxu0 %v3731
          %v3939 = vpop.f32.mrf.mxu0
          %v3940 = vadd.f32 0.0, %v3939
          %3941 = vmatmul.f32.gmra.mxu0 %v3734
          %v3942 = vpop.f32.mrf.mxu0
          %v3943 = vadd.f32 0.0, %v3942
          %3944 = vmatmul.f32.gmra.mxu0 %v3737
          %v3945 = vpop.f32.mrf.mxu0
          %v3946 = vadd.f32 0.0, %v3945
          %3947 = vmatmul.f32.gmra.mxu0 %v3740
          %v3948 = vpop.f32.mrf.mxu0
          %v3949 = vadd.f32 0.0, %v3948
          %3950 = vmatmul.f32.gmra.mxu0 %v3743
          %v3951 = vpop.f32.mrf.mxu0
          %v3952 = vadd.f32 0.0, %v3951
          %3953 = vmatmul.f32.gmra.mxu0 %v3746
          %v3954 = vpop.f32.mrf.mxu0
          %v3955 = vadd.f32 0.0, %v3954
          %3956 = vmatmul.f32.gmra.mxu0 %v3749
          %v3957 = vpop.f32.mrf.mxu0
          %v3958 = vadd.f32 0.0, %v3957
          %3959 = vmatmul.f32.gmra.mxu0 %v3752
          %v3960 = vpop.f32.mrf.mxu0
          %v3961 = vadd.f32 0.0, %v3960
          %3962 = vmatmul.f32.gmra.mxu0 %v3755
          %v3963 = vpop.f32.mrf.mxu0
          %v3964 = vadd.f32 0.0, %v3963
          %3965 = vmatmul.f32.gmra.mxu0 %v3758
          %v3966 = vpop.f32.mrf.mxu0
          %v3967 = vadd.f32 0.0, %v3966
          %3968 = vmatmul.f32.gmra.mxu0 %v3761
          %v3969 = vpop.f32.mrf.mxu0
          %v3970 = vadd.f32 0.0, %v3969
          %3971 = vmatmul.f32.gmra.mxu0 %v3764
          %v3972 = vpop.f32.mrf.mxu0
          %v3973 = vadd.f32 0.0, %v3972
          %3974 = vmatmul.f32.gmra.mxu0 %v3767
          %v3975 = vpop.f32.mrf.mxu0
          %v3976 = vadd.f32 0.0, %v3975
          %3977 = vmatmul.f32.gmra.mxu0 %v3770
          %v3978 = vpop.f32.mrf.mxu0
          %v3979 = vadd.f32 0.0, %v3978
          %3980 = vmatmul.f32.gmra.mxu0 %v3773
          %v3981 = vpop.f32.mrf.mxu0
          %v3982 = vadd.f32 0.0, %v3981
          %3983 = vmatmul.f32.gmra.mxu0 %v3776
          %v3984 = vpop.f32.mrf.mxu0
          %v3985 = vadd.f32 0.0, %v3984
          %3986 = vmatmul.f32.gmra.mxu0 %v3779
          %v3987 = vpop.f32.mrf.mxu0
          %v3988 = vadd.f32 0.0, %v3987
          %3989 = vmatmul.f32.gmra.mxu0 %v3782
          %v3990 = vpop.f32.mrf.mxu0
          %v3991 = vadd.f32 0.0, %v3990
          %3992 = vdwg.mxu0
          %v3993 = vadd.f32 %v3459, %v3802
          %v3994 = vadd.f32 %v3460, %v3805
          %v3995 = vadd.f32 %v3461, %v3808
          %v3996 = vadd.f32 %v3462, %v3811
          %v3997 = vadd.f32 %v3463, %v3814
          %v3998 = vadd.f32 %v3464, %v3817
          %v3999 = vadd.f32 %v3465, %v3820
          %v4000 = vadd.f32 %v3466, %v3823
          %v4001 = vadd.f32 %v3467, %v3826
          %v4002 = vadd.f32 %v3468, %v3829
          %v4003 = vadd.f32 %v3469, %v3832
          %v4004 = vadd.f32 %v3470, %v3835
          %v4005 = vadd.f32 %v3471, %v3838
          %v4006 = vadd.f32 %v3472, %v3841
          %v4007 = vadd.f32 %v3473, %v3844
          %v4008 = vadd.f32 %v3474, %v3847
          %v4009 = vadd.f32 %v3475, %v3850
          %v4010 = vadd.f32 %v3476, %v3853
          %v4011 = vadd.f32 %v3477, %v3856
          %v4012 = vadd.f32 %v3478, %v3859
          %v4013 = vadd.f32 %v3479, %v3862
          %v4014 = vadd.f32 %v3480, %v3865
          %v4015 = vadd.f32 %v3481, %v3868
          %v4016 = vadd.f32 %v3482, %v3871
          %v4017 = vadd.f32 %v3483, %v3874
          %v4018 = vadd.f32 %v3484, %v3877
          %v4019 = vadd.f32 %v3485, %v3880
          %v4020 = vadd.f32 %v3486, %v3883
          %v4021 = vadd.f32 %v3487, %v3886
          %v4022 = vadd.f32 %v3488, %v3889
          %v4023 = vadd.f32 %v3489, %v3892
          %v4024 = vadd.f32 %v3490, %v3895
          %v4025 = vadd.f32 %v3491, %v3898
          %v4026 = vadd.f32 %v3492, %v3901
          %v4027 = vadd.f32 %v3493, %v3904
          %v4028 = vadd.f32 %v3494, %v3907
          %v4029 = vadd.f32 %v3495, %v3910
          %v4030 = vadd.f32 %v3496, %v3913
          %v4031 = vadd.f32 %v3497, %v3916
          %v4032 = vadd.f32 %v3498, %v3919
          %v4033 = vadd.f32 %v3499, %v3922
          %v4034 = vadd.f32 %v3500, %v3925
          %v4035 = vadd.f32 %v3501, %v3928
          %v4036 = vadd.f32 %v3502, %v3931
          %v4037 = vadd.f32 %v3503, %v3934
          %v4038 = vadd.f32 %v3504, %v3937
          %v4039 = vadd.f32 %v3505, %v3940
          %v4040 = vadd.f32 %v3506, %v3943
          %v4041 = vadd.f32 %v3507, %v3946
          %v4042 = vadd.f32 %v3508, %v3949
          %v4043 = vadd.f32 %v3509, %v3952
          %v4044 = vadd.f32 %v3510, %v3955
          %v4045 = vadd.f32 %v3511, %v3958
          %v4046 = vadd.f32 %v3512, %v3961
          %v4047 = vadd.f32 %v3513, %v3964
          %v4048 = vadd.f32 %v3514, %v3967
          %v4049 = vadd.f32 %v3515, %v3970
          %v4050 = vadd.f32 %v3516, %v3973
          %v4051 = vadd.f32 %v3517, %v3976
          %v4052 = vadd.f32 %v3518, %v3979
          %v4053 = vadd.f32 %v3519, %v3982
          %v4054 = vadd.f32 %v3520, %v3985
          %v4055 = vadd.f32 %v3521, %v3988
          %v4056 = vadd.f32 %v3522, %v3991
          %v4057 = vld [vmem:[%s2988 + $0x2] sm:$0xff]
          %v4058 = vld [vmem:[%s2988 + $0xa] sm:$0xff]
          %v4059 = vld [vmem:[%s2988 + $0x12] sm:$0xff]
          %v4060 = vld [vmem:[%s2988 + $0x1a] sm:$0xff]
          %v4061 = vld [vmem:[%s2988 + $0x22] sm:$0xff]
          %v4062 = vld [vmem:[%s2988 + $0x2a] sm:$0xff]
          %v4063 = vld [vmem:[%s2988 + $0x32] sm:$0xff]
          %v4064 = vld [vmem:[%s2988 + $0x3a] sm:$0xff]
          %v4065 = vld [vmem:[%s2988 + $0x4a] sm:$0xff]
          %v4066 = vld [vmem:[%s2988 + $0x52] sm:$0xff]
          %v4067 = vld [vmem:[%s2988 + $0x5a] sm:$0xff]
          %v4068 = vld [vmem:[%s2988 + $0x62] sm:$0xff]
          %v4069 = vld [vmem:[%s2988 + $0x6a] sm:$0xff]
          %v4070 = vld [vmem:[%s2988 + $0x72] sm:$0xff]
          %v4071 = vld [vmem:[%s2988 + $0x7a] sm:$0xff]
          %v4072 = vld [vmem:[%s2988 + $0x82] sm:$0xff]
          %v4073 = vld [vmem:[%s2988 + $0x92] sm:$0xff]
          %v4074 = vld [vmem:[%s2988 + $0x9a] sm:$0xff]
          %v4075 = vld [vmem:[%s2988 + $0xa2] sm:$0xff]
          %v4076 = vld [vmem:[%s2988 + $0xaa] sm:$0xff]
          %v4077 = vld [vmem:[%s2988 + $0xb2] sm:$0xff]
          %v4078 = vld [vmem:[%s2988 + $0xba] sm:$0xff]
          %v4079 = vld [vmem:[%s2988 + $0xc2] sm:$0xff]
          %v4080 = vld [vmem:[%s2988 + $0xca] sm:$0xff]
          %v4081 = vld [vmem:[%s2988 + $0xda] sm:$0xff]
          %v4082 = vld [vmem:[%s2988 + $0xe2] sm:$0xff]
          %v4083 = vld [vmem:[%s2988 + $0xea] sm:$0xff]
          %v4084 = vld [vmem:[%s2988 + $0xf2] sm:$0xff]
          %v4085 = vld [vmem:[%s2988 + $0xfa] sm:$0xff]
          %v4086 = vld [vmem:[%s2988 + $0x102] sm:$0xff]
          %v4087 = vld [vmem:[%s2988 + $0x10a] sm:$0xff]
          %v4088 = vld [vmem:[%s2988 + $0x112] sm:$0xff]
          %v4089 = vld [vmem:[%s2988 + $0x122] sm:$0xff]
          %v4090 = vld [vmem:[%s2988 + $0x12a] sm:$0xff]
          %v4091 = vld [vmem:[%s2988 + $0x132] sm:$0xff]
          %v4092 = vld [vmem:[%s2988 + $0x13a] sm:$0xff]
          %v4093 = vld [vmem:[%s2988 + $0x142] sm:$0xff]
          %v4094 = vld [vmem:[%s2988 + $0x14a] sm:$0xff]
          %v4095 = vld [vmem:[%s2988 + $0x152] sm:$0xff]
          %v4096 = vld [vmem:[%s2988 + $0x15a] sm:$0xff]
          %v4097 = vld [vmem:[%s2988 + $0x16a] sm:$0xff]
          %v4098 = vld [vmem:[%s2988 + $0x172] sm:$0xff]
          %v4099 = vld [vmem:[%s2988 + $0x17a] sm:$0xff]
          %v4100 = vld [vmem:[%s2988 + $0x182] sm:$0xff]
          %v4101 = vld [vmem:[%s2988 + $0x18a] sm:$0xff]
          %v4102 = vld [vmem:[%s2988 + $0x192] sm:$0xff]
          %v4103 = vld [vmem:[%s2988 + $0x19a] sm:$0xff]
          %v4104 = vld [vmem:[%s2988 + $0x1a2] sm:$0xff]
          %v4105 = vld [vmem:[%s2988 + $0x1b2] sm:$0xff]
          %v4106 = vld [vmem:[%s2988 + $0x1ba] sm:$0xff]
          %v4107 = vld [vmem:[%s2988 + $0x1c2] sm:$0xff]
          %v4108 = vld [vmem:[%s2988 + $0x1ca] sm:$0xff]
          %v4109 = vld [vmem:[%s2988 + $0x1d2] sm:$0xff]
          %v4110 = vld [vmem:[%s2988 + $0x1da] sm:$0xff]
          %v4111 = vld [vmem:[%s2988 + $0x1e2] sm:$0xff]
          %v4112 = vld [vmem:[%s2988 + $0x1ea] sm:$0xff]
          %v4113 = vld [vmem:[%s2988 + $0x1fa] sm:$0xff]
          %v4114 = vld [vmem:[%s2988 + $0x202] sm:$0xff]
          %v4115 = vld [vmem:[%s2988 + $0x20a] sm:$0xff]
          %v4116 = vld [vmem:[%s2988 + $0x212] sm:$0xff]
          %v4117 = vld [vmem:[%s2988 + $0x21a] sm:$0xff]
          %v4118 = vld [vmem:[%s2988 + $0x222] sm:$0xff]
          %v4119 = vld [vmem:[%s2988 + $0x22a] sm:$0xff]
          %v4120 = vld [vmem:[%s2988 + $0x232] sm:$0xff]
          %s4121 = scalar_lea.vmem [#allocation12], 160
          %v4122 = vld [vmem:[%s4121] sm:$0xff]
          %v4123 = vld [vmem:[%s4121 + $0x8] sm:$0xff]
          %v4124 = vld [vmem:[%s4121 + $0x10] sm:$0xff]
          %v4125 = vld [vmem:[%s4121 + $0x18] sm:$0xff]
          %v4127 = vsel %vm544, %v4057, 0
          %v4130 = vsel %vm544, %v4058, 0
          %v4133 = vsel %vm544, %v4059, 0
          %v4136 = vsel %vm544, %v4060, 0
          %v4139 = vsel %vm544, %v4061, 0
          %v4142 = vsel %vm544, %v4062, 0
          %v4145 = vsel %vm544, %v4063, 0
          %v4148 = vsel %vm544, %v4064, 0
          %v4151 = vsel %vm544, %v4065, 0
          %v4154 = vsel %vm544, %v4066, 0
          %v4157 = vsel %vm544, %v4067, 0
          %v4160 = vsel %vm544, %v4068, 0
          %v4163 = vsel %vm544, %v4069, 0
          %v4166 = vsel %vm544, %v4070, 0
          %v4169 = vsel %vm544, %v4071, 0
          %v4172 = vsel %vm544, %v4072, 0
          %v4175 = vsel %vm544, %v4073, 0
          %v4178 = vsel %vm544, %v4074, 0
          %v4181 = vsel %vm544, %v4075, 0
          %v4184 = vsel %vm544, %v4076, 0
          %v4187 = vsel %vm544, %v4077, 0
          %v4190 = vsel %vm544, %v4078, 0
          %v4193 = vsel %vm544, %v4079, 0
          %v4196 = vsel %vm544, %v4080, 0
          %v4199 = vsel %vm544, %v4081, 0
          %v4202 = vsel %vm544, %v4082, 0
          %v4205 = vsel %vm544, %v4083, 0
          %v4208 = vsel %vm544, %v4084, 0
          %v4211 = vsel %vm544, %v4085, 0
          %v4214 = vsel %vm544, %v4086, 0
          %v4217 = vsel %vm544, %v4087, 0
          %v4220 = vsel %vm544, %v4088, 0
          %v4223 = vsel %vm544, %v4089, 0
          %v4226 = vsel %vm544, %v4090, 0
          %v4229 = vsel %vm544, %v4091, 0
          %v4232 = vsel %vm544, %v4092, 0
          %v4235 = vsel %vm544, %v4093, 0
          %v4238 = vsel %vm544, %v4094, 0
          %v4241 = vsel %vm544, %v4095, 0
          %v4244 = vsel %vm544, %v4096, 0
          %v4247 = vsel %vm544, %v4097, 0
          %v4250 = vsel %vm544, %v4098, 0
          %v4253 = vsel %vm544, %v4099, 0
          %v4256 = vsel %vm544, %v4100, 0
          %v4259 = vsel %vm544, %v4101, 0
          %v4262 = vsel %vm544, %v4102, 0
          %v4265 = vsel %vm544, %v4103, 0
          %v4268 = vsel %vm544, %v4104, 0
          %v4271 = vsel %vm544, %v4105, 0
          %v4274 = vsel %vm544, %v4106, 0
          %v4277 = vsel %vm544, %v4107, 0
          %v4280 = vsel %vm544, %v4108, 0
          %v4283 = vsel %vm544, %v4109, 0
          %v4286 = vsel %vm544, %v4110, 0
          %v4289 = vsel %vm544, %v4111, 0
          %v4292 = vsel %vm544, %v4112, 0
          %v4295 = vsel %vm544, %v4113, 0
          %v4298 = vsel %vm544, %v4114, 0
          %v4301 = vsel %vm544, %v4115, 0
          %v4304 = vsel %vm544, %v4116, 0
          %v4307 = vsel %vm544, %v4117, 0
          %v4310 = vsel %vm544, %v4118, 0
          %v4313 = vsel %vm544, %v4119, 0
          %v4316 = vsel %vm544, %v4120, 0
          %4318 = vmatpush.msra.mxu0 0.0
          %4319 = vmatpush.msra.mxu0 0.0
          %4320 = vmatpush.msra.mxu0 0.0
          %4321 = vmatpush.msra.mxu0 0.0
          %4322 = vmatpush.msra.mxu0 0.0
          %4323 = vmatpush.msra.mxu0 0.0
          %4324 = vmatpush.msra.mxu0 0.0
          %4325 = vmatpush.msra.mxu0 0.0
          %4326 = vmatpush.msra.mxu0 0.0
          %4327 = vmatpush.msra.mxu0 0.0
          %4328 = vmatpush.msra.mxu0 0.0
          %4329 = vmatpush.msra.mxu0 0.0
          %4330 = vmatpush.msra.mxu0 %v4125
          %4331 = vmatpush.msra.mxu0 %v4124
          %4332 = vmatpush.msra.mxu0 %v4123
          %4333 = vmatpush.msra.mxu0 %v4122
          %4334 = vmatmul.f32.gmra.mxu0 %v4127
          %v4335 = vpop.f32.mrf.mxu0
          %v4336 = vadd.f32 0.0, %v4335
          %4337 = vmatmul.f32.gmra.mxu0 %v4130
          %v4338 = vpop.f32.mrf.mxu0
          %v4339 = vadd.f32 0.0, %v4338
          %4340 = vmatmul.f32.gmra.mxu0 %v4133
          %v4341 = vpop.f32.mrf.mxu0
          %v4342 = vadd.f32 0.0, %v4341
          %4343 = vmatmul.f32.gmra.mxu0 %v4136
          %v4344 = vpop.f32.mrf.mxu0
          %v4345 = vadd.f32 0.0, %v4344
          %4346 = vmatmul.f32.gmra.mxu0 %v4139
          %v4347 = vpop.f32.mrf.mxu0
          %v4348 = vadd.f32 0.0, %v4347
          %4349 = vmatmul.f32.gmra.mxu0 %v4142
          %v4350 = vpop.f32.mrf.mxu0
          %v4351 = vadd.f32 0.0, %v4350
          %4352 = vmatmul.f32.gmra.mxu0 %v4145
          %v4353 = vpop.f32.mrf.mxu0
          %v4354 = vadd.f32 0.0, %v4353
          %4355 = vmatmul.f32.gmra.mxu0 %v4148
          %v4356 = vpop.f32.mrf.mxu0
          %v4357 = vadd.f32 0.0, %v4356
          %4358 = vmatmul.f32.gmra.mxu0 %v4151
          %v4359 = vpop.f32.mrf.mxu0
          %v4360 = vadd.f32 0.0, %v4359
          %4361 = vmatmul.f32.gmra.mxu0 %v4154
          %v4362 = vpop.f32.mrf.mxu0
          %v4363 = vadd.f32 0.0, %v4362
          %4364 = vmatmul.f32.gmra.mxu0 %v4157
          %v4365 = vpop.f32.mrf.mxu0
          %v4366 = vadd.f32 0.0, %v4365
          %4367 = vmatmul.f32.gmra.mxu0 %v4160
          %v4368 = vpop.f32.mrf.mxu0
          %v4369 = vadd.f32 0.0, %v4368
          %4370 = vmatmul.f32.gmra.mxu0 %v4163
          %v4371 = vpop.f32.mrf.mxu0
          %v4372 = vadd.f32 0.0, %v4371
          %4373 = vmatmul.f32.gmra.mxu0 %v4166
          %v4374 = vpop.f32.mrf.mxu0
          %v4375 = vadd.f32 0.0, %v4374
          %4376 = vmatmul.f32.gmra.mxu0 %v4169
          %v4377 = vpop.f32.mrf.mxu0
          %v4378 = vadd.f32 0.0, %v4377
          %4379 = vmatmul.f32.gmra.mxu0 %v4172
          %v4380 = vpop.f32.mrf.mxu0
          %v4381 = vadd.f32 0.0, %v4380
          %4382 = vmatmul.f32.gmra.mxu0 %v4175
          %v4383 = vpop.f32.mrf.mxu0
          %v4384 = vadd.f32 0.0, %v4383
          %4385 = vmatmul.f32.gmra.mxu0 %v4178
          %v4386 = vpop.f32.mrf.mxu0
          %v4387 = vadd.f32 0.0, %v4386
          %4388 = vmatmul.f32.gmra.mxu0 %v4181
          %v4389 = vpop.f32.mrf.mxu0
          %v4390 = vadd.f32 0.0, %v4389
          %4391 = vmatmul.f32.gmra.mxu0 %v4184
          %v4392 = vpop.f32.mrf.mxu0
          %v4393 = vadd.f32 0.0, %v4392
          %4394 = vmatmul.f32.gmra.mxu0 %v4187
          %v4395 = vpop.f32.mrf.mxu0
          %v4396 = vadd.f32 0.0, %v4395
          %4397 = vmatmul.f32.gmra.mxu0 %v4190
          %v4398 = vpop.f32.mrf.mxu0
          %v4399 = vadd.f32 0.0, %v4398
          %4400 = vmatmul.f32.gmra.mxu0 %v4193
          %v4401 = vpop.f32.mrf.mxu0
          %v4402 = vadd.f32 0.0, %v4401
          %4403 = vmatmul.f32.gmra.mxu0 %v4196
          %v4404 = vpop.f32.mrf.mxu0
          %v4405 = vadd.f32 0.0, %v4404
          %4406 = vmatmul.f32.gmra.mxu0 %v4199
          %v4407 = vpop.f32.mrf.mxu0
          %v4408 = vadd.f32 0.0, %v4407
          %4409 = vmatmul.f32.gmra.mxu0 %v4202
          %v4410 = vpop.f32.mrf.mxu0
          %v4411 = vadd.f32 0.0, %v4410
          %4412 = vmatmul.f32.gmra.mxu0 %v4205
          %v4413 = vpop.f32.mrf.mxu0
          %v4414 = vadd.f32 0.0, %v4413
          %4415 = vmatmul.f32.gmra.mxu0 %v4208
          %v4416 = vpop.f32.mrf.mxu0
          %v4417 = vadd.f32 0.0, %v4416
          %4418 = vmatmul.f32.gmra.mxu0 %v4211
          %v4419 = vpop.f32.mrf.mxu0
          %v4420 = vadd.f32 0.0, %v4419
          %4421 = vmatmul.f32.gmra.mxu0 %v4214
          %v4422 = vpop.f32.mrf.mxu0
          %v4423 = vadd.f32 0.0, %v4422
          %4424 = vmatmul.f32.gmra.mxu0 %v4217
          %v4425 = vpop.f32.mrf.mxu0
          %v4426 = vadd.f32 0.0, %v4425
          %4427 = vmatmul.f32.gmra.mxu0 %v4220
          %v4428 = vpop.f32.mrf.mxu0
          %v4429 = vadd.f32 0.0, %v4428
          %4430 = vmatmul.f32.gmra.mxu0 %v4223
          %v4431 = vpop.f32.mrf.mxu0
          %v4432 = vadd.f32 0.0, %v4431
          %4433 = vmatmul.f32.gmra.mxu0 %v4226
          %v4434 = vpop.f32.mrf.mxu0
          %v4435 = vadd.f32 0.0, %v4434
          %4436 = vmatmul.f32.gmra.mxu0 %v4229
          %v4437 = vpop.f32.mrf.mxu0
          %v4438 = vadd.f32 0.0, %v4437
          %4439 = vmatmul.f32.gmra.mxu0 %v4232
          %v4440 = vpop.f32.mrf.mxu0
          %v4441 = vadd.f32 0.0, %v4440
          %4442 = vmatmul.f32.gmra.mxu0 %v4235
          %v4443 = vpop.f32.mrf.mxu0
          %v4444 = vadd.f32 0.0, %v4443
          %4445 = vmatmul.f32.gmra.mxu0 %v4238
          %v4446 = vpop.f32.mrf.mxu0
          %v4447 = vadd.f32 0.0, %v4446
          %4448 = vmatmul.f32.gmra.mxu0 %v4241
          %v4449 = vpop.f32.mrf.mxu0
          %v4450 = vadd.f32 0.0, %v4449
          %4451 = vmatmul.f32.gmra.mxu0 %v4244
          %v4452 = vpop.f32.mrf.mxu0
          %v4453 = vadd.f32 0.0, %v4452
          %4454 = vmatmul.f32.gmra.mxu0 %v4247
          %v4455 = vpop.f32.mrf.mxu0
          %v4456 = vadd.f32 0.0, %v4455
          %4457 = vmatmul.f32.gmra.mxu0 %v4250
          %v4458 = vpop.f32.mrf.mxu0
          %v4459 = vadd.f32 0.0, %v4458
          %4460 = vmatmul.f32.gmra.mxu0 %v4253
          %v4461 = vpop.f32.mrf.mxu0
          %v4462 = vadd.f32 0.0, %v4461
          %4463 = vmatmul.f32.gmra.mxu0 %v4256
          %v4464 = vpop.f32.mrf.mxu0
          %v4465 = vadd.f32 0.0, %v4464
          %4466 = vmatmul.f32.gmra.mxu0 %v4259
          %v4467 = vpop.f32.mrf.mxu0
          %v4468 = vadd.f32 0.0, %v4467
          %4469 = vmatmul.f32.gmra.mxu0 %v4262
          %v4470 = vpop.f32.mrf.mxu0
          %v4471 = vadd.f32 0.0, %v4470
          %4472 = vmatmul.f32.gmra.mxu0 %v4265
          %v4473 = vpop.f32.mrf.mxu0
          %v4474 = vadd.f32 0.0, %v4473
          %4475 = vmatmul.f32.gmra.mxu0 %v4268
          %v4476 = vpop.f32.mrf.mxu0
          %v4477 = vadd.f32 0.0, %v4476
          %4478 = vmatmul.f32.gmra.mxu0 %v4271
          %v4479 = vpop.f32.mrf.mxu0
          %v4480 = vadd.f32 0.0, %v4479
          %4481 = vmatmul.f32.gmra.mxu0 %v4274
          %v4482 = vpop.f32.mrf.mxu0
          %v4483 = vadd.f32 0.0, %v4482
          %4484 = vmatmul.f32.gmra.mxu0 %v4277
          %v4485 = vpop.f32.mrf.mxu0
          %v4486 = vadd.f32 0.0, %v4485
          %4487 = vmatmul.f32.gmra.mxu0 %v4280
          %v4488 = vpop.f32.mrf.mxu0
          %v4489 = vadd.f32 0.0, %v4488
          %4490 = vmatmul.f32.gmra.mxu0 %v4283
          %v4491 = vpop.f32.mrf.mxu0
          %v4492 = vadd.f32 0.0, %v4491
          %4493 = vmatmul.f32.gmra.mxu0 %v4286
          %v4494 = vpop.f32.mrf.mxu0
          %v4495 = vadd.f32 0.0, %v4494
          %4496 = vmatmul.f32.gmra.mxu0 %v4289
          %v4497 = vpop.f32.mrf.mxu0
          %v4498 = vadd.f32 0.0, %v4497
          %4499 = vmatmul.f32.gmra.mxu0 %v4292
          %v4500 = vpop.f32.mrf.mxu0
          %v4501 = vadd.f32 0.0, %v4500
          %4502 = vmatmul.f32.gmra.mxu0 %v4295
          %v4503 = vpop.f32.mrf.mxu0
          %v4504 = vadd.f32 0.0, %v4503
          %4505 = vmatmul.f32.gmra.mxu0 %v4298
          %v4506 = vpop.f32.mrf.mxu0
          %v4507 = vadd.f32 0.0, %v4506
          %4508 = vmatmul.f32.gmra.mxu0 %v4301
          %v4509 = vpop.f32.mrf.mxu0
          %v4510 = vadd.f32 0.0, %v4509
          %4511 = vmatmul.f32.gmra.mxu0 %v4304
          %v4512 = vpop.f32.mrf.mxu0
          %v4513 = vadd.f32 0.0, %v4512
          %4514 = vmatmul.f32.gmra.mxu0 %v4307
          %v4515 = vpop.f32.mrf.mxu0
          %v4516 = vadd.f32 0.0, %v4515
          %4517 = vmatmul.f32.gmra.mxu0 %v4310
          %v4518 = vpop.f32.mrf.mxu0
          %v4519 = vadd.f32 0.0, %v4518
          %4520 = vmatmul.f32.gmra.mxu0 %v4313
          %v4521 = vpop.f32.mrf.mxu0
          %v4522 = vadd.f32 0.0, %v4521
          %4523 = vmatmul.f32.gmra.mxu0 %v4316
          %v4524 = vpop.f32.mrf.mxu0
          %v4525 = vadd.f32 0.0, %v4524
          %4526 = vdwg.mxu0
          %v4527 = vadd.f32 %v3993, %v4336
          %v4528 = vadd.f32 %v3994, %v4339
          %v4529 = vadd.f32 %v3995, %v4342
          %v4530 = vadd.f32 %v3996, %v4345
          %v4531 = vadd.f32 %v3997, %v4348
          %v4532 = vadd.f32 %v3998, %v4351
          %v4533 = vadd.f32 %v3999, %v4354
          %v4534 = vadd.f32 %v4000, %v4357
          %v4535 = vadd.f32 %v4001, %v4360
          %v4536 = vadd.f32 %v4002, %v4363
          %v4537 = vadd.f32 %v4003, %v4366
          %v4538 = vadd.f32 %v4004, %v4369
          %v4539 = vadd.f32 %v4005, %v4372
          %v4540 = vadd.f32 %v4006, %v4375
          %v4541 = vadd.f32 %v4007, %v4378
          %v4542 = vadd.f32 %v4008, %v4381
          %v4543 = vadd.f32 %v4009, %v4384
          %v4544 = vadd.f32 %v4010, %v4387
          %v4545 = vadd.f32 %v4011, %v4390
          %v4546 = vadd.f32 %v4012, %v4393
          %v4547 = vadd.f32 %v4013, %v4396
          %v4548 = vadd.f32 %v4014, %v4399
          %v4549 = vadd.f32 %v4015, %v4402
          %v4550 = vadd.f32 %v4016, %v4405
          %v4551 = vadd.f32 %v4017, %v4408
          %v4552 = vadd.f32 %v4018, %v4411
          %v4553 = vadd.f32 %v4019, %v4414
          %v4554 = vadd.f32 %v4020, %v4417
          %v4555 = vadd.f32 %v4021, %v4420
          %v4556 = vadd.f32 %v4022, %v4423
          %v4557 = vadd.f32 %v4023, %v4426
          %v4558 = vadd.f32 %v4024, %v4429
          %v4559 = vadd.f32 %v4025, %v4432
          %v4560 = vadd.f32 %v4026, %v4435
          %v4561 = vadd.f32 %v4027, %v4438
          %v4562 = vadd.f32 %v4028, %v4441
          %v4563 = vadd.f32 %v4029, %v4444
          %v4564 = vadd.f32 %v4030, %v4447
          %v4565 = vadd.f32 %v4031, %v4450
          %v4566 = vadd.f32 %v4032, %v4453
          %v4567 = vadd.f32 %v4033, %v4456
          %v4568 = vadd.f32 %v4034, %v4459
          %v4569 = vadd.f32 %v4035, %v4462
          %v4570 = vadd.f32 %v4036, %v4465
          %v4571 = vadd.f32 %v4037, %v4468
          %v4572 = vadd.f32 %v4038, %v4471
          %v4573 = vadd.f32 %v4039, %v4474
          %v4574 = vadd.f32 %v4040, %v4477
          %v4575 = vadd.f32 %v4041, %v4480
          %v4576 = vadd.f32 %v4042, %v4483
          %v4577 = vadd.f32 %v4043, %v4486
          %v4578 = vadd.f32 %v4044, %v4489
          %v4579 = vadd.f32 %v4045, %v4492
          %v4580 = vadd.f32 %v4046, %v4495
          %v4581 = vadd.f32 %v4047, %v4498
          %v4582 = vadd.f32 %v4048, %v4501
          %v4583 = vadd.f32 %v4049, %v4504
          %v4584 = vadd.f32 %v4050, %v4507
          %v4585 = vadd.f32 %v4051, %v4510
          %v4586 = vadd.f32 %v4052, %v4513
          %v4587 = vadd.f32 %v4053, %v4516
          %v4588 = vadd.f32 %v4054, %v4519
          %v4589 = vadd.f32 %v4055, %v4522
          %v4590 = vadd.f32 %v4056, %v4525
          %s4591 = sadd.s32 %s1510, 2
          %s4592 = smul.u32 %s4591, 72
          %s4593 = scalar_lea.vmem [#allocation4], %s4592
          %v4594 = vld [vmem:[%s4593] sm:$0xff]
          %v4595 = vld [vmem:[%s4593 + $0x8] sm:$0xff]
          %v4596 = vld [vmem:[%s4593 + $0x10] sm:$0xff]
          %v4597 = vld [vmem:[%s4593 + $0x18] sm:$0xff]
          %v4598 = vld [vmem:[%s4593 + $0x20] sm:$0xff]
          %v4599 = vld [vmem:[%s4593 + $0x28] sm:$0xff]
          %v4600 = vld [vmem:[%s4593 + $0x30] sm:$0xff]
          %v4601 = vld [vmem:[%s4593 + $0x38] sm:$0xff]
          %v4602 = vld [vmem:[%s4593 + $0x48] sm:$0xff]
          %v4603 = vld [vmem:[%s4593 + $0x50] sm:$0xff]
          %v4604 = vld [vmem:[%s4593 + $0x58] sm:$0xff]
          %v4605 = vld [vmem:[%s4593 + $0x60] sm:$0xff]
          %v4606 = vld [vmem:[%s4593 + $0x68] sm:$0xff]
          %v4607 = vld [vmem:[%s4593 + $0x70] sm:$0xff]
          %v4608 = vld [vmem:[%s4593 + $0x78] sm:$0xff]
          %v4609 = vld [vmem:[%s4593 + $0x80] sm:$0xff]
          %v4610 = vld [vmem:[%s4593 + $0x90] sm:$0xff]
          %v4611 = vld [vmem:[%s4593 + $0x98] sm:$0xff]
          %v4612 = vld [vmem:[%s4593 + $0xa0] sm:$0xff]
          %v4613 = vld [vmem:[%s4593 + $0xa8] sm:$0xff]
          %v4614 = vld [vmem:[%s4593 + $0xb0] sm:$0xff]
          %v4615 = vld [vmem:[%s4593 + $0xb8] sm:$0xff]
          %v4616 = vld [vmem:[%s4593 + $0xc0] sm:$0xff]
          %v4617 = vld [vmem:[%s4593 + $0xc8] sm:$0xff]
          %v4618 = vld [vmem:[%s4593 + $0xd8] sm:$0xff]
          %v4619 = vld [vmem:[%s4593 + $0xe0] sm:$0xff]
          %v4620 = vld [vmem:[%s4593 + $0xe8] sm:$0xff]
          %v4621 = vld [vmem:[%s4593 + $0xf0] sm:$0xff]
          %v4622 = vld [vmem:[%s4593 + $0xf8] sm:$0xff]
          %v4623 = vld [vmem:[%s4593 + $0x100] sm:$0xff]
          %v4624 = vld [vmem:[%s4593 + $0x108] sm:$0xff]
          %v4625 = vld [vmem:[%s4593 + $0x110] sm:$0xff]
          %v4626 = vld [vmem:[%s4593 + $0x120] sm:$0xff]
          %v4627 = vld [vmem:[%s4593 + $0x128] sm:$0xff]
          %v4628 = vld [vmem:[%s4593 + $0x130] sm:$0xff]
          %v4629 = vld [vmem:[%s4593 + $0x138] sm:$0xff]
          %v4630 = vld [vmem:[%s4593 + $0x140] sm:$0xff]
          %v4631 = vld [vmem:[%s4593 + $0x148] sm:$0xff]
          %v4632 = vld [vmem:[%s4593 + $0x150] sm:$0xff]
          %v4633 = vld [vmem:[%s4593 + $0x158] sm:$0xff]
          %v4634 = vld [vmem:[%s4593 + $0x168] sm:$0xff]
          %v4635 = vld [vmem:[%s4593 + $0x170] sm:$0xff]
          %v4636 = vld [vmem:[%s4593 + $0x178] sm:$0xff]
          %v4637 = vld [vmem:[%s4593 + $0x180] sm:$0xff]
          %v4638 = vld [vmem:[%s4593 + $0x188] sm:$0xff]
          %v4639 = vld [vmem:[%s4593 + $0x190] sm:$0xff]
          %v4640 = vld [vmem:[%s4593 + $0x198] sm:$0xff]
          %v4641 = vld [vmem:[%s4593 + $0x1a0] sm:$0xff]
          %v4642 = vld [vmem:[%s4593 + $0x1b0] sm:$0xff]
          %v4643 = vld [vmem:[%s4593 + $0x1b8] sm:$0xff]
          %v4644 = vld [vmem:[%s4593 + $0x1c0] sm:$0xff]
          %v4645 = vld [vmem:[%s4593 + $0x1c8] sm:$0xff]
          %v4646 = vld [vmem:[%s4593 + $0x1d0] sm:$0xff]
          %v4647 = vld [vmem:[%s4593 + $0x1d8] sm:$0xff]
          %v4648 = vld [vmem:[%s4593 + $0x1e0] sm:$0xff]
          %v4649 = vld [vmem:[%s4593 + $0x1e8] sm:$0xff]
          %v4650 = vld [vmem:[%s4593 + $0x1f8] sm:$0xff]
          %v4651 = vld [vmem:[%s4593 + $0x200] sm:$0xff]
          %v4652 = vld [vmem:[%s4593 + $0x208] sm:$0xff]
          %v4653 = vld [vmem:[%s4593 + $0x210] sm:$0xff]
          %v4654 = vld [vmem:[%s4593 + $0x218] sm:$0xff]
          %v4655 = vld [vmem:[%s4593 + $0x220] sm:$0xff]
          %v4656 = vld [vmem:[%s4593 + $0x228] sm:$0xff]
          %v4657 = vld [vmem:[%s4593 + $0x230] sm:$0xff]
          %s4658 = scalar_lea.vmem [#allocation12], 192
          %v4659 = vld [vmem:[%s4658] sm:$0xff]
          %v4660 = vld [vmem:[%s4658 + $0x8] sm:$0xff]
          %v4661 = vld [vmem:[%s4658 + $0x10] sm:$0xff]
          %v4662 = vld [vmem:[%s4658 + $0x18] sm:$0xff]
          %v4664 = vsel %vm544, %v4594, 0
          %v4667 = vsel %vm544, %v4595, 0
          %v4670 = vsel %vm544, %v4596, 0
          %v4673 = vsel %vm544, %v4597, 0
          %v4676 = vsel %vm544, %v4598, 0
          %v4679 = vsel %vm544, %v4599, 0
          %v4682 = vsel %vm544, %v4600, 0
          %v4685 = vsel %vm544, %v4601, 0
          %v4688 = vsel %vm544, %v4602, 0
          %v4691 = vsel %vm544, %v4603, 0
          %v4694 = vsel %vm544, %v4604, 0
          %v4697 = vsel %vm544, %v4605, 0
          %v4700 = vsel %vm544, %v4606, 0
          %v4703 = vsel %vm544, %v4607, 0
          %v4706 = vsel %vm544, %v4608, 0
          %v4709 = vsel %vm544, %v4609, 0
          %v4712 = vsel %vm544, %v4610, 0
          %v4715 = vsel %vm544, %v4611, 0
          %v4718 = vsel %vm544, %v4612, 0
          %v4721 = vsel %vm544, %v4613, 0
          %v4724 = vsel %vm544, %v4614, 0
          %v4727 = vsel %vm544, %v4615, 0
          %v4730 = vsel %vm544, %v4616, 0
          %v4733 = vsel %vm544, %v4617, 0
          %v4736 = vsel %vm544, %v4618, 0
          %v4739 = vsel %vm544, %v4619, 0
          %v4742 = vsel %vm544, %v4620, 0
          %v4745 = vsel %vm544, %v4621, 0
          %v4748 = vsel %vm544, %v4622, 0
          %v4751 = vsel %vm544, %v4623, 0
          %v4754 = vsel %vm544, %v4624, 0
          %v4757 = vsel %vm544, %v4625, 0
          %v4760 = vsel %vm544, %v4626, 0
          %v4763 = vsel %vm544, %v4627, 0
          %v4766 = vsel %vm544, %v4628, 0
          %v4769 = vsel %vm544, %v4629, 0
          %v4772 = vsel %vm544, %v4630, 0
          %v4775 = vsel %vm544, %v4631, 0
          %v4778 = vsel %vm544, %v4632, 0
          %v4781 = vsel %vm544, %v4633, 0
          %v4784 = vsel %vm544, %v4634, 0
          %v4787 = vsel %vm544, %v4635, 0
          %v4790 = vsel %vm544, %v4636, 0
          %v4793 = vsel %vm544, %v4637, 0
          %v4796 = vsel %vm544, %v4638, 0
          %v4799 = vsel %vm544, %v4639, 0
          %v4802 = vsel %vm544, %v4640, 0
          %v4805 = vsel %vm544, %v4641, 0
          %v4808 = vsel %vm544, %v4642, 0
          %v4811 = vsel %vm544, %v4643, 0
          %v4814 = vsel %vm544, %v4644, 0
          %v4817 = vsel %vm544, %v4645, 0
          %v4820 = vsel %vm544, %v4646, 0
          %v4823 = vsel %vm544, %v4647, 0
          %v4826 = vsel %vm544, %v4648, 0
          %v4829 = vsel %vm544, %v4649, 0
          %v4832 = vsel %vm544, %v4650, 0
          %v4835 = vsel %vm544, %v4651, 0
          %v4838 = vsel %vm544, %v4652, 0
          %v4841 = vsel %vm544, %v4653, 0
          %v4844 = vsel %vm544, %v4654, 0
          %v4847 = vsel %vm544, %v4655, 0
          %v4850 = vsel %vm544, %v4656, 0
          %v4853 = vsel %vm544, %v4657, 0
          %4855 = vmatpush.msra.mxu0 0.0
          %4856 = vmatpush.msra.mxu0 0.0
          %4857 = vmatpush.msra.mxu0 0.0
          %4858 = vmatpush.msra.mxu0 0.0
          %4859 = vmatpush.msra.mxu0 0.0
          %4860 = vmatpush.msra.mxu0 0.0
          %4861 = vmatpush.msra.mxu0 0.0
          %4862 = vmatpush.msra.mxu0 0.0
          %4863 = vmatpush.msra.mxu0 0.0
          %4864 = vmatpush.msra.mxu0 0.0
          %4865 = vmatpush.msra.mxu0 0.0
          %4866 = vmatpush.msra.mxu0 0.0
          %4867 = vmatpush.msra.mxu0 %v4662
          %4868 = vmatpush.msra.mxu0 %v4661
          %4869 = vmatpush.msra.mxu0 %v4660
          %4870 = vmatpush.msra.mxu0 %v4659
          %4871 = vmatmul.f32.gmra.mxu0 %v4664
          %v4872 = vpop.f32.mrf.mxu0
          %v4873 = vadd.f32 0.0, %v4872
          %4874 = vmatmul.f32.gmra.mxu0 %v4667
          %v4875 = vpop.f32.mrf.mxu0
          %v4876 = vadd.f32 0.0, %v4875
          %4877 = vmatmul.f32.gmra.mxu0 %v4670
          %v4878 = vpop.f32.mrf.mxu0
          %v4879 = vadd.f32 0.0, %v4878
          %4880 = vmatmul.f32.gmra.mxu0 %v4673
          %v4881 = vpop.f32.mrf.mxu0
          %v4882 = vadd.f32 0.0, %v4881
          %4883 = vmatmul.f32.gmra.mxu0 %v4676
          %v4884 = vpop.f32.mrf.mxu0
          %v4885 = vadd.f32 0.0, %v4884
          %4886 = vmatmul.f32.gmra.mxu0 %v4679
          %v4887 = vpop.f32.mrf.mxu0
          %v4888 = vadd.f32 0.0, %v4887
          %4889 = vmatmul.f32.gmra.mxu0 %v4682
          %v4890 = vpop.f32.mrf.mxu0
          %v4891 = vadd.f32 0.0, %v4890
          %4892 = vmatmul.f32.gmra.mxu0 %v4685
          %v4893 = vpop.f32.mrf.mxu0
          %v4894 = vadd.f32 0.0, %v4893
          %4895 = vmatmul.f32.gmra.mxu0 %v4688
          %v4896 = vpop.f32.mrf.mxu0
          %v4897 = vadd.f32 0.0, %v4896
          %4898 = vmatmul.f32.gmra.mxu0 %v4691
          %v4899 = vpop.f32.mrf.mxu0
          %v4900 = vadd.f32 0.0, %v4899
          %4901 = vmatmul.f32.gmra.mxu0 %v4694
          %v4902 = vpop.f32.mrf.mxu0
          %v4903 = vadd.f32 0.0, %v4902
          %4904 = vmatmul.f32.gmra.mxu0 %v4697
          %v4905 = vpop.f32.mrf.mxu0
          %v4906 = vadd.f32 0.0, %v4905
          %4907 = vmatmul.f32.gmra.mxu0 %v4700
          %v4908 = vpop.f32.mrf.mxu0
          %v4909 = vadd.f32 0.0, %v4908
          %4910 = vmatmul.f32.gmra.mxu0 %v4703
          %v4911 = vpop.f32.mrf.mxu0
          %v4912 = vadd.f32 0.0, %v4911
          %4913 = vmatmul.f32.gmra.mxu0 %v4706
          %v4914 = vpop.f32.mrf.mxu0
          %v4915 = vadd.f32 0.0, %v4914
          %4916 = vmatmul.f32.gmra.mxu0 %v4709
          %v4917 = vpop.f32.mrf.mxu0
          %v4918 = vadd.f32 0.0, %v4917
          %4919 = vmatmul.f32.gmra.mxu0 %v4712
          %v4920 = vpop.f32.mrf.mxu0
          %v4921 = vadd.f32 0.0, %v4920
          %4922 = vmatmul.f32.gmra.mxu0 %v4715
          %v4923 = vpop.f32.mrf.mxu0
          %v4924 = vadd.f32 0.0, %v4923
          %4925 = vmatmul.f32.gmra.mxu0 %v4718
          %v4926 = vpop.f32.mrf.mxu0
          %v4927 = vadd.f32 0.0, %v4926
          %4928 = vmatmul.f32.gmra.mxu0 %v4721
          %v4929 = vpop.f32.mrf.mxu0
          %v4930 = vadd.f32 0.0, %v4929
          %4931 = vmatmul.f32.gmra.mxu0 %v4724
          %v4932 = vpop.f32.mrf.mxu0
          %v4933 = vadd.f32 0.0, %v4932
          %4934 = vmatmul.f32.gmra.mxu0 %v4727
          %v4935 = vpop.f32.mrf.mxu0
          %v4936 = vadd.f32 0.0, %v4935
          %4937 = vmatmul.f32.gmra.mxu0 %v4730
          %v4938 = vpop.f32.mrf.mxu0
          %v4939 = vadd.f32 0.0, %v4938
          %4940 = vmatmul.f32.gmra.mxu0 %v4733
          %v4941 = vpop.f32.mrf.mxu0
          %v4942 = vadd.f32 0.0, %v4941
          %4943 = vmatmul.f32.gmra.mxu0 %v4736
          %v4944 = vpop.f32.mrf.mxu0
          %v4945 = vadd.f32 0.0, %v4944
          %4946 = vmatmul.f32.gmra.mxu0 %v4739
          %v4947 = vpop.f32.mrf.mxu0
          %v4948 = vadd.f32 0.0, %v4947
          %4949 = vmatmul.f32.gmra.mxu0 %v4742
          %v4950 = vpop.f32.mrf.mxu0
          %v4951 = vadd.f32 0.0, %v4950
          %4952 = vmatmul.f32.gmra.mxu0 %v4745
          %v4953 = vpop.f32.mrf.mxu0
          %v4954 = vadd.f32 0.0, %v4953
          %4955 = vmatmul.f32.gmra.mxu0 %v4748
          %v4956 = vpop.f32.mrf.mxu0
          %v4957 = vadd.f32 0.0, %v4956
          %4958 = vmatmul.f32.gmra.mxu0 %v4751
          %v4959 = vpop.f32.mrf.mxu0
          %v4960 = vadd.f32 0.0, %v4959
          %4961 = vmatmul.f32.gmra.mxu0 %v4754
          %v4962 = vpop.f32.mrf.mxu0
          %v4963 = vadd.f32 0.0, %v4962
          %4964 = vmatmul.f32.gmra.mxu0 %v4757
          %v4965 = vpop.f32.mrf.mxu0
          %v4966 = vadd.f32 0.0, %v4965
          %4967 = vmatmul.f32.gmra.mxu0 %v4760
          %v4968 = vpop.f32.mrf.mxu0
          %v4969 = vadd.f32 0.0, %v4968
          %4970 = vmatmul.f32.gmra.mxu0 %v4763
          %v4971 = vpop.f32.mrf.mxu0
          %v4972 = vadd.f32 0.0, %v4971
          %4973 = vmatmul.f32.gmra.mxu0 %v4766
          %v4974 = vpop.f32.mrf.mxu0
          %v4975 = vadd.f32 0.0, %v4974
          %4976 = vmatmul.f32.gmra.mxu0 %v4769
          %v4977 = vpop.f32.mrf.mxu0
          %v4978 = vadd.f32 0.0, %v4977
          %4979 = vmatmul.f32.gmra.mxu0 %v4772
          %v4980 = vpop.f32.mrf.mxu0
          %v4981 = vadd.f32 0.0, %v4980
          %4982 = vmatmul.f32.gmra.mxu0 %v4775
          %v4983 = vpop.f32.mrf.mxu0
          %v4984 = vadd.f32 0.0, %v4983
          %4985 = vmatmul.f32.gmra.mxu0 %v4778
          %v4986 = vpop.f32.mrf.mxu0
          %v4987 = vadd.f32 0.0, %v4986
          %4988 = vmatmul.f32.gmra.mxu0 %v4781
          %v4989 = vpop.f32.mrf.mxu0
          %v4990 = vadd.f32 0.0, %v4989
          %4991 = vmatmul.f32.gmra.mxu0 %v4784
          %v4992 = vpop.f32.mrf.mxu0
          %v4993 = vadd.f32 0.0, %v4992
          %4994 = vmatmul.f32.gmra.mxu0 %v4787
          %v4995 = vpop.f32.mrf.mxu0
          %v4996 = vadd.f32 0.0, %v4995
          %4997 = vmatmul.f32.gmra.mxu0 %v4790
          %v4998 = vpop.f32.mrf.mxu0
          %v4999 = vadd.f32 0.0, %v4998
          %5000 = vmatmul.f32.gmra.mxu0 %v4793
          %v5001 = vpop.f32.mrf.mxu0
          %v5002 = vadd.f32 0.0, %v5001
          %5003 = vmatmul.f32.gmra.mxu0 %v4796
          %v5004 = vpop.f32.mrf.mxu0
          %v5005 = vadd.f32 0.0, %v5004
          %5006 = vmatmul.f32.gmra.mxu0 %v4799
          %v5007 = vpop.f32.mrf.mxu0
          %v5008 = vadd.f32 0.0, %v5007
          %5009 = vmatmul.f32.gmra.mxu0 %v4802
          %v5010 = vpop.f32.mrf.mxu0
          %v5011 = vadd.f32 0.0, %v5010
          %5012 = vmatmul.f32.gmra.mxu0 %v4805
          %v5013 = vpop.f32.mrf.mxu0
          %v5014 = vadd.f32 0.0, %v5013
          %5015 = vmatmul.f32.gmra.mxu0 %v4808
          %v5016 = vpop.f32.mrf.mxu0
          %v5017 = vadd.f32 0.0, %v5016
          %5018 = vmatmul.f32.gmra.mxu0 %v4811
          %v5019 = vpop.f32.mrf.mxu0
          %v5020 = vadd.f32 0.0, %v5019
          %5021 = vmatmul.f32.gmra.mxu0 %v4814
          %v5022 = vpop.f32.mrf.mxu0
          %v5023 = vadd.f32 0.0, %v5022
          %5024 = vmatmul.f32.gmra.mxu0 %v4817
          %v5025 = vpop.f32.mrf.mxu0
          %v5026 = vadd.f32 0.0, %v5025
          %5027 = vmatmul.f32.gmra.mxu0 %v4820
          %v5028 = vpop.f32.mrf.mxu0
          %v5029 = vadd.f32 0.0, %v5028
          %5030 = vmatmul.f32.gmra.mxu0 %v4823
          %v5031 = vpop.f32.mrf.mxu0
          %v5032 = vadd.f32 0.0, %v5031
          %5033 = vmatmul.f32.gmra.mxu0 %v4826
          %v5034 = vpop.f32.mrf.mxu0
          %v5035 = vadd.f32 0.0, %v5034
          %5036 = vmatmul.f32.gmra.mxu0 %v4829
          %v5037 = vpop.f32.mrf.mxu0
          %v5038 = vadd.f32 0.0, %v5037
          %5039 = vmatmul.f32.gmra.mxu0 %v4832
          %v5040 = vpop.f32.mrf.mxu0
          %v5041 = vadd.f32 0.0, %v5040
          %5042 = vmatmul.f32.gmra.mxu0 %v4835
          %v5043 = vpop.f32.mrf.mxu0
          %v5044 = vadd.f32 0.0, %v5043
          %5045 = vmatmul.f32.gmra.mxu0 %v4838
          %v5046 = vpop.f32.mrf.mxu0
          %v5047 = vadd.f32 0.0, %v5046
          %5048 = vmatmul.f32.gmra.mxu0 %v4841
          %v5049 = vpop.f32.mrf.mxu0
          %v5050 = vadd.f32 0.0, %v5049
          %5051 = vmatmul.f32.gmra.mxu0 %v4844
          %v5052 = vpop.f32.mrf.mxu0
          %v5053 = vadd.f32 0.0, %v5052
          %5054 = vmatmul.f32.gmra.mxu0 %v4847
          %v5055 = vpop.f32.mrf.mxu0
          %v5056 = vadd.f32 0.0, %v5055
          %5057 = vmatmul.f32.gmra.mxu0 %v4850
          %v5058 = vpop.f32.mrf.mxu0
          %v5059 = vadd.f32 0.0, %v5058
          %5060 = vmatmul.f32.gmra.mxu0 %v4853
          %v5061 = vpop.f32.mrf.mxu0
          %v5062 = vadd.f32 0.0, %v5061
          %5063 = vdwg.mxu0
          %v5064 = vadd.f32 %v4527, %v4873
          %v5065 = vadd.f32 %v4528, %v4876
          %v5066 = vadd.f32 %v4529, %v4879
          %v5067 = vadd.f32 %v4530, %v4882
          %v5068 = vadd.f32 %v4531, %v4885
          %v5069 = vadd.f32 %v4532, %v4888
          %v5070 = vadd.f32 %v4533, %v4891
          %v5071 = vadd.f32 %v4534, %v4894
          %v5072 = vadd.f32 %v4535, %v4897
          %v5073 = vadd.f32 %v4536, %v4900
          %v5074 = vadd.f32 %v4537, %v4903
          %v5075 = vadd.f32 %v4538, %v4906
          %v5076 = vadd.f32 %v4539, %v4909
          %v5077 = vadd.f32 %v4540, %v4912
          %v5078 = vadd.f32 %v4541, %v4915
          %v5079 = vadd.f32 %v4542, %v4918
          %v5080 = vadd.f32 %v4543, %v4921
          %v5081 = vadd.f32 %v4544, %v4924
          %v5082 = vadd.f32 %v4545, %v4927
          %v5083 = vadd.f32 %v4546, %v4930
          %v5084 = vadd.f32 %v4547, %v4933
          %v5085 = vadd.f32 %v4548, %v4936
          %v5086 = vadd.f32 %v4549, %v4939
          %v5087 = vadd.f32 %v4550, %v4942
          %v5088 = vadd.f32 %v4551, %v4945
          %v5089 = vadd.f32 %v4552, %v4948
          %v5090 = vadd.f32 %v4553, %v4951
          %v5091 = vadd.f32 %v4554, %v4954
          %v5092 = vadd.f32 %v4555, %v4957
          %v5093 = vadd.f32 %v4556, %v4960
          %v5094 = vadd.f32 %v4557, %v4963
          %v5095 = vadd.f32 %v4558, %v4966
          %v5096 = vadd.f32 %v4559, %v4969
          %v5097 = vadd.f32 %v4560, %v4972
          %v5098 = vadd.f32 %v4561, %v4975
          %v5099 = vadd.f32 %v4562, %v4978
          %v5100 = vadd.f32 %v4563, %v4981
          %v5101 = vadd.f32 %v4564, %v4984
          %v5102 = vadd.f32 %v4565, %v4987
          %v5103 = vadd.f32 %v4566, %v4990
          %v5104 = vadd.f32 %v4567, %v4993
          %v5105 = vadd.f32 %v4568, %v4996
          %v5106 = vadd.f32 %v4569, %v4999
          %v5107 = vadd.f32 %v4570, %v5002
          %v5108 = vadd.f32 %v4571, %v5005
          %v5109 = vadd.f32 %v4572, %v5008
          %v5110 = vadd.f32 %v4573, %v5011
          %v5111 = vadd.f32 %v4574, %v5014
          %v5112 = vadd.f32 %v4575, %v5017
          %v5113 = vadd.f32 %v4576, %v5020
          %v5114 = vadd.f32 %v4577, %v5023
          %v5115 = vadd.f32 %v4578, %v5026
          %v5116 = vadd.f32 %v4579, %v5029
          %v5117 = vadd.f32 %v4580, %v5032
          %v5118 = vadd.f32 %v4581, %v5035
          %v5119 = vadd.f32 %v4582, %v5038
          %v5120 = vadd.f32 %v4583, %v5041
          %v5121 = vadd.f32 %v4584, %v5044
          %v5122 = vadd.f32 %v4585, %v5047
          %v5123 = vadd.f32 %v4586, %v5050
          %v5124 = vadd.f32 %v4587, %v5053
          %v5125 = vadd.f32 %v4588, %v5056
          %v5126 = vadd.f32 %v4589, %v5059
          %v5127 = vadd.f32 %v4590, %v5062
          %v5128 = vld [vmem:[%s4593 + $0x1] sm:$0xff]
          %v5129 = vld [vmem:[%s4593 + $0x9] sm:$0xff]
          %v5130 = vld [vmem:[%s4593 + $0x11] sm:$0xff]
          %v5131 = vld [vmem:[%s4593 + $0x19] sm:$0xff]
          %v5132 = vld [vmem:[%s4593 + $0x21] sm:$0xff]
          %v5133 = vld [vmem:[%s4593 + $0x29] sm:$0xff]
          %v5134 = vld [vmem:[%s4593 + $0x31] sm:$0xff]
          %v5135 = vld [vmem:[%s4593 + $0x39] sm:$0xff]
          %v5136 = vld [vmem:[%s4593 + $0x49] sm:$0xff]
          %v5137 = vld [vmem:[%s4593 + $0x51] sm:$0xff]
          %v5138 = vld [vmem:[%s4593 + $0x59] sm:$0xff]
          %v5139 = vld [vmem:[%s4593 + $0x61] sm:$0xff]
          %v5140 = vld [vmem:[%s4593 + $0x69] sm:$0xff]
          %v5141 = vld [vmem:[%s4593 + $0x71] sm:$0xff]
          %v5142 = vld [vmem:[%s4593 + $0x79] sm:$0xff]
          %v5143 = vld [vmem:[%s4593 + $0x81] sm:$0xff]
          %v5144 = vld [vmem:[%s4593 + $0x91] sm:$0xff]
          %v5145 = vld [vmem:[%s4593 + $0x99] sm:$0xff]
          %v5146 = vld [vmem:[%s4593 + $0xa1] sm:$0xff]
          %v5147 = vld [vmem:[%s4593 + $0xa9] sm:$0xff]
          %v5148 = vld [vmem:[%s4593 + $0xb1] sm:$0xff]
          %v5149 = vld [vmem:[%s4593 + $0xb9] sm:$0xff]
          %v5150 = vld [vmem:[%s4593 + $0xc1] sm:$0xff]
          %v5151 = vld [vmem:[%s4593 + $0xc9] sm:$0xff]
          %v5152 = vld [vmem:[%s4593 + $0xd9] sm:$0xff]
          %v5153 = vld [vmem:[%s4593 + $0xe1] sm:$0xff]
          %v5154 = vld [vmem:[%s4593 + $0xe9] sm:$0xff]
          %v5155 = vld [vmem:[%s4593 + $0xf1] sm:$0xff]
          %v5156 = vld [vmem:[%s4593 + $0xf9] sm:$0xff]
          %v5157 = vld [vmem:[%s4593 + $0x101] sm:$0xff]
          %v5158 = vld [vmem:[%s4593 + $0x109] sm:$0xff]
          %v5159 = vld [vmem:[%s4593 + $0x111] sm:$0xff]
          %v5160 = vld [vmem:[%s4593 + $0x121] sm:$0xff]
          %v5161 = vld [vmem:[%s4593 + $0x129] sm:$0xff]
          %v5162 = vld [vmem:[%s4593 + $0x131] sm:$0xff]
          %v5163 = vld [vmem:[%s4593 + $0x139] sm:$0xff]
          %v5164 = vld [vmem:[%s4593 + $0x141] sm:$0xff]
          %v5165 = vld [vmem:[%s4593 + $0x149] sm:$0xff]
          %v5166 = vld [vmem:[%s4593 + $0x151] sm:$0xff]
          %v5167 = vld [vmem:[%s4593 + $0x159] sm:$0xff]
          %v5168 = vld [vmem:[%s4593 + $0x169] sm:$0xff]
          %v5169 = vld [vmem:[%s4593 + $0x171] sm:$0xff]
          %v5170 = vld [vmem:[%s4593 + $0x179] sm:$0xff]
          %v5171 = vld [vmem:[%s4593 + $0x181] sm:$0xff]
          %v5172 = vld [vmem:[%s4593 + $0x189] sm:$0xff]
          %v5173 = vld [vmem:[%s4593 + $0x191] sm:$0xff]
          %v5174 = vld [vmem:[%s4593 + $0x199] sm:$0xff]
          %v5175 = vld [vmem:[%s4593 + $0x1a1] sm:$0xff]
          %v5176 = vld [vmem:[%s4593 + $0x1b1] sm:$0xff]
          %v5177 = vld [vmem:[%s4593 + $0x1b9] sm:$0xff]
          %v5178 = vld [vmem:[%s4593 + $0x1c1] sm:$0xff]
          %v5179 = vld [vmem:[%s4593 + $0x1c9] sm:$0xff]
          %v5180 = vld [vmem:[%s4593 + $0x1d1] sm:$0xff]
          %v5181 = vld [vmem:[%s4593 + $0x1d9] sm:$0xff]
          %v5182 = vld [vmem:[%s4593 + $0x1e1] sm:$0xff]
          %v5183 = vld [vmem:[%s4593 + $0x1e9] sm:$0xff]
          %v5184 = vld [vmem:[%s4593 + $0x1f9] sm:$0xff]
          %v5185 = vld [vmem:[%s4593 + $0x201] sm:$0xff]
          %v5186 = vld [vmem:[%s4593 + $0x209] sm:$0xff]
          %v5187 = vld [vmem:[%s4593 + $0x211] sm:$0xff]
          %v5188 = vld [vmem:[%s4593 + $0x219] sm:$0xff]
          %v5189 = vld [vmem:[%s4593 + $0x221] sm:$0xff]
          %v5190 = vld [vmem:[%s4593 + $0x229] sm:$0xff]
          %v5191 = vld [vmem:[%s4593 + $0x231] sm:$0xff]
          %s5192 = scalar_lea.vmem [#allocation12], 224
          %v5193 = vld [vmem:[%s5192] sm:$0xff]
          %v5194 = vld [vmem:[%s5192 + $0x8] sm:$0xff]
          %v5195 = vld [vmem:[%s5192 + $0x10] sm:$0xff]
          %v5196 = vld [vmem:[%s5192 + $0x18] sm:$0xff]
          %v5198 = vsel %vm544, %v5128, 0
          %v5201 = vsel %vm544, %v5129, 0
          %v5204 = vsel %vm544, %v5130, 0
          %v5207 = vsel %vm544, %v5131, 0
          %v5210 = vsel %vm544, %v5132, 0
          %v5213 = vsel %vm544, %v5133, 0
          %v5216 = vsel %vm544, %v5134, 0
          %v5219 = vsel %vm544, %v5135, 0
          %v5222 = vsel %vm544, %v5136, 0
          %v5225 = vsel %vm544, %v5137, 0
          %v5228 = vsel %vm544, %v5138, 0
          %v5231 = vsel %vm544, %v5139, 0
          %v5234 = vsel %vm544, %v5140, 0
          %v5237 = vsel %vm544, %v5141, 0
          %v5240 = vsel %vm544, %v5142, 0
          %v5243 = vsel %vm544, %v5143, 0
          %v5246 = vsel %vm544, %v5144, 0
          %v5249 = vsel %vm544, %v5145, 0
          %v5252 = vsel %vm544, %v5146, 0
          %v5255 = vsel %vm544, %v5147, 0
          %v5258 = vsel %vm544, %v5148, 0
          %v5261 = vsel %vm544, %v5149, 0
          %v5264 = vsel %vm544, %v5150, 0
          %v5267 = vsel %vm544, %v5151, 0
          %v5270 = vsel %vm544, %v5152, 0
          %v5273 = vsel %vm544, %v5153, 0
          %v5276 = vsel %vm544, %v5154, 0
          %v5279 = vsel %vm544, %v5155, 0
          %v5282 = vsel %vm544, %v5156, 0
          %v5285 = vsel %vm544, %v5157, 0
          %v5288 = vsel %vm544, %v5158, 0
          %v5291 = vsel %vm544, %v5159, 0
          %v5294 = vsel %vm544, %v5160, 0
          %v5297 = vsel %vm544, %v5161, 0
          %v5300 = vsel %vm544, %v5162, 0
          %v5303 = vsel %vm544, %v5163, 0
          %v5306 = vsel %vm544, %v5164, 0
          %v5309 = vsel %vm544, %v5165, 0
          %v5312 = vsel %vm544, %v5166, 0
          %v5315 = vsel %vm544, %v5167, 0
          %v5318 = vsel %vm544, %v5168, 0
          %v5321 = vsel %vm544, %v5169, 0
          %v5324 = vsel %vm544, %v5170, 0
          %v5327 = vsel %vm544, %v5171, 0
          %v5330 = vsel %vm544, %v5172, 0
          %v5333 = vsel %vm544, %v5173, 0
          %v5336 = vsel %vm544, %v5174, 0
          %v5339 = vsel %vm544, %v5175, 0
          %v5342 = vsel %vm544, %v5176, 0
          %v5345 = vsel %vm544, %v5177, 0
          %v5348 = vsel %vm544, %v5178, 0
          %v5351 = vsel %vm544, %v5179, 0
          %v5354 = vsel %vm544, %v5180, 0
          %v5357 = vsel %vm544, %v5181, 0
          %v5360 = vsel %vm544, %v5182, 0
          %v5363 = vsel %vm544, %v5183, 0
          %v5366 = vsel %vm544, %v5184, 0
          %v5369 = vsel %vm544, %v5185, 0
          %v5372 = vsel %vm544, %v5186, 0
          %v5375 = vsel %vm544, %v5187, 0
          %v5378 = vsel %vm544, %v5188, 0
          %v5381 = vsel %vm544, %v5189, 0
          %v5384 = vsel %vm544, %v5190, 0
          %v5387 = vsel %vm544, %v5191, 0
          %5389 = vmatpush.msra.mxu0 0.0
          %5390 = vmatpush.msra.mxu0 0.0
          %5391 = vmatpush.msra.mxu0 0.0
          %5392 = vmatpush.msra.mxu0 0.0
          %5393 = vmatpush.msra.mxu0 0.0
          %5394 = vmatpush.msra.mxu0 0.0
          %5395 = vmatpush.msra.mxu0 0.0
          %5396 = vmatpush.msra.mxu0 0.0
          %5397 = vmatpush.msra.mxu0 0.0
          %5398 = vmatpush.msra.mxu0 0.0
          %5399 = vmatpush.msra.mxu0 0.0
          %5400 = vmatpush.msra.mxu0 0.0
          %5401 = vmatpush.msra.mxu0 %v5196
          %5402 = vmatpush.msra.mxu0 %v5195
          %5403 = vmatpush.msra.mxu0 %v5194
          %5404 = vmatpush.msra.mxu0 %v5193
          %5405 = vmatmul.f32.gmra.mxu0 %v5198
          %v5406 = vpop.f32.mrf.mxu0
          %v5407 = vadd.f32 0.0, %v5406
          %5408 = vmatmul.f32.gmra.mxu0 %v5201
          %v5409 = vpop.f32.mrf.mxu0
          %v5410 = vadd.f32 0.0, %v5409
          %5411 = vmatmul.f32.gmra.mxu0 %v5204
          %v5412 = vpop.f32.mrf.mxu0
          %v5413 = vadd.f32 0.0, %v5412
          %5414 = vmatmul.f32.gmra.mxu0 %v5207
          %v5415 = vpop.f32.mrf.mxu0
          %v5416 = vadd.f32 0.0, %v5415
          %5417 = vmatmul.f32.gmra.mxu0 %v5210
          %v5418 = vpop.f32.mrf.mxu0
          %v5419 = vadd.f32 0.0, %v5418
          %5420 = vmatmul.f32.gmra.mxu0 %v5213
          %v5421 = vpop.f32.mrf.mxu0
          %v5422 = vadd.f32 0.0, %v5421
          %5423 = vmatmul.f32.gmra.mxu0 %v5216
          %v5424 = vpop.f32.mrf.mxu0
          %v5425 = vadd.f32 0.0, %v5424
          %5426 = vmatmul.f32.gmra.mxu0 %v5219
          %v5427 = vpop.f32.mrf.mxu0
          %v5428 = vadd.f32 0.0, %v5427
          %5429 = vmatmul.f32.gmra.mxu0 %v5222
          %v5430 = vpop.f32.mrf.mxu0
          %v5431 = vadd.f32 0.0, %v5430
          %5432 = vmatmul.f32.gmra.mxu0 %v5225
          %v5433 = vpop.f32.mrf.mxu0
          %v5434 = vadd.f32 0.0, %v5433
          %5435 = vmatmul.f32.gmra.mxu0 %v5228
          %v5436 = vpop.f32.mrf.mxu0
          %v5437 = vadd.f32 0.0, %v5436
          %5438 = vmatmul.f32.gmra.mxu0 %v5231
          %v5439 = vpop.f32.mrf.mxu0
          %v5440 = vadd.f32 0.0, %v5439
          %5441 = vmatmul.f32.gmra.mxu0 %v5234
          %v5442 = vpop.f32.mrf.mxu0
          %v5443 = vadd.f32 0.0, %v5442
          %5444 = vmatmul.f32.gmra.mxu0 %v5237
          %v5445 = vpop.f32.mrf.mxu0
          %v5446 = vadd.f32 0.0, %v5445
          %5447 = vmatmul.f32.gmra.mxu0 %v5240
          %v5448 = vpop.f32.mrf.mxu0
          %v5449 = vadd.f32 0.0, %v5448
          %5450 = vmatmul.f32.gmra.mxu0 %v5243
          %v5451 = vpop.f32.mrf.mxu0
          %v5452 = vadd.f32 0.0, %v5451
          %5453 = vmatmul.f32.gmra.mxu0 %v5246
          %v5454 = vpop.f32.mrf.mxu0
          %v5455 = vadd.f32 0.0, %v5454
          %5456 = vmatmul.f32.gmra.mxu0 %v5249
          %v5457 = vpop.f32.mrf.mxu0
          %v5458 = vadd.f32 0.0, %v5457
          %5459 = vmatmul.f32.gmra.mxu0 %v5252
          %v5460 = vpop.f32.mrf.mxu0
          %v5461 = vadd.f32 0.0, %v5460
          %5462 = vmatmul.f32.gmra.mxu0 %v5255
          %v5463 = vpop.f32.mrf.mxu0
          %v5464 = vadd.f32 0.0, %v5463
          %5465 = vmatmul.f32.gmra.mxu0 %v5258
          %v5466 = vpop.f32.mrf.mxu0
          %v5467 = vadd.f32 0.0, %v5466
          %5468 = vmatmul.f32.gmra.mxu0 %v5261
          %v5469 = vpop.f32.mrf.mxu0
          %v5470 = vadd.f32 0.0, %v5469
          %5471 = vmatmul.f32.gmra.mxu0 %v5264
          %v5472 = vpop.f32.mrf.mxu0
          %v5473 = vadd.f32 0.0, %v5472
          %5474 = vmatmul.f32.gmra.mxu0 %v5267
          %v5475 = vpop.f32.mrf.mxu0
          %v5476 = vadd.f32 0.0, %v5475
          %5477 = vmatmul.f32.gmra.mxu0 %v5270
          %v5478 = vpop.f32.mrf.mxu0
          %v5479 = vadd.f32 0.0, %v5478
          %5480 = vmatmul.f32.gmra.mxu0 %v5273
          %v5481 = vpop.f32.mrf.mxu0
          %v5482 = vadd.f32 0.0, %v5481
          %5483 = vmatmul.f32.gmra.mxu0 %v5276
          %v5484 = vpop.f32.mrf.mxu0
          %v5485 = vadd.f32 0.0, %v5484
          %5486 = vmatmul.f32.gmra.mxu0 %v5279
          %v5487 = vpop.f32.mrf.mxu0
          %v5488 = vadd.f32 0.0, %v5487
          %5489 = vmatmul.f32.gmra.mxu0 %v5282
          %v5490 = vpop.f32.mrf.mxu0
          %v5491 = vadd.f32 0.0, %v5490
          %5492 = vmatmul.f32.gmra.mxu0 %v5285
          %v5493 = vpop.f32.mrf.mxu0
          %v5494 = vadd.f32 0.0, %v5493
          %5495 = vmatmul.f32.gmra.mxu0 %v5288
          %v5496 = vpop.f32.mrf.mxu0
          %v5497 = vadd.f32 0.0, %v5496
          %5498 = vmatmul.f32.gmra.mxu0 %v5291
          %v5499 = vpop.f32.mrf.mxu0
          %v5500 = vadd.f32 0.0, %v5499
          %5501 = vmatmul.f32.gmra.mxu0 %v5294
          %v5502 = vpop.f32.mrf.mxu0
          %v5503 = vadd.f32 0.0, %v5502
          %5504 = vmatmul.f32.gmra.mxu0 %v5297
          %v5505 = vpop.f32.mrf.mxu0
          %v5506 = vadd.f32 0.0, %v5505
          %5507 = vmatmul.f32.gmra.mxu0 %v5300
          %v5508 = vpop.f32.mrf.mxu0
          %v5509 = vadd.f32 0.0, %v5508
          %5510 = vmatmul.f32.gmra.mxu0 %v5303
          %v5511 = vpop.f32.mrf.mxu0
          %v5512 = vadd.f32 0.0, %v5511
          %5513 = vmatmul.f32.gmra.mxu0 %v5306
          %v5514 = vpop.f32.mrf.mxu0
          %v5515 = vadd.f32 0.0, %v5514
          %5516 = vmatmul.f32.gmra.mxu0 %v5309
          %v5517 = vpop.f32.mrf.mxu0
          %v5518 = vadd.f32 0.0, %v5517
          %5519 = vmatmul.f32.gmra.mxu0 %v5312
          %v5520 = vpop.f32.mrf.mxu0
          %v5521 = vadd.f32 0.0, %v5520
          %5522 = vmatmul.f32.gmra.mxu0 %v5315
          %v5523 = vpop.f32.mrf.mxu0
          %v5524 = vadd.f32 0.0, %v5523
          %5525 = vmatmul.f32.gmra.mxu0 %v5318
          %v5526 = vpop.f32.mrf.mxu0
          %v5527 = vadd.f32 0.0, %v5526
          %5528 = vmatmul.f32.gmra.mxu0 %v5321
          %v5529 = vpop.f32.mrf.mxu0
          %v5530 = vadd.f32 0.0, %v5529
          %5531 = vmatmul.f32.gmra.mxu0 %v5324
          %v5532 = vpop.f32.mrf.mxu0
          %v5533 = vadd.f32 0.0, %v5532
          %5534 = vmatmul.f32.gmra.mxu0 %v5327
          %v5535 = vpop.f32.mrf.mxu0
          %v5536 = vadd.f32 0.0, %v5535
          %5537 = vmatmul.f32.gmra.mxu0 %v5330
          %v5538 = vpop.f32.mrf.mxu0
          %v5539 = vadd.f32 0.0, %v5538
          %5540 = vmatmul.f32.gmra.mxu0 %v5333
          %v5541 = vpop.f32.mrf.mxu0
          %v5542 = vadd.f32 0.0, %v5541
          %5543 = vmatmul.f32.gmra.mxu0 %v5336
          %v5544 = vpop.f32.mrf.mxu0
          %v5545 = vadd.f32 0.0, %v5544
          %5546 = vmatmul.f32.gmra.mxu0 %v5339
          %v5547 = vpop.f32.mrf.mxu0
          %v5548 = vadd.f32 0.0, %v5547
          %5549 = vmatmul.f32.gmra.mxu0 %v5342
          %v5550 = vpop.f32.mrf.mxu0
          %v5551 = vadd.f32 0.0, %v5550
          %5552 = vmatmul.f32.gmra.mxu0 %v5345
          %v5553 = vpop.f32.mrf.mxu0
          %v5554 = vadd.f32 0.0, %v5553
          %5555 = vmatmul.f32.gmra.mxu0 %v5348
          %v5556 = vpop.f32.mrf.mxu0
          %v5557 = vadd.f32 0.0, %v5556
          %5558 = vmatmul.f32.gmra.mxu0 %v5351
          %v5559 = vpop.f32.mrf.mxu0
          %v5560 = vadd.f32 0.0, %v5559
          %5561 = vmatmul.f32.gmra.mxu0 %v5354
          %v5562 = vpop.f32.mrf.mxu0
          %v5563 = vadd.f32 0.0, %v5562
          %5564 = vmatmul.f32.gmra.mxu0 %v5357
          %v5565 = vpop.f32.mrf.mxu0
          %v5566 = vadd.f32 0.0, %v5565
          %5567 = vmatmul.f32.gmra.mxu0 %v5360
          %v5568 = vpop.f32.mrf.mxu0
          %v5569 = vadd.f32 0.0, %v5568
          %5570 = vmatmul.f32.gmra.mxu0 %v5363
          %v5571 = vpop.f32.mrf.mxu0
          %v5572 = vadd.f32 0.0, %v5571
          %5573 = vmatmul.f32.gmra.mxu0 %v5366
          %v5574 = vpop.f32.mrf.mxu0
          %v5575 = vadd.f32 0.0, %v5574
          %5576 = vmatmul.f32.gmra.mxu0 %v5369
          %v5577 = vpop.f32.mrf.mxu0
          %v5578 = vadd.f32 0.0, %v5577
          %5579 = vmatmul.f32.gmra.mxu0 %v5372
          %v5580 = vpop.f32.mrf.mxu0
          %v5581 = vadd.f32 0.0, %v5580
          %5582 = vmatmul.f32.gmra.mxu0 %v5375
          %v5583 = vpop.f32.mrf.mxu0
          %v5584 = vadd.f32 0.0, %v5583
          %5585 = vmatmul.f32.gmra.mxu0 %v5378
          %v5586 = vpop.f32.mrf.mxu0
          %v5587 = vadd.f32 0.0, %v5586
          %5588 = vmatmul.f32.gmra.mxu0 %v5381
          %v5589 = vpop.f32.mrf.mxu0
          %v5590 = vadd.f32 0.0, %v5589
          %5591 = vmatmul.f32.gmra.mxu0 %v5384
          %v5592 = vpop.f32.mrf.mxu0
          %v5593 = vadd.f32 0.0, %v5592
          %5594 = vmatmul.f32.gmra.mxu0 %v5387
          %v5595 = vpop.f32.mrf.mxu0
          %v5596 = vadd.f32 0.0, %v5595
          %5597 = vdwg.mxu0
          %v5598 = vadd.f32 %v5064, %v5407
          %v5599 = vadd.f32 %v5065, %v5410
          %v5600 = vadd.f32 %v5066, %v5413
          %v5601 = vadd.f32 %v5067, %v5416
          %v5602 = vadd.f32 %v5068, %v5419
          %v5603 = vadd.f32 %v5069, %v5422
          %v5604 = vadd.f32 %v5070, %v5425
          %v5605 = vadd.f32 %v5071, %v5428
          %v5606 = vadd.f32 %v5072, %v5431
          %v5607 = vadd.f32 %v5073, %v5434
          %v5608 = vadd.f32 %v5074, %v5437
          %v5609 = vadd.f32 %v5075, %v5440
          %v5610 = vadd.f32 %v5076, %v5443
          %v5611 = vadd.f32 %v5077, %v5446
          %v5612 = vadd.f32 %v5078, %v5449
          %v5613 = vadd.f32 %v5079, %v5452
          %v5614 = vadd.f32 %v5080, %v5455
          %v5615 = vadd.f32 %v5081, %v5458
          %v5616 = vadd.f32 %v5082, %v5461
          %v5617 = vadd.f32 %v5083, %v5464
          %v5618 = vadd.f32 %v5084, %v5467
          %v5619 = vadd.f32 %v5085, %v5470
          %v5620 = vadd.f32 %v5086, %v5473
          %v5621 = vadd.f32 %v5087, %v5476
          %v5622 = vadd.f32 %v5088, %v5479
          %v5623 = vadd.f32 %v5089, %v5482
          %v5624 = vadd.f32 %v5090, %v5485
          %v5625 = vadd.f32 %v5091, %v5488
          %v5626 = vadd.f32 %v5092, %v5491
          %v5627 = vadd.f32 %v5093, %v5494
          %v5628 = vadd.f32 %v5094, %v5497
          %v5629 = vadd.f32 %v5095, %v5500
          %v5630 = vadd.f32 %v5096, %v5503
          %v5631 = vadd.f32 %v5097, %v5506
          %v5632 = vadd.f32 %v5098, %v5509
          %v5633 = vadd.f32 %v5099, %v5512
          %v5634 = vadd.f32 %v5100, %v5515
          %v5635 = vadd.f32 %v5101, %v5518
          %v5636 = vadd.f32 %v5102, %v5521
          %v5637 = vadd.f32 %v5103, %v5524
          %v5638 = vadd.f32 %v5104, %v5527
          %v5639 = vadd.f32 %v5105, %v5530
          %v5640 = vadd.f32 %v5106, %v5533
          %v5641 = vadd.f32 %v5107, %v5536
          %v5642 = vadd.f32 %v5108, %v5539
          %v5643 = vadd.f32 %v5109, %v5542
          %v5644 = vadd.f32 %v5110, %v5545
          %v5645 = vadd.f32 %v5111, %v5548
          %v5646 = vadd.f32 %v5112, %v5551
          %v5647 = vadd.f32 %v5113, %v5554
          %v5648 = vadd.f32 %v5114, %v5557
          %v5649 = vadd.f32 %v5115, %v5560
          %v5650 = vadd.f32 %v5116, %v5563
          %v5651 = vadd.f32 %v5117, %v5566
          %v5652 = vadd.f32 %v5118, %v5569
          %v5653 = vadd.f32 %v5119, %v5572
          %v5654 = vadd.f32 %v5120, %v5575
          %v5655 = vadd.f32 %v5121, %v5578
          %v5656 = vadd.f32 %v5122, %v5581
          %v5657 = vadd.f32 %v5123, %v5584
          %v5658 = vadd.f32 %v5124, %v5587
          %v5659 = vadd.f32 %v5125, %v5590
          %v5660 = vadd.f32 %v5126, %v5593
          %v5661 = vadd.f32 %v5127, %v5596
          %v5662 = vld [vmem:[%s4593 + $0x2] sm:$0xff]
          %v5663 = vld [vmem:[%s4593 + $0xa] sm:$0xff]
          %v5664 = vld [vmem:[%s4593 + $0x12] sm:$0xff]
          %v5665 = vld [vmem:[%s4593 + $0x1a] sm:$0xff]
          %v5666 = vld [vmem:[%s4593 + $0x22] sm:$0xff]
          %v5667 = vld [vmem:[%s4593 + $0x2a] sm:$0xff]
          %v5668 = vld [vmem:[%s4593 + $0x32] sm:$0xff]
          %v5669 = vld [vmem:[%s4593 + $0x3a] sm:$0xff]
          %v5670 = vld [vmem:[%s4593 + $0x4a] sm:$0xff]
          %v5671 = vld [vmem:[%s4593 + $0x52] sm:$0xff]
          %v5672 = vld [vmem:[%s4593 + $0x5a] sm:$0xff]
          %v5673 = vld [vmem:[%s4593 + $0x62] sm:$0xff]
          %v5674 = vld [vmem:[%s4593 + $0x6a] sm:$0xff]
          %v5675 = vld [vmem:[%s4593 + $0x72] sm:$0xff]
          %v5676 = vld [vmem:[%s4593 + $0x7a] sm:$0xff]
          %v5677 = vld [vmem:[%s4593 + $0x82] sm:$0xff]
          %v5678 = vld [vmem:[%s4593 + $0x92] sm:$0xff]
          %v5679 = vld [vmem:[%s4593 + $0x9a] sm:$0xff]
          %v5680 = vld [vmem:[%s4593 + $0xa2] sm:$0xff]
          %v5681 = vld [vmem:[%s4593 + $0xaa] sm:$0xff]
          %v5682 = vld [vmem:[%s4593 + $0xb2] sm:$0xff]
          %v5683 = vld [vmem:[%s4593 + $0xba] sm:$0xff]
          %v5684 = vld [vmem:[%s4593 + $0xc2] sm:$0xff]
          %v5685 = vld [vmem:[%s4593 + $0xca] sm:$0xff]
          %v5686 = vld [vmem:[%s4593 + $0xda] sm:$0xff]
          %v5687 = vld [vmem:[%s4593 + $0xe2] sm:$0xff]
          %v5688 = vld [vmem:[%s4593 + $0xea] sm:$0xff]
          %v5689 = vld [vmem:[%s4593 + $0xf2] sm:$0xff]
          %v5690 = vld [vmem:[%s4593 + $0xfa] sm:$0xff]
          %v5691 = vld [vmem:[%s4593 + $0x102] sm:$0xff]
          %v5692 = vld [vmem:[%s4593 + $0x10a] sm:$0xff]
          %v5693 = vld [vmem:[%s4593 + $0x112] sm:$0xff]
          %v5694 = vld [vmem:[%s4593 + $0x122] sm:$0xff]
          %v5695 = vld [vmem:[%s4593 + $0x12a] sm:$0xff]
          %v5696 = vld [vmem:[%s4593 + $0x132] sm:$0xff]
          %v5697 = vld [vmem:[%s4593 + $0x13a] sm:$0xff]
          %v5698 = vld [vmem:[%s4593 + $0x142] sm:$0xff]
          %v5699 = vld [vmem:[%s4593 + $0x14a] sm:$0xff]
          %v5700 = vld [vmem:[%s4593 + $0x152] sm:$0xff]
          %v5701 = vld [vmem:[%s4593 + $0x15a] sm:$0xff]
          %v5702 = vld [vmem:[%s4593 + $0x16a] sm:$0xff]
          %v5703 = vld [vmem:[%s4593 + $0x172] sm:$0xff]
          %v5704 = vld [vmem:[%s4593 + $0x17a] sm:$0xff]
          %v5705 = vld [vmem:[%s4593 + $0x182] sm:$0xff]
          %v5706 = vld [vmem:[%s4593 + $0x18a] sm:$0xff]
          %v5707 = vld [vmem:[%s4593 + $0x192] sm:$0xff]
          %v5708 = vld [vmem:[%s4593 + $0x19a] sm:$0xff]
          %v5709 = vld [vmem:[%s4593 + $0x1a2] sm:$0xff]
          %v5710 = vld [vmem:[%s4593 + $0x1b2] sm:$0xff]
          %v5711 = vld [vmem:[%s4593 + $0x1ba] sm:$0xff]
          %v5712 = vld [vmem:[%s4593 + $0x1c2] sm:$0xff]
          %v5713 = vld [vmem:[%s4593 + $0x1ca] sm:$0xff]
          %v5714 = vld [vmem:[%s4593 + $0x1d2] sm:$0xff]
          %v5715 = vld [vmem:[%s4593 + $0x1da] sm:$0xff]
          %v5716 = vld [vmem:[%s4593 + $0x1e2] sm:$0xff]
          %v5717 = vld [vmem:[%s4593 + $0x1ea] sm:$0xff]
          %v5718 = vld [vmem:[%s4593 + $0x1fa] sm:$0xff]
          %v5719 = vld [vmem:[%s4593 + $0x202] sm:$0xff]
          %v5720 = vld [vmem:[%s4593 + $0x20a] sm:$0xff]
          %v5721 = vld [vmem:[%s4593 + $0x212] sm:$0xff]
          %v5722 = vld [vmem:[%s4593 + $0x21a] sm:$0xff]
          %v5723 = vld [vmem:[%s4593 + $0x222] sm:$0xff]
          %v5724 = vld [vmem:[%s4593 + $0x22a] sm:$0xff]
          %v5725 = vld [vmem:[%s4593 + $0x232] sm:$0xff]
          %s5726 = scalar_lea.vmem [#allocation12], 256
          %v5727 = vld [vmem:[%s5726] sm:$0xff]
          %v5728 = vld [vmem:[%s5726 + $0x8] sm:$0xff]
          %v5729 = vld [vmem:[%s5726 + $0x10] sm:$0xff]
          %v5730 = vld [vmem:[%s5726 + $0x18] sm:$0xff]
          %v5732 = vsel %vm544, %v5662, 0
          %v5735 = vsel %vm544, %v5663, 0
          %v5738 = vsel %vm544, %v5664, 0
          %v5741 = vsel %vm544, %v5665, 0
          %v5744 = vsel %vm544, %v5666, 0
          %v5747 = vsel %vm544, %v5667, 0
          %v5750 = vsel %vm544, %v5668, 0
          %v5753 = vsel %vm544, %v5669, 0
          %v5756 = vsel %vm544, %v5670, 0
          %v5759 = vsel %vm544, %v5671, 0
          %v5762 = vsel %vm544, %v5672, 0
          %v5765 = vsel %vm544, %v5673, 0
          %v5768 = vsel %vm544, %v5674, 0
          %v5771 = vsel %vm544, %v5675, 0
          %v5774 = vsel %vm544, %v5676, 0
          %v5777 = vsel %vm544, %v5677, 0
          %v5780 = vsel %vm544, %v5678, 0
          %v5783 = vsel %vm544, %v5679, 0
          %v5786 = vsel %vm544, %v5680, 0
          %v5789 = vsel %vm544, %v5681, 0
          %v5792 = vsel %vm544, %v5682, 0
          %v5795 = vsel %vm544, %v5683, 0
          %v5798 = vsel %vm544, %v5684, 0
          %v5801 = vsel %vm544, %v5685, 0
          %v5804 = vsel %vm544, %v5686, 0
          %v5807 = vsel %vm544, %v5687, 0
          %v5810 = vsel %vm544, %v5688, 0
          %v5813 = vsel %vm544, %v5689, 0
          %v5816 = vsel %vm544, %v5690, 0
          %v5819 = vsel %vm544, %v5691, 0
          %v5822 = vsel %vm544, %v5692, 0
          %v5825 = vsel %vm544, %v5693, 0
          %v5828 = vsel %vm544, %v5694, 0
          %v5831 = vsel %vm544, %v5695, 0
          %v5834 = vsel %vm544, %v5696, 0
          %v5837 = vsel %vm544, %v5697, 0
          %v5840 = vsel %vm544, %v5698, 0
          %v5843 = vsel %vm544, %v5699, 0
          %v5846 = vsel %vm544, %v5700, 0
          %v5849 = vsel %vm544, %v5701, 0
          %v5852 = vsel %vm544, %v5702, 0
          %v5855 = vsel %vm544, %v5703, 0
          %v5858 = vsel %vm544, %v5704, 0
          %v5861 = vsel %vm544, %v5705, 0
          %v5864 = vsel %vm544, %v5706, 0
          %v5867 = vsel %vm544, %v5707, 0
          %v5870 = vsel %vm544, %v5708, 0
          %v5873 = vsel %vm544, %v5709, 0
          %v5876 = vsel %vm544, %v5710, 0
          %v5879 = vsel %vm544, %v5711, 0
          %v5882 = vsel %vm544, %v5712, 0
          %v5885 = vsel %vm544, %v5713, 0
          %v5888 = vsel %vm544, %v5714, 0
          %v5891 = vsel %vm544, %v5715, 0
          %v5894 = vsel %vm544, %v5716, 0
          %v5897 = vsel %vm544, %v5717, 0
          %v5900 = vsel %vm544, %v5718, 0
          %v5903 = vsel %vm544, %v5719, 0
          %v5906 = vsel %vm544, %v5720, 0
          %v5909 = vsel %vm544, %v5721, 0
          %v5912 = vsel %vm544, %v5722, 0
          %v5915 = vsel %vm544, %v5723, 0
          %v5918 = vsel %vm544, %v5724, 0
          %v5921 = vsel %vm544, %v5725, 0
          %5923 = vmatpush.msra.mxu0 0.0
          %5924 = vmatpush.msra.mxu0 0.0
          %5925 = vmatpush.msra.mxu0 0.0
          %5926 = vmatpush.msra.mxu0 0.0
          %5927 = vmatpush.msra.mxu0 0.0
          %5928 = vmatpush.msra.mxu0 0.0
          %5929 = vmatpush.msra.mxu0 0.0
          %5930 = vmatpush.msra.mxu0 0.0
          %5931 = vmatpush.msra.mxu0 0.0
          %5932 = vmatpush.msra.mxu0 0.0
          %5933 = vmatpush.msra.mxu0 0.0
          %5934 = vmatpush.msra.mxu0 0.0
          %5935 = vmatpush.msra.mxu0 %v5730
          %5936 = vmatpush.msra.mxu0 %v5729
          %5937 = vmatpush.msra.mxu0 %v5728
          %5938 = vmatpush.msra.mxu0 %v5727
          %5939 = vmatmul.f32.gmra.mxu0 %v5732
          %v5940 = vpop.f32.mrf.mxu0
          %v5941 = vadd.f32 0.0, %v5940
          %5942 = vmatmul.f32.gmra.mxu0 %v5735
          %v5943 = vpop.f32.mrf.mxu0
          %v5944 = vadd.f32 0.0, %v5943
          %5945 = vmatmul.f32.gmra.mxu0 %v5738
          %v5946 = vpop.f32.mrf.mxu0
          %v5947 = vadd.f32 0.0, %v5946
          %5948 = vmatmul.f32.gmra.mxu0 %v5741
          %v5949 = vpop.f32.mrf.mxu0
          %v5950 = vadd.f32 0.0, %v5949
          %5951 = vmatmul.f32.gmra.mxu0 %v5744
          %v5952 = vpop.f32.mrf.mxu0
          %v5953 = vadd.f32 0.0, %v5952
          %5954 = vmatmul.f32.gmra.mxu0 %v5747
          %v5955 = vpop.f32.mrf.mxu0
          %v5956 = vadd.f32 0.0, %v5955
          %5957 = vmatmul.f32.gmra.mxu0 %v5750
          %v5958 = vpop.f32.mrf.mxu0
          %v5959 = vadd.f32 0.0, %v5958
          %5960 = vmatmul.f32.gmra.mxu0 %v5753
          %v5961 = vpop.f32.mrf.mxu0
          %v5962 = vadd.f32 0.0, %v5961
          %5963 = vmatmul.f32.gmra.mxu0 %v5756
          %v5964 = vpop.f32.mrf.mxu0
          %v5965 = vadd.f32 0.0, %v5964
          %5966 = vmatmul.f32.gmra.mxu0 %v5759
          %v5967 = vpop.f32.mrf.mxu0
          %v5968 = vadd.f32 0.0, %v5967
          %5969 = vmatmul.f32.gmra.mxu0 %v5762
          %v5970 = vpop.f32.mrf.mxu0
          %v5971 = vadd.f32 0.0, %v5970
          %5972 = vmatmul.f32.gmra.mxu0 %v5765
          %v5973 = vpop.f32.mrf.mxu0
          %v5974 = vadd.f32 0.0, %v5973
          %5975 = vmatmul.f32.gmra.mxu0 %v5768
          %v5976 = vpop.f32.mrf.mxu0
          %v5977 = vadd.f32 0.0, %v5976
          %5978 = vmatmul.f32.gmra.mxu0 %v5771
          %v5979 = vpop.f32.mrf.mxu0
          %v5980 = vadd.f32 0.0, %v5979
          %5981 = vmatmul.f32.gmra.mxu0 %v5774
          %v5982 = vpop.f32.mrf.mxu0
          %v5983 = vadd.f32 0.0, %v5982
          %5984 = vmatmul.f32.gmra.mxu0 %v5777
          %v5985 = vpop.f32.mrf.mxu0
          %v5986 = vadd.f32 0.0, %v5985
          %5987 = vmatmul.f32.gmra.mxu0 %v5780
          %v5988 = vpop.f32.mrf.mxu0
          %v5989 = vadd.f32 0.0, %v5988
          %5990 = vmatmul.f32.gmra.mxu0 %v5783
          %v5991 = vpop.f32.mrf.mxu0
          %v5992 = vadd.f32 0.0, %v5991
          %5993 = vmatmul.f32.gmra.mxu0 %v5786
          %v5994 = vpop.f32.mrf.mxu0
          %v5995 = vadd.f32 0.0, %v5994
          %5996 = vmatmul.f32.gmra.mxu0 %v5789
          %v5997 = vpop.f32.mrf.mxu0
          %v5998 = vadd.f32 0.0, %v5997
          %5999 = vmatmul.f32.gmra.mxu0 %v5792
          %v6000 = vpop.f32.mrf.mxu0
          %v6001 = vadd.f32 0.0, %v6000
          %6002 = vmatmul.f32.gmra.mxu0 %v5795
          %v6003 = vpop.f32.mrf.mxu0
          %v6004 = vadd.f32 0.0, %v6003
          %6005 = vmatmul.f32.gmra.mxu0 %v5798
          %v6006 = vpop.f32.mrf.mxu0
          %v6007 = vadd.f32 0.0, %v6006
          %6008 = vmatmul.f32.gmra.mxu0 %v5801
          %v6009 = vpop.f32.mrf.mxu0
          %v6010 = vadd.f32 0.0, %v6009
          %6011 = vmatmul.f32.gmra.mxu0 %v5804
          %v6012 = vpop.f32.mrf.mxu0
          %v6013 = vadd.f32 0.0, %v6012
          %6014 = vmatmul.f32.gmra.mxu0 %v5807
          %v6015 = vpop.f32.mrf.mxu0
          %v6016 = vadd.f32 0.0, %v6015
          %6017 = vmatmul.f32.gmra.mxu0 %v5810
          %v6018 = vpop.f32.mrf.mxu0
          %v6019 = vadd.f32 0.0, %v6018
          %6020 = vmatmul.f32.gmra.mxu0 %v5813
          %v6021 = vpop.f32.mrf.mxu0
          %v6022 = vadd.f32 0.0, %v6021
          %6023 = vmatmul.f32.gmra.mxu0 %v5816
          %v6024 = vpop.f32.mrf.mxu0
          %v6025 = vadd.f32 0.0, %v6024
          %6026 = vmatmul.f32.gmra.mxu0 %v5819
          %v6027 = vpop.f32.mrf.mxu0
          %v6028 = vadd.f32 0.0, %v6027
          %6029 = vmatmul.f32.gmra.mxu0 %v5822
          %v6030 = vpop.f32.mrf.mxu0
          %v6031 = vadd.f32 0.0, %v6030
          %6032 = vmatmul.f32.gmra.mxu0 %v5825
          %v6033 = vpop.f32.mrf.mxu0
          %v6034 = vadd.f32 0.0, %v6033
          %6035 = vmatmul.f32.gmra.mxu0 %v5828
          %v6036 = vpop.f32.mrf.mxu0
          %v6037 = vadd.f32 0.0, %v6036
          %6038 = vmatmul.f32.gmra.mxu0 %v5831
          %v6039 = vpop.f32.mrf.mxu0
          %v6040 = vadd.f32 0.0, %v6039
          %6041 = vmatmul.f32.gmra.mxu0 %v5834
          %v6042 = vpop.f32.mrf.mxu0
          %v6043 = vadd.f32 0.0, %v6042
          %6044 = vmatmul.f32.gmra.mxu0 %v5837
          %v6045 = vpop.f32.mrf.mxu0
          %v6046 = vadd.f32 0.0, %v6045
          %6047 = vmatmul.f32.gmra.mxu0 %v5840
          %v6048 = vpop.f32.mrf.mxu0
          %v6049 = vadd.f32 0.0, %v6048
          %6050 = vmatmul.f32.gmra.mxu0 %v5843
          %v6051 = vpop.f32.mrf.mxu0
          %v6052 = vadd.f32 0.0, %v6051
          %6053 = vmatmul.f32.gmra.mxu0 %v5846
          %v6054 = vpop.f32.mrf.mxu0
          %v6055 = vadd.f32 0.0, %v6054
          %6056 = vmatmul.f32.gmra.mxu0 %v5849
          %v6057 = vpop.f32.mrf.mxu0
          %v6058 = vadd.f32 0.0, %v6057
          %6059 = vmatmul.f32.gmra.mxu0 %v5852
          %v6060 = vpop.f32.mrf.mxu0
          %v6061 = vadd.f32 0.0, %v6060
          %6062 = vmatmul.f32.gmra.mxu0 %v5855
          %v6063 = vpop.f32.mrf.mxu0
          %v6064 = vadd.f32 0.0, %v6063
          %6065 = vmatmul.f32.gmra.mxu0 %v5858
          %v6066 = vpop.f32.mrf.mxu0
          %v6067 = vadd.f32 0.0, %v6066
          %6068 = vmatmul.f32.gmra.mxu0 %v5861
          %v6069 = vpop.f32.mrf.mxu0
          %v6070 = vadd.f32 0.0, %v6069
          %6071 = vmatmul.f32.gmra.mxu0 %v5864
          %v6072 = vpop.f32.mrf.mxu0
          %v6073 = vadd.f32 0.0, %v6072
          %6074 = vmatmul.f32.gmra.mxu0 %v5867
          %v6075 = vpop.f32.mrf.mxu0
          %v6076 = vadd.f32 0.0, %v6075
          %6077 = vmatmul.f32.gmra.mxu0 %v5870
          %v6078 = vpop.f32.mrf.mxu0
          %v6079 = vadd.f32 0.0, %v6078
          %6080 = vmatmul.f32.gmra.mxu0 %v5873
          %v6081 = vpop.f32.mrf.mxu0
          %v6082 = vadd.f32 0.0, %v6081
          %6083 = vmatmul.f32.gmra.mxu0 %v5876
          %v6084 = vpop.f32.mrf.mxu0
          %v6085 = vadd.f32 0.0, %v6084
          %6086 = vmatmul.f32.gmra.mxu0 %v5879
          %v6087 = vpop.f32.mrf.mxu0
          %v6088 = vadd.f32 0.0, %v6087
          %6089 = vmatmul.f32.gmra.mxu0 %v5882
          %v6090 = vpop.f32.mrf.mxu0
          %v6091 = vadd.f32 0.0, %v6090
          %6092 = vmatmul.f32.gmra.mxu0 %v5885
          %v6093 = vpop.f32.mrf.mxu0
          %v6094 = vadd.f32 0.0, %v6093
          %6095 = vmatmul.f32.gmra.mxu0 %v5888
          %v6096 = vpop.f32.mrf.mxu0
          %v6097 = vadd.f32 0.0, %v6096
          %6098 = vmatmul.f32.gmra.mxu0 %v5891
          %v6099 = vpop.f32.mrf.mxu0
          %v6100 = vadd.f32 0.0, %v6099
          %6101 = vmatmul.f32.gmra.mxu0 %v5894
          %v6102 = vpop.f32.mrf.mxu0
          %v6103 = vadd.f32 0.0, %v6102
          %6104 = vmatmul.f32.gmra.mxu0 %v5897
          %v6105 = vpop.f32.mrf.mxu0
          %v6106 = vadd.f32 0.0, %v6105
          %6107 = vmatmul.f32.gmra.mxu0 %v5900
          %v6108 = vpop.f32.mrf.mxu0
          %v6109 = vadd.f32 0.0, %v6108
          %6110 = vmatmul.f32.gmra.mxu0 %v5903
          %v6111 = vpop.f32.mrf.mxu0
          %v6112 = vadd.f32 0.0, %v6111
          %6113 = vmatmul.f32.gmra.mxu0 %v5906
          %v6114 = vpop.f32.mrf.mxu0
          %v6115 = vadd.f32 0.0, %v6114
          %6116 = vmatmul.f32.gmra.mxu0 %v5909
          %v6117 = vpop.f32.mrf.mxu0
          %v6118 = vadd.f32 0.0, %v6117
          %6119 = vmatmul.f32.gmra.mxu0 %v5912
          %v6120 = vpop.f32.mrf.mxu0
          %v6121 = vadd.f32 0.0, %v6120
          %6122 = vmatmul.f32.gmra.mxu0 %v5915
          %v6123 = vpop.f32.mrf.mxu0
          %v6124 = vadd.f32 0.0, %v6123
          %6125 = vmatmul.f32.gmra.mxu0 %v5918
          %v6126 = vpop.f32.mrf.mxu0
          %v6127 = vadd.f32 0.0, %v6126
          %6128 = vmatmul.f32.gmra.mxu0 %v5921
          %v6129 = vpop.f32.mrf.mxu0
          %v6130 = vadd.f32 0.0, %v6129
          %6131 = vdwg.mxu0
          %v6132 = vadd.f32 %v5598, %v5941
          %v6133 = vadd.f32 %v5599, %v5944
          %v6134 = vadd.f32 %v5600, %v5947
          %v6135 = vadd.f32 %v5601, %v5950
          %v6136 = vadd.f32 %v5602, %v5953
          %v6137 = vadd.f32 %v5603, %v5956
          %v6138 = vadd.f32 %v5604, %v5959
          %v6139 = vadd.f32 %v5605, %v5962
          %v6140 = vadd.f32 %v5606, %v5965
          %v6141 = vadd.f32 %v5607, %v5968
          %v6142 = vadd.f32 %v5608, %v5971
          %v6143 = vadd.f32 %v5609, %v5974
          %v6144 = vadd.f32 %v5610, %v5977
          %v6145 = vadd.f32 %v5611, %v5980
          %v6146 = vadd.f32 %v5612, %v5983
          %v6147 = vadd.f32 %v5613, %v5986
          %v6148 = vadd.f32 %v5614, %v5989
          %v6149 = vadd.f32 %v5615, %v5992
          %v6150 = vadd.f32 %v5616, %v5995
          %v6151 = vadd.f32 %v5617, %v5998
          %v6152 = vadd.f32 %v5618, %v6001
          %v6153 = vadd.f32 %v5619, %v6004
          %v6154 = vadd.f32 %v5620, %v6007
          %v6155 = vadd.f32 %v5621, %v6010
          %v6156 = vadd.f32 %v5622, %v6013
          %v6157 = vadd.f32 %v5623, %v6016
          %v6158 = vadd.f32 %v5624, %v6019
          %v6159 = vadd.f32 %v5625, %v6022
          %v6160 = vadd.f32 %v5626, %v6025
          %v6161 = vadd.f32 %v5627, %v6028
          %v6162 = vadd.f32 %v5628, %v6031
          %v6163 = vadd.f32 %v5629, %v6034
          %v6164 = vadd.f32 %v5630, %v6037
          %v6165 = vadd.f32 %v5631, %v6040
          %v6166 = vadd.f32 %v5632, %v6043
          %v6167 = vadd.f32 %v5633, %v6046
          %v6168 = vadd.f32 %v5634, %v6049
          %v6169 = vadd.f32 %v5635, %v6052
          %v6170 = vadd.f32 %v5636, %v6055
          %v6171 = vadd.f32 %v5637, %v6058
          %v6172 = vadd.f32 %v5638, %v6061
          %v6173 = vadd.f32 %v5639, %v6064
          %v6174 = vadd.f32 %v5640, %v6067
          %v6175 = vadd.f32 %v5641, %v6070
          %v6176 = vadd.f32 %v5642, %v6073
          %v6177 = vadd.f32 %v5643, %v6076
          %v6178 = vadd.f32 %v5644, %v6079
          %v6179 = vadd.f32 %v5645, %v6082
          %v6180 = vadd.f32 %v5646, %v6085
          %v6181 = vadd.f32 %v5647, %v6088
          %v6182 = vadd.f32 %v5648, %v6091
          %v6183 = vadd.f32 %v5649, %v6094
          %v6184 = vadd.f32 %v5650, %v6097
          %v6185 = vadd.f32 %v5651, %v6100
          %v6186 = vadd.f32 %v5652, %v6103
          %v6187 = vadd.f32 %v5653, %v6106
          %v6188 = vadd.f32 %v5654, %v6109
          %v6189 = vadd.f32 %v5655, %v6112
          %v6190 = vadd.f32 %v5656, %v6115
          %v6191 = vadd.f32 %v5657, %v6118
          %v6192 = vadd.f32 %v5658, %v6121
          %v6193 = vadd.f32 %v5659, %v6124
          %v6194 = vadd.f32 %v5660, %v6127
          %v6195 = vadd.f32 %v5661, %v6130
          %v6196 = vld [vmem:[%s5] sm:$0x1]
          %v6198 = vperm.slane %v6196, 0
          %v6200 = vadd.f32 %v6132, %v6198
          %v6201 = vadd.f32 %v6133, %v6198
          %v6202 = vadd.f32 %v6134, %v6198
          %v6203 = vadd.f32 %v6135, %v6198
          %v6204 = vadd.f32 %v6136, %v6198
          %v6205 = vadd.f32 %v6137, %v6198
          %v6206 = vadd.f32 %v6138, %v6198
          %v6207 = vadd.f32 %v6139, %v6198
          %v6208 = vadd.f32 %v6140, %v6198
          %v6209 = vadd.f32 %v6141, %v6198
          %v6210 = vadd.f32 %v6142, %v6198
          %v6211 = vadd.f32 %v6143, %v6198
          %v6212 = vadd.f32 %v6144, %v6198
          %v6213 = vadd.f32 %v6145, %v6198
          %v6214 = vadd.f32 %v6146, %v6198
          %v6215 = vadd.f32 %v6147, %v6198
          %v6216 = vadd.f32 %v6148, %v6198
          %v6217 = vadd.f32 %v6149, %v6198
          %v6218 = vadd.f32 %v6150, %v6198
          %v6219 = vadd.f32 %v6151, %v6198
          %v6220 = vadd.f32 %v6152, %v6198
          %v6221 = vadd.f32 %v6153, %v6198
          %v6222 = vadd.f32 %v6154, %v6198
          %v6223 = vadd.f32 %v6155, %v6198
          %v6224 = vadd.f32 %v6156, %v6198
          %v6225 = vadd.f32 %v6157, %v6198
          %v6226 = vadd.f32 %v6158, %v6198
          %v6227 = vadd.f32 %v6159, %v6198
          %v6228 = vadd.f32 %v6160, %v6198
          %v6229 = vadd.f32 %v6161, %v6198
          %v6230 = vadd.f32 %v6162, %v6198
          %v6231 = vadd.f32 %v6163, %v6198
          %v6232 = vadd.f32 %v6164, %v6198
          %v6233 = vadd.f32 %v6165, %v6198
          %v6234 = vadd.f32 %v6166, %v6198
          %v6235 = vadd.f32 %v6167, %v6198
          %v6236 = vadd.f32 %v6168, %v6198
          %v6237 = vadd.f32 %v6169, %v6198
          %v6238 = vadd.f32 %v6170, %v6198
          %v6239 = vadd.f32 %v6171, %v6198
          %v6240 = vadd.f32 %v6172, %v6198
          %v6241 = vadd.f32 %v6173, %v6198
          %v6242 = vadd.f32 %v6174, %v6198
          %v6243 = vadd.f32 %v6175, %v6198
          %v6244 = vadd.f32 %v6176, %v6198
          %v6245 = vadd.f32 %v6177, %v6198
          %v6246 = vadd.f32 %v6178, %v6198
          %v6247 = vadd.f32 %v6179, %v6198
          %v6248 = vadd.f32 %v6180, %v6198
          %v6249 = vadd.f32 %v6181, %v6198
          %v6250 = vadd.f32 %v6182, %v6198
          %v6251 = vadd.f32 %v6183, %v6198
          %v6252 = vadd.f32 %v6184, %v6198
          %v6253 = vadd.f32 %v6185, %v6198
          %v6254 = vadd.f32 %v6186, %v6198
          %v6255 = vadd.f32 %v6187, %v6198
          %v6256 = vadd.f32 %v6188, %v6198
          %v6257 = vadd.f32 %v6189, %v6198
          %v6258 = vadd.f32 %v6190, %v6198
          %v6259 = vadd.f32 %v6191, %v6198
          %v6260 = vadd.f32 %v6192, %v6198
          %v6261 = vadd.f32 %v6193, %v6198
          %v6262 = vadd.f32 %v6194, %v6198
          %v6263 = vadd.f32 %v6195, %v6198
          %v6264 = vmax.f32 %v6200, 0.0
          %v6265 = vmax.f32 %v6201, 0.0
          %v6266 = vmax.f32 %v6202, 0.0
          %v6267 = vmax.f32 %v6203, 0.0
          %v6268 = vmax.f32 %v6204, 0.0
          %v6269 = vmax.f32 %v6205, 0.0
          %v6270 = vmax.f32 %v6206, 0.0
          %v6271 = vmax.f32 %v6207, 0.0
          %v6272 = vmax.f32 %v6208, 0.0
          %v6273 = vmax.f32 %v6209, 0.0
          %v6274 = vmax.f32 %v6210, 0.0
          %v6275 = vmax.f32 %v6211, 0.0
          %v6276 = vmax.f32 %v6212, 0.0
          %v6277 = vmax.f32 %v6213, 0.0
          %v6278 = vmax.f32 %v6214, 0.0
          %v6279 = vmax.f32 %v6215, 0.0
          %v6280 = vmax.f32 %v6216, 0.0
          %v6281 = vmax.f32 %v6217, 0.0
          %v6282 = vmax.f32 %v6218, 0.0
          %v6283 = vmax.f32 %v6219, 0.0
          %v6284 = vmax.f32 %v6220, 0.0
          %v6285 = vmax.f32 %v6221, 0.0
          %v6286 = vmax.f32 %v6222, 0.0
          %v6287 = vmax.f32 %v6223, 0.0
          %v6288 = vmax.f32 %v6224, 0.0
          %v6289 = vmax.f32 %v6225, 0.0
          %v6290 = vmax.f32 %v6226, 0.0
          %v6291 = vmax.f32 %v6227, 0.0
          %v6292 = vmax.f32 %v6228, 0.0
          %v6293 = vmax.f32 %v6229, 0.0
          %v6294 = vmax.f32 %v6230, 0.0
          %v6295 = vmax.f32 %v6231, 0.0
          %v6296 = vmax.f32 %v6232, 0.0
          %v6297 = vmax.f32 %v6233, 0.0
          %v6298 = vmax.f32 %v6234, 0.0
          %v6299 = vmax.f32 %v6235, 0.0
          %v6300 = vmax.f32 %v6236, 0.0
          %v6301 = vmax.f32 %v6237, 0.0
          %v6302 = vmax.f32 %v6238, 0.0
          %v6303 = vmax.f32 %v6239, 0.0
          %v6304 = vmax.f32 %v6240, 0.0
          %v6305 = vmax.f32 %v6241, 0.0
          %v6306 = vmax.f32 %v6242, 0.0
          %v6307 = vmax.f32 %v6243, 0.0
          %v6308 = vmax.f32 %v6244, 0.0
          %v6309 = vmax.f32 %v6245, 0.0
          %v6310 = vmax.f32 %v6246, 0.0
          %v6311 = vmax.f32 %v6247, 0.0
          %v6312 = vmax.f32 %v6248, 0.0
          %v6313 = vmax.f32 %v6249, 0.0
          %v6314 = vmax.f32 %v6250, 0.0
          %v6315 = vmax.f32 %v6251, 0.0
          %v6316 = vmax.f32 %v6252, 0.0
          %v6317 = vmax.f32 %v6253, 0.0
          %v6318 = vmax.f32 %v6254, 0.0
          %v6319 = vmax.f32 %v6255, 0.0
          %v6320 = vmax.f32 %v6256, 0.0
          %v6321 = vmax.f32 %v6257, 0.0
          %v6322 = vmax.f32 %v6258, 0.0
          %v6323 = vmax.f32 %v6259, 0.0
          %v6324 = vmax.f32 %v6260, 0.0
          %v6325 = vmax.f32 %v6261, 0.0
          %v6326 = vmax.f32 %v6262, 0.0
          %v6327 = vmax.f32 %v6263, 0.0
          %v6328 = vmax.f32 %v6264, %v6272
          %v6329 = vmax.f32 %v6265, %v6273
          %v6330 = vmax.f32 %v6266, %v6274
          %v6331 = vmax.f32 %v6267, %v6275
          %v6332 = vmax.f32 %v6268, %v6276
          %v6333 = vmax.f32 %v6269, %v6277
          %v6334 = vmax.f32 %v6270, %v6278
          %v6335 = vmax.f32 %v6271, %v6279
          %v6336 = vmax.f32 %v6280, %v6288
          %v6337 = vmax.f32 %v6281, %v6289
          %v6338 = vmax.f32 %v6282, %v6290
          %v6339 = vmax.f32 %v6283, %v6291
          %v6340 = vmax.f32 %v6284, %v6292
          %v6341 = vmax.f32 %v6285, %v6293
          %v6342 = vmax.f32 %v6286, %v6294
          %v6343 = vmax.f32 %v6287, %v6295
          %v6344 = vmax.f32 %v6296, %v6304
          %v6345 = vmax.f32 %v6297, %v6305
          %v6346 = vmax.f32 %v6298, %v6306
          %v6347 = vmax.f32 %v6299, %v6307
          %v6348 = vmax.f32 %v6300, %v6308
          %v6349 = vmax.f32 %v6301, %v6309
          %v6350 = vmax.f32 %v6302, %v6310
          %v6351 = vmax.f32 %v6303, %v6311
          %v6352 = vmax.f32 %v6312, %v6320
          %v6353 = vmax.f32 %v6313, %v6321
          %v6354 = vmax.f32 %v6314, %v6322
          %v6355 = vmax.f32 %v6315, %v6323
          %v6356 = vmax.f32 %v6316, %v6324
          %v6357 = vmax.f32 %v6317, %v6325
          %v6358 = vmax.f32 %v6318, %v6326
          %v6359 = vmax.f32 %v6319, %v6327
          %6360 = vst.msk [vmem:[#allocation5] sm:$0xff] %vm698, %v6328
          %6361 = vst.msk [vmem:[#allocation5 + $0x8] sm:$0xff] %vm698, %v6329
          %6362 = vst.msk [vmem:[#allocation5 + $0x10] sm:$0xff] %vm698, %v6330
          %6363 = vst.msk [vmem:[#allocation5 + $0x18] sm:$0xff] %vm698, %v6331
          %6364 = vst.msk [vmem:[#allocation5 + $0x20] sm:$0xff] %vm698, %v6332
          %6365 = vst.msk [vmem:[#allocation5 + $0x28] sm:$0xff] %vm698, %v6333
          %6366 = vst.msk [vmem:[#allocation5 + $0x30] sm:$0xff] %vm698, %v6334
          %6367 = vst.msk [vmem:[#allocation5 + $0x38] sm:$0xff] %vm698, %v6335
          %6368 = vst.msk [vmem:[#allocation5 + $0x40] sm:$0xff] %vm698, %v6336
          %6369 = vst.msk [vmem:[#allocation5 + $0x48] sm:$0xff] %vm698, %v6337
          %6370 = vst.msk [vmem:[#allocation5 + $0x50] sm:$0xff] %vm698, %v6338
          %6371 = vst.msk [vmem:[#allocation5 + $0x58] sm:$0xff] %vm698, %v6339
          %6372 = vst.msk [vmem:[#allocation5 + $0x60] sm:$0xff] %vm698, %v6340
          %6373 = vst.msk [vmem:[#allocation5 + $0x68] sm:$0xff] %vm698, %v6341
          %6374 = vst.msk [vmem:[#allocation5 + $0x70] sm:$0xff] %vm698, %v6342
          %6375 = vst.msk [vmem:[#allocation5 + $0x78] sm:$0xff] %vm698, %v6343
          %6376 = vst.msk [vmem:[#allocation5 + $0x80] sm:$0xff] %vm698, %v6344
          %6377 = vst.msk [vmem:[#allocation5 + $0x88] sm:$0xff] %vm698, %v6345
          %6378 = vst.msk [vmem:[#allocation5 + $0x90] sm:$0xff] %vm698, %v6346
          %6379 = vst.msk [vmem:[#allocation5 + $0x98] sm:$0xff] %vm698, %v6347
          %6380 = vst.msk [vmem:[#allocation5 + $0xa0] sm:$0xff] %vm698, %v6348
          %6381 = vst.msk [vmem:[#allocation5 + $0xa8] sm:$0xff] %vm698, %v6349
          %6382 = vst.msk [vmem:[#allocation5 + $0xb0] sm:$0xff] %vm698, %v6350
          %6383 = vst.msk [vmem:[#allocation5 + $0xb8] sm:$0xff] %vm698, %v6351
          %6384 = vst.msk [vmem:[#allocation5 + $0xc0] sm:$0xff] %vm698, %v6352
          %6385 = vst.msk [vmem:[#allocation5 + $0xc8] sm:$0xff] %vm698, %v6353
          %6386 = vst.msk [vmem:[#allocation5 + $0xd0] sm:$0xff] %vm698, %v6354
          %6387 = vst.msk [vmem:[#allocation5 + $0xd8] sm:$0xff] %vm698, %v6355
          %6388 = vst.msk [vmem:[#allocation5 + $0xe0] sm:$0xff] %vm698, %v6356
          %6389 = vst.msk [vmem:[#allocation5 + $0xe8] sm:$0xff] %vm698, %v6357
          %6390 = vst.msk [vmem:[#allocation5 + $0xf0] sm:$0xff] %vm698, %v6358
          %6391 = vst.msk [vmem:[#allocation5 + $0xf8] sm:$0xff] %vm698, %v6359
          %v6392 = vld [vmem:[#allocation5] ss:$2 sm:$0xff]
          %s6393 = scalar_lea.vmem [#allocation5], 16
          %v6394 = vld [vmem:[%s6393] ss:$2 sm:$0xff]
          %s6395 = scalar_lea.vmem [#allocation5], 32
          %v6396 = vld [vmem:[%s6395] ss:$2 sm:$0xff]
          %s6397 = scalar_lea.vmem [#allocation5], 48
          %v6398 = vld [vmem:[%s6397] ss:$2 sm:$0xff]
          %s6399 = scalar_lea.vmem [#allocation5], 64
          %v6400 = vld [vmem:[%s6399] ss:$2 sm:$0xff]
          %s6401 = scalar_lea.vmem [#allocation5], 80
          %v6402 = vld [vmem:[%s6401] ss:$2 sm:$0xff]
          %s6403 = scalar_lea.vmem [#allocation5], 96
          %v6404 = vld [vmem:[%s6403] ss:$2 sm:$0xff]
          %s6405 = scalar_lea.vmem [#allocation5], 112
          %v6406 = vld [vmem:[%s6405] ss:$2 sm:$0xff]
          %s6407 = scalar_lea.vmem [#allocation5], 128
          %v6408 = vld [vmem:[%s6407] ss:$2 sm:$0xff]
          %s6409 = scalar_lea.vmem [#allocation5], 144
          %v6410 = vld [vmem:[%s6409] ss:$2 sm:$0xff]
          %s6411 = scalar_lea.vmem [#allocation5], 160
          %v6412 = vld [vmem:[%s6411] ss:$2 sm:$0xff]
          %s6413 = scalar_lea.vmem [#allocation5], 176
          %v6414 = vld [vmem:[%s6413] ss:$2 sm:$0xff]
          %s6415 = scalar_lea.vmem [#allocation5], 192
          %v6416 = vld [vmem:[%s6415] ss:$2 sm:$0xff]
          %s6417 = scalar_lea.vmem [#allocation5], 208
          %v6418 = vld [vmem:[%s6417] ss:$2 sm:$0xff]
          %s6419 = scalar_lea.vmem [#allocation5], 224
          %v6420 = vld [vmem:[%s6419] ss:$2 sm:$0xff]
          %s6421 = scalar_lea.vmem [#allocation5], 240
          %v6422 = vld [vmem:[%s6421] ss:$2 sm:$0xff]
          %s6423 = scalar_lea.vmem [#allocation5], 1
          %v6424 = vld [vmem:[%s6423] ss:$2 sm:$0xff]
          %s6425 = scalar_lea.vmem [#allocation5], 17
          %v6426 = vld [vmem:[%s6425] ss:$2 sm:$0xff]
          %s6427 = scalar_lea.vmem [#allocation5], 33
          %v6428 = vld [vmem:[%s6427] ss:$2 sm:$0xff]
          %s6429 = scalar_lea.vmem [#allocation5], 49
          %v6430 = vld [vmem:[%s6429] ss:$2 sm:$0xff]
          %s6431 = scalar_lea.vmem [#allocation5], 65
          %v6432 = vld [vmem:[%s6431] ss:$2 sm:$0xff]
          %s6433 = scalar_lea.vmem [#allocation5], 81
          %v6434 = vld [vmem:[%s6433] ss:$2 sm:$0xff]
          %s6435 = scalar_lea.vmem [#allocation5], 97
          %v6436 = vld [vmem:[%s6435] ss:$2 sm:$0xff]
          %s6437 = scalar_lea.vmem [#allocation5], 113
          %v6438 = vld [vmem:[%s6437] ss:$2 sm:$0xff]
          %s6439 = scalar_lea.vmem [#allocation5], 129
          %v6440 = vld [vmem:[%s6439] ss:$2 sm:$0xff]
          %s6441 = scalar_lea.vmem [#allocation5], 145
          %v6442 = vld [vmem:[%s6441] ss:$2 sm:$0xff]
          %s6443 = scalar_lea.vmem [#allocation5], 161
          %v6444 = vld [vmem:[%s6443] ss:$2 sm:$0xff]
          %s6445 = scalar_lea.vmem [#allocation5], 177
          %v6446 = vld [vmem:[%s6445] ss:$2 sm:$0xff]
          %s6447 = scalar_lea.vmem [#allocation5], 193
          %v6448 = vld [vmem:[%s6447] ss:$2 sm:$0xff]
          %s6449 = scalar_lea.vmem [#allocation5], 209
          %v6450 = vld [vmem:[%s6449] ss:$2 sm:$0xff]
          %s6451 = scalar_lea.vmem [#allocation5], 225
          %v6452 = vld [vmem:[%s6451] ss:$2 sm:$0xff]
          %s6453 = scalar_lea.vmem [#allocation5], 241
          %v6454 = vld [vmem:[%s6453] ss:$2 sm:$0xff]
          %v6455 = vmax.f32 %v6392, %v6424
          %v6456 = vmax.f32 %v6394, %v6426
          %v6457 = vmax.f32 %v6396, %v6428
          %v6458 = vmax.f32 %v6398, %v6430
          %v6459 = vmax.f32 %v6400, %v6432
          %v6460 = vmax.f32 %v6402, %v6434
          %v6461 = vmax.f32 %v6404, %v6436
          %v6462 = vmax.f32 %v6406, %v6438
          %v6463 = vmax.f32 %v6408, %v6440
          %v6464 = vmax.f32 %v6410, %v6442
          %v6465 = vmax.f32 %v6412, %v6444
          %v6466 = vmax.f32 %v6414, %v6446
          %v6467 = vmax.f32 %v6416, %v6448
          %v6468 = vmax.f32 %v6418, %v6450
          %v6469 = vmax.f32 %v6420, %v6452
          %v6470 = vmax.f32 %v6422, %v6454
          %s6471 = smul.u32 %s1505, 4
          %s6472 = sadd.s32 %s6471, 1
          %s6473 = smul.u32 %s6472, 40
          %s6474 = scalar_lea.vmem [#allocation6], %s6473
          %6475 = vst.msk [vmem:[%s6474 + $0x1] sm:$0xff] %vm698, %v6455
          %6476 = vst.msk [vmem:[%s6474 + $0x9] sm:$0xff] %vm698, %v6456
          %6477 = vst.msk [vmem:[%s6474 + $0x11] sm:$0xff] %vm698, %v6457
          %6478 = vst.msk [vmem:[%s6474 + $0x19] sm:$0xff] %vm698, %v6458
          %6479 = vst.msk [vmem:[%s6474 + $0x29] sm:$0xff] %vm698, %v6459
          %6480 = vst.msk [vmem:[%s6474 + $0x31] sm:$0xff] %vm698, %v6460
          %6481 = vst.msk [vmem:[%s6474 + $0x39] sm:$0xff] %vm698, %v6461
          %6482 = vst.msk [vmem:[%s6474 + $0x41] sm:$0xff] %vm698, %v6462
          %6483 = vst.msk [vmem:[%s6474 + $0x51] sm:$0xff] %vm698, %v6463
          %6484 = vst.msk [vmem:[%s6474 + $0x59] sm:$0xff] %vm698, %v6464
          %6485 = vst.msk [vmem:[%s6474 + $0x61] sm:$0xff] %vm698, %v6465
          %6486 = vst.msk [vmem:[%s6474 + $0x69] sm:$0xff] %vm698, %v6466
          %6487 = vst.msk [vmem:[%s6474 + $0x79] sm:$0xff] %vm698, %v6467
          %6488 = vst.msk [vmem:[%s6474 + $0x81] sm:$0xff] %vm698, %v6468
          %6489 = vst.msk [vmem:[%s6474 + $0x89] sm:$0xff] %vm698, %v6469
          %6490 = vst.msk [vmem:[%s6474 + $0x91] sm:$0xff] %vm698, %v6470
        $region104: #{multi_input_forward.1} parent=71 // loop_footer
          %s1509 = sadd.s32 1, %s1505
        $region105: #{multi_input_forward.1} parent=71 // loop_footer_branch
          %1504 = sbr.rel target = $region101
        $region106: #{multi_input_forward.1} parent=71 // loop_exit
          _
        loop: start=0, step=1, limit=4
        $region107: #{multi_input_forward.1} parent=71 // loop_pre_header
          _
        $region108: #{multi_input_forward.1} parent=71 // loop_header
          %s6492 = sphi 0, %s6496
          %p6493 = scmp.ge.s32.totalorder %s6492, 4
        $region109: #{multi_input_forward.1} parent=71 // loop_header_branch
          %6495 = sbr.rel (%p6493) target = $region113
        $region110: #{multi_input_forward.1} parent=71 // loop_body
          %s6497 = smul.u32 %s6492, 8
          %s6498 = smul.u32 %s6497, 40
          %s6499 = scalar_lea.vmem [#allocation6], %s6498
          %v6500 = vld [vmem:[%s6499] sm:$0xff]
          %v6501 = vld [vmem:[%s6499 + $0x8] sm:$0xff]
          %v6502 = vld [vmem:[%s6499 + $0x10] sm:$0xff]
          %v6503 = vld [vmem:[%s6499 + $0x18] sm:$0xff]
          %v6504 = vld [vmem:[%s6499 + $0x28] sm:$0xff]
          %v6505 = vld [vmem:[%s6499 + $0x30] sm:$0xff]
          %v6506 = vld [vmem:[%s6499 + $0x38] sm:$0xff]
          %v6507 = vld [vmem:[%s6499 + $0x40] sm:$0xff]
          %v6508 = vld [vmem:[%s6499 + $0x50] sm:$0xff]
          %v6509 = vld [vmem:[%s6499 + $0x58] sm:$0xff]
          %v6510 = vld [vmem:[%s6499 + $0x60] sm:$0xff]
          %v6511 = vld [vmem:[%s6499 + $0x68] sm:$0xff]
          %v6512 = vld [vmem:[%s6499 + $0x78] sm:$0xff]
          %v6513 = vld [vmem:[%s6499 + $0x80] sm:$0xff]
          %v6514 = vld [vmem:[%s6499 + $0x88] sm:$0xff]
          %v6515 = vld [vmem:[%s6499 + $0x90] sm:$0xff]
          %v6516 = vld [vmem:[%s6499 + $0xa0] sm:$0xff]
          %v6517 = vld [vmem:[%s6499 + $0xa8] sm:$0xff]
          %v6518 = vld [vmem:[%s6499 + $0xb0] sm:$0xff]
          %v6519 = vld [vmem:[%s6499 + $0xb8] sm:$0xff]
          %v6520 = vld [vmem:[%s6499 + $0xc8] sm:$0xff]
          %v6521 = vld [vmem:[%s6499 + $0xd0] sm:$0xff]
          %v6522 = vld [vmem:[%s6499 + $0xd8] sm:$0xff]
          %v6523 = vld [vmem:[%s6499 + $0xe0] sm:$0xff]
          %v6524 = vld [vmem:[%s6499 + $0xf0] sm:$0xff]
          %v6525 = vld [vmem:[%s6499 + $0xf8] sm:$0xff]
          %v6526 = vld [vmem:[%s6499 + $0x100] sm:$0xff]
          %v6527 = vld [vmem:[%s6499 + $0x108] sm:$0xff]
          %v6528 = vld [vmem:[%s6499 + $0x118] sm:$0xff]
          %v6529 = vld [vmem:[%s6499 + $0x120] sm:$0xff]
          %v6530 = vld [vmem:[%s6499 + $0x128] sm:$0xff]
          %v6531 = vld [vmem:[%s6499 + $0x130] sm:$0xff]
          %v6532 = vld [vmem:[#allocation14] sm:$0xff]
          %v6533 = vld [vmem:[#allocation14 + $0x8] sm:$0xff]
          %v6534 = vld [vmem:[#allocation14 + $0x10] sm:$0xff]
          %v6535 = vld [vmem:[#allocation14 + $0x18] sm:$0xff]
          %v6536 = vld [vmem:[#allocation14 + $0x20] sm:$0xff]
          %v6537 = vld [vmem:[#allocation14 + $0x28] sm:$0xff]
          %v6538 = vld [vmem:[#allocation14 + $0x30] sm:$0xff]
          %v6539 = vld [vmem:[#allocation14 + $0x38] sm:$0xff]
          %v6540 = vld [vmem:[%s6499 + $0x1] sm:$0xff]
          %v6541 = vld [vmem:[%s6499 + $0x9] sm:$0xff]
          %v6542 = vld [vmem:[%s6499 + $0x11] sm:$0xff]
          %v6543 = vld [vmem:[%s6499 + $0x19] sm:$0xff]
          %v6544 = vld [vmem:[%s6499 + $0x29] sm:$0xff]
          %v6545 = vld [vmem:[%s6499 + $0x31] sm:$0xff]
          %v6546 = vld [vmem:[%s6499 + $0x39] sm:$0xff]
          %v6547 = vld [vmem:[%s6499 + $0x41] sm:$0xff]
          %v6548 = vld [vmem:[%s6499 + $0x51] sm:$0xff]
          %v6549 = vld [vmem:[%s6499 + $0x59] sm:$0xff]
          %v6550 = vld [vmem:[%s6499 + $0x61] sm:$0xff]
          %v6551 = vld [vmem:[%s6499 + $0x69] sm:$0xff]
          %v6552 = vld [vmem:[%s6499 + $0x79] sm:$0xff]
          %v6553 = vld [vmem:[%s6499 + $0x81] sm:$0xff]
          %v6554 = vld [vmem:[%s6499 + $0x89] sm:$0xff]
          %v6555 = vld [vmem:[%s6499 + $0x91] sm:$0xff]
          %v6556 = vld [vmem:[%s6499 + $0xa1] sm:$0xff]
          %v6557 = vld [vmem:[%s6499 + $0xa9] sm:$0xff]
          %v6558 = vld [vmem:[%s6499 + $0xb1] sm:$0xff]
          %v6559 = vld [vmem:[%s6499 + $0xb9] sm:$0xff]
          %v6560 = vld [vmem:[%s6499 + $0xc9] sm:$0xff]
          %v6561 = vld [vmem:[%s6499 + $0xd1] sm:$0xff]
          %v6562 = vld [vmem:[%s6499 + $0xd9] sm:$0xff]
          %v6563 = vld [vmem:[%s6499 + $0xe1] sm:$0xff]
          %v6564 = vld [vmem:[%s6499 + $0xf1] sm:$0xff]
          %v6565 = vld [vmem:[%s6499 + $0xf9] sm:$0xff]
          %v6566 = vld [vmem:[%s6499 + $0x101] sm:$0xff]
          %v6567 = vld [vmem:[%s6499 + $0x109] sm:$0xff]
          %v6568 = vld [vmem:[%s6499 + $0x119] sm:$0xff]
          %v6569 = vld [vmem:[%s6499 + $0x121] sm:$0xff]
          %v6570 = vld [vmem:[%s6499 + $0x129] sm:$0xff]
          %v6571 = vld [vmem:[%s6499 + $0x131] sm:$0xff]
          %s6572 = scalar_lea.vmem [#allocation14], 64
          %v6573 = vld [vmem:[%s6572] sm:$0xff]
          %v6574 = vld [vmem:[%s6572 + $0x8] sm:$0xff]
          %v6575 = vld [vmem:[%s6572 + $0x10] sm:$0xff]
          %v6576 = vld [vmem:[%s6572 + $0x18] sm:$0xff]
          %v6577 = vld [vmem:[%s6572 + $0x20] sm:$0xff]
          %v6578 = vld [vmem:[%s6572 + $0x28] sm:$0xff]
          %v6579 = vld [vmem:[%s6572 + $0x30] sm:$0xff]
          %v6580 = vld [vmem:[%s6572 + $0x38] sm:$0xff]
          %v6582 = vsel %vm698, %v6540, 0
          %v6585 = vsel %vm698, %v6541, 0
          %v6588 = vsel %vm698, %v6542, 0
          %v6591 = vsel %vm698, %v6543, 0
          %v6594 = vsel %vm698, %v6544, 0
          %v6597 = vsel %vm698, %v6545, 0
          %v6600 = vsel %vm698, %v6546, 0
          %v6603 = vsel %vm698, %v6547, 0
          %v6606 = vsel %vm698, %v6548, 0
          %v6609 = vsel %vm698, %v6549, 0
          %v6612 = vsel %vm698, %v6550, 0
          %v6615 = vsel %vm698, %v6551, 0
          %v6618 = vsel %vm698, %v6552, 0
          %v6621 = vsel %vm698, %v6553, 0
          %v6624 = vsel %vm698, %v6554, 0
          %v6627 = vsel %vm698, %v6555, 0
          %v6630 = vsel %vm698, %v6556, 0
          %v6633 = vsel %vm698, %v6557, 0
          %v6636 = vsel %vm698, %v6558, 0
          %v6639 = vsel %vm698, %v6559, 0
          %v6642 = vsel %vm698, %v6560, 0
          %v6645 = vsel %vm698, %v6561, 0
          %v6648 = vsel %vm698, %v6562, 0
          %v6651 = vsel %vm698, %v6563, 0
          %v6654 = vsel %vm698, %v6564, 0
          %v6657 = vsel %vm698, %v6565, 0
          %v6660 = vsel %vm698, %v6566, 0
          %v6663 = vsel %vm698, %v6567, 0
          %v6666 = vsel %vm698, %v6568, 0
          %v6669 = vsel %vm698, %v6569, 0
          %v6672 = vsel %vm698, %v6570, 0
          %v6675 = vsel %vm698, %v6571, 0
          %6677 = vmatpush.msra.mxu0 0.0
          %6678 = vmatpush.msra.mxu0 0.0
          %6679 = vmatpush.msra.mxu0 0.0
          %6680 = vmatpush.msra.mxu0 0.0
          %6681 = vmatpush.msra.mxu0 0.0
          %6682 = vmatpush.msra.mxu0 0.0
          %6683 = vmatpush.msra.mxu0 0.0
          %6684 = vmatpush.msra.mxu0 0.0
          %6685 = vmatpush.msra.mxu0 %v6580
          %6686 = vmatpush.msra.mxu0 %v6579
          %6687 = vmatpush.msra.mxu0 %v6578
          %6688 = vmatpush.msra.mxu0 %v6577
          %6689 = vmatpush.msra.mxu0 %v6576
          %6690 = vmatpush.msra.mxu0 %v6575
          %6691 = vmatpush.msra.mxu0 %v6574
          %6692 = vmatpush.msra.mxu0 %v6573
          %6693 = vmatmul.f32.gmra.mxu0 %v6582
          %v6694 = vpop.f32.mrf.mxu0
          %v6695 = vadd.f32 0.0, %v6694
          %6696 = vmatmul.f32.gmra.mxu0 %v6585
          %v6697 = vpop.f32.mrf.mxu0
          %v6698 = vadd.f32 0.0, %v6697
          %6699 = vmatmul.f32.gmra.mxu0 %v6588
          %v6700 = vpop.f32.mrf.mxu0
          %v6701 = vadd.f32 0.0, %v6700
          %6702 = vmatmul.f32.gmra.mxu0 %v6591
          %v6703 = vpop.f32.mrf.mxu0
          %v6704 = vadd.f32 0.0, %v6703
          %6705 = vmatmul.f32.gmra.mxu0 %v6594
          %v6706 = vpop.f32.mrf.mxu0
          %v6707 = vadd.f32 0.0, %v6706
          %6708 = vmatmul.f32.gmra.mxu0 %v6597
          %v6709 = vpop.f32.mrf.mxu0
          %v6710 = vadd.f32 0.0, %v6709
          %6711 = vmatmul.f32.gmra.mxu0 %v6600
          %v6712 = vpop.f32.mrf.mxu0
          %v6713 = vadd.f32 0.0, %v6712
          %6714 = vmatmul.f32.gmra.mxu0 %v6603
          %v6715 = vpop.f32.mrf.mxu0
          %v6716 = vadd.f32 0.0, %v6715
          %6717 = vmatmul.f32.gmra.mxu0 %v6606
          %v6718 = vpop.f32.mrf.mxu0
          %v6719 = vadd.f32 0.0, %v6718
          %6720 = vmatmul.f32.gmra.mxu0 %v6609
          %v6721 = vpop.f32.mrf.mxu0
          %v6722 = vadd.f32 0.0, %v6721
          %6723 = vmatmul.f32.gmra.mxu0 %v6612
          %v6724 = vpop.f32.mrf.mxu0
          %v6725 = vadd.f32 0.0, %v6724
          %6726 = vmatmul.f32.gmra.mxu0 %v6615
          %v6727 = vpop.f32.mrf.mxu0
          %v6728 = vadd.f32 0.0, %v6727
          %6729 = vmatmul.f32.gmra.mxu0 %v6618
          %v6730 = vpop.f32.mrf.mxu0
          %v6731 = vadd.f32 0.0, %v6730
          %6732 = vmatmul.f32.gmra.mxu0 %v6621
          %v6733 = vpop.f32.mrf.mxu0
          %v6734 = vadd.f32 0.0, %v6733
          %6735 = vmatmul.f32.gmra.mxu0 %v6624
          %v6736 = vpop.f32.mrf.mxu0
          %v6737 = vadd.f32 0.0, %v6736
          %6738 = vmatmul.f32.gmra.mxu0 %v6627
          %v6739 = vpop.f32.mrf.mxu0
          %v6740 = vadd.f32 0.0, %v6739
          %6741 = vmatmul.f32.gmra.mxu0 %v6630
          %v6742 = vpop.f32.mrf.mxu0
          %v6743 = vadd.f32 0.0, %v6742
          %6744 = vmatmul.f32.gmra.mxu0 %v6633
          %v6745 = vpop.f32.mrf.mxu0
          %v6746 = vadd.f32 0.0, %v6745
          %6747 = vmatmul.f32.gmra.mxu0 %v6636
          %v6748 = vpop.f32.mrf.mxu0
          %v6749 = vadd.f32 0.0, %v6748
          %6750 = vmatmul.f32.gmra.mxu0 %v6639
          %v6751 = vpop.f32.mrf.mxu0
          %v6752 = vadd.f32 0.0, %v6751
          %6753 = vmatmul.f32.gmra.mxu0 %v6642
          %v6754 = vpop.f32.mrf.mxu0
          %v6755 = vadd.f32 0.0, %v6754
          %6756 = vmatmul.f32.gmra.mxu0 %v6645
          %v6757 = vpop.f32.mrf.mxu0
          %v6758 = vadd.f32 0.0, %v6757
          %6759 = vmatmul.f32.gmra.mxu0 %v6648
          %v6760 = vpop.f32.mrf.mxu0
          %v6761 = vadd.f32 0.0, %v6760
          %6762 = vmatmul.f32.gmra.mxu0 %v6651
          %v6763 = vpop.f32.mrf.mxu0
          %v6764 = vadd.f32 0.0, %v6763
          %6765 = vmatmul.f32.gmra.mxu0 %v6654
          %v6766 = vpop.f32.mrf.mxu0
          %v6767 = vadd.f32 0.0, %v6766
          %6768 = vmatmul.f32.gmra.mxu0 %v6657
          %v6769 = vpop.f32.mrf.mxu0
          %v6770 = vadd.f32 0.0, %v6769
          %6771 = vmatmul.f32.gmra.mxu0 %v6660
          %v6772 = vpop.f32.mrf.mxu0
          %v6773 = vadd.f32 0.0, %v6772
          %6774 = vmatmul.f32.gmra.mxu0 %v6663
          %v6775 = vpop.f32.mrf.mxu0
          %v6776 = vadd.f32 0.0, %v6775
          %6777 = vmatmul.f32.gmra.mxu0 %v6666
          %v6778 = vpop.f32.mrf.mxu0
          %v6779 = vadd.f32 0.0, %v6778
          %6780 = vmatmul.f32.gmra.mxu0 %v6669
          %v6781 = vpop.f32.mrf.mxu0
          %v6782 = vadd.f32 0.0, %v6781
          %6783 = vmatmul.f32.gmra.mxu0 %v6672
          %v6784 = vpop.f32.mrf.mxu0
          %v6785 = vadd.f32 0.0, %v6784
          %6786 = vmatmul.f32.gmra.mxu0 %v6675
          %v6787 = vpop.f32.mrf.mxu0
          %v6788 = vadd.f32 0.0, %v6787
          %6789 = vdwg.mxu0
          %v6791 = vsel %vm698, %v6500, 0
          %v6794 = vsel %vm698, %v6501, 0
          %v6797 = vsel %vm698, %v6502, 0
          %v6800 = vsel %vm698, %v6503, 0
          %v6803 = vsel %vm698, %v6504, 0
          %v6806 = vsel %vm698, %v6505, 0
          %v6809 = vsel %vm698, %v6506, 0
          %v6812 = vsel %vm698, %v6507, 0
          %v6815 = vsel %vm698, %v6508, 0
          %v6818 = vsel %vm698, %v6509, 0
          %v6821 = vsel %vm698, %v6510, 0
          %v6824 = vsel %vm698, %v6511, 0
          %v6827 = vsel %vm698, %v6512, 0
          %v6830 = vsel %vm698, %v6513, 0
          %v6833 = vsel %vm698, %v6514, 0
          %v6836 = vsel %vm698, %v6515, 0
          %v6839 = vsel %vm698, %v6516, 0
          %v6842 = vsel %vm698, %v6517, 0
          %v6845 = vsel %vm698, %v6518, 0
          %v6848 = vsel %vm698, %v6519, 0
          %v6851 = vsel %vm698, %v6520, 0
          %v6854 = vsel %vm698, %v6521, 0
          %v6857 = vsel %vm698, %v6522, 0
          %v6860 = vsel %vm698, %v6523, 0
          %v6863 = vsel %vm698, %v6524, 0
          %v6866 = vsel %vm698, %v6525, 0
          %v6869 = vsel %vm698, %v6526, 0
          %v6872 = vsel %vm698, %v6527, 0
          %v6875 = vsel %vm698, %v6528, 0
          %v6878 = vsel %vm698, %v6529, 0
          %v6881 = vsel %vm698, %v6530, 0
          %v6884 = vsel %vm698, %v6531, 0
          %6886 = vmatpush.msra.mxu0 0.0
          %6887 = vmatpush.msra.mxu0 0.0
          %6888 = vmatpush.msra.mxu0 0.0
          %6889 = vmatpush.msra.mxu0 0.0
          %6890 = vmatpush.msra.mxu0 0.0
          %6891 = vmatpush.msra.mxu0 0.0
          %6892 = vmatpush.msra.mxu0 0.0
          %6893 = vmatpush.msra.mxu0 0.0
          %6894 = vmatpush.msra.mxu0 %v6539
          %6895 = vmatpush.msra.mxu0 %v6538
          %6896 = vmatpush.msra.mxu0 %v6537
          %6897 = vmatpush.msra.mxu0 %v6536
          %6898 = vmatpush.msra.mxu0 %v6535
          %6899 = vmatpush.msra.mxu0 %v6534
          %6900 = vmatpush.msra.mxu0 %v6533
          %6901 = vmatpush.msra.mxu0 %v6532
          %6902 = vmatmul.f32.gmra.mxu0 %v6791
          %v6903 = vpop.f32.mrf.mxu0
          %v6904 = vadd.f32 %v6695, %v6903
          %6905 = vmatmul.f32.gmra.mxu0 %v6794
          %v6906 = vpop.f32.mrf.mxu0
          %v6907 = vadd.f32 %v6698, %v6906
          %6908 = vmatmul.f32.gmra.mxu0 %v6797
          %v6909 = vpop.f32.mrf.mxu0
          %v6910 = vadd.f32 %v6701, %v6909
          %6911 = vmatmul.f32.gmra.mxu0 %v6800
          %v6912 = vpop.f32.mrf.mxu0
          %v6913 = vadd.f32 %v6704, %v6912
          %6914 = vmatmul.f32.gmra.mxu0 %v6803
          %v6915 = vpop.f32.mrf.mxu0
          %v6916 = vadd.f32 %v6707, %v6915
          %6917 = vmatmul.f32.gmra.mxu0 %v6806
          %v6918 = vpop.f32.mrf.mxu0
          %v6919 = vadd.f32 %v6710, %v6918
          %6920 = vmatmul.f32.gmra.mxu0 %v6809
          %v6921 = vpop.f32.mrf.mxu0
          %v6922 = vadd.f32 %v6713, %v6921
          %6923 = vmatmul.f32.gmra.mxu0 %v6812
          %v6924 = vpop.f32.mrf.mxu0
          %v6925 = vadd.f32 %v6716, %v6924
          %6926 = vmatmul.f32.gmra.mxu0 %v6815
          %v6927 = vpop.f32.mrf.mxu0
          %v6928 = vadd.f32 %v6719, %v6927
          %6929 = vmatmul.f32.gmra.mxu0 %v6818
          %v6930 = vpop.f32.mrf.mxu0
          %v6931 = vadd.f32 %v6722, %v6930
          %6932 = vmatmul.f32.gmra.mxu0 %v6821
          %v6933 = vpop.f32.mrf.mxu0
          %v6934 = vadd.f32 %v6725, %v6933
          %6935 = vmatmul.f32.gmra.mxu0 %v6824
          %v6936 = vpop.f32.mrf.mxu0
          %v6937 = vadd.f32 %v6728, %v6936
          %6938 = vmatmul.f32.gmra.mxu0 %v6827
          %v6939 = vpop.f32.mrf.mxu0
          %v6940 = vadd.f32 %v6731, %v6939
          %6941 = vmatmul.f32.gmra.mxu0 %v6830
          %v6942 = vpop.f32.mrf.mxu0
          %v6943 = vadd.f32 %v6734, %v6942
          %6944 = vmatmul.f32.gmra.mxu0 %v6833
          %v6945 = vpop.f32.mrf.mxu0
          %v6946 = vadd.f32 %v6737, %v6945
          %6947 = vmatmul.f32.gmra.mxu0 %v6836
          %v6948 = vpop.f32.mrf.mxu0
          %v6949 = vadd.f32 %v6740, %v6948
          %6950 = vmatmul.f32.gmra.mxu0 %v6839
          %v6951 = vpop.f32.mrf.mxu0
          %v6952 = vadd.f32 %v6743, %v6951
          %6953 = vmatmul.f32.gmra.mxu0 %v6842
          %v6954 = vpop.f32.mrf.mxu0
          %v6955 = vadd.f32 %v6746, %v6954
          %6956 = vmatmul.f32.gmra.mxu0 %v6845
          %v6957 = vpop.f32.mrf.mxu0
          %v6958 = vadd.f32 %v6749, %v6957
          %6959 = vmatmul.f32.gmra.mxu0 %v6848
          %v6960 = vpop.f32.mrf.mxu0
          %v6961 = vadd.f32 %v6752, %v6960
          %6962 = vmatmul.f32.gmra.mxu0 %v6851
          %v6963 = vpop.f32.mrf.mxu0
          %v6964 = vadd.f32 %v6755, %v6963
          %6965 = vmatmul.f32.gmra.mxu0 %v6854
          %v6966 = vpop.f32.mrf.mxu0
          %v6967 = vadd.f32 %v6758, %v6966
          %6968 = vmatmul.f32.gmra.mxu0 %v6857
          %v6969 = vpop.f32.mrf.mxu0
          %v6970 = vadd.f32 %v6761, %v6969
          %6971 = vmatmul.f32.gmra.mxu0 %v6860
          %v6972 = vpop.f32.mrf.mxu0
          %v6973 = vadd.f32 %v6764, %v6972
          %6974 = vmatmul.f32.gmra.mxu0 %v6863
          %v6975 = vpop.f32.mrf.mxu0
          %v6976 = vadd.f32 %v6767, %v6975
          %6977 = vmatmul.f32.gmra.mxu0 %v6866
          %v6978 = vpop.f32.mrf.mxu0
          %v6979 = vadd.f32 %v6770, %v6978
          %6980 = vmatmul.f32.gmra.mxu0 %v6869
          %v6981 = vpop.f32.mrf.mxu0
          %v6982 = vadd.f32 %v6773, %v6981
          %6983 = vmatmul.f32.gmra.mxu0 %v6872
          %v6984 = vpop.f32.mrf.mxu0
          %v6985 = vadd.f32 %v6776, %v6984
          %6986 = vmatmul.f32.gmra.mxu0 %v6875
          %v6987 = vpop.f32.mrf.mxu0
          %v6988 = vadd.f32 %v6779, %v6987
          %6989 = vmatmul.f32.gmra.mxu0 %v6878
          %v6990 = vpop.f32.mrf.mxu0
          %v6991 = vadd.f32 %v6782, %v6990
          %6992 = vmatmul.f32.gmra.mxu0 %v6881
          %v6993 = vpop.f32.mrf.mxu0
          %v6994 = vadd.f32 %v6785, %v6993
          %6995 = vmatmul.f32.gmra.mxu0 %v6884
          %v6996 = vpop.f32.mrf.mxu0
          %v6997 = vadd.f32 %v6788, %v6996
          %6998 = vdwg.mxu0
          %v6999 = vld [vmem:[%s6499 + $0x2] sm:$0xff]
          %v7000 = vld [vmem:[%s6499 + $0xa] sm:$0xff]
          %v7001 = vld [vmem:[%s6499 + $0x12] sm:$0xff]
          %v7002 = vld [vmem:[%s6499 + $0x1a] sm:$0xff]
          %v7003 = vld [vmem:[%s6499 + $0x2a] sm:$0xff]
          %v7004 = vld [vmem:[%s6499 + $0x32] sm:$0xff]
          %v7005 = vld [vmem:[%s6499 + $0x3a] sm:$0xff]
          %v7006 = vld [vmem:[%s6499 + $0x42] sm:$0xff]
          %v7007 = vld [vmem:[%s6499 + $0x52] sm:$0xff]
          %v7008 = vld [vmem:[%s6499 + $0x5a] sm:$0xff]
          %v7009 = vld [vmem:[%s6499 + $0x62] sm:$0xff]
          %v7010 = vld [vmem:[%s6499 + $0x6a] sm:$0xff]
          %v7011 = vld [vmem:[%s6499 + $0x7a] sm:$0xff]
          %v7012 = vld [vmem:[%s6499 + $0x82] sm:$0xff]
          %v7013 = vld [vmem:[%s6499 + $0x8a] sm:$0xff]
          %v7014 = vld [vmem:[%s6499 + $0x92] sm:$0xff]
          %v7015 = vld [vmem:[%s6499 + $0xa2] sm:$0xff]
          %v7016 = vld [vmem:[%s6499 + $0xaa] sm:$0xff]
          %v7017 = vld [vmem:[%s6499 + $0xb2] sm:$0xff]
          %v7018 = vld [vmem:[%s6499 + $0xba] sm:$0xff]
          %v7019 = vld [vmem:[%s6499 + $0xca] sm:$0xff]
          %v7020 = vld [vmem:[%s6499 + $0xd2] sm:$0xff]
          %v7021 = vld [vmem:[%s6499 + $0xda] sm:$0xff]
          %v7022 = vld [vmem:[%s6499 + $0xe2] sm:$0xff]
          %v7023 = vld [vmem:[%s6499 + $0xf2] sm:$0xff]
          %v7024 = vld [vmem:[%s6499 + $0xfa] sm:$0xff]
          %v7025 = vld [vmem:[%s6499 + $0x102] sm:$0xff]
          %v7026 = vld [vmem:[%s6499 + $0x10a] sm:$0xff]
          %v7027 = vld [vmem:[%s6499 + $0x11a] sm:$0xff]
          %v7028 = vld [vmem:[%s6499 + $0x122] sm:$0xff]
          %v7029 = vld [vmem:[%s6499 + $0x12a] sm:$0xff]
          %v7030 = vld [vmem:[%s6499 + $0x132] sm:$0xff]
          %s7031 = scalar_lea.vmem [#allocation14], 128
          %v7032 = vld [vmem:[%s7031] sm:$0xff]
          %v7033 = vld [vmem:[%s7031 + $0x8] sm:$0xff]
          %v7034 = vld [vmem:[%s7031 + $0x10] sm:$0xff]
          %v7035 = vld [vmem:[%s7031 + $0x18] sm:$0xff]
          %v7036 = vld [vmem:[%s7031 + $0x20] sm:$0xff]
          %v7037 = vld [vmem:[%s7031 + $0x28] sm:$0xff]
          %v7038 = vld [vmem:[%s7031 + $0x30] sm:$0xff]
          %v7039 = vld [vmem:[%s7031 + $0x38] sm:$0xff]
          %v7041 = vsel %vm698, %v6999, 0
          %v7044 = vsel %vm698, %v7000, 0
          %v7047 = vsel %vm698, %v7001, 0
          %v7050 = vsel %vm698, %v7002, 0
          %v7053 = vsel %vm698, %v7003, 0
          %v7056 = vsel %vm698, %v7004, 0
          %v7059 = vsel %vm698, %v7005, 0
          %v7062 = vsel %vm698, %v7006, 0
          %v7065 = vsel %vm698, %v7007, 0
          %v7068 = vsel %vm698, %v7008, 0
          %v7071 = vsel %vm698, %v7009, 0
          %v7074 = vsel %vm698, %v7010, 0
          %v7077 = vsel %vm698, %v7011, 0
          %v7080 = vsel %vm698, %v7012, 0
          %v7083 = vsel %vm698, %v7013, 0
          %v7086 = vsel %vm698, %v7014, 0
          %v7089 = vsel %vm698, %v7015, 0
          %v7092 = vsel %vm698, %v7016, 0
          %v7095 = vsel %vm698, %v7017, 0
          %v7098 = vsel %vm698, %v7018, 0
          %v7101 = vsel %vm698, %v7019, 0
          %v7104 = vsel %vm698, %v7020, 0
          %v7107 = vsel %vm698, %v7021, 0
          %v7110 = vsel %vm698, %v7022, 0
          %v7113 = vsel %vm698, %v7023, 0
          %v7116 = vsel %vm698, %v7024, 0
          %v7119 = vsel %vm698, %v7025, 0
          %v7122 = vsel %vm698, %v7026, 0
          %v7125 = vsel %vm698, %v7027, 0
          %v7128 = vsel %vm698, %v7028, 0
          %v7131 = vsel %vm698, %v7029, 0
          %v7134 = vsel %vm698, %v7030, 0
          %7136 = vmatpush.msra.mxu0 0.0
          %7137 = vmatpush.msra.mxu0 0.0
          %7138 = vmatpush.msra.mxu0 0.0
          %7139 = vmatpush.msra.mxu0 0.0
          %7140 = vmatpush.msra.mxu0 0.0
          %7141 = vmatpush.msra.mxu0 0.0
          %7142 = vmatpush.msra.mxu0 0.0
          %7143 = vmatpush.msra.mxu0 0.0
          %7144 = vmatpush.msra.mxu0 %v7039
          %7145 = vmatpush.msra.mxu0 %v7038
          %7146 = vmatpush.msra.mxu0 %v7037
          %7147 = vmatpush.msra.mxu0 %v7036
          %7148 = vmatpush.msra.mxu0 %v7035
          %7149 = vmatpush.msra.mxu0 %v7034
          %7150 = vmatpush.msra.mxu0 %v7033
          %7151 = vmatpush.msra.mxu0 %v7032
          %7152 = vmatmul.f32.gmra.mxu0 %v7041
          %v7153 = vpop.f32.mrf.mxu0
          %v7154 = vadd.f32 0.0, %v7153
          %7155 = vmatmul.f32.gmra.mxu0 %v7044
          %v7156 = vpop.f32.mrf.mxu0
          %v7157 = vadd.f32 0.0, %v7156
          %7158 = vmatmul.f32.gmra.mxu0 %v7047
          %v7159 = vpop.f32.mrf.mxu0
          %v7160 = vadd.f32 0.0, %v7159
          %7161 = vmatmul.f32.gmra.mxu0 %v7050
          %v7162 = vpop.f32.mrf.mxu0
          %v7163 = vadd.f32 0.0, %v7162
          %7164 = vmatmul.f32.gmra.mxu0 %v7053
          %v7165 = vpop.f32.mrf.mxu0
          %v7166 = vadd.f32 0.0, %v7165
          %7167 = vmatmul.f32.gmra.mxu0 %v7056
          %v7168 = vpop.f32.mrf.mxu0
          %v7169 = vadd.f32 0.0, %v7168
          %7170 = vmatmul.f32.gmra.mxu0 %v7059
          %v7171 = vpop.f32.mrf.mxu0
          %v7172 = vadd.f32 0.0, %v7171
          %7173 = vmatmul.f32.gmra.mxu0 %v7062
          %v7174 = vpop.f32.mrf.mxu0
          %v7175 = vadd.f32 0.0, %v7174
          %7176 = vmatmul.f32.gmra.mxu0 %v7065
          %v7177 = vpop.f32.mrf.mxu0
          %v7178 = vadd.f32 0.0, %v7177
          %7179 = vmatmul.f32.gmra.mxu0 %v7068
          %v7180 = vpop.f32.mrf.mxu0
          %v7181 = vadd.f32 0.0, %v7180
          %7182 = vmatmul.f32.gmra.mxu0 %v7071
          %v7183 = vpop.f32.mrf.mxu0
          %v7184 = vadd.f32 0.0, %v7183
          %7185 = vmatmul.f32.gmra.mxu0 %v7074
          %v7186 = vpop.f32.mrf.mxu0
          %v7187 = vadd.f32 0.0, %v7186
          %7188 = vmatmul.f32.gmra.mxu0 %v7077
          %v7189 = vpop.f32.mrf.mxu0
          %v7190 = vadd.f32 0.0, %v7189
          %7191 = vmatmul.f32.gmra.mxu0 %v7080
          %v7192 = vpop.f32.mrf.mxu0
          %v7193 = vadd.f32 0.0, %v7192
          %7194 = vmatmul.f32.gmra.mxu0 %v7083
          %v7195 = vpop.f32.mrf.mxu0
          %v7196 = vadd.f32 0.0, %v7195
          %7197 = vmatmul.f32.gmra.mxu0 %v7086
          %v7198 = vpop.f32.mrf.mxu0
          %v7199 = vadd.f32 0.0, %v7198
          %7200 = vmatmul.f32.gmra.mxu0 %v7089
          %v7201 = vpop.f32.mrf.mxu0
          %v7202 = vadd.f32 0.0, %v7201
          %7203 = vmatmul.f32.gmra.mxu0 %v7092
          %v7204 = vpop.f32.mrf.mxu0
          %v7205 = vadd.f32 0.0, %v7204
          %7206 = vmatmul.f32.gmra.mxu0 %v7095
          %v7207 = vpop.f32.mrf.mxu0
          %v7208 = vadd.f32 0.0, %v7207
          %7209 = vmatmul.f32.gmra.mxu0 %v7098
          %v7210 = vpop.f32.mrf.mxu0
          %v7211 = vadd.f32 0.0, %v7210
          %7212 = vmatmul.f32.gmra.mxu0 %v7101
          %v7213 = vpop.f32.mrf.mxu0
          %v7214 = vadd.f32 0.0, %v7213
          %7215 = vmatmul.f32.gmra.mxu0 %v7104
          %v7216 = vpop.f32.mrf.mxu0
          %v7217 = vadd.f32 0.0, %v7216
          %7218 = vmatmul.f32.gmra.mxu0 %v7107
          %v7219 = vpop.f32.mrf.mxu0
          %v7220 = vadd.f32 0.0, %v7219
          %7221 = vmatmul.f32.gmra.mxu0 %v7110
          %v7222 = vpop.f32.mrf.mxu0
          %v7223 = vadd.f32 0.0, %v7222
          %7224 = vmatmul.f32.gmra.mxu0 %v7113
          %v7225 = vpop.f32.mrf.mxu0
          %v7226 = vadd.f32 0.0, %v7225
          %7227 = vmatmul.f32.gmra.mxu0 %v7116
          %v7228 = vpop.f32.mrf.mxu0
          %v7229 = vadd.f32 0.0, %v7228
          %7230 = vmatmul.f32.gmra.mxu0 %v7119
          %v7231 = vpop.f32.mrf.mxu0
          %v7232 = vadd.f32 0.0, %v7231
          %7233 = vmatmul.f32.gmra.mxu0 %v7122
          %v7234 = vpop.f32.mrf.mxu0
          %v7235 = vadd.f32 0.0, %v7234
          %7236 = vmatmul.f32.gmra.mxu0 %v7125
          %v7237 = vpop.f32.mrf.mxu0
          %v7238 = vadd.f32 0.0, %v7237
          %7239 = vmatmul.f32.gmra.mxu0 %v7128
          %v7240 = vpop.f32.mrf.mxu0
          %v7241 = vadd.f32 0.0, %v7240
          %7242 = vmatmul.f32.gmra.mxu0 %v7131
          %v7243 = vpop.f32.mrf.mxu0
          %v7244 = vadd.f32 0.0, %v7243
          %7245 = vmatmul.f32.gmra.mxu0 %v7134
          %v7246 = vpop.f32.mrf.mxu0
          %v7247 = vadd.f32 0.0, %v7246
          %7248 = vdwg.mxu0
          %v7249 = vadd.f32 %v6904, %v7154
          %v7250 = vadd.f32 %v6907, %v7157
          %v7251 = vadd.f32 %v6910, %v7160
          %v7252 = vadd.f32 %v6913, %v7163
          %v7253 = vadd.f32 %v6916, %v7166
          %v7254 = vadd.f32 %v6919, %v7169
          %v7255 = vadd.f32 %v6922, %v7172
          %v7256 = vadd.f32 %v6925, %v7175
          %v7257 = vadd.f32 %v6928, %v7178
          %v7258 = vadd.f32 %v6931, %v7181
          %v7259 = vadd.f32 %v6934, %v7184
          %v7260 = vadd.f32 %v6937, %v7187
          %v7261 = vadd.f32 %v6940, %v7190
          %v7262 = vadd.f32 %v6943, %v7193
          %v7263 = vadd.f32 %v6946, %v7196
          %v7264 = vadd.f32 %v6949, %v7199
          %v7265 = vadd.f32 %v6952, %v7202
          %v7266 = vadd.f32 %v6955, %v7205
          %v7267 = vadd.f32 %v6958, %v7208
          %v7268 = vadd.f32 %v6961, %v7211
          %v7269 = vadd.f32 %v6964, %v7214
          %v7270 = vadd.f32 %v6967, %v7217
          %v7271 = vadd.f32 %v6970, %v7220
          %v7272 = vadd.f32 %v6973, %v7223
          %v7273 = vadd.f32 %v6976, %v7226
          %v7274 = vadd.f32 %v6979, %v7229
          %v7275 = vadd.f32 %v6982, %v7232
          %v7276 = vadd.f32 %v6985, %v7235
          %v7277 = vadd.f32 %v6988, %v7238
          %v7278 = vadd.f32 %v6991, %v7241
          %v7279 = vadd.f32 %v6994, %v7244
          %v7280 = vadd.f32 %v6997, %v7247
          %s7281 = sadd.s32 %s6497, 1
          %s7282 = smul.u32 %s7281, 40
          %s7283 = scalar_lea.vmem [#allocation6], %s7282
          %v7284 = vld [vmem:[%s7283] sm:$0xff]
          %v7285 = vld [vmem:[%s7283 + $0x8] sm:$0xff]
          %v7286 = vld [vmem:[%s7283 + $0x10] sm:$0xff]
          %v7287 = vld [vmem:[%s7283 + $0x18] sm:$0xff]
          %v7288 = vld [vmem:[%s7283 + $0x28] sm:$0xff]
          %v7289 = vld [vmem:[%s7283 + $0x30] sm:$0xff]
          %v7290 = vld [vmem:[%s7283 + $0x38] sm:$0xff]
          %v7291 = vld [vmem:[%s7283 + $0x40] sm:$0xff]
          %v7292 = vld [vmem:[%s7283 + $0x50] sm:$0xff]
          %v7293 = vld [vmem:[%s7283 + $0x58] sm:$0xff]
          %v7294 = vld [vmem:[%s7283 + $0x60] sm:$0xff]
          %v7295 = vld [vmem:[%s7283 + $0x68] sm:$0xff]
          %v7296 = vld [vmem:[%s7283 + $0x78] sm:$0xff]
          %v7297 = vld [vmem:[%s7283 + $0x80] sm:$0xff]
          %v7298 = vld [vmem:[%s7283 + $0x88] sm:$0xff]
          %v7299 = vld [vmem:[%s7283 + $0x90] sm:$0xff]
          %v7300 = vld [vmem:[%s7283 + $0xa0] sm:$0xff]
          %v7301 = vld [vmem:[%s7283 + $0xa8] sm:$0xff]
          %v7302 = vld [vmem:[%s7283 + $0xb0] sm:$0xff]
          %v7303 = vld [vmem:[%s7283 + $0xb8] sm:$0xff]
          %v7304 = vld [vmem:[%s7283 + $0xc8] sm:$0xff]
          %v7305 = vld [vmem:[%s7283 + $0xd0] sm:$0xff]
          %v7306 = vld [vmem:[%s7283 + $0xd8] sm:$0xff]
          %v7307 = vld [vmem:[%s7283 + $0xe0] sm:$0xff]
          %v7308 = vld [vmem:[%s7283 + $0xf0] sm:$0xff]
          %v7309 = vld [vmem:[%s7283 + $0xf8] sm:$0xff]
          %v7310 = vld [vmem:[%s7283 + $0x100] sm:$0xff]
          %v7311 = vld [vmem:[%s7283 + $0x108] sm:$0xff]
          %v7312 = vld [vmem:[%s7283 + $0x118] sm:$0xff]
          %v7313 = vld [vmem:[%s7283 + $0x120] sm:$0xff]
          %v7314 = vld [vmem:[%s7283 + $0x128] sm:$0xff]
          %v7315 = vld [vmem:[%s7283 + $0x130] sm:$0xff]
          %s7316 = scalar_lea.vmem [#allocation14], 192
          %v7317 = vld [vmem:[%s7316] sm:$0xff]
          %v7318 = vld [vmem:[%s7316 + $0x8] sm:$0xff]
          %v7319 = vld [vmem:[%s7316 + $0x10] sm:$0xff]
          %v7320 = vld [vmem:[%s7316 + $0x18] sm:$0xff]
          %v7321 = vld [vmem:[%s7316 + $0x20] sm:$0xff]
          %v7322 = vld [vmem:[%s7316 + $0x28] sm:$0xff]
          %v7323 = vld [vmem:[%s7316 + $0x30] sm:$0xff]
          %v7324 = vld [vmem:[%s7316 + $0x38] sm:$0xff]
          %v7326 = vsel %vm698, %v7284, 0
          %v7329 = vsel %vm698, %v7285, 0
          %v7332 = vsel %vm698, %v7286, 0
          %v7335 = vsel %vm698, %v7287, 0
          %v7338 = vsel %vm698, %v7288, 0
          %v7341 = vsel %vm698, %v7289, 0
          %v7344 = vsel %vm698, %v7290, 0
          %v7347 = vsel %vm698, %v7291, 0
          %v7350 = vsel %vm698, %v7292, 0
          %v7353 = vsel %vm698, %v7293, 0
          %v7356 = vsel %vm698, %v7294, 0
          %v7359 = vsel %vm698, %v7295, 0
          %v7362 = vsel %vm698, %v7296, 0
          %v7365 = vsel %vm698, %v7297, 0
          %v7368 = vsel %vm698, %v7298, 0
          %v7371 = vsel %vm698, %v7299, 0
          %v7374 = vsel %vm698, %v7300, 0
          %v7377 = vsel %vm698, %v7301, 0
          %v7380 = vsel %vm698, %v7302, 0
          %v7383 = vsel %vm698, %v7303, 0
          %v7386 = vsel %vm698, %v7304, 0
          %v7389 = vsel %vm698, %v7305, 0
          %v7392 = vsel %vm698, %v7306, 0
          %v7395 = vsel %vm698, %v7307, 0
          %v7398 = vsel %vm698, %v7308, 0
          %v7401 = vsel %vm698, %v7309, 0
          %v7404 = vsel %vm698, %v7310, 0
          %v7407 = vsel %vm698, %v7311, 0
          %v7410 = vsel %vm698, %v7312, 0
          %v7413 = vsel %vm698, %v7313, 0
          %v7416 = vsel %vm698, %v7314, 0
          %v7419 = vsel %vm698, %v7315, 0
          %7421 = vmatpush.msra.mxu0 0.0
          %7422 = vmatpush.msra.mxu0 0.0
          %7423 = vmatpush.msra.mxu0 0.0
          %7424 = vmatpush.msra.mxu0 0.0
          %7425 = vmatpush.msra.mxu0 0.0
          %7426 = vmatpush.msra.mxu0 0.0
          %7427 = vmatpush.msra.mxu0 0.0
          %7428 = vmatpush.msra.mxu0 0.0
          %7429 = vmatpush.msra.mxu0 %v7324
          %7430 = vmatpush.msra.mxu0 %v7323
          %7431 = vmatpush.msra.mxu0 %v7322
          %7432 = vmatpush.msra.mxu0 %v7321
          %7433 = vmatpush.msra.mxu0 %v7320
          %7434 = vmatpush.msra.mxu0 %v7319
          %7435 = vmatpush.msra.mxu0 %v7318
          %7436 = vmatpush.msra.mxu0 %v7317
          %7437 = vmatmul.f32.gmra.mxu0 %v7326
          %v7438 = vpop.f32.mrf.mxu0
          %v7439 = vadd.f32 0.0, %v7438
          %7440 = vmatmul.f32.gmra.mxu0 %v7329
          %v7441 = vpop.f32.mrf.mxu0
          %v7442 = vadd.f32 0.0, %v7441
          %7443 = vmatmul.f32.gmra.mxu0 %v7332
          %v7444 = vpop.f32.mrf.mxu0
          %v7445 = vadd.f32 0.0, %v7444
          %7446 = vmatmul.f32.gmra.mxu0 %v7335
          %v7447 = vpop.f32.mrf.mxu0
          %v7448 = vadd.f32 0.0, %v7447
          %7449 = vmatmul.f32.gmra.mxu0 %v7338
          %v7450 = vpop.f32.mrf.mxu0
          %v7451 = vadd.f32 0.0, %v7450
          %7452 = vmatmul.f32.gmra.mxu0 %v7341
          %v7453 = vpop.f32.mrf.mxu0
          %v7454 = vadd.f32 0.0, %v7453
          %7455 = vmatmul.f32.gmra.mxu0 %v7344
          %v7456 = vpop.f32.mrf.mxu0
          %v7457 = vadd.f32 0.0, %v7456
          %7458 = vmatmul.f32.gmra.mxu0 %v7347
          %v7459 = vpop.f32.mrf.mxu0
          %v7460 = vadd.f32 0.0, %v7459
          %7461 = vmatmul.f32.gmra.mxu0 %v7350
          %v7462 = vpop.f32.mrf.mxu0
          %v7463 = vadd.f32 0.0, %v7462
          %7464 = vmatmul.f32.gmra.mxu0 %v7353
          %v7465 = vpop.f32.mrf.mxu0
          %v7466 = vadd.f32 0.0, %v7465
          %7467 = vmatmul.f32.gmra.mxu0 %v7356
          %v7468 = vpop.f32.mrf.mxu0
          %v7469 = vadd.f32 0.0, %v7468
          %7470 = vmatmul.f32.gmra.mxu0 %v7359
          %v7471 = vpop.f32.mrf.mxu0
          %v7472 = vadd.f32 0.0, %v7471
          %7473 = vmatmul.f32.gmra.mxu0 %v7362
          %v7474 = vpop.f32.mrf.mxu0
          %v7475 = vadd.f32 0.0, %v7474
          %7476 = vmatmul.f32.gmra.mxu0 %v7365
          %v7477 = vpop.f32.mrf.mxu0
          %v7478 = vadd.f32 0.0, %v7477
          %7479 = vmatmul.f32.gmra.mxu0 %v7368
          %v7480 = vpop.f32.mrf.mxu0
          %v7481 = vadd.f32 0.0, %v7480
          %7482 = vmatmul.f32.gmra.mxu0 %v7371
          %v7483 = vpop.f32.mrf.mxu0
          %v7484 = vadd.f32 0.0, %v7483
          %7485 = vmatmul.f32.gmra.mxu0 %v7374
          %v7486 = vpop.f32.mrf.mxu0
          %v7487 = vadd.f32 0.0, %v7486
          %7488 = vmatmul.f32.gmra.mxu0 %v7377
          %v7489 = vpop.f32.mrf.mxu0
          %v7490 = vadd.f32 0.0, %v7489
          %7491 = vmatmul.f32.gmra.mxu0 %v7380
          %v7492 = vpop.f32.mrf.mxu0
          %v7493 = vadd.f32 0.0, %v7492
          %7494 = vmatmul.f32.gmra.mxu0 %v7383
          %v7495 = vpop.f32.mrf.mxu0
          %v7496 = vadd.f32 0.0, %v7495
          %7497 = vmatmul.f32.gmra.mxu0 %v7386
          %v7498 = vpop.f32.mrf.mxu0
          %v7499 = vadd.f32 0.0, %v7498
          %7500 = vmatmul.f32.gmra.mxu0 %v7389
          %v7501 = vpop.f32.mrf.mxu0
          %v7502 = vadd.f32 0.0, %v7501
          %7503 = vmatmul.f32.gmra.mxu0 %v7392
          %v7504 = vpop.f32.mrf.mxu0
          %v7505 = vadd.f32 0.0, %v7504
          %7506 = vmatmul.f32.gmra.mxu0 %v7395
          %v7507 = vpop.f32.mrf.mxu0
          %v7508 = vadd.f32 0.0, %v7507
          %7509 = vmatmul.f32.gmra.mxu0 %v7398
          %v7510 = vpop.f32.mrf.mxu0
          %v7511 = vadd.f32 0.0, %v7510
          %7512 = vmatmul.f32.gmra.mxu0 %v7401
          %v7513 = vpop.f32.mrf.mxu0
          %v7514 = vadd.f32 0.0, %v7513
          %7515 = vmatmul.f32.gmra.mxu0 %v7404
          %v7516 = vpop.f32.mrf.mxu0
          %v7517 = vadd.f32 0.0, %v7516
          %7518 = vmatmul.f32.gmra.mxu0 %v7407
          %v7519 = vpop.f32.mrf.mxu0
          %v7520 = vadd.f32 0.0, %v7519
          %7521 = vmatmul.f32.gmra.mxu0 %v7410
          %v7522 = vpop.f32.mrf.mxu0
          %v7523 = vadd.f32 0.0, %v7522
          %7524 = vmatmul.f32.gmra.mxu0 %v7413
          %v7525 = vpop.f32.mrf.mxu0
          %v7526 = vadd.f32 0.0, %v7525
          %7527 = vmatmul.f32.gmra.mxu0 %v7416
          %v7528 = vpop.f32.mrf.mxu0
          %v7529 = vadd.f32 0.0, %v7528
          %7530 = vmatmul.f32.gmra.mxu0 %v7419
          %v7531 = vpop.f32.mrf.mxu0
          %v7532 = vadd.f32 0.0, %v7531
          %7533 = vdwg.mxu0
          %v7534 = vadd.f32 %v7249, %v7439
          %v7535 = vadd.f32 %v7250, %v7442
          %v7536 = vadd.f32 %v7251, %v7445
          %v7537 = vadd.f32 %v7252, %v7448
          %v7538 = vadd.f32 %v7253, %v7451
          %v7539 = vadd.f32 %v7254, %v7454
          %v7540 = vadd.f32 %v7255, %v7457
          %v7541 = vadd.f32 %v7256, %v7460
          %v7542 = vadd.f32 %v7257, %v7463
          %v7543 = vadd.f32 %v7258, %v7466
          %v7544 = vadd.f32 %v7259, %v7469
          %v7545 = vadd.f32 %v7260, %v7472
          %v7546 = vadd.f32 %v7261, %v7475
          %v7547 = vadd.f32 %v7262, %v7478
          %v7548 = vadd.f32 %v7263, %v7481
          %v7549 = vadd.f32 %v7264, %v7484
          %v7550 = vadd.f32 %v7265, %v7487
          %v7551 = vadd.f32 %v7266, %v7490
          %v7552 = vadd.f32 %v7267, %v7493
          %v7553 = vadd.f32 %v7268, %v7496
          %v7554 = vadd.f32 %v7269, %v7499
          %v7555 = vadd.f32 %v7270, %v7502
          %v7556 = vadd.f32 %v7271, %v7505
          %v7557 = vadd.f32 %v7272, %v7508
          %v7558 = vadd.f32 %v7273, %v7511
          %v7559 = vadd.f32 %v7274, %v7514
          %v7560 = vadd.f32 %v7275, %v7517
          %v7561 = vadd.f32 %v7276, %v7520
          %v7562 = vadd.f32 %v7277, %v7523
          %v7563 = vadd.f32 %v7278, %v7526
          %v7564 = vadd.f32 %v7279, %v7529
          %v7565 = vadd.f32 %v7280, %v7532
          %v7566 = vld [vmem:[%s7283 + $0x1] sm:$0xff]
          %v7567 = vld [vmem:[%s7283 + $0x9] sm:$0xff]
          %v7568 = vld [vmem:[%s7283 + $0x11] sm:$0xff]
          %v7569 = vld [vmem:[%s7283 + $0x19] sm:$0xff]
          %v7570 = vld [vmem:[%s7283 + $0x29] sm:$0xff]
          %v7571 = vld [vmem:[%s7283 + $0x31] sm:$0xff]
          %v7572 = vld [vmem:[%s7283 + $0x39] sm:$0xff]
          %v7573 = vld [vmem:[%s7283 + $0x41] sm:$0xff]
          %v7574 = vld [vmem:[%s7283 + $0x51] sm:$0xff]
          %v7575 = vld [vmem:[%s7283 + $0x59] sm:$0xff]
          %v7576 = vld [vmem:[%s7283 + $0x61] sm:$0xff]
          %v7577 = vld [vmem:[%s7283 + $0x69] sm:$0xff]
          %v7578 = vld [vmem:[%s7283 + $0x79] sm:$0xff]
          %v7579 = vld [vmem:[%s7283 + $0x81] sm:$0xff]
          %v7580 = vld [vmem:[%s7283 + $0x89] sm:$0xff]
          %v7581 = vld [vmem:[%s7283 + $0x91] sm:$0xff]
          %v7582 = vld [vmem:[%s7283 + $0xa1] sm:$0xff]
          %v7583 = vld [vmem:[%s7283 + $0xa9] sm:$0xff]
          %v7584 = vld [vmem:[%s7283 + $0xb1] sm:$0xff]
          %v7585 = vld [vmem:[%s7283 + $0xb9] sm:$0xff]
          %v7586 = vld [vmem:[%s7283 + $0xc9] sm:$0xff]
          %v7587 = vld [vmem:[%s7283 + $0xd1] sm:$0xff]
          %v7588 = vld [vmem:[%s7283 + $0xd9] sm:$0xff]
          %v7589 = vld [vmem:[%s7283 + $0xe1] sm:$0xff]
          %v7590 = vld [vmem:[%s7283 + $0xf1] sm:$0xff]
          %v7591 = vld [vmem:[%s7283 + $0xf9] sm:$0xff]
          %v7592 = vld [vmem:[%s7283 + $0x101] sm:$0xff]
          %v7593 = vld [vmem:[%s7283 + $0x109] sm:$0xff]
          %v7594 = vld [vmem:[%s7283 + $0x119] sm:$0xff]
          %v7595 = vld [vmem:[%s7283 + $0x121] sm:$0xff]
          %v7596 = vld [vmem:[%s7283 + $0x129] sm:$0xff]
          %v7597 = vld [vmem:[%s7283 + $0x131] sm:$0xff]
          %s7598 = scalar_lea.vmem [#allocation14], 256
          %v7599 = vld [vmem:[%s7598] sm:$0xff]
          %v7600 = vld [vmem:[%s7598 + $0x8] sm:$0xff]
          %v7601 = vld [vmem:[%s7598 + $0x10] sm:$0xff]
          %v7602 = vld [vmem:[%s7598 + $0x18] sm:$0xff]
          %v7603 = vld [vmem:[%s7598 + $0x20] sm:$0xff]
          %v7604 = vld [vmem:[%s7598 + $0x28] sm:$0xff]
          %v7605 = vld [vmem:[%s7598 + $0x30] sm:$0xff]
          %v7606 = vld [vmem:[%s7598 + $0x38] sm:$0xff]
          %v7608 = vsel %vm698, %v7566, 0
          %v7611 = vsel %vm698, %v7567, 0
          %v7614 = vsel %vm698, %v7568, 0
          %v7617 = vsel %vm698, %v7569, 0
          %v7620 = vsel %vm698, %v7570, 0
          %v7623 = vsel %vm698, %v7571, 0
          %v7626 = vsel %vm698, %v7572, 0
          %v7629 = vsel %vm698, %v7573, 0
          %v7632 = vsel %vm698, %v7574, 0
          %v7635 = vsel %vm698, %v7575, 0
          %v7638 = vsel %vm698, %v7576, 0
          %v7641 = vsel %vm698, %v7577, 0
          %v7644 = vsel %vm698, %v7578, 0
          %v7647 = vsel %vm698, %v7579, 0
          %v7650 = vsel %vm698, %v7580, 0
          %v7653 = vsel %vm698, %v7581, 0
          %v7656 = vsel %vm698, %v7582, 0
          %v7659 = vsel %vm698, %v7583, 0
          %v7662 = vsel %vm698, %v7584, 0
          %v7665 = vsel %vm698, %v7585, 0
          %v7668 = vsel %vm698, %v7586, 0
          %v7671 = vsel %vm698, %v7587, 0
          %v7674 = vsel %vm698, %v7588, 0
          %v7677 = vsel %vm698, %v7589, 0
          %v7680 = vsel %vm698, %v7590, 0
          %v7683 = vsel %vm698, %v7591, 0
          %v7686 = vsel %vm698, %v7592, 0
          %v7689 = vsel %vm698, %v7593, 0
          %v7692 = vsel %vm698, %v7594, 0
          %v7695 = vsel %vm698, %v7595, 0
          %v7698 = vsel %vm698, %v7596, 0
          %v7701 = vsel %vm698, %v7597, 0
          %7703 = vmatpush.msra.mxu0 0.0
          %7704 = vmatpush.msra.mxu0 0.0
          %7705 = vmatpush.msra.mxu0 0.0
          %7706 = vmatpush.msra.mxu0 0.0
          %7707 = vmatpush.msra.mxu0 0.0
          %7708 = vmatpush.msra.mxu0 0.0
          %7709 = vmatpush.msra.mxu0 0.0
          %7710 = vmatpush.msra.mxu0 0.0
          %7711 = vmatpush.msra.mxu0 %v7606
          %7712 = vmatpush.msra.mxu0 %v7605
          %7713 = vmatpush.msra.mxu0 %v7604
          %7714 = vmatpush.msra.mxu0 %v7603
          %7715 = vmatpush.msra.mxu0 %v7602
          %7716 = vmatpush.msra.mxu0 %v7601
          %7717 = vmatpush.msra.mxu0 %v7600
          %7718 = vmatpush.msra.mxu0 %v7599
          %7719 = vmatmul.f32.gmra.mxu0 %v7608
          %v7720 = vpop.f32.mrf.mxu0
          %v7721 = vadd.f32 0.0, %v7720
          %7722 = vmatmul.f32.gmra.mxu0 %v7611
          %v7723 = vpop.f32.mrf.mxu0
          %v7724 = vadd.f32 0.0, %v7723
          %7725 = vmatmul.f32.gmra.mxu0 %v7614
          %v7726 = vpop.f32.mrf.mxu0
          %v7727 = vadd.f32 0.0, %v7726
          %7728 = vmatmul.f32.gmra.mxu0 %v7617
          %v7729 = vpop.f32.mrf.mxu0
          %v7730 = vadd.f32 0.0, %v7729
          %7731 = vmatmul.f32.gmra.mxu0 %v7620
          %v7732 = vpop.f32.mrf.mxu0
          %v7733 = vadd.f32 0.0, %v7732
          %7734 = vmatmul.f32.gmra.mxu0 %v7623
          %v7735 = vpop.f32.mrf.mxu0
          %v7736 = vadd.f32 0.0, %v7735
          %7737 = vmatmul.f32.gmra.mxu0 %v7626
          %v7738 = vpop.f32.mrf.mxu0
          %v7739 = vadd.f32 0.0, %v7738
          %7740 = vmatmul.f32.gmra.mxu0 %v7629
          %v7741 = vpop.f32.mrf.mxu0
          %v7742 = vadd.f32 0.0, %v7741
          %7743 = vmatmul.f32.gmra.mxu0 %v7632
          %v7744 = vpop.f32.mrf.mxu0
          %v7745 = vadd.f32 0.0, %v7744
          %7746 = vmatmul.f32.gmra.mxu0 %v7635
          %v7747 = vpop.f32.mrf.mxu0
          %v7748 = vadd.f32 0.0, %v7747
          %7749 = vmatmul.f32.gmra.mxu0 %v7638
          %v7750 = vpop.f32.mrf.mxu0
          %v7751 = vadd.f32 0.0, %v7750
          %7752 = vmatmul.f32.gmra.mxu0 %v7641
          %v7753 = vpop.f32.mrf.mxu0
          %v7754 = vadd.f32 0.0, %v7753
          %7755 = vmatmul.f32.gmra.mxu0 %v7644
          %v7756 = vpop.f32.mrf.mxu0
          %v7757 = vadd.f32 0.0, %v7756
          %7758 = vmatmul.f32.gmra.mxu0 %v7647
          %v7759 = vpop.f32.mrf.mxu0
          %v7760 = vadd.f32 0.0, %v7759
          %7761 = vmatmul.f32.gmra.mxu0 %v7650
          %v7762 = vpop.f32.mrf.mxu0
          %v7763 = vadd.f32 0.0, %v7762
          %7764 = vmatmul.f32.gmra.mxu0 %v7653
          %v7765 = vpop.f32.mrf.mxu0
          %v7766 = vadd.f32 0.0, %v7765
          %7767 = vmatmul.f32.gmra.mxu0 %v7656
          %v7768 = vpop.f32.mrf.mxu0
          %v7769 = vadd.f32 0.0, %v7768
          %7770 = vmatmul.f32.gmra.mxu0 %v7659
          %v7771 = vpop.f32.mrf.mxu0
          %v7772 = vadd.f32 0.0, %v7771
          %7773 = vmatmul.f32.gmra.mxu0 %v7662
          %v7774 = vpop.f32.mrf.mxu0
          %v7775 = vadd.f32 0.0, %v7774
          %7776 = vmatmul.f32.gmra.mxu0 %v7665
          %v7777 = vpop.f32.mrf.mxu0
          %v7778 = vadd.f32 0.0, %v7777
          %7779 = vmatmul.f32.gmra.mxu0 %v7668
          %v7780 = vpop.f32.mrf.mxu0
          %v7781 = vadd.f32 0.0, %v7780
          %7782 = vmatmul.f32.gmra.mxu0 %v7671
          %v7783 = vpop.f32.mrf.mxu0
          %v7784 = vadd.f32 0.0, %v7783
          %7785 = vmatmul.f32.gmra.mxu0 %v7674
          %v7786 = vpop.f32.mrf.mxu0
          %v7787 = vadd.f32 0.0, %v7786
          %7788 = vmatmul.f32.gmra.mxu0 %v7677
          %v7789 = vpop.f32.mrf.mxu0
          %v7790 = vadd.f32 0.0, %v7789
          %7791 = vmatmul.f32.gmra.mxu0 %v7680
          %v7792 = vpop.f32.mrf.mxu0
          %v7793 = vadd.f32 0.0, %v7792
          %7794 = vmatmul.f32.gmra.mxu0 %v7683
          %v7795 = vpop.f32.mrf.mxu0
          %v7796 = vadd.f32 0.0, %v7795
          %7797 = vmatmul.f32.gmra.mxu0 %v7686
          %v7798 = vpop.f32.mrf.mxu0
          %v7799 = vadd.f32 0.0, %v7798
          %7800 = vmatmul.f32.gmra.mxu0 %v7689
          %v7801 = vpop.f32.mrf.mxu0
          %v7802 = vadd.f32 0.0, %v7801
          %7803 = vmatmul.f32.gmra.mxu0 %v7692
          %v7804 = vpop.f32.mrf.mxu0
          %v7805 = vadd.f32 0.0, %v7804
          %7806 = vmatmul.f32.gmra.mxu0 %v7695
          %v7807 = vpop.f32.mrf.mxu0
          %v7808 = vadd.f32 0.0, %v7807
          %7809 = vmatmul.f32.gmra.mxu0 %v7698
          %v7810 = vpop.f32.mrf.mxu0
          %v7811 = vadd.f32 0.0, %v7810
          %7812 = vmatmul.f32.gmra.mxu0 %v7701
          %v7813 = vpop.f32.mrf.mxu0
          %v7814 = vadd.f32 0.0, %v7813
          %7815 = vdwg.mxu0
          %v7816 = vadd.f32 %v7534, %v7721
          %v7817 = vadd.f32 %v7535, %v7724
          %v7818 = vadd.f32 %v7536, %v7727
          %v7819 = vadd.f32 %v7537, %v7730
          %v7820 = vadd.f32 %v7538, %v7733
          %v7821 = vadd.f32 %v7539, %v7736
          %v7822 = vadd.f32 %v7540, %v7739
          %v7823 = vadd.f32 %v7541, %v7742
          %v7824 = vadd.f32 %v7542, %v7745
          %v7825 = vadd.f32 %v7543, %v7748
          %v7826 = vadd.f32 %v7544, %v7751
          %v7827 = vadd.f32 %v7545, %v7754
          %v7828 = vadd.f32 %v7546, %v7757
          %v7829 = vadd.f32 %v7547, %v7760
          %v7830 = vadd.f32 %v7548, %v7763
          %v7831 = vadd.f32 %v7549, %v7766
          %v7832 = vadd.f32 %v7550, %v7769
          %v7833 = vadd.f32 %v7551, %v7772
          %v7834 = vadd.f32 %v7552, %v7775
          %v7835 = vadd.f32 %v7553, %v7778
          %v7836 = vadd.f32 %v7554, %v7781
          %v7837 = vadd.f32 %v7555, %v7784
          %v7838 = vadd.f32 %v7556, %v7787
          %v7839 = vadd.f32 %v7557, %v7790
          %v7840 = vadd.f32 %v7558, %v7793
          %v7841 = vadd.f32 %v7559, %v7796
          %v7842 = vadd.f32 %v7560, %v7799
          %v7843 = vadd.f32 %v7561, %v7802
          %v7844 = vadd.f32 %v7562, %v7805
          %v7845 = vadd.f32 %v7563, %v7808
          %v7846 = vadd.f32 %v7564, %v7811
          %v7847 = vadd.f32 %v7565, %v7814
          %v7848 = vld [vmem:[%s7283 + $0x2] sm:$0xff]
          %v7849 = vld [vmem:[%s7283 + $0xa] sm:$0xff]
          %v7850 = vld [vmem:[%s7283 + $0x12] sm:$0xff]
          %v7851 = vld [vmem:[%s7283 + $0x1a] sm:$0xff]
          %v7852 = vld [vmem:[%s7283 + $0x2a] sm:$0xff]
          %v7853 = vld [vmem:[%s7283 + $0x32] sm:$0xff]
          %v7854 = vld [vmem:[%s7283 + $0x3a] sm:$0xff]
          %v7855 = vld [vmem:[%s7283 + $0x42] sm:$0xff]
          %v7856 = vld [vmem:[%s7283 + $0x52] sm:$0xff]
          %v7857 = vld [vmem:[%s7283 + $0x5a] sm:$0xff]
          %v7858 = vld [vmem:[%s7283 + $0x62] sm:$0xff]
          %v7859 = vld [vmem:[%s7283 + $0x6a] sm:$0xff]
          %v7860 = vld [vmem:[%s7283 + $0x7a] sm:$0xff]
          %v7861 = vld [vmem:[%s7283 + $0x82] sm:$0xff]
          %v7862 = vld [vmem:[%s7283 + $0x8a] sm:$0xff]
          %v7863 = vld [vmem:[%s7283 + $0x92] sm:$0xff]
          %v7864 = vld [vmem:[%s7283 + $0xa2] sm:$0xff]
          %v7865 = vld [vmem:[%s7283 + $0xaa] sm:$0xff]
          %v7866 = vld [vmem:[%s7283 + $0xb2] sm:$0xff]
          %v7867 = vld [vmem:[%s7283 + $0xba] sm:$0xff]
          %v7868 = vld [vmem:[%s7283 + $0xca] sm:$0xff]
          %v7869 = vld [vmem:[%s7283 + $0xd2] sm:$0xff]
          %v7870 = vld [vmem:[%s7283 + $0xda] sm:$0xff]
          %v7871 = vld [vmem:[%s7283 + $0xe2] sm:$0xff]
          %v7872 = vld [vmem:[%s7283 + $0xf2] sm:$0xff]
          %v7873 = vld [vmem:[%s7283 + $0xfa] sm:$0xff]
          %v7874 = vld [vmem:[%s7283 + $0x102] sm:$0xff]
          %v7875 = vld [vmem:[%s7283 + $0x10a] sm:$0xff]
          %v7876 = vld [vmem:[%s7283 + $0x11a] sm:$0xff]
          %v7877 = vld [vmem:[%s7283 + $0x122] sm:$0xff]
          %v7878 = vld [vmem:[%s7283 + $0x12a] sm:$0xff]
          %v7879 = vld [vmem:[%s7283 + $0x132] sm:$0xff]
          %s7880 = scalar_lea.vmem [#allocation14], 320
          %v7881 = vld [vmem:[%s7880] sm:$0xff]
          %v7882 = vld [vmem:[%s7880 + $0x8] sm:$0xff]
          %v7883 = vld [vmem:[%s7880 + $0x10] sm:$0xff]
          %v7884 = vld [vmem:[%s7880 + $0x18] sm:$0xff]
          %v7885 = vld [vmem:[%s7880 + $0x20] sm:$0xff]
          %v7886 = vld [vmem:[%s7880 + $0x28] sm:$0xff]
          %v7887 = vld [vmem:[%s7880 + $0x30] sm:$0xff]
          %v7888 = vld [vmem:[%s7880 + $0x38] sm:$0xff]
          %v7890 = vsel %vm698, %v7848, 0
          %v7893 = vsel %vm698, %v7849, 0
          %v7896 = vsel %vm698, %v7850, 0
          %v7899 = vsel %vm698, %v7851, 0
          %v7902 = vsel %vm698, %v7852, 0
          %v7905 = vsel %vm698, %v7853, 0
          %v7908 = vsel %vm698, %v7854, 0
          %v7911 = vsel %vm698, %v7855, 0
          %v7914 = vsel %vm698, %v7856, 0
          %v7917 = vsel %vm698, %v7857, 0
          %v7920 = vsel %vm698, %v7858, 0
          %v7923 = vsel %vm698, %v7859, 0
          %v7926 = vsel %vm698, %v7860, 0
          %v7929 = vsel %vm698, %v7861, 0
          %v7932 = vsel %vm698, %v7862, 0
          %v7935 = vsel %vm698, %v7863, 0
          %v7938 = vsel %vm698, %v7864, 0
          %v7941 = vsel %vm698, %v7865, 0
          %v7944 = vsel %vm698, %v7866, 0
          %v7947 = vsel %vm698, %v7867, 0
          %v7950 = vsel %vm698, %v7868, 0
          %v7953 = vsel %vm698, %v7869, 0
          %v7956 = vsel %vm698, %v7870, 0
          %v7959 = vsel %vm698, %v7871, 0
          %v7962 = vsel %vm698, %v7872, 0
          %v7965 = vsel %vm698, %v7873, 0
          %v7968 = vsel %vm698, %v7874, 0
          %v7971 = vsel %vm698, %v7875, 0
          %v7974 = vsel %vm698, %v7876, 0
          %v7977 = vsel %vm698, %v7877, 0
          %v7980 = vsel %vm698, %v7878, 0
          %v7983 = vsel %vm698, %v7879, 0
          %7985 = vmatpush.msra.mxu0 0.0
          %7986 = vmatpush.msra.mxu0 0.0
          %7987 = vmatpush.msra.mxu0 0.0
          %7988 = vmatpush.msra.mxu0 0.0
          %7989 = vmatpush.msra.mxu0 0.0
          %7990 = vmatpush.msra.mxu0 0.0
          %7991 = vmatpush.msra.mxu0 0.0
          %7992 = vmatpush.msra.mxu0 0.0
          %7993 = vmatpush.msra.mxu0 %v7888
          %7994 = vmatpush.msra.mxu0 %v7887
          %7995 = vmatpush.msra.mxu0 %v7886
          %7996 = vmatpush.msra.mxu0 %v7885
          %7997 = vmatpush.msra.mxu0 %v7884
          %7998 = vmatpush.msra.mxu0 %v7883
          %7999 = vmatpush.msra.mxu0 %v7882
          %8000 = vmatpush.msra.mxu0 %v7881
          %8001 = vmatmul.f32.gmra.mxu0 %v7890
          %v8002 = vpop.f32.mrf.mxu0
          %v8003 = vadd.f32 0.0, %v8002
          %8004 = vmatmul.f32.gmra.mxu0 %v7893
          %v8005 = vpop.f32.mrf.mxu0
          %v8006 = vadd.f32 0.0, %v8005
          %8007 = vmatmul.f32.gmra.mxu0 %v7896
          %v8008 = vpop.f32.mrf.mxu0
          %v8009 = vadd.f32 0.0, %v8008
          %8010 = vmatmul.f32.gmra.mxu0 %v7899
          %v8011 = vpop.f32.mrf.mxu0
          %v8012 = vadd.f32 0.0, %v8011
          %8013 = vmatmul.f32.gmra.mxu0 %v7902
          %v8014 = vpop.f32.mrf.mxu0
          %v8015 = vadd.f32 0.0, %v8014
          %8016 = vmatmul.f32.gmra.mxu0 %v7905
          %v8017 = vpop.f32.mrf.mxu0
          %v8018 = vadd.f32 0.0, %v8017
          %8019 = vmatmul.f32.gmra.mxu0 %v7908
          %v8020 = vpop.f32.mrf.mxu0
          %v8021 = vadd.f32 0.0, %v8020
          %8022 = vmatmul.f32.gmra.mxu0 %v7911
          %v8023 = vpop.f32.mrf.mxu0
          %v8024 = vadd.f32 0.0, %v8023
          %8025 = vmatmul.f32.gmra.mxu0 %v7914
          %v8026 = vpop.f32.mrf.mxu0
          %v8027 = vadd.f32 0.0, %v8026
          %8028 = vmatmul.f32.gmra.mxu0 %v7917
          %v8029 = vpop.f32.mrf.mxu0
          %v8030 = vadd.f32 0.0, %v8029
          %8031 = vmatmul.f32.gmra.mxu0 %v7920
          %v8032 = vpop.f32.mrf.mxu0
          %v8033 = vadd.f32 0.0, %v8032
          %8034 = vmatmul.f32.gmra.mxu0 %v7923
          %v8035 = vpop.f32.mrf.mxu0
          %v8036 = vadd.f32 0.0, %v8035
          %8037 = vmatmul.f32.gmra.mxu0 %v7926
          %v8038 = vpop.f32.mrf.mxu0
          %v8039 = vadd.f32 0.0, %v8038
          %8040 = vmatmul.f32.gmra.mxu0 %v7929
          %v8041 = vpop.f32.mrf.mxu0
          %v8042 = vadd.f32 0.0, %v8041
          %8043 = vmatmul.f32.gmra.mxu0 %v7932
          %v8044 = vpop.f32.mrf.mxu0
          %v8045 = vadd.f32 0.0, %v8044
          %8046 = vmatmul.f32.gmra.mxu0 %v7935
          %v8047 = vpop.f32.mrf.mxu0
          %v8048 = vadd.f32 0.0, %v8047
          %8049 = vmatmul.f32.gmra.mxu0 %v7938
          %v8050 = vpop.f32.mrf.mxu0
          %v8051 = vadd.f32 0.0, %v8050
          %8052 = vmatmul.f32.gmra.mxu0 %v7941
          %v8053 = vpop.f32.mrf.mxu0
          %v8054 = vadd.f32 0.0, %v8053
          %8055 = vmatmul.f32.gmra.mxu0 %v7944
          %v8056 = vpop.f32.mrf.mxu0
          %v8057 = vadd.f32 0.0, %v8056
          %8058 = vmatmul.f32.gmra.mxu0 %v7947
          %v8059 = vpop.f32.mrf.mxu0
          %v8060 = vadd.f32 0.0, %v8059
          %8061 = vmatmul.f32.gmra.mxu0 %v7950
          %v8062 = vpop.f32.mrf.mxu0
          %v8063 = vadd.f32 0.0, %v8062
          %8064 = vmatmul.f32.gmra.mxu0 %v7953
          %v8065 = vpop.f32.mrf.mxu0
          %v8066 = vadd.f32 0.0, %v8065
          %8067 = vmatmul.f32.gmra.mxu0 %v7956
          %v8068 = vpop.f32.mrf.mxu0
          %v8069 = vadd.f32 0.0, %v8068
          %8070 = vmatmul.f32.gmra.mxu0 %v7959
          %v8071 = vpop.f32.mrf.mxu0
          %v8072 = vadd.f32 0.0, %v8071
          %8073 = vmatmul.f32.gmra.mxu0 %v7962
          %v8074 = vpop.f32.mrf.mxu0
          %v8075 = vadd.f32 0.0, %v8074
          %8076 = vmatmul.f32.gmra.mxu0 %v7965
          %v8077 = vpop.f32.mrf.mxu0
          %v8078 = vadd.f32 0.0, %v8077
          %8079 = vmatmul.f32.gmra.mxu0 %v7968
          %v8080 = vpop.f32.mrf.mxu0
          %v8081 = vadd.f32 0.0, %v8080
          %8082 = vmatmul.f32.gmra.mxu0 %v7971
          %v8083 = vpop.f32.mrf.mxu0
          %v8084 = vadd.f32 0.0, %v8083
          %8085 = vmatmul.f32.gmra.mxu0 %v7974
          %v8086 = vpop.f32.mrf.mxu0
          %v8087 = vadd.f32 0.0, %v8086
          %8088 = vmatmul.f32.gmra.mxu0 %v7977
          %v8089 = vpop.f32.mrf.mxu0
          %v8090 = vadd.f32 0.0, %v8089
          %8091 = vmatmul.f32.gmra.mxu0 %v7980
          %v8092 = vpop.f32.mrf.mxu0
          %v8093 = vadd.f32 0.0, %v8092
          %8094 = vmatmul.f32.gmra.mxu0 %v7983
          %v8095 = vpop.f32.mrf.mxu0
          %v8096 = vadd.f32 0.0, %v8095
          %8097 = vdwg.mxu0
          %v8098 = vadd.f32 %v7816, %v8003
          %v8099 = vadd.f32 %v7817, %v8006
          %v8100 = vadd.f32 %v7818, %v8009
          %v8101 = vadd.f32 %v7819, %v8012
          %v8102 = vadd.f32 %v7820, %v8015
          %v8103 = vadd.f32 %v7821, %v8018
          %v8104 = vadd.f32 %v7822, %v8021
          %v8105 = vadd.f32 %v7823, %v8024
          %v8106 = vadd.f32 %v7824, %v8027
          %v8107 = vadd.f32 %v7825, %v8030
          %v8108 = vadd.f32 %v7826, %v8033
          %v8109 = vadd.f32 %v7827, %v8036
          %v8110 = vadd.f32 %v7828, %v8039
          %v8111 = vadd.f32 %v7829, %v8042
          %v8112 = vadd.f32 %v7830, %v8045
          %v8113 = vadd.f32 %v7831, %v8048
          %v8114 = vadd.f32 %v7832, %v8051
          %v8115 = vadd.f32 %v7833, %v8054
          %v8116 = vadd.f32 %v7834, %v8057
          %v8117 = vadd.f32 %v7835, %v8060
          %v8118 = vadd.f32 %v7836, %v8063
          %v8119 = vadd.f32 %v7837, %v8066
          %v8120 = vadd.f32 %v7838, %v8069
          %v8121 = vadd.f32 %v7839, %v8072
          %v8122 = vadd.f32 %v7840, %v8075
          %v8123 = vadd.f32 %v7841, %v8078
          %v8124 = vadd.f32 %v7842, %v8081
          %v8125 = vadd.f32 %v7843, %v8084
          %v8126 = vadd.f32 %v7844, %v8087
          %v8127 = vadd.f32 %v7845, %v8090
          %v8128 = vadd.f32 %v7846, %v8093
          %v8129 = vadd.f32 %v7847, %v8096
          %s8130 = sadd.s32 %s6497, 2
          %s8131 = smul.u32 %s8130, 40
          %s8132 = scalar_lea.vmem [#allocation6], %s8131
          %v8133 = vld [vmem:[%s8132] sm:$0xff]
          %v8134 = vld [vmem:[%s8132 + $0x8] sm:$0xff]
          %v8135 = vld [vmem:[%s8132 + $0x10] sm:$0xff]
          %v8136 = vld [vmem:[%s8132 + $0x18] sm:$0xff]
          %v8137 = vld [vmem:[%s8132 + $0x28] sm:$0xff]
          %v8138 = vld [vmem:[%s8132 + $0x30] sm:$0xff]
          %v8139 = vld [vmem:[%s8132 + $0x38] sm:$0xff]
          %v8140 = vld [vmem:[%s8132 + $0x40] sm:$0xff]
          %v8141 = vld [vmem:[%s8132 + $0x50] sm:$0xff]
          %v8142 = vld [vmem:[%s8132 + $0x58] sm:$0xff]
          %v8143 = vld [vmem:[%s8132 + $0x60] sm:$0xff]
          %v8144 = vld [vmem:[%s8132 + $0x68] sm:$0xff]
          %v8145 = vld [vmem:[%s8132 + $0x78] sm:$0xff]
          %v8146 = vld [vmem:[%s8132 + $0x80] sm:$0xff]
          %v8147 = vld [vmem:[%s8132 + $0x88] sm:$0xff]
          %v8148 = vld [vmem:[%s8132 + $0x90] sm:$0xff]
          %v8149 = vld [vmem:[%s8132 + $0xa0] sm:$0xff]
          %v8150 = vld [vmem:[%s8132 + $0xa8] sm:$0xff]
          %v8151 = vld [vmem:[%s8132 + $0xb0] sm:$0xff]
          %v8152 = vld [vmem:[%s8132 + $0xb8] sm:$0xff]
          %v8153 = vld [vmem:[%s8132 + $0xc8] sm:$0xff]
          %v8154 = vld [vmem:[%s8132 + $0xd0] sm:$0xff]
          %v8155 = vld [vmem:[%s8132 + $0xd8] sm:$0xff]
          %v8156 = vld [vmem:[%s8132 + $0xe0] sm:$0xff]
          %v8157 = vld [vmem:[%s8132 + $0xf0] sm:$0xff]
          %v8158 = vld [vmem:[%s8132 + $0xf8] sm:$0xff]
          %v8159 = vld [vmem:[%s8132 + $0x100] sm:$0xff]
          %v8160 = vld [vmem:[%s8132 + $0x108] sm:$0xff]
          %v8161 = vld [vmem:[%s8132 + $0x118] sm:$0xff]
          %v8162 = vld [vmem:[%s8132 + $0x120] sm:$0xff]
          %v8163 = vld [vmem:[%s8132 + $0x128] sm:$0xff]
          %v8164 = vld [vmem:[%s8132 + $0x130] sm:$0xff]
          %s8165 = scalar_lea.vmem [#allocation14], 384
          %v8166 = vld [vmem:[%s8165] sm:$0xff]
          %v8167 = vld [vmem:[%s8165 + $0x8] sm:$0xff]
          %v8168 = vld [vmem:[%s8165 + $0x10] sm:$0xff]
          %v8169 = vld [vmem:[%s8165 + $0x18] sm:$0xff]
          %v8170 = vld [vmem:[%s8165 + $0x20] sm:$0xff]
          %v8171 = vld [vmem:[%s8165 + $0x28] sm:$0xff]
          %v8172 = vld [vmem:[%s8165 + $0x30] sm:$0xff]
          %v8173 = vld [vmem:[%s8165 + $0x38] sm:$0xff]
          %v8175 = vsel %vm698, %v8133, 0
          %v8178 = vsel %vm698, %v8134, 0
          %v8181 = vsel %vm698, %v8135, 0
          %v8184 = vsel %vm698, %v8136, 0
          %v8187 = vsel %vm698, %v8137, 0
          %v8190 = vsel %vm698, %v8138, 0
          %v8193 = vsel %vm698, %v8139, 0
          %v8196 = vsel %vm698, %v8140, 0
          %v8199 = vsel %vm698, %v8141, 0
          %v8202 = vsel %vm698, %v8142, 0
          %v8205 = vsel %vm698, %v8143, 0
          %v8208 = vsel %vm698, %v8144, 0
          %v8211 = vsel %vm698, %v8145, 0
          %v8214 = vsel %vm698, %v8146, 0
          %v8217 = vsel %vm698, %v8147, 0
          %v8220 = vsel %vm698, %v8148, 0
          %v8223 = vsel %vm698, %v8149, 0
          %v8226 = vsel %vm698, %v8150, 0
          %v8229 = vsel %vm698, %v8151, 0
          %v8232 = vsel %vm698, %v8152, 0
          %v8235 = vsel %vm698, %v8153, 0
          %v8238 = vsel %vm698, %v8154, 0
          %v8241 = vsel %vm698, %v8155, 0
          %v8244 = vsel %vm698, %v8156, 0
          %v8247 = vsel %vm698, %v8157, 0
          %v8250 = vsel %vm698, %v8158, 0
          %v8253 = vsel %vm698, %v8159, 0
          %v8256 = vsel %vm698, %v8160, 0
          %v8259 = vsel %vm698, %v8161, 0
          %v8262 = vsel %vm698, %v8162, 0
          %v8265 = vsel %vm698, %v8163, 0
          %v8268 = vsel %vm698, %v8164, 0
          %8270 = vmatpush.msra.mxu0 0.0
          %8271 = vmatpush.msra.mxu0 0.0
          %8272 = vmatpush.msra.mxu0 0.0
          %8273 = vmatpush.msra.mxu0 0.0
          %8274 = vmatpush.msra.mxu0 0.0
          %8275 = vmatpush.msra.mxu0 0.0
          %8276 = vmatpush.msra.mxu0 0.0
          %8277 = vmatpush.msra.mxu0 0.0
          %8278 = vmatpush.msra.mxu0 %v8173
          %8279 = vmatpush.msra.mxu0 %v8172
          %8280 = vmatpush.msra.mxu0 %v8171
          %8281 = vmatpush.msra.mxu0 %v8170
          %8282 = vmatpush.msra.mxu0 %v8169
          %8283 = vmatpush.msra.mxu0 %v8168
          %8284 = vmatpush.msra.mxu0 %v8167
          %8285 = vmatpush.msra.mxu0 %v8166
          %8286 = vmatmul.f32.gmra.mxu0 %v8175
          %v8287 = vpop.f32.mrf.mxu0
          %v8288 = vadd.f32 0.0, %v8287
          %8289 = vmatmul.f32.gmra.mxu0 %v8178
          %v8290 = vpop.f32.mrf.mxu0
          %v8291 = vadd.f32 0.0, %v8290
          %8292 = vmatmul.f32.gmra.mxu0 %v8181
          %v8293 = vpop.f32.mrf.mxu0
          %v8294 = vadd.f32 0.0, %v8293
          %8295 = vmatmul.f32.gmra.mxu0 %v8184
          %v8296 = vpop.f32.mrf.mxu0
          %v8297 = vadd.f32 0.0, %v8296
          %8298 = vmatmul.f32.gmra.mxu0 %v8187
          %v8299 = vpop.f32.mrf.mxu0
          %v8300 = vadd.f32 0.0, %v8299
          %8301 = vmatmul.f32.gmra.mxu0 %v8190
          %v8302 = vpop.f32.mrf.mxu0
          %v8303 = vadd.f32 0.0, %v8302
          %8304 = vmatmul.f32.gmra.mxu0 %v8193
          %v8305 = vpop.f32.mrf.mxu0
          %v8306 = vadd.f32 0.0, %v8305
          %8307 = vmatmul.f32.gmra.mxu0 %v8196
          %v8308 = vpop.f32.mrf.mxu0
          %v8309 = vadd.f32 0.0, %v8308
          %8310 = vmatmul.f32.gmra.mxu0 %v8199
          %v8311 = vpop.f32.mrf.mxu0
          %v8312 = vadd.f32 0.0, %v8311
          %8313 = vmatmul.f32.gmra.mxu0 %v8202
          %v8314 = vpop.f32.mrf.mxu0
          %v8315 = vadd.f32 0.0, %v8314
          %8316 = vmatmul.f32.gmra.mxu0 %v8205
          %v8317 = vpop.f32.mrf.mxu0
          %v8318 = vadd.f32 0.0, %v8317
          %8319 = vmatmul.f32.gmra.mxu0 %v8208
          %v8320 = vpop.f32.mrf.mxu0
          %v8321 = vadd.f32 0.0, %v8320
          %8322 = vmatmul.f32.gmra.mxu0 %v8211
          %v8323 = vpop.f32.mrf.mxu0
          %v8324 = vadd.f32 0.0, %v8323
          %8325 = vmatmul.f32.gmra.mxu0 %v8214
          %v8326 = vpop.f32.mrf.mxu0
          %v8327 = vadd.f32 0.0, %v8326
          %8328 = vmatmul.f32.gmra.mxu0 %v8217
          %v8329 = vpop.f32.mrf.mxu0
          %v8330 = vadd.f32 0.0, %v8329
          %8331 = vmatmul.f32.gmra.mxu0 %v8220
          %v8332 = vpop.f32.mrf.mxu0
          %v8333 = vadd.f32 0.0, %v8332
          %8334 = vmatmul.f32.gmra.mxu0 %v8223
          %v8335 = vpop.f32.mrf.mxu0
          %v8336 = vadd.f32 0.0, %v8335
          %8337 = vmatmul.f32.gmra.mxu0 %v8226
          %v8338 = vpop.f32.mrf.mxu0
          %v8339 = vadd.f32 0.0, %v8338
          %8340 = vmatmul.f32.gmra.mxu0 %v8229
          %v8341 = vpop.f32.mrf.mxu0
          %v8342 = vadd.f32 0.0, %v8341
          %8343 = vmatmul.f32.gmra.mxu0 %v8232
          %v8344 = vpop.f32.mrf.mxu0
          %v8345 = vadd.f32 0.0, %v8344
          %8346 = vmatmul.f32.gmra.mxu0 %v8235
          %v8347 = vpop.f32.mrf.mxu0
          %v8348 = vadd.f32 0.0, %v8347
          %8349 = vmatmul.f32.gmra.mxu0 %v8238
          %v8350 = vpop.f32.mrf.mxu0
          %v8351 = vadd.f32 0.0, %v8350
          %8352 = vmatmul.f32.gmra.mxu0 %v8241
          %v8353 = vpop.f32.mrf.mxu0
          %v8354 = vadd.f32 0.0, %v8353
          %8355 = vmatmul.f32.gmra.mxu0 %v8244
          %v8356 = vpop.f32.mrf.mxu0
          %v8357 = vadd.f32 0.0, %v8356
          %8358 = vmatmul.f32.gmra.mxu0 %v8247
          %v8359 = vpop.f32.mrf.mxu0
          %v8360 = vadd.f32 0.0, %v8359
          %8361 = vmatmul.f32.gmra.mxu0 %v8250
          %v8362 = vpop.f32.mrf.mxu0
          %v8363 = vadd.f32 0.0, %v8362
          %8364 = vmatmul.f32.gmra.mxu0 %v8253
          %v8365 = vpop.f32.mrf.mxu0
          %v8366 = vadd.f32 0.0, %v8365
          %8367 = vmatmul.f32.gmra.mxu0 %v8256
          %v8368 = vpop.f32.mrf.mxu0
          %v8369 = vadd.f32 0.0, %v8368
          %8370 = vmatmul.f32.gmra.mxu0 %v8259
          %v8371 = vpop.f32.mrf.mxu0
          %v8372 = vadd.f32 0.0, %v8371
          %8373 = vmatmul.f32.gmra.mxu0 %v8262
          %v8374 = vpop.f32.mrf.mxu0
          %v8375 = vadd.f32 0.0, %v8374
          %8376 = vmatmul.f32.gmra.mxu0 %v8265
          %v8377 = vpop.f32.mrf.mxu0
          %v8378 = vadd.f32 0.0, %v8377
          %8379 = vmatmul.f32.gmra.mxu0 %v8268
          %v8380 = vpop.f32.mrf.mxu0
          %v8381 = vadd.f32 0.0, %v8380
          %8382 = vdwg.mxu0
          %v8383 = vadd.f32 %v8098, %v8288
          %v8384 = vadd.f32 %v8099, %v8291
          %v8385 = vadd.f32 %v8100, %v8294
          %v8386 = vadd.f32 %v8101, %v8297
          %v8387 = vadd.f32 %v8102, %v8300
          %v8388 = vadd.f32 %v8103, %v8303
          %v8389 = vadd.f32 %v8104, %v8306
          %v8390 = vadd.f32 %v8105, %v8309
          %v8391 = vadd.f32 %v8106, %v8312
          %v8392 = vadd.f32 %v8107, %v8315
          %v8393 = vadd.f32 %v8108, %v8318
          %v8394 = vadd.f32 %v8109, %v8321
          %v8395 = vadd.f32 %v8110, %v8324
          %v8396 = vadd.f32 %v8111, %v8327
          %v8397 = vadd.f32 %v8112, %v8330
          %v8398 = vadd.f32 %v8113, %v8333
          %v8399 = vadd.f32 %v8114, %v8336
          %v8400 = vadd.f32 %v8115, %v8339
          %v8401 = vadd.f32 %v8116, %v8342
          %v8402 = vadd.f32 %v8117, %v8345
          %v8403 = vadd.f32 %v8118, %v8348
          %v8404 = vadd.f32 %v8119, %v8351
          %v8405 = vadd.f32 %v8120, %v8354
          %v8406 = vadd.f32 %v8121, %v8357
          %v8407 = vadd.f32 %v8122, %v8360
          %v8408 = vadd.f32 %v8123, %v8363
          %v8409 = vadd.f32 %v8124, %v8366
          %v8410 = vadd.f32 %v8125, %v8369
          %v8411 = vadd.f32 %v8126, %v8372
          %v8412 = vadd.f32 %v8127, %v8375
          %v8413 = vadd.f32 %v8128, %v8378
          %v8414 = vadd.f32 %v8129, %v8381
          %v8415 = vld [vmem:[%s8132 + $0x1] sm:$0xff]
          %v8416 = vld [vmem:[%s8132 + $0x9] sm:$0xff]
          %v8417 = vld [vmem:[%s8132 + $0x11] sm:$0xff]
          %v8418 = vld [vmem:[%s8132 + $0x19] sm:$0xff]
          %v8419 = vld [vmem:[%s8132 + $0x29] sm:$0xff]
          %v8420 = vld [vmem:[%s8132 + $0x31] sm:$0xff]
          %v8421 = vld [vmem:[%s8132 + $0x39] sm:$0xff]
          %v8422 = vld [vmem:[%s8132 + $0x41] sm:$0xff]
          %v8423 = vld [vmem:[%s8132 + $0x51] sm:$0xff]
          %v8424 = vld [vmem:[%s8132 + $0x59] sm:$0xff]
          %v8425 = vld [vmem:[%s8132 + $0x61] sm:$0xff]
          %v8426 = vld [vmem:[%s8132 + $0x69] sm:$0xff]
          %v8427 = vld [vmem:[%s8132 + $0x79] sm:$0xff]
          %v8428 = vld [vmem:[%s8132 + $0x81] sm:$0xff]
          %v8429 = vld [vmem:[%s8132 + $0x89] sm:$0xff]
          %v8430 = vld [vmem:[%s8132 + $0x91] sm:$0xff]
          %v8431 = vld [vmem:[%s8132 + $0xa1] sm:$0xff]
          %v8432 = vld [vmem:[%s8132 + $0xa9] sm:$0xff]
          %v8433 = vld [vmem:[%s8132 + $0xb1] sm:$0xff]
          %v8434 = vld [vmem:[%s8132 + $0xb9] sm:$0xff]
          %v8435 = vld [vmem:[%s8132 + $0xc9] sm:$0xff]
          %v8436 = vld [vmem:[%s8132 + $0xd1] sm:$0xff]
          %v8437 = vld [vmem:[%s8132 + $0xd9] sm:$0xff]
          %v8438 = vld [vmem:[%s8132 + $0xe1] sm:$0xff]
          %v8439 = vld [vmem:[%s8132 + $0xf1] sm:$0xff]
          %v8440 = vld [vmem:[%s8132 + $0xf9] sm:$0xff]
          %v8441 = vld [vmem:[%s8132 + $0x101] sm:$0xff]
          %v8442 = vld [vmem:[%s8132 + $0x109] sm:$0xff]
          %v8443 = vld [vmem:[%s8132 + $0x119] sm:$0xff]
          %v8444 = vld [vmem:[%s8132 + $0x121] sm:$0xff]
          %v8445 = vld [vmem:[%s8132 + $0x129] sm:$0xff]
          %v8446 = vld [vmem:[%s8132 + $0x131] sm:$0xff]
          %s8447 = scalar_lea.vmem [#allocation14], 448
          %v8448 = vld [vmem:[%s8447] sm:$0xff]
          %v8449 = vld [vmem:[%s8447 + $0x8] sm:$0xff]
          %v8450 = vld [vmem:[%s8447 + $0x10] sm:$0xff]
          %v8451 = vld [vmem:[%s8447 + $0x18] sm:$0xff]
          %v8452 = vld [vmem:[%s8447 + $0x20] sm:$0xff]
          %v8453 = vld [vmem:[%s8447 + $0x28] sm:$0xff]
          %v8454 = vld [vmem:[%s8447 + $0x30] sm:$0xff]
          %v8455 = vld [vmem:[%s8447 + $0x38] sm:$0xff]
          %v8457 = vsel %vm698, %v8415, 0
          %v8460 = vsel %vm698, %v8416, 0
          %v8463 = vsel %vm698, %v8417, 0
          %v8466 = vsel %vm698, %v8418, 0
          %v8469 = vsel %vm698, %v8419, 0
          %v8472 = vsel %vm698, %v8420, 0
          %v8475 = vsel %vm698, %v8421, 0
          %v8478 = vsel %vm698, %v8422, 0
          %v8481 = vsel %vm698, %v8423, 0
          %v8484 = vsel %vm698, %v8424, 0
          %v8487 = vsel %vm698, %v8425, 0
          %v8490 = vsel %vm698, %v8426, 0
          %v8493 = vsel %vm698, %v8427, 0
          %v8496 = vsel %vm698, %v8428, 0
          %v8499 = vsel %vm698, %v8429, 0
          %v8502 = vsel %vm698, %v8430, 0
          %v8505 = vsel %vm698, %v8431, 0
          %v8508 = vsel %vm698, %v8432, 0
          %v8511 = vsel %vm698, %v8433, 0
          %v8514 = vsel %vm698, %v8434, 0
          %v8517 = vsel %vm698, %v8435, 0
          %v8520 = vsel %vm698, %v8436, 0
          %v8523 = vsel %vm698, %v8437, 0
          %v8526 = vsel %vm698, %v8438, 0
          %v8529 = vsel %vm698, %v8439, 0
          %v8532 = vsel %vm698, %v8440, 0
          %v8535 = vsel %vm698, %v8441, 0
          %v8538 = vsel %vm698, %v8442, 0
          %v8541 = vsel %vm698, %v8443, 0
          %v8544 = vsel %vm698, %v8444, 0
          %v8547 = vsel %vm698, %v8445, 0
          %v8550 = vsel %vm698, %v8446, 0
          %8552 = vmatpush.msra.mxu0 0.0
          %8553 = vmatpush.msra.mxu0 0.0
          %8554 = vmatpush.msra.mxu0 0.0
          %8555 = vmatpush.msra.mxu0 0.0
          %8556 = vmatpush.msra.mxu0 0.0
          %8557 = vmatpush.msra.mxu0 0.0
          %8558 = vmatpush.msra.mxu0 0.0
          %8559 = vmatpush.msra.mxu0 0.0
          %8560 = vmatpush.msra.mxu0 %v8455
          %8561 = vmatpush.msra.mxu0 %v8454
          %8562 = vmatpush.msra.mxu0 %v8453
          %8563 = vmatpush.msra.mxu0 %v8452
          %8564 = vmatpush.msra.mxu0 %v8451
          %8565 = vmatpush.msra.mxu0 %v8450
          %8566 = vmatpush.msra.mxu0 %v8449
          %8567 = vmatpush.msra.mxu0 %v8448
          %8568 = vmatmul.f32.gmra.mxu0 %v8457
          %v8569 = vpop.f32.mrf.mxu0
          %v8570 = vadd.f32 0.0, %v8569
          %8571 = vmatmul.f32.gmra.mxu0 %v8460
          %v8572 = vpop.f32.mrf.mxu0
          %v8573 = vadd.f32 0.0, %v8572
          %8574 = vmatmul.f32.gmra.mxu0 %v8463
          %v8575 = vpop.f32.mrf.mxu0
          %v8576 = vadd.f32 0.0, %v8575
          %8577 = vmatmul.f32.gmra.mxu0 %v8466
          %v8578 = vpop.f32.mrf.mxu0
          %v8579 = vadd.f32 0.0, %v8578
          %8580 = vmatmul.f32.gmra.mxu0 %v8469
          %v8581 = vpop.f32.mrf.mxu0
          %v8582 = vadd.f32 0.0, %v8581
          %8583 = vmatmul.f32.gmra.mxu0 %v8472
          %v8584 = vpop.f32.mrf.mxu0
          %v8585 = vadd.f32 0.0, %v8584
          %8586 = vmatmul.f32.gmra.mxu0 %v8475
          %v8587 = vpop.f32.mrf.mxu0
          %v8588 = vadd.f32 0.0, %v8587
          %8589 = vmatmul.f32.gmra.mxu0 %v8478
          %v8590 = vpop.f32.mrf.mxu0
          %v8591 = vadd.f32 0.0, %v8590
          %8592 = vmatmul.f32.gmra.mxu0 %v8481
          %v8593 = vpop.f32.mrf.mxu0
          %v8594 = vadd.f32 0.0, %v8593
          %8595 = vmatmul.f32.gmra.mxu0 %v8484
          %v8596 = vpop.f32.mrf.mxu0
          %v8597 = vadd.f32 0.0, %v8596
          %8598 = vmatmul.f32.gmra.mxu0 %v8487
          %v8599 = vpop.f32.mrf.mxu0
          %v8600 = vadd.f32 0.0, %v8599
          %8601 = vmatmul.f32.gmra.mxu0 %v8490
          %v8602 = vpop.f32.mrf.mxu0
          %v8603 = vadd.f32 0.0, %v8602
          %8604 = vmatmul.f32.gmra.mxu0 %v8493
          %v8605 = vpop.f32.mrf.mxu0
          %v8606 = vadd.f32 0.0, %v8605
          %8607 = vmatmul.f32.gmra.mxu0 %v8496
          %v8608 = vpop.f32.mrf.mxu0
          %v8609 = vadd.f32 0.0, %v8608
          %8610 = vmatmul.f32.gmra.mxu0 %v8499
          %v8611 = vpop.f32.mrf.mxu0
          %v8612 = vadd.f32 0.0, %v8611
          %8613 = vmatmul.f32.gmra.mxu0 %v8502
          %v8614 = vpop.f32.mrf.mxu0
          %v8615 = vadd.f32 0.0, %v8614
          %8616 = vmatmul.f32.gmra.mxu0 %v8505
          %v8617 = vpop.f32.mrf.mxu0
          %v8618 = vadd.f32 0.0, %v8617
          %8619 = vmatmul.f32.gmra.mxu0 %v8508
          %v8620 = vpop.f32.mrf.mxu0
          %v8621 = vadd.f32 0.0, %v8620
          %8622 = vmatmul.f32.gmra.mxu0 %v8511
          %v8623 = vpop.f32.mrf.mxu0
          %v8624 = vadd.f32 0.0, %v8623
          %8625 = vmatmul.f32.gmra.mxu0 %v8514
          %v8626 = vpop.f32.mrf.mxu0
          %v8627 = vadd.f32 0.0, %v8626
          %8628 = vmatmul.f32.gmra.mxu0 %v8517
          %v8629 = vpop.f32.mrf.mxu0
          %v8630 = vadd.f32 0.0, %v8629
          %8631 = vmatmul.f32.gmra.mxu0 %v8520
          %v8632 = vpop.f32.mrf.mxu0
          %v8633 = vadd.f32 0.0, %v8632
          %8634 = vmatmul.f32.gmra.mxu0 %v8523
          %v8635 = vpop.f32.mrf.mxu0
          %v8636 = vadd.f32 0.0, %v8635
          %8637 = vmatmul.f32.gmra.mxu0 %v8526
          %v8638 = vpop.f32.mrf.mxu0
          %v8639 = vadd.f32 0.0, %v8638
          %8640 = vmatmul.f32.gmra.mxu0 %v8529
          %v8641 = vpop.f32.mrf.mxu0
          %v8642 = vadd.f32 0.0, %v8641
          %8643 = vmatmul.f32.gmra.mxu0 %v8532
          %v8644 = vpop.f32.mrf.mxu0
          %v8645 = vadd.f32 0.0, %v8644
          %8646 = vmatmul.f32.gmra.mxu0 %v8535
          %v8647 = vpop.f32.mrf.mxu0
          %v8648 = vadd.f32 0.0, %v8647
          %8649 = vmatmul.f32.gmra.mxu0 %v8538
          %v8650 = vpop.f32.mrf.mxu0
          %v8651 = vadd.f32 0.0, %v8650
          %8652 = vmatmul.f32.gmra.mxu0 %v8541
          %v8653 = vpop.f32.mrf.mxu0
          %v8654 = vadd.f32 0.0, %v8653
          %8655 = vmatmul.f32.gmra.mxu0 %v8544
          %v8656 = vpop.f32.mrf.mxu0
          %v8657 = vadd.f32 0.0, %v8656
          %8658 = vmatmul.f32.gmra.mxu0 %v8547
          %v8659 = vpop.f32.mrf.mxu0
          %v8660 = vadd.f32 0.0, %v8659
          %8661 = vmatmul.f32.gmra.mxu0 %v8550
          %v8662 = vpop.f32.mrf.mxu0
          %v8663 = vadd.f32 0.0, %v8662
          %8664 = vdwg.mxu0
          %v8665 = vadd.f32 %v8383, %v8570
          %v8666 = vadd.f32 %v8384, %v8573
          %v8667 = vadd.f32 %v8385, %v8576
          %v8668 = vadd.f32 %v8386, %v8579
          %v8669 = vadd.f32 %v8387, %v8582
          %v8670 = vadd.f32 %v8388, %v8585
          %v8671 = vadd.f32 %v8389, %v8588
          %v8672 = vadd.f32 %v8390, %v8591
          %v8673 = vadd.f32 %v8391, %v8594
          %v8674 = vadd.f32 %v8392, %v8597
          %v8675 = vadd.f32 %v8393, %v8600
          %v8676 = vadd.f32 %v8394, %v8603
          %v8677 = vadd.f32 %v8395, %v8606
          %v8678 = vadd.f32 %v8396, %v8609
          %v8679 = vadd.f32 %v8397, %v8612
          %v8680 = vadd.f32 %v8398, %v8615
          %v8681 = vadd.f32 %v8399, %v8618
          %v8682 = vadd.f32 %v8400, %v8621
          %v8683 = vadd.f32 %v8401, %v8624
          %v8684 = vadd.f32 %v8402, %v8627
          %v8685 = vadd.f32 %v8403, %v8630
          %v8686 = vadd.f32 %v8404, %v8633
          %v8687 = vadd.f32 %v8405, %v8636
          %v8688 = vadd.f32 %v8406, %v8639
          %v8689 = vadd.f32 %v8407, %v8642
          %v8690 = vadd.f32 %v8408, %v8645
          %v8691 = vadd.f32 %v8409, %v8648
          %v8692 = vadd.f32 %v8410, %v8651
          %v8693 = vadd.f32 %v8411, %v8654
          %v8694 = vadd.f32 %v8412, %v8657
          %v8695 = vadd.f32 %v8413, %v8660
          %v8696 = vadd.f32 %v8414, %v8663
          %v8697 = vld [vmem:[%s8132 + $0x2] sm:$0xff]
          %v8698 = vld [vmem:[%s8132 + $0xa] sm:$0xff]
          %v8699 = vld [vmem:[%s8132 + $0x12] sm:$0xff]
          %v8700 = vld [vmem:[%s8132 + $0x1a] sm:$0xff]
          %v8701 = vld [vmem:[%s8132 + $0x2a] sm:$0xff]
          %v8702 = vld [vmem:[%s8132 + $0x32] sm:$0xff]
          %v8703 = vld [vmem:[%s8132 + $0x3a] sm:$0xff]
          %v8704 = vld [vmem:[%s8132 + $0x42] sm:$0xff]
          %v8705 = vld [vmem:[%s8132 + $0x52] sm:$0xff]
          %v8706 = vld [vmem:[%s8132 + $0x5a] sm:$0xff]
          %v8707 = vld [vmem:[%s8132 + $0x62] sm:$0xff]
          %v8708 = vld [vmem:[%s8132 + $0x6a] sm:$0xff]
          %v8709 = vld [vmem:[%s8132 + $0x7a] sm:$0xff]
          %v8710 = vld [vmem:[%s8132 + $0x82] sm:$0xff]
          %v8711 = vld [vmem:[%s8132 + $0x8a] sm:$0xff]
          %v8712 = vld [vmem:[%s8132 + $0x92] sm:$0xff]
          %v8713 = vld [vmem:[%s8132 + $0xa2] sm:$0xff]
          %v8714 = vld [vmem:[%s8132 + $0xaa] sm:$0xff]
          %v8715 = vld [vmem:[%s8132 + $0xb2] sm:$0xff]
          %v8716 = vld [vmem:[%s8132 + $0xba] sm:$0xff]
          %v8717 = vld [vmem:[%s8132 + $0xca] sm:$0xff]
          %v8718 = vld [vmem:[%s8132 + $0xd2] sm:$0xff]
          %v8719 = vld [vmem:[%s8132 + $0xda] sm:$0xff]
          %v8720 = vld [vmem:[%s8132 + $0xe2] sm:$0xff]
          %v8721 = vld [vmem:[%s8132 + $0xf2] sm:$0xff]
          %v8722 = vld [vmem:[%s8132 + $0xfa] sm:$0xff]
          %v8723 = vld [vmem:[%s8132 + $0x102] sm:$0xff]
          %v8724 = vld [vmem:[%s8132 + $0x10a] sm:$0xff]
          %v8725 = vld [vmem:[%s8132 + $0x11a] sm:$0xff]
          %v8726 = vld [vmem:[%s8132 + $0x122] sm:$0xff]
          %v8727 = vld [vmem:[%s8132 + $0x12a] sm:$0xff]
          %v8728 = vld [vmem:[%s8132 + $0x132] sm:$0xff]
          %s8729 = scalar_lea.vmem [#allocation14], 512
          %v8730 = vld [vmem:[%s8729] sm:$0xff]
          %v8731 = vld [vmem:[%s8729 + $0x8] sm:$0xff]
          %v8732 = vld [vmem:[%s8729 + $0x10] sm:$0xff]
          %v8733 = vld [vmem:[%s8729 + $0x18] sm:$0xff]
          %v8734 = vld [vmem:[%s8729 + $0x20] sm:$0xff]
          %v8735 = vld [vmem:[%s8729 + $0x28] sm:$0xff]
          %v8736 = vld [vmem:[%s8729 + $0x30] sm:$0xff]
          %v8737 = vld [vmem:[%s8729 + $0x38] sm:$0xff]
          %v8739 = vsel %vm698, %v8697, 0
          %v8742 = vsel %vm698, %v8698, 0
          %v8745 = vsel %vm698, %v8699, 0
          %v8748 = vsel %vm698, %v8700, 0
          %v8751 = vsel %vm698, %v8701, 0
          %v8754 = vsel %vm698, %v8702, 0
          %v8757 = vsel %vm698, %v8703, 0
          %v8760 = vsel %vm698, %v8704, 0
          %v8763 = vsel %vm698, %v8705, 0
          %v8766 = vsel %vm698, %v8706, 0
          %v8769 = vsel %vm698, %v8707, 0
          %v8772 = vsel %vm698, %v8708, 0
          %v8775 = vsel %vm698, %v8709, 0
          %v8778 = vsel %vm698, %v8710, 0
          %v8781 = vsel %vm698, %v8711, 0
          %v8784 = vsel %vm698, %v8712, 0
          %v8787 = vsel %vm698, %v8713, 0
          %v8790 = vsel %vm698, %v8714, 0
          %v8793 = vsel %vm698, %v8715, 0
          %v8796 = vsel %vm698, %v8716, 0
          %v8799 = vsel %vm698, %v8717, 0
          %v8802 = vsel %vm698, %v8718, 0
          %v8805 = vsel %vm698, %v8719, 0
          %v8808 = vsel %vm698, %v8720, 0
          %v8811 = vsel %vm698, %v8721, 0
          %v8814 = vsel %vm698, %v8722, 0
          %v8817 = vsel %vm698, %v8723, 0
          %v8820 = vsel %vm698, %v8724, 0
          %v8823 = vsel %vm698, %v8725, 0
          %v8826 = vsel %vm698, %v8726, 0
          %v8829 = vsel %vm698, %v8727, 0
          %v8832 = vsel %vm698, %v8728, 0
          %8834 = vmatpush.msra.mxu0 0.0
          %8835 = vmatpush.msra.mxu0 0.0
          %8836 = vmatpush.msra.mxu0 0.0
          %8837 = vmatpush.msra.mxu0 0.0
          %8838 = vmatpush.msra.mxu0 0.0
          %8839 = vmatpush.msra.mxu0 0.0
          %8840 = vmatpush.msra.mxu0 0.0
          %8841 = vmatpush.msra.mxu0 0.0
          %8842 = vmatpush.msra.mxu0 %v8737
          %8843 = vmatpush.msra.mxu0 %v8736
          %8844 = vmatpush.msra.mxu0 %v8735
          %8845 = vmatpush.msra.mxu0 %v8734
          %8846 = vmatpush.msra.mxu0 %v8733
          %8847 = vmatpush.msra.mxu0 %v8732
          %8848 = vmatpush.msra.mxu0 %v8731
          %8849 = vmatpush.msra.mxu0 %v8730
          %8850 = vmatmul.f32.gmra.mxu0 %v8739
          %v8851 = vpop.f32.mrf.mxu0
          %v8852 = vadd.f32 0.0, %v8851
          %8853 = vmatmul.f32.gmra.mxu0 %v8742
          %v8854 = vpop.f32.mrf.mxu0
          %v8855 = vadd.f32 0.0, %v8854
          %8856 = vmatmul.f32.gmra.mxu0 %v8745
          %v8857 = vpop.f32.mrf.mxu0
          %v8858 = vadd.f32 0.0, %v8857
          %8859 = vmatmul.f32.gmra.mxu0 %v8748
          %v8860 = vpop.f32.mrf.mxu0
          %v8861 = vadd.f32 0.0, %v8860
          %8862 = vmatmul.f32.gmra.mxu0 %v8751
          %v8863 = vpop.f32.mrf.mxu0
          %v8864 = vadd.f32 0.0, %v8863
          %8865 = vmatmul.f32.gmra.mxu0 %v8754
          %v8866 = vpop.f32.mrf.mxu0
          %v8867 = vadd.f32 0.0, %v8866
          %8868 = vmatmul.f32.gmra.mxu0 %v8757
          %v8869 = vpop.f32.mrf.mxu0
          %v8870 = vadd.f32 0.0, %v8869
          %8871 = vmatmul.f32.gmra.mxu0 %v8760
          %v8872 = vpop.f32.mrf.mxu0
          %v8873 = vadd.f32 0.0, %v8872
          %8874 = vmatmul.f32.gmra.mxu0 %v8763
          %v8875 = vpop.f32.mrf.mxu0
          %v8876 = vadd.f32 0.0, %v8875
          %8877 = vmatmul.f32.gmra.mxu0 %v8766
          %v8878 = vpop.f32.mrf.mxu0
          %v8879 = vadd.f32 0.0, %v8878
          %8880 = vmatmul.f32.gmra.mxu0 %v8769
          %v8881 = vpop.f32.mrf.mxu0
          %v8882 = vadd.f32 0.0, %v8881
          %8883 = vmatmul.f32.gmra.mxu0 %v8772
          %v8884 = vpop.f32.mrf.mxu0
          %v8885 = vadd.f32 0.0, %v8884
          %8886 = vmatmul.f32.gmra.mxu0 %v8775
          %v8887 = vpop.f32.mrf.mxu0
          %v8888 = vadd.f32 0.0, %v8887
          %8889 = vmatmul.f32.gmra.mxu0 %v8778
          %v8890 = vpop.f32.mrf.mxu0
          %v8891 = vadd.f32 0.0, %v8890
          %8892 = vmatmul.f32.gmra.mxu0 %v8781
          %v8893 = vpop.f32.mrf.mxu0
          %v8894 = vadd.f32 0.0, %v8893
          %8895 = vmatmul.f32.gmra.mxu0 %v8784
          %v8896 = vpop.f32.mrf.mxu0
          %v8897 = vadd.f32 0.0, %v8896
          %8898 = vmatmul.f32.gmra.mxu0 %v8787
          %v8899 = vpop.f32.mrf.mxu0
          %v8900 = vadd.f32 0.0, %v8899
          %8901 = vmatmul.f32.gmra.mxu0 %v8790
          %v8902 = vpop.f32.mrf.mxu0
          %v8903 = vadd.f32 0.0, %v8902
          %8904 = vmatmul.f32.gmra.mxu0 %v8793
          %v8905 = vpop.f32.mrf.mxu0
          %v8906 = vadd.f32 0.0, %v8905
          %8907 = vmatmul.f32.gmra.mxu0 %v8796
          %v8908 = vpop.f32.mrf.mxu0
          %v8909 = vadd.f32 0.0, %v8908
          %8910 = vmatmul.f32.gmra.mxu0 %v8799
          %v8911 = vpop.f32.mrf.mxu0
          %v8912 = vadd.f32 0.0, %v8911
          %8913 = vmatmul.f32.gmra.mxu0 %v8802
          %v8914 = vpop.f32.mrf.mxu0
          %v8915 = vadd.f32 0.0, %v8914
          %8916 = vmatmul.f32.gmra.mxu0 %v8805
          %v8917 = vpop.f32.mrf.mxu0
          %v8918 = vadd.f32 0.0, %v8917
          %8919 = vmatmul.f32.gmra.mxu0 %v8808
          %v8920 = vpop.f32.mrf.mxu0
          %v8921 = vadd.f32 0.0, %v8920
          %8922 = vmatmul.f32.gmra.mxu0 %v8811
          %v8923 = vpop.f32.mrf.mxu0
          %v8924 = vadd.f32 0.0, %v8923
          %8925 = vmatmul.f32.gmra.mxu0 %v8814
          %v8926 = vpop.f32.mrf.mxu0
          %v8927 = vadd.f32 0.0, %v8926
          %8928 = vmatmul.f32.gmra.mxu0 %v8817
          %v8929 = vpop.f32.mrf.mxu0
          %v8930 = vadd.f32 0.0, %v8929
          %8931 = vmatmul.f32.gmra.mxu0 %v8820
          %v8932 = vpop.f32.mrf.mxu0
          %v8933 = vadd.f32 0.0, %v8932
          %8934 = vmatmul.f32.gmra.mxu0 %v8823
          %v8935 = vpop.f32.mrf.mxu0
          %v8936 = vadd.f32 0.0, %v8935
          %8937 = vmatmul.f32.gmra.mxu0 %v8826
          %v8938 = vpop.f32.mrf.mxu0
          %v8939 = vadd.f32 0.0, %v8938
          %8940 = vmatmul.f32.gmra.mxu0 %v8829
          %v8941 = vpop.f32.mrf.mxu0
          %v8942 = vadd.f32 0.0, %v8941
          %8943 = vmatmul.f32.gmra.mxu0 %v8832
          %v8944 = vpop.f32.mrf.mxu0
          %v8945 = vadd.f32 0.0, %v8944
          %8946 = vdwg.mxu0
          %v8947 = vadd.f32 %v8665, %v8852
          %v8948 = vadd.f32 %v8666, %v8855
          %v8949 = vadd.f32 %v8667, %v8858
          %v8950 = vadd.f32 %v8668, %v8861
          %v8951 = vadd.f32 %v8669, %v8864
          %v8952 = vadd.f32 %v8670, %v8867
          %v8953 = vadd.f32 %v8671, %v8870
          %v8954 = vadd.f32 %v8672, %v8873
          %v8955 = vadd.f32 %v8673, %v8876
          %v8956 = vadd.f32 %v8674, %v8879
          %v8957 = vadd.f32 %v8675, %v8882
          %v8958 = vadd.f32 %v8676, %v8885
          %v8959 = vadd.f32 %v8677, %v8888
          %v8960 = vadd.f32 %v8678, %v8891
          %v8961 = vadd.f32 %v8679, %v8894
          %v8962 = vadd.f32 %v8680, %v8897
          %v8963 = vadd.f32 %v8681, %v8900
          %v8964 = vadd.f32 %v8682, %v8903
          %v8965 = vadd.f32 %v8683, %v8906
          %v8966 = vadd.f32 %v8684, %v8909
          %v8967 = vadd.f32 %v8685, %v8912
          %v8968 = vadd.f32 %v8686, %v8915
          %v8969 = vadd.f32 %v8687, %v8918
          %v8970 = vadd.f32 %v8688, %v8921
          %v8971 = vadd.f32 %v8689, %v8924
          %v8972 = vadd.f32 %v8690, %v8927
          %v8973 = vadd.f32 %v8691, %v8930
          %v8974 = vadd.f32 %v8692, %v8933
          %v8975 = vadd.f32 %v8693, %v8936
          %v8976 = vadd.f32 %v8694, %v8939
          %v8977 = vadd.f32 %v8695, %v8942
          %v8978 = vadd.f32 %v8696, %v8945
          %v8979 = vld [vmem:[%s7] sm:$0x1]
          %v8981 = vperm.slane %v8979, 0
          %v8983 = vadd.f32 %v8947, %v8981
          %v8984 = vadd.f32 %v8948, %v8981
          %v8985 = vadd.f32 %v8949, %v8981
          %v8986 = vadd.f32 %v8950, %v8981
          %v8987 = vadd.f32 %v8951, %v8981
          %v8988 = vadd.f32 %v8952, %v8981
          %v8989 = vadd.f32 %v8953, %v8981
          %v8990 = vadd.f32 %v8954, %v8981
          %v8991 = vadd.f32 %v8955, %v8981
          %v8992 = vadd.f32 %v8956, %v8981
          %v8993 = vadd.f32 %v8957, %v8981
          %v8994 = vadd.f32 %v8958, %v8981
          %v8995 = vadd.f32 %v8959, %v8981
          %v8996 = vadd.f32 %v8960, %v8981
          %v8997 = vadd.f32 %v8961, %v8981
          %v8998 = vadd.f32 %v8962, %v8981
          %v8999 = vadd.f32 %v8963, %v8981
          %v9000 = vadd.f32 %v8964, %v8981
          %v9001 = vadd.f32 %v8965, %v8981
          %v9002 = vadd.f32 %v8966, %v8981
          %v9003 = vadd.f32 %v8967, %v8981
          %v9004 = vadd.f32 %v8968, %v8981
          %v9005 = vadd.f32 %v8969, %v8981
          %v9006 = vadd.f32 %v8970, %v8981
          %v9007 = vadd.f32 %v8971, %v8981
          %v9008 = vadd.f32 %v8972, %v8981
          %v9009 = vadd.f32 %v8973, %v8981
          %v9010 = vadd.f32 %v8974, %v8981
          %v9011 = vadd.f32 %v8975, %v8981
          %v9012 = vadd.f32 %v8976, %v8981
          %v9013 = vadd.f32 %v8977, %v8981
          %v9014 = vadd.f32 %v8978, %v8981
          %v9015 = vmax.f32 %v8983, 0.0
          %v9016 = vmax.f32 %v8984, 0.0
          %v9017 = vmax.f32 %v8985, 0.0
          %v9018 = vmax.f32 %v8986, 0.0
          %v9019 = vmax.f32 %v8987, 0.0
          %v9020 = vmax.f32 %v8988, 0.0
          %v9021 = vmax.f32 %v8989, 0.0
          %v9022 = vmax.f32 %v8990, 0.0
          %v9023 = vmax.f32 %v8991, 0.0
          %v9024 = vmax.f32 %v8992, 0.0
          %v9025 = vmax.f32 %v8993, 0.0
          %v9026 = vmax.f32 %v8994, 0.0
          %v9027 = vmax.f32 %v8995, 0.0
          %v9028 = vmax.f32 %v8996, 0.0
          %v9029 = vmax.f32 %v8997, 0.0
          %v9030 = vmax.f32 %v8998, 0.0
          %v9031 = vmax.f32 %v8999, 0.0
          %v9032 = vmax.f32 %v9000, 0.0
          %v9033 = vmax.f32 %v9001, 0.0
          %v9034 = vmax.f32 %v9002, 0.0
          %v9035 = vmax.f32 %v9003, 0.0
          %v9036 = vmax.f32 %v9004, 0.0
          %v9037 = vmax.f32 %v9005, 0.0
          %v9038 = vmax.f32 %v9006, 0.0
          %v9039 = vmax.f32 %v9007, 0.0
          %v9040 = vmax.f32 %v9008, 0.0
          %v9041 = vmax.f32 %v9009, 0.0
          %v9042 = vmax.f32 %v9010, 0.0
          %v9043 = vmax.f32 %v9011, 0.0
          %v9044 = vmax.f32 %v9012, 0.0
          %v9045 = vmax.f32 %v9013, 0.0
          %v9046 = vmax.f32 %v9014, 0.0
          %v9047 = vmax.f32 %v9015, %v9019
          %v9048 = vmax.f32 %v9016, %v9020
          %v9049 = vmax.f32 %v9017, %v9021
          %v9050 = vmax.f32 %v9018, %v9022
          %v9051 = vmax.f32 %v9023, %v9027
          %v9052 = vmax.f32 %v9024, %v9028
          %v9053 = vmax.f32 %v9025, %v9029
          %v9054 = vmax.f32 %v9026, %v9030
          %v9055 = vmax.f32 %v9031, %v9035
          %v9056 = vmax.f32 %v9032, %v9036
          %v9057 = vmax.f32 %v9033, %v9037
          %v9058 = vmax.f32 %v9034, %v9038
          %v9059 = vmax.f32 %v9039, %v9043
          %v9060 = vmax.f32 %v9040, %v9044
          %v9061 = vmax.f32 %v9041, %v9045
          %v9062 = vmax.f32 %v9042, %v9046
          %9063 = vst [vmem:[#allocation7] sm:$0xff] %v9047
          %9064 = vst [vmem:[#allocation7 + $0x8] sm:$0xff] %v9048
          %9065 = vst [vmem:[#allocation7 + $0x10] sm:$0xff] %v9049
          %9066 = vst [vmem:[#allocation7 + $0x18] sm:$0xff] %v9050
          %9067 = vst [vmem:[#allocation7 + $0x20] sm:$0xff] %v9051
          %9068 = vst [vmem:[#allocation7 + $0x28] sm:$0xff] %v9052
          %9069 = vst [vmem:[#allocation7 + $0x30] sm:$0xff] %v9053
          %9070 = vst [vmem:[#allocation7 + $0x38] sm:$0xff] %v9054
          %9071 = vst [vmem:[#allocation7 + $0x40] sm:$0xff] %v9055
          %9072 = vst [vmem:[#allocation7 + $0x48] sm:$0xff] %v9056
          %9073 = vst [vmem:[#allocation7 + $0x50] sm:$0xff] %v9057
          %9074 = vst [vmem:[#allocation7 + $0x58] sm:$0xff] %v9058
          %9075 = vst [vmem:[#allocation7 + $0x60] sm:$0xff] %v9059
          %9076 = vst [vmem:[#allocation7 + $0x68] sm:$0xff] %v9060
          %9077 = vst [vmem:[#allocation7 + $0x70] sm:$0xff] %v9061
          %9078 = vst [vmem:[#allocation7 + $0x78] sm:$0xff] %v9062
          %v9079 = vld [vmem:[#allocation7] ss:$2 sm:$0xff]
          %s9080 = scalar_lea.vmem [#allocation7], 16
          %v9081 = vld [vmem:[%s9080] ss:$2 sm:$0xff]
          %s9082 = scalar_lea.vmem [#allocation7], 32
          %v9083 = vld [vmem:[%s9082] ss:$2 sm:$0xff]
          %s9084 = scalar_lea.vmem [#allocation7], 48
          %v9085 = vld [vmem:[%s9084] ss:$2 sm:$0xff]
          %s9086 = scalar_lea.vmem [#allocation7], 64
          %v9087 = vld [vmem:[%s9086] ss:$2 sm:$0xff]
          %s9088 = scalar_lea.vmem [#allocation7], 80
          %v9089 = vld [vmem:[%s9088] ss:$2 sm:$0xff]
          %s9090 = scalar_lea.vmem [#allocation7], 96
          %v9091 = vld [vmem:[%s9090] ss:$2 sm:$0xff]
          %s9092 = scalar_lea.vmem [#allocation7], 112
          %v9093 = vld [vmem:[%s9092] ss:$2 sm:$0xff]
          %s9094 = scalar_lea.vmem [#allocation7], 1
          %v9095 = vld [vmem:[%s9094] ss:$2 sm:$0xff]
          %s9096 = scalar_lea.vmem [#allocation7], 17
          %v9097 = vld [vmem:[%s9096] ss:$2 sm:$0xff]
          %s9098 = scalar_lea.vmem [#allocation7], 33
          %v9099 = vld [vmem:[%s9098] ss:$2 sm:$0xff]
          %s9100 = scalar_lea.vmem [#allocation7], 49
          %v9101 = vld [vmem:[%s9100] ss:$2 sm:$0xff]
          %s9102 = scalar_lea.vmem [#allocation7], 65
          %v9103 = vld [vmem:[%s9102] ss:$2 sm:$0xff]
          %s9104 = scalar_lea.vmem [#allocation7], 81
          %v9105 = vld [vmem:[%s9104] ss:$2 sm:$0xff]
          %s9106 = scalar_lea.vmem [#allocation7], 97
          %v9107 = vld [vmem:[%s9106] ss:$2 sm:$0xff]
          %s9108 = scalar_lea.vmem [#allocation7], 113
          %v9109 = vld [vmem:[%s9108] ss:$2 sm:$0xff]
          %v9110 = vmax.f32 %v9079, %v9095
          %v9111 = vmax.f32 %v9081, %v9097
          %v9112 = vmax.f32 %v9083, %v9099
          %v9113 = vmax.f32 %v9085, %v9101
          %v9114 = vmax.f32 %v9087, %v9103
          %v9115 = vmax.f32 %v9089, %v9105
          %v9116 = vmax.f32 %v9091, %v9107
          %v9117 = vmax.f32 %v9093, %v9109
          %s9118 = smul.u32 %s6492, 4
          %s9119 = smul.u32 %s9118, 16
          %s9120 = scalar_lea.vmem [#allocation8], %s9119
          %9121 = vst [vmem:[%s9120] sm:$0xff] %v9110
          %9122 = vst [vmem:[%s9120 + $0x8] sm:$0xff] %v9111
          %9123 = vst [vmem:[%s9120 + $0x10] sm:$0xff] %v9112
          %9124 = vst [vmem:[%s9120 + $0x18] sm:$0xff] %v9113
          %9125 = vst [vmem:[%s9120 + $0x20] sm:$0xff] %v9114
          %9126 = vst [vmem:[%s9120 + $0x28] sm:$0xff] %v9115
          %9127 = vst [vmem:[%s9120 + $0x30] sm:$0xff] %v9116
          %9128 = vst [vmem:[%s9120 + $0x38] sm:$0xff] %v9117
        $region111: #{multi_input_forward.1} parent=71 // loop_footer
          %s6496 = sadd.s32 1, %s6492
        $region112: #{multi_input_forward.1} parent=71 // loop_footer_branch
          %6491 = sbr.rel target = $region108
        $region113: #{multi_input_forward.1} parent=71 // loop_exit
          _
        %v9129 = vld [vmem:[#allocation8] sm:$0xff]
        %v9130 = vld [vmem:[#allocation8 + $0x8] sm:$0xff]
        %v9131 = vld [vmem:[#allocation8 + $0x10] sm:$0xff]
        %v9132 = vld [vmem:[#allocation8 + $0x18] sm:$0xff]
        %v9133 = vld [vmem:[#allocation8 + $0x20] sm:$0xff]
        %v9134 = vld [vmem:[#allocation8 + $0x28] sm:$0xff]
        %v9135 = vld [vmem:[#allocation8 + $0x30] sm:$0xff]
        %v9136 = vld [vmem:[#allocation8 + $0x38] sm:$0xff]
        %v9137 = vld [vmem:[#allocation8 + $0x40] sm:$0xff]
        %v9138 = vld [vmem:[#allocation8 + $0x48] sm:$0xff]
        %v9139 = vld [vmem:[#allocation8 + $0x50] sm:$0xff]
        %v9140 = vld [vmem:[#allocation8 + $0x58] sm:$0xff]
        %v9141 = vld [vmem:[#allocation8 + $0x60] sm:$0xff]
        %v9142 = vld [vmem:[#allocation8 + $0x68] sm:$0xff]
        %v9143 = vld [vmem:[#allocation8 + $0x70] sm:$0xff]
        %v9144 = vld [vmem:[#allocation8 + $0x78] sm:$0xff]
        %v9145 = vld [vmem:[#allocation8 + $0x80] sm:$0xff]
        %v9146 = vld [vmem:[#allocation8 + $0x88] sm:$0xff]
        %v9147 = vld [vmem:[#allocation8 + $0x90] sm:$0xff]
        %v9148 = vld [vmem:[#allocation8 + $0x98] sm:$0xff]
        %v9149 = vld [vmem:[#allocation8 + $0xa0] sm:$0xff]
        %v9150 = vld [vmem:[#allocation8 + $0xa8] sm:$0xff]
        %v9151 = vld [vmem:[#allocation8 + $0xb0] sm:$0xff]
        %v9152 = vld [vmem:[#allocation8 + $0xb8] sm:$0xff]
        %v9153 = vld [vmem:[#allocation8 + $0xc0] sm:$0xff]
        %v9154 = vld [vmem:[#allocation8 + $0xc8] sm:$0xff]
        %v9155 = vld [vmem:[#allocation8 + $0xd0] sm:$0xff]
        %v9156 = vld [vmem:[#allocation8 + $0xd8] sm:$0xff]
        %v9157 = vld [vmem:[#allocation8 + $0xe0] sm:$0xff]
        %v9158 = vld [vmem:[#allocation8 + $0xe8] sm:$0xff]
        %v9159 = vld [vmem:[#allocation8 + $0xf0] sm:$0xff]
        %v9160 = vld [vmem:[#allocation8 + $0xf8] sm:$0xff]
        %v9161 = vld [vmem:[%s537] sm:$0x1]
        %v9162 = vld [vmem:[%s8] sm:$0x1]
        %9164 = vset.pattern.permute.xlu0 0
        %9165 = vperm.xlu0 %9164, %v9161
        %v9166 = vpop.permute.xlu0 %9165
        %v9168 = vperm.slane %v9166, 0
        %v9169 = vmul.f32 %v9168, %v9162
        %v9170 = vld [vmem:[%s8 + $0x1] sm:$0x1]
        %9171 = vset.pattern.permute.xlu0 1
        %9172 = vperm.xlu0 %9171, %v9161
        %v9173 = vpop.permute.xlu0 %9172
        %v9175 = vperm.slane %v9173, 0
        %v9176 = vmul.f32 %v9175, %v9170
        %v9177 = vadd.f32 %v9169, %v9176
        %v9178 = vld [vmem:[%s9] sm:$0x1]
        %v9179 = vadd.f32 %v9177, %v9178
        %v9180 = vmax.f32 %v9179, 0.0
        %v9181 = vld [vmem:[#allocation17] sm:$0x1]
        %v9182 = vld [vmem:[#allocation15] sm:$0xff]
        %v9183 = vld [vmem:[#allocation15 + $0x8] sm:$0xff]
        %v9184 = vld [vmem:[#allocation15 + $0x10] sm:$0xff]
        %v9185 = vld [vmem:[#allocation15 + $0x18] sm:$0xff]
        %v9186 = vld [vmem:[#allocation15 + $0x20] sm:$0xff]
        %v9187 = vld [vmem:[#allocation15 + $0x28] sm:$0xff]
        %v9188 = vld [vmem:[#allocation15 + $0x30] sm:$0xff]
        %v9189 = vld [vmem:[#allocation15 + $0x38] sm:$0xff]
        %v9190 = vld [vmem:[#allocation15 + $0x40] sm:$0xff]
        %v9191 = vld [vmem:[#allocation15 + $0x48] sm:$0xff]
        %v9192 = vld [vmem:[#allocation15 + $0x50] sm:$0xff]
        %v9193 = vld [vmem:[#allocation15 + $0x58] sm:$0xff]
        %v9194 = vld [vmem:[#allocation15 + $0x60] sm:$0xff]
        %v9195 = vld [vmem:[#allocation15 + $0x68] sm:$0xff]
        %v9196 = vld [vmem:[#allocation15 + $0x70] sm:$0xff]
        %v9197 = vld [vmem:[#allocation15 + $0x78] sm:$0xff]
        %v9198 = vld [vmem:[#allocation15 + $0x80] sm:$0xff]
        %v9199 = vld [vmem:[#allocation15 + $0x88] sm:$0xff]
        %v9200 = vld [vmem:[#allocation15 + $0x90] sm:$0xff]
        %v9201 = vld [vmem:[#allocation15 + $0x98] sm:$0xff]
        %v9202 = vld [vmem:[#allocation15 + $0xa0] sm:$0xff]
        %v9203 = vld [vmem:[#allocation15 + $0xa8] sm:$0xff]
        %v9204 = vld [vmem:[#allocation15 + $0xb0] sm:$0xff]
        %v9205 = vld [vmem:[#allocation15 + $0xb8] sm:$0xff]
        %v9206 = vld [vmem:[#allocation15 + $0xc0] sm:$0xff]
        %v9207 = vld [vmem:[#allocation15 + $0xc8] sm:$0xff]
        %v9208 = vld [vmem:[#allocation15 + $0xd0] sm:$0xff]
        %v9209 = vld [vmem:[#allocation15 + $0xd8] sm:$0xff]
        %v9210 = vld [vmem:[#allocation15 + $0xe0] sm:$0xff]
        %v9211 = vld [vmem:[#allocation15 + $0xe8] sm:$0xff]
        %v9212 = vld [vmem:[#allocation15 + $0xf0] sm:$0xff]
        %v9213 = vld [vmem:[#allocation15 + $0xf8] sm:$0xff]
        %v9214 = vmul.f32 %v9129, %v9182
        %v9215 = vmul.f32 %v9130, %v9183
        %v9216 = vmul.f32 %v9131, %v9184
        %v9217 = vmul.f32 %v9132, %v9185
        %v9218 = vmul.f32 %v9133, %v9186
        %v9219 = vmul.f32 %v9134, %v9187
        %v9220 = vmul.f32 %v9135, %v9188
        %v9221 = vmul.f32 %v9136, %v9189
        %v9222 = vmul.f32 %v9137, %v9190
        %v9223 = vmul.f32 %v9138, %v9191
        %v9224 = vmul.f32 %v9139, %v9192
        %v9225 = vmul.f32 %v9140, %v9193
        %v9226 = vmul.f32 %v9141, %v9194
        %v9227 = vmul.f32 %v9142, %v9195
        %v9228 = vmul.f32 %v9143, %v9196
        %v9229 = vmul.f32 %v9144, %v9197
        %v9230 = vmul.f32 %v9145, %v9198
        %v9231 = vmul.f32 %v9146, %v9199
        %v9232 = vmul.f32 %v9147, %v9200
        %v9233 = vmul.f32 %v9148, %v9201
        %v9234 = vmul.f32 %v9149, %v9202
        %v9235 = vmul.f32 %v9150, %v9203
        %v9236 = vmul.f32 %v9151, %v9204
        %v9237 = vmul.f32 %v9152, %v9205
        %v9238 = vmul.f32 %v9153, %v9206
        %v9239 = vmul.f32 %v9154, %v9207
        %v9240 = vmul.f32 %v9155, %v9208
        %v9241 = vmul.f32 %v9156, %v9209
        %v9242 = vmul.f32 %v9157, %v9210
        %v9243 = vmul.f32 %v9158, %v9211
        %v9244 = vmul.f32 %v9159, %v9212
        %v9245 = vmul.f32 %v9160, %v9213
        %v9246 = vadd.f32 %v9214, %v9215
        %v9247 = vadd.f32 %v9246, %v9216
        %v9248 = vadd.f32 %v9247, %v9217
        %v9249 = vadd.f32 %v9248, %v9218
        %v9250 = vadd.f32 %v9249, %v9219
        %v9251 = vadd.f32 %v9250, %v9220
        %v9252 = vadd.f32 %v9251, %v9221
        %v9253 = vadd.f32 %v9252, %v9222
        %v9254 = vadd.f32 %v9253, %v9223
        %v9255 = vadd.f32 %v9254, %v9224
        %v9256 = vadd.f32 %v9255, %v9225
        %v9257 = vadd.f32 %v9256, %v9226
        %v9258 = vadd.f32 %v9257, %v9227
        %v9259 = vadd.f32 %v9258, %v9228
        %v9260 = vadd.f32 %v9259, %v9229
        %v9261 = vadd.f32 %v9260, %v9230
        %v9262 = vadd.f32 %v9261, %v9231
        %v9263 = vadd.f32 %v9262, %v9232
        %v9264 = vadd.f32 %v9263, %v9233
        %v9265 = vadd.f32 %v9264, %v9234
        %v9266 = vadd.f32 %v9265, %v9235
        %v9267 = vadd.f32 %v9266, %v9236
        %v9268 = vadd.f32 %v9267, %v9237
        %v9269 = vadd.f32 %v9268, %v9238
        %v9270 = vadd.f32 %v9269, %v9239
        %v9271 = vadd.f32 %v9270, %v9240
        %v9272 = vadd.f32 %v9271, %v9241
        %v9273 = vadd.f32 %v9272, %v9242
        %v9274 = vadd.f32 %v9273, %v9243
        %v9275 = vadd.f32 %v9274, %v9244
        %v9276 = vadd.f32 %v9275, %v9245
        %9277 = vadd.xlane.f32.xlu0 %v9276
        %v9278 = vpop.xlane.xlu0 %9277
        %v9279 = vrot.slane %v9278, 4
        %v9280 = vadd.f32 %v9278, %v9279
        %v9281 = vrot.slane %v9280, 2
        %v9282 = vadd.f32 %v9280, %v9281
        %v9283 = vrot.slane %v9282, 1
        %v9284 = vadd.f32 %v9282, %v9283
        %s9285 = vtos %v9284
        %v9286 = vld [vmem:[%s11] sm:$0x1]
        %v9287 = vmul.f32 %v9180, %v9286
        %v9288 = vsel %vm711, %v9287, 0.0
        %9289 = vadd.xlane.f32.xlu0 %v9288
        %v9290 = vpop.xlane.xlu0 %9289
        %v9291 = vrot.slane %v9290, 4
        %v9292 = vadd.f32 %v9290, %v9291
        %v9293 = vrot.slane %v9292, 2
        %v9294 = vadd.f32 %v9292, %v9293
        %v9295 = vrot.slane %v9294, 1
        %v9296 = vadd.f32 %v9294, %v9295
        %s9297 = vtos %v9296
        %s9298 = sadd.f32 %s9285, %s9297
        %vm9299 = vcmp.eq.s32.totalorder %v894, 0
        %v9300 = vstv %s9298
        %v9301 = vsel %vm9299, %v9300, 0.0
        %v9302 = vadd.f32 %v9181, %v9301
        %s9303 = scalar_lea.vmem [#allocation15], 256
        %v9304 = vld [vmem:[%s9303] sm:$0xff]
        %v9305 = vld [vmem:[%s9303 + $0x8] sm:$0xff]
        %v9306 = vld [vmem:[%s9303 + $0x10] sm:$0xff]
        %v9307 = vld [vmem:[%s9303 + $0x18] sm:$0xff]
        %v9308 = vld [vmem:[%s9303 + $0x20] sm:$0xff]
        %v9309 = vld [vmem:[%s9303 + $0x28] sm:$0xff]
        %v9310 = vld [vmem:[%s9303 + $0x30] sm:$0xff]
        %v9311 = vld [vmem:[%s9303 + $0x38] sm:$0xff]
        %v9312 = vld [vmem:[%s9303 + $0x40] sm:$0xff]
        %v9313 = vld [vmem:[%s9303 + $0x48] sm:$0xff]
        %v9314 = vld [vmem:[%s9303 + $0x50] sm:$0xff]
        %v9315 = vld [vmem:[%s9303 + $0x58] sm:$0xff]
        %v9316 = vld [vmem:[%s9303 + $0x60] sm:$0xff]
        %v9317 = vld [vmem:[%s9303 + $0x68] sm:$0xff]
        %v9318 = vld [vmem:[%s9303 + $0x70] sm:$0xff]
        %v9319 = vld [vmem:[%s9303 + $0x78] sm:$0xff]
        %v9320 = vld [vmem:[%s9303 + $0x80] sm:$0xff]
        %v9321 = vld [vmem:[%s9303 + $0x88] sm:$0xff]
        %v9322 = vld [vmem:[%s9303 + $0x90] sm:$0xff]
        %v9323 = vld [vmem:[%s9303 + $0x98] sm:$0xff]
        %v9324 = vld [vmem:[%s9303 + $0xa0] sm:$0xff]
        %v9325 = vld [vmem:[%s9303 + $0xa8] sm:$0xff]
        %v9326 = vld [vmem:[%s9303 + $0xb0] sm:$0xff]
        %v9327 = vld [vmem:[%s9303 + $0xb8] sm:$0xff]
        %v9328 = vld [vmem:[%s9303 + $0xc0] sm:$0xff]
        %v9329 = vld [vmem:[%s9303 + $0xc8] sm:$0xff]
        %v9330 = vld [vmem:[%s9303 + $0xd0] sm:$0xff]
        %v9331 = vld [vmem:[%s9303 + $0xd8] sm:$0xff]
        %v9332 = vld [vmem:[%s9303 + $0xe0] sm:$0xff]
        %v9333 = vld [vmem:[%s9303 + $0xe8] sm:$0xff]
        %v9334 = vld [vmem:[%s9303 + $0xf0] sm:$0xff]
        %v9335 = vld [vmem:[%s9303 + $0xf8] sm:$0xff]
        %v9336 = vmul.f32 %v9129, %v9304
        %v9337 = vmul.f32 %v9130, %v9305
        %v9338 = vmul.f32 %v9131, %v9306
        %v9339 = vmul.f32 %v9132, %v9307
        %v9340 = vmul.f32 %v9133, %v9308
        %v9341 = vmul.f32 %v9134, %v9309
        %v9342 = vmul.f32 %v9135, %v9310
        %v9343 = vmul.f32 %v9136, %v9311
        %v9344 = vmul.f32 %v9137, %v9312
        %v9345 = vmul.f32 %v9138, %v9313
        %v9346 = vmul.f32 %v9139, %v9314
        %v9347 = vmul.f32 %v9140, %v9315
        %v9348 = vmul.f32 %v9141, %v9316
        %v9349 = vmul.f32 %v9142, %v9317
        %v9350 = vmul.f32 %v9143, %v9318
        %v9351 = vmul.f32 %v9144, %v9319
        %v9352 = vmul.f32 %v9145, %v9320
        %v9353 = vmul.f32 %v9146, %v9321
        %v9354 = vmul.f32 %v9147, %v9322
        %v9355 = vmul.f32 %v9148, %v9323
        %v9356 = vmul.f32 %v9149, %v9324
        %v9357 = vmul.f32 %v9150, %v9325
        %v9358 = vmul.f32 %v9151, %v9326
        %v9359 = vmul.f32 %v9152, %v9327
        %v9360 = vmul.f32 %v9153, %v9328
        %v9361 = vmul.f32 %v9154, %v9329
        %v9362 = vmul.f32 %v9155, %v9330
        %v9363 = vmul.f32 %v9156, %v9331
        %v9364 = vmul.f32 %v9157, %v9332
        %v9365 = vmul.f32 %v9158, %v9333
        %v9366 = vmul.f32 %v9159, %v9334
        %v9367 = vmul.f32 %v9160, %v9335
        %v9368 = vadd.f32 %v9336, %v9337
        %v9369 = vadd.f32 %v9368, %v9338
        %v9370 = vadd.f32 %v9369, %v9339
        %v9371 = vadd.f32 %v9370, %v9340
        %v9372 = vadd.f32 %v9371, %v9341
        %v9373 = vadd.f32 %v9372, %v9342
        %v9374 = vadd.f32 %v9373, %v9343
        %v9375 = vadd.f32 %v9374, %v9344
        %v9376 = vadd.f32 %v9375, %v9345
        %v9377 = vadd.f32 %v9376, %v9346
        %v9378 = vadd.f32 %v9377, %v9347
        %v9379 = vadd.f32 %v9378, %v9348
        %v9380 = vadd.f32 %v9379, %v9349
        %v9381 = vadd.f32 %v9380, %v9350
        %v9382 = vadd.f32 %v9381, %v9351
        %v9383 = vadd.f32 %v9382, %v9352
        %v9384 = vadd.f32 %v9383, %v9353
        %v9385 = vadd.f32 %v9384, %v9354
        %v9386 = vadd.f32 %v9385, %v9355
        %v9387 = vadd.f32 %v9386, %v9356
        %v9388 = vadd.f32 %v9387, %v9357
        %v9389 = vadd.f32 %v9388, %v9358
        %v9390 = vadd.f32 %v9389, %v9359
        %v9391 = vadd.f32 %v9390, %v9360
        %v9392 = vadd.f32 %v9391, %v9361
        %v9393 = vadd.f32 %v9392, %v9362
        %v9394 = vadd.f32 %v9393, %v9363
        %v9395 = vadd.f32 %v9394, %v9364
        %v9396 = vadd.f32 %v9395, %v9365
        %v9397 = vadd.f32 %v9396, %v9366
        %v9398 = vadd.f32 %v9397, %v9367
        %9399 = vadd.xlane.f32.xlu0 %v9398
        %v9400 = vpop.xlane.xlu0 %9399
        %v9401 = vrot.slane %v9400, 4
        %v9402 = vadd.f32 %v9400, %v9401
        %v9403 = vrot.slane %v9402, 2
        %v9404 = vadd.f32 %v9402, %v9403
        %v9405 = vrot.slane %v9404, 1
        %v9406 = vadd.f32 %v9404, %v9405
        %s9407 = vtos %v9406
        %v9408 = vld [vmem:[%s11 + $0x1] sm:$0x1]
        %v9409 = vmul.f32 %v9180, %v9408
        %v9410 = vsel %vm711, %v9409, 0.0
        %9411 = vadd.xlane.f32.xlu0 %v9410
        %v9412 = vpop.xlane.xlu0 %9411
        %v9413 = vrot.slane %v9412, 4
        %v9414 = vadd.f32 %v9412, %v9413
        %v9415 = vrot.slane %v9414, 2
        %v9416 = vadd.f32 %v9414, %v9415
        %v9417 = vrot.slane %v9416, 1
        %v9418 = vadd.f32 %v9416, %v9417
        %s9419 = vtos %v9418
        %s9420 = sadd.f32 %s9407, %s9419
        %vm9421 = vcmp.eq.s32.totalorder %v894, 1
        %v9422 = vstv %s9420
        %v9423 = vsel %vm9421, %v9422, 0.0
        %v9424 = vadd.f32 %v9302, %v9423
        %vm9425 = vcmask 8192
        %9426 = vst.msk [vmem:[%s534] sm:$0x1] %vm9425, %v9424
        %s9427 = sand.u32 %s323, 1
        %s9428 = scalar_lea.sflag [#allocation11], %s9427
        %s9429 = sand.u32 %s323, 1
        %s9430 = scalar_lea.vmem [#allocation18], %s9429
        // Predicated region
        $region114: #{multi_input_forward.1} parent=71 // pred_check
          %p9431 = pneg %p333
        $region115: #{multi_input_forward.1} parent=71 // pred_check_branch
          %9433 = sbr.rel (%p9431) target = $region117
        $region116: #{multi_input_forward.1} parent=71 // pred_region
          %9435 = vsyncadd %s9428, 0
          %s9436 = scalar_lea.hbm %s13, %s32
          %s9438 = sshll.u32 %s9430, 4
          %s9439 = int_to_ptr.vmem [resolvable:$true] %s9438
          %s9440 = sshll.u32 %s9436, 4
          %s9441 = int_to_ptr.hbm [resolvable:$true] %s9440
          %9443 = dma.vmem_to_hbm [thread:$0]  %s9439, 16, %s9441, %s9428
        $region117: #{multi_input_forward.1} parent=71 // pred_fallthru
          _
      $region72: #{multi_input_forward.1} parent=5 // pred_fallthru
        _
      %p9444 = scmp.le.s32.totalorder 2, %s27
      // Predicated region
      $region118: #{multi_input_forward.1} parent=5 // pred_check
        %p9445 = pneg %p9444
      $region119: #{multi_input_forward.1} parent=5 // pred_check_branch
        %9447 = sbr.rel (%p9445) target = $region121
      $region120: #{multi_input_forward.1} parent=5 // pred_region
        %s9448 = ssub.s32 %s27, 2
        // Predicated region
        $region122: #{multi_input_forward.1} parent=120 // pred_check
          %p9449 = pneg %p339
        $region123: #{multi_input_forward.1} parent=120 // pred_check_branch
          %9451 = sbr.rel (%p9449) target = $region125
        $region124: #{multi_input_forward.1} parent=120 // pred_region
          %s9452 = sand.u32 %s324, 1
          %s9453 = scalar_lea.sflag [#allocation11], %s9452
          %s9454 = sand.u32 %s324, 1
          %s9455 = scalar_lea.vmem [#allocation18], %s9454
          %9457 = dma.done %s9453, 16
        $region125: #{multi_input_forward.1} parent=120 // pred_fallthru
          _
      $region121: #{multi_input_forward.1} parent=5 // pred_fallthru
        _
    $region6: #{multi_input_forward.1} parent=1 // loop_footer
      %s31 = sadd.s32 1, %s27
    $region7: #{multi_input_forward.1} parent=1 // loop_footer_branch
      %26 = sbr.rel target = $region3
    $region8: #{multi_input_forward.1} parent=1 // loop_exit
      _
    %9458 = vsyncpa [#allocation10], 1
    %s9459 = scalar_lea.sflag [#allocation10], 1
    %9460 = vsyncpa %s9459, 1
    %9461 = vsyncpa [#allocation13], 1
    %9462 = vsyncpa [#allocation16], 1
    %9463 = vsyncpa [#allocation11], 1
    %s9464 = scalar_lea.sflag [#allocation11], 1
    %9465 = vsyncpa %s9464, 1

</llo_original>
